<compile_context>
chip_gen: v6e
topology: v6e:2x2x1
jax: 0.10.0
libtpu: 0.0.40
codegen_flags: <defaults>
</compile_context>

<pallas_src>
import functools

import jax
import jax.numpy as jnp
import numpy as np
from jax.experimental import pallas as pl
from jax.experimental.pallas import tpu as pltpu


def _freq_bands(n_freqs):
    # torch.linspace(2.**0., 2.**(n_freqs-1), n_freqs) -> float32 values.
    return np.linspace(2.0 ** 0.0, 2.0 ** (n_freqs - 1), n_freqs).astype(np.float32)


def _lane_tables(d_input, n_freqs, pack):
    """Per-output-lane constants for the packed sample-major layout.

    Returns a (pack*d_input + 4, pack*d_out) float32 array with rows:
      [0, pack*d_input): one-hot source-channel selectors,
      -4: per-lane frequency (1.0 on identity lanes),
      -3: identity mask, -2: sin mask, -1: cos mask.
    """
    freqs = _freq_bands(n_freqs)
    d_out = d_input * (1 + 2 * n_freqs)
    width = pack * d_out
    n_src = pack * d_input

    sel = np.zeros((n_src, width), np.float32)
    freq_row = np.ones((width,), np.float32)
    w_id = np.zeros((width,), np.float32)
    w_sin = np.zeros((width,), np.float32)
    w_cos = np.zeros((width,), np.float32)

    for p in range(width):
        j, c = divmod(p, d_out)                 # sample-within-row, output channel
        if c < d_input:
            ch = c
            w_id[p] = 1.0
        else:
            k, r = divmod(c - d_input, 2 * d_input)
            if r < d_input:
                ch = r
                w_sin[p] = 1.0
            else:
                ch = r - d_input
                w_cos[p] = 1.0
            freq_row[p] = freqs[k]
        sel[j * d_input + ch, p] = 1.0

    return np.concatenate(
        [sel, freq_row[None], w_id[None], w_sin[None], w_cos[None]], axis=0)


def _pe_kernel(tab_ref, x_ref, o_ref, *, n_src):
    # x_ref: (rows, n_src) sample-major block (samples along sublanes).
    # o_ref: (rows, pack*d_out) lane-dense output block.
    x = x_ref[...].astype(jnp.float32)

    # Fan each source channel out to its output lanes: lane broadcast + one-hot mask.
    xg = x[:, 0:1] * tab_ref[0:1, :]
    for c in range(1, n_src):                   # compile-time unrolled (n_src is tiny)
        xg = xg + x[:, c:c + 1] * tab_ref[c:c + 1, :]

    ang = xg * tab_ref[n_src:n_src + 1, :]      # per-lane frequency
    w_id = tab_ref[n_src + 1:n_src + 2, :]
    w_sin = tab_ref[n_src + 2:n_src + 3, :]
    w_cos = tab_ref[n_src + 3:n_src + 4, :]

    out = xg * w_id + jnp.sin(ang) * w_sin + jnp.cos(ang) * w_cos
    o_ref[...] = out.astype(o_ref.dtype)


def positional_encoder(x, n_freqs, *, block_rows=2048, out_dtype=None):
    """x: (..., d_input). Returns (..., d_input * (1 + 2*n_freqs))."""
    orig_shape = x.shape
    d_input = orig_shape[-1]
    d_out = d_input * (1 + 2 * n_freqs)
    out_dtype = x.dtype if out_dtype is None else jnp.dtype(out_dtype)

    x2 = x.reshape(-1, d_input)
    n = x2.shape[0]

    # Pack consecutive samples per kernel row so output rows are ~lane-dense.
    pack = max(1, 128 // d_out)
    pad = (-n) % pack
    if pad:
        x2 = jnp.pad(x2, ((0, pad), (0, 0)))    # tiny input-side pad only
    n_padded = n + pad
    rows = n_padded // pack
    n_src = pack * d_input
    width = pack * d_out

    # Rows per grid step: multiple of 8 sublanes, clipped to the problem size.
    block_rows = max(8, min(int(block_rows), rows))
    block_rows = ((block_rows + 7) // 8) * 8
    grid = (pl.cdiv(rows, block_rows),)

    tab = jnp.asarray(_lane_tables(d_input, n_freqs, pack))   # (n_src+4, width)
    x_rows = x2.reshape(rows, n_src)                          # free row-major reshape

    kernel = functools.partial(_pe_kernel, n_src=n_src)
    cost = pl.CostEstimate(
        flops=rows * width * (2 * n_src + 6),
        transcendentals=2 * rows * width,                     # sin + cos over all lanes
        bytes_accessed=x_rows.size * x_rows.dtype.itemsize
        + rows * width * jnp.dtype(out_dtype).itemsize,
    )

    out_rows = pl.pallas_call(
        kernel,
        out_shape=jax.ShapeDtypeStruct((rows, width), out_dtype),
        grid_spec=pltpu.PrefetchScalarGridSpec(
            num_scalar_prefetch=0,
            grid=grid,
            in_specs=[
                # Constant block index -> table stays resident in VMEM.
                pl.BlockSpec(tab.shape, lambda i: (0, 0)),
                pl.BlockSpec((block_rows, n_src), lambda i: (i, 0)),
            ],
            out_specs=pl.BlockSpec((block_rows, width), lambda i: (i, 0)),
        ),
        compiler_params=pltpu.CompilerParams(
            dimension_semantics=("parallel",)),
        cost_estimate=cost,
    )(tab, x_rows)

    out = out_rows.reshape(n_padded, d_out)                   # free reshape back
    if pad:
        out = out[:n]
    return out.reshape(*orig_shape[:-1], d_out)


def positional_encoder_ref(x, n_freqs):
    # Pure-JAX reference using the SAME float32 frequency values as the kernel.
    freqs = _freq_bands(n_freqs)
    parts = [x]
    for f in freqs:
        f = float(f)
        parts.append(jnp.sin(x * f))
        parts.append(jnp.cos(x * f))
    return jnp.concatenate(parts, axis=-1)


if __name__ == "__main__":
    d_input = 3        # xyz coordinates
    n_freqs = 10       # classic NeRF positional encoding
    batch, n_points = 2, 1000

    key = jax.random.PRNGKey(0)
    # NeRF-style normalized coordinates in [-1, 1].
    x = jax.random.uniform(key, (batch, n_points, d_input), dtype=jnp.float32,
                           minval=-1.0, maxval=1.0)

    # Small block_rows here so the tiny demo still runs >= 2 grid steps (megacore);
    # the production default (2048 rows = 4096 samples per step) is used otherwise.
    out = positional_encoder(x, n_freqs, block_rows=256)
    out = jax.block_until_ready(out)

    ref = positional_encoder_ref(x, n_freqs)
    assert out.shape == (batch, n_points, d_input * (1 + 2 * n_freqs))
    np.testing.assert_allclose(np.asarray(out), np.asarray(ref), rtol=1e-4, atol=1e-4)

    print("KERNEL_OK")
</pallas_src>

<mosaic_0001>
module attributes {stable_mosaic.version = 11 : i64} {
  func.func @_pe_kernel(%arg0: i32, %arg1: memref<10x126xf32, #tpu.memory_space<vmem>>, %arg2: memref<256x6xf32, #tpu.memory_space<vmem>>, %arg3: memref<256x126xf32, #tpu.memory_space<vmem>>) attributes {dimension_semantics = [#tpu.dimension_semantics<parallel>], iteration_bounds = array<i64: 4>, scalar_prefetch = 0 : i64, scratch_operands = 0 : i64, tpu.core_type = #tpu.core_type<tc>, window_params = [{pipeline_mode = #tpu.pipeline_mode<synchronous>, transform_indices = @transform_0, window_bounds = array<i64: 10, 126>}, {transform_indices = @transform_1, window_bounds = array<i64: 256, 6>}, {transform_indices = @transform_2, window_bounds = array<i64: 256, 126>}]} {
    %c0 = arith.constant 0 : index
    %c0_0 = arith.constant 0 : index
    %0 = vector.load %arg2[%c0, %c0_0] : memref<256x6xf32, #tpu.memory_space<vmem>>, vector<256x6xf32>
    %1 = vector.extract_strided_slice %0 {offsets = [0, 0], sizes = [256, 1], strides = [1, 1]} : vector<256x6xf32> to vector<256x1xf32>
    %c0_1 = arith.constant 0 : index
    %c0_2 = arith.constant 0 : index
    %2 = vector.load %arg1[%c0_1, %c0_2] : memref<10x126xf32, #tpu.memory_space<vmem>>, vector<1x126xf32>
    %3 = vector.broadcast %1 : vector<256x1xf32> to vector<256x126xf32>
    %4 = vector.broadcast %2 : vector<1x126xf32> to vector<256x126xf32>
    %5 = arith.mulf %3, %4 : vector<256x126xf32>
    %6 = vector.extract_strided_slice %0 {offsets = [0, 1], sizes = [256, 1], strides = [1, 1]} : vector<256x6xf32> to vector<256x1xf32>
    %c1 = arith.constant 1 : index
    %c0_3 = arith.constant 0 : index
    %7 = vector.load %arg1[%c1, %c0_3] : memref<10x126xf32, #tpu.memory_space<vmem>>, vector<1x126xf32>
    %8 = vector.broadcast %6 : vector<256x1xf32> to vector<256x126xf32>
    %9 = vector.broadcast %7 : vector<1x126xf32> to vector<256x126xf32>
    %10 = arith.mulf %8, %9 : vector<256x126xf32>
    %11 = arith.addf %5, %10 : vector<256x126xf32>
    %12 = vector.extract_strided_slice %0 {offsets = [0, 2], sizes = [256, 1], strides = [1, 1]} : vector<256x6xf32> to vector<256x1xf32>
    %c2 = arith.constant 2 : index
    %c0_4 = arith.constant 0 : index
    %13 = vector.load %arg1[%c2, %c0_4] : memref<10x126xf32, #tpu.memory_space<vmem>>, vector<1x126xf32>
    %14 = vector.broadcast %12 : vector<256x1xf32> to vector<256x126xf32>
    %15 = vector.broadcast %13 : vector<1x126xf32> to vector<256x126xf32>
    %16 = arith.mulf %14, %15 : vector<256x126xf32>
    %17 = arith.addf %11, %16 : vector<256x126xf32>
    %18 = vector.extract_strided_slice %0 {offsets = [0, 3], sizes = [256, 1], strides = [1, 1]} : vector<256x6xf32> to vector<256x1xf32>
    %c3 = arith.constant 3 : index
    %c0_5 = arith.constant 0 : index
    %19 = vector.load %arg1[%c3, %c0_5] : memref<10x126xf32, #tpu.memory_space<vmem>>, vector<1x126xf32>
    %20 = vector.broadcast %18 : vector<256x1xf32> to vector<256x126xf32>
    %21 = vector.broadcast %19 : vector<1x126xf32> to vector<256x126xf32>
    %22 = arith.mulf %20, %21 : vector<256x126xf32>
    %23 = arith.addf %17, %22 : vector<256x126xf32>
    %24 = vector.extract_strided_slice %0 {offsets = [0, 4], sizes = [256, 1], strides = [1, 1]} : vector<256x6xf32> to vector<256x1xf32>
    %c4 = arith.constant 4 : index
    %c0_6 = arith.constant 0 : index
    %25 = vector.load %arg1[%c4, %c0_6] : memref<10x126xf32, #tpu.memory_space<vmem>>, vector<1x126xf32>
    %26 = vector.broadcast %24 : vector<256x1xf32> to vector<256x126xf32>
    %27 = vector.broadcast %25 : vector<1x126xf32> to vector<256x126xf32>
    %28 = arith.mulf %26, %27 : vector<256x126xf32>
    %29 = arith.addf %23, %28 : vector<256x126xf32>
    %30 = vector.extract_strided_slice %0 {offsets = [0, 5], sizes = [256, 1], strides = [1, 1]} : vector<256x6xf32> to vector<256x1xf32>
    %c5 = arith.constant 5 : index
    %c0_7 = arith.constant 0 : index
    %31 = vector.load %arg1[%c5, %c0_7] : memref<10x126xf32, #tpu.memory_space<vmem>>, vector<1x126xf32>
    %32 = vector.broadcast %30 : vector<256x1xf32> to vector<256x126xf32>
    %33 = vector.broadcast %31 : vector<1x126xf32> to vector<256x126xf32>
    %34 = arith.mulf %32, %33 : vector<256x126xf32>
    %35 = arith.addf %29, %34 : vector<256x126xf32>
    %c6 = arith.constant 6 : index
    %c0_8 = arith.constant 0 : index
    %36 = vector.load %arg1[%c6, %c0_8] : memref<10x126xf32, #tpu.memory_space<vmem>>, vector<1x126xf32>
    %37 = vector.broadcast %36 : vector<1x126xf32> to vector<256x126xf32>
    %38 = arith.mulf %35, %37 : vector<256x126xf32>
    %c7 = arith.constant 7 : index
    %c0_9 = arith.constant 0 : index
    %39 = vector.load %arg1[%c7, %c0_9] : memref<10x126xf32, #tpu.memory_space<vmem>>, vector<1x126xf32>
    %c8 = arith.constant 8 : index
    %c0_10 = arith.constant 0 : index
    %40 = vector.load %arg1[%c8, %c0_10] : memref<10x126xf32, #tpu.memory_space<vmem>>, vector<1x126xf32>
    %c9 = arith.constant 9 : index
    %c0_11 = arith.constant 0 : index
    %41 = vector.load %arg1[%c9, %c0_11] : memref<10x126xf32, #tpu.memory_space<vmem>>, vector<1x126xf32>
    %42 = vector.broadcast %39 : vector<1x126xf32> to vector<256x126xf32>
    %43 = arith.mulf %35, %42 : vector<256x126xf32>
    %44 = math.sin %38 : vector<256x126xf32>
    %45 = vector.broadcast %40 : vector<1x126xf32> to vector<256x126xf32>
    %46 = arith.mulf %44, %45 : vector<256x126xf32>
    %47 = arith.addf %43, %46 : vector<256x126xf32>
    %48 = math.cos %38 : vector<256x126xf32>
    %49 = vector.broadcast %41 : vector<1x126xf32> to vector<256x126xf32>
    %50 = arith.mulf %48, %49 : vector<256x126xf32>
    %51 = arith.addf %47, %50 : vector<256x126xf32>
    %c0_12 = arith.constant 0 : index
    %c0_13 = arith.constant 0 : index
    %52 = vector.load %arg3[%c0_12, %c0_13] : memref<256x126xf32, #tpu.memory_space<vmem>>, vector<256x126xf32>
    tpu.vector_store %arg3[%c0_12, %c0_13], %51 {strides = array<i32>} : memref<256x126xf32, #tpu.memory_space<vmem>>, vector<256x126xf32>,
    return
  }
  func.func @transform_0(%arg0: i32) -> (i32, i32) {
    %c0_i32 = arith.constant 0 : i32
    %c0_i32_0 = arith.constant 0 : i32
    %c0_i32_1 = arith.constant 0 : i32
    return %c0_i32, %c0_i32_0 : i32, i32
  }
  func.func @transform_1(%arg0: i32) -> (i32, i32) {
    %c0_i32 = arith.constant 0 : i32
    %c0_i32_0 = arith.constant 0 : i32
    return %arg0, %c0_i32 : i32, i32
  }
  func.func @transform_2(%arg0: i32) -> (i32, i32) {
    %c0_i32 = arith.constant 0 : i32
    %c0_i32_0 = arith.constant 0 : i32
    return %arg0, %c0_i32 : i32, i32
  }
}

</mosaic_0001>

<llo_original>
// kernel: tpu_custom_call.1
$region0: #{tpu_custom_call.1}
  #allocation0 [shape = 'u32[]', space=smem, size = 0x4, offset = 0x4, fixed_abs, tag = 'smem constant byte address 0x4 - core index']
  #allocation1 [shape = 'u32[144,128]{1,0:T(1,128)}', space=vmem, size = 0x12000, scoped, tag = 'internal scratch']
  %s0 = inlined_call_operand.vmem [shape: f32[10,126], index: 0, kind: input, shape index: {}]
  %s1 = inlined_call_operand.vmem [shape: f32[1000,6], index: 1, kind: input, shape index: {}]
  %s2 = inlined_call_operand.hbm [shape: f32[1000,126], index: 2, kind: output, shape index: {}]
  %s3 = sld [smem:[#allocation0]]
  $region41: #{tpu_custom_call.1} parent=0
    _
  %s5 = ssub.s32 1, %s3
  %s6 = scalar_select 0, %s5, %s3
  $region1: #{tpu_custom_call.1} parent=0
    #allocation2 [shape = 'u8[262144]{0}', space=vmem, size = 0x40000, scoped, tag = 'output window, operand 0']
    #allocation3 [shape = 's32[2]{0}', space=sflag, size = 0x8, scoped, tag = 'scoped memory for tpu_custom_call.1']
    %7 = vsyncpa [#allocation3], 0
    %s8 = scalar_lea.sflag [#allocation3], 1
    %9 = vsyncpa %s8, 0
    loop: start=0, step=1, limit=6
    $region2: #{tpu_custom_call.1} parent=1 // loop_pre_header
      _
    $region3: #{tpu_custom_call.1} parent=1 // loop_header
      %s11 = sphi 0, %s15
      %p12 = scmp.ge.s32.totalorder %s11, 6
      %s19 = sphi 0, %s19
      %s21 = sphi 0, %s19
      %s22 = sphi 0, %s21
      %s36 = sphi 0, %s22
      %s42 = sphi 0, %s44
      %s45 = sphi 0, %s42
      %s46 = sphi 0, %s45
      %s62 = sphi 0, %s46
      %s68 = sphi 0, %s70
      %s71 = sphi 0, %s68
      %s72 = sphi 0, %s71
      %s88 = sphi 0, %s72
    $region4: #{tpu_custom_call.1} parent=1 // loop_header_branch
      %14 = sbr.rel (%p12) target = $region8
    $region5: #{tpu_custom_call.1} parent=1 // loop_body
      %s16 = ssub.s32 %s11, 1
      %s17 = ssub.s32 %s11, 2
      %s18 = sadd.s32 %s11, 1
      %s20 = sadd.s32 %s19, 1
      %p23 = scmp.eq.s32.totalorder %s11, 3
      %p24 = scmp.ne.s32.totalorder %s19, %s21
      %p25 = scmp.eq.s32.totalorder %s11, 0
      %p26 = por %p24, %p25
      %p27 = scmp.ne.s32.totalorder %s19, %s21
      %p28 = scmp.eq.s32.totalorder %s16, 3
      %p29 = por %p27, %p28
      %p30 = scmp.ne.s32.totalorder %s21, %s22
      %p31 = scmp.eq.s32.totalorder %s16, 0
      %p32 = por %p30, %p31
      %p33 = scmp.ne.s32.totalorder %s21, %s22
      %p34 = scmp.eq.s32.totalorder %s17, 3
      %p35 = por %p33, %p34
      %p37 = scmp.ne.s32.totalorder %s22, %s36
      %p38 = scmp.eq.s32.totalorder %s17, 0
      %p39 = por %p37, %p38
      %s40 = ssub.s32 %s11, %s18
      %p41 = scmp.eq.s32.totalorder %s40, 0
      %s43 = sadd.s32 %s42, 1
      %s44 = scalar_select %p41, %s42, %s43
      %p47 = pneg %p41
      %p48 = scmp.eq.s32.totalorder %s11, 3
      %p49 = por %p47, %p48
      %p50 = scmp.ne.s32.totalorder %s42, %s45
      %p51 = scmp.eq.s32.totalorder %s11, 0
      %p52 = por %p50, %p51
      %p53 = scmp.ne.s32.totalorder %s42, %s45
      %p54 = scmp.eq.s32.totalorder %s16, 3
      %p55 = por %p53, %p54
      %p56 = scmp.ne.s32.totalorder %s45, %s46
      %p57 = scmp.eq.s32.totalorder %s16, 0
      %p58 = por %p56, %p57
      %p59 = scmp.ne.s32.totalorder %s45, %s46
      %p60 = scmp.eq.s32.totalorder %s17, 3
      %p61 = por %p59, %p60
      %p63 = scmp.ne.s32.totalorder %s46, %s62
      %p64 = scmp.eq.s32.totalorder %s17, 0
      %p65 = por %p63, %p64
      %s66 = ssub.s32 %s11, %s18
      %p67 = scmp.eq.s32.totalorder %s66, 0
      %s69 = sadd.s32 %s68, 1
      %s70 = scalar_select %p67, %s68, %s69
      %p73 = pneg %p67
      %p74 = scmp.eq.s32.totalorder %s11, 3
      %p75 = por %p73, %p74
      %p76 = scmp.ne.s32.totalorder %s68, %s71
      %p77 = scmp.eq.s32.totalorder %s11, 0
      %p78 = por %p76, %p77
      %p79 = scmp.ne.s32.totalorder %s68, %s71
      %p80 = scmp.eq.s32.totalorder %s16, 3
      %p81 = por %p79, %p80
      %p82 = scmp.ne.s32.totalorder %s71, %s72
      %p83 = scmp.eq.s32.totalorder %s16, 0
      %p84 = por %p82, %p83
      %p85 = scmp.ne.s32.totalorder %s71, %s72
      %p86 = scmp.eq.s32.totalorder %s17, 3
      %p87 = por %p85, %p86
      %p89 = scmp.ne.s32.totalorder %s72, %s88
      %p90 = scmp.eq.s32.totalorder %s17, 0
      %p91 = por %p89, %p90
      %p92 = scmp.le.s32.totalorder 1, %s11
      %p93 = scmp.lt.s32.totalorder %s11, 5
      %p94 = pnand %p92, %p93
      %p95 = pneg %p94
      // Predicated region
      $region9: #{tpu_custom_call.1} parent=5 // pred_check
        _
      $region10: #{tpu_custom_call.1} parent=5 // pred_check_branch
        %97 = sbr.rel (%p94) target = $region12
      $region11: #{tpu_custom_call.1} parent=5 // pred_region
        %s98 = ssub.s32 %s11, 1
        // Predicated region
        $region13: #{tpu_custom_call.1} parent=11 // pred_check
          %p99 = pneg %p32
        $region14: #{tpu_custom_call.1} parent=11 // pred_check_branch
          %101 = sbr.rel (%p99) target = $region16
        $region15: #{tpu_custom_call.1} parent=11 // pred_region
          _
        $region16: #{tpu_custom_call.1} parent=11 // pred_fallthru
          _
      $region12: #{tpu_custom_call.1} parent=5 // pred_fallthru
        _
      %p102 = scmp.lt.s32.totalorder %s11, 4
      // Predicated region
      $region17: #{tpu_custom_call.1} parent=5 // pred_check
        %p103 = pneg %p102
      $region18: #{tpu_custom_call.1} parent=5 // pred_check_branch
        %105 = sbr.rel (%p103) target = $region20
      $region19: #{tpu_custom_call.1} parent=5 // pred_region
        // Predicated region
        $region21: #{tpu_custom_call.1} parent=19 // pred_check
          %p106 = pneg %p52
        $region22: #{tpu_custom_call.1} parent=19 // pred_check_branch
          %108 = sbr.rel (%p106) target = $region24
        $region23: #{tpu_custom_call.1} parent=19 // pred_region
          %s109 = smul.u32 32, %s11
          %s110 = ssub.s32 125, %s109
          %p111 = scmp.lt.s32.totalorder %s110, 32
          %s112 = scalar_select %p111, %s110, 32
          %s113 = smul.u32 128, %s112
          %p114 = scmp.lt.s32.totalorder %s109, 124
          %s115 = scalar_select %p114, %s109, 124
          %s116 = smul.addr %s115, 8
          %s117 = scalar_lea.vmem %s1, %s116
          %s118 = smul.u32 32, %s11
          %s119 = ssub.s32 125, %s118
          %p120 = scmp.lt.s32.totalorder %s119, 32
          %s121 = scalar_select %p120, %s119, 32
          %s122 = smul.u32 128, %s121
        $region24: #{tpu_custom_call.1} parent=19 // pred_fallthru
          _
      $region20: #{tpu_custom_call.1} parent=5 // pred_fallthru
        _
      %p123 = scmp.le.s32.totalorder 1, %s11
      %p124 = scmp.lt.s32.totalorder %s11, 5
      %p125 = pnand %p123, %p124
      %p126 = pneg %p125
      // Predicated region
      $region25: #{tpu_custom_call.1} parent=5 // pred_check
        _
      $region26: #{tpu_custom_call.1} parent=5 // pred_check_branch
        %128 = sbr.rel (%p125) target = $region28
      $region27: #{tpu_custom_call.1} parent=5 // pred_region
        %s129 = ssub.s32 %s11, 1
        %p130 = pneg %p32
        %p131 = pneg %p29
        %s132 = smul.u32 32, %s16
        %s133 = ssub.s32 125, %s132
        %p134 = scmp.lt.s32.totalorder %s133, 32
        %s135 = scalar_select %p134, %s133, 32
        %s136 = smul.u32 128, %s135
        %p137 = scmp.lt.s32.totalorder %s132, 124
        %s138 = scalar_select %p137, %s132, 124
        %s139 = smul.addr %s138, 8
        %s140 = scalar_lea.vmem %s1, %s139
        %p141 = pneg %p58
        %p142 = pneg %p55
        %p143 = pneg %p84
        %p144 = pneg %p81
        %s145 = sand.u32 %s71, 1
        %s146 = scalar_lea.sflag [#allocation3], %s145
        %s147 = sand.u32 %s71, 1
        %s148 = smul.addr %s147, 256
        %s149 = scalar_lea.vmem [#allocation2], %s148
        %s150 = smul.u32 32, %s16
        %s151 = ssub.s32 125, %s150
        %p152 = scmp.lt.s32.totalorder %s151, 32
        %s153 = scalar_select %p152, %s151, 32
        %s154 = smul.u32 128, %s153
        %p155 = scmp.lt.s32.totalorder %s150, 124
        %s156 = scalar_select %p155, %s150, 124
        %s157 = smul.addr %s156, 8
        %s158 = scalar_lea.vmem %s1, %s157
        %s159 = smul.u32 32, %s16
        %s160 = ssub.s32 125, %s159
        %p161 = scmp.lt.s32.totalorder %s160, 32
        %s162 = scalar_select %p161, %s160, 32
        %s163 = smul.u32 128, %s162
        %s164 = smul.u32 32, %s16
        %s165 = ssub.s32 125, %s164
        %p166 = scmp.lt.s32.totalorder %s165, 32
        %s167 = scalar_select %p166, %s165, 32
        %s168 = smul.u32 128, %s167
        %v169 = vld [vmem:[%s158] sm:$0xff]
        %v170 = vld [vmem:[%s158 + $0x8] sm:$0xff]
        %v171 = vld [vmem:[%s158 + $0x10] sm:$0xff]
        %v172 = vld [vmem:[%s158 + $0x18] sm:$0xff]
        %v173 = vld [vmem:[%s158 + $0x20] sm:$0xff]
        %v174 = vld [vmem:[%s158 + $0x28] sm:$0xff]
        %v175 = vld [vmem:[%s158 + $0x30] sm:$0xff]
        %v176 = vld [vmem:[%s158 + $0x38] sm:$0xff]
        %v177 = vld [vmem:[%s158 + $0x40] sm:$0xff]
        %v178 = vld [vmem:[%s158 + $0x48] sm:$0xff]
        %v179 = vld [vmem:[%s158 + $0x50] sm:$0xff]
        %v180 = vld [vmem:[%s158 + $0x58] sm:$0xff]
        %v181 = vld [vmem:[%s158 + $0x60] sm:$0xff]
        %v182 = vld [vmem:[%s158 + $0x68] sm:$0xff]
        %v183 = vld [vmem:[%s158 + $0x70] sm:$0xff]
        %v184 = vld [vmem:[%s158 + $0x78] sm:$0xff]
        %v185 = vld [vmem:[%s158 + $0x80] sm:$0xff]
        %v186 = vld [vmem:[%s158 + $0x88] sm:$0xff]
        %v187 = vld [vmem:[%s158 + $0x90] sm:$0xff]
        %v188 = vld [vmem:[%s158 + $0x98] sm:$0xff]
        %v189 = vld [vmem:[%s158 + $0xa0] sm:$0xff]
        %v190 = vld [vmem:[%s158 + $0xa8] sm:$0xff]
        %v191 = vld [vmem:[%s158 + $0xb0] sm:$0xff]
        %v192 = vld [vmem:[%s158 + $0xb8] sm:$0xff]
        %v193 = vld [vmem:[%s158 + $0xc0] sm:$0xff]
        %v194 = vld [vmem:[%s158 + $0xc8] sm:$0xff]
        %v195 = vld [vmem:[%s158 + $0xd0] sm:$0xff]
        %v196 = vld [vmem:[%s158 + $0xd8] sm:$0xff]
        %v197 = vld [vmem:[%s158 + $0xe0] sm:$0xff]
        %v198 = vld [vmem:[%s158 + $0xe8] sm:$0xff]
        %v199 = vld [vmem:[%s158 + $0xf0] sm:$0xff]
        %v200 = vld [vmem:[%s158 + $0xf8] sm:$0xff]
        %v201 = vld [vmem:[%s0] sm:$0x1]
        %203 = vset.pattern.permute.xlu0 0
        %204 = vperm.xlu0 %203, %v169
        %v205 = vpop.permute.xlu0 %204
        %208 = vset.pattern.permute.xlu0 0
        %209 = vperm.xlu0 %208, %v170
        %v210 = vpop.permute.xlu0 %209
        %213 = vset.pattern.permute.xlu0 0
        %214 = vperm.xlu0 %213, %v171
        %v215 = vpop.permute.xlu0 %214
        %218 = vset.pattern.permute.xlu0 0
        %219 = vperm.xlu0 %218, %v172
        %v220 = vpop.permute.xlu0 %219
        %223 = vset.pattern.permute.xlu0 0
        %224 = vperm.xlu0 %223, %v173
        %v225 = vpop.permute.xlu0 %224
        %228 = vset.pattern.permute.xlu0 0
        %229 = vperm.xlu0 %228, %v174
        %v230 = vpop.permute.xlu0 %229
        %233 = vset.pattern.permute.xlu0 0
        %234 = vperm.xlu0 %233, %v175
        %v235 = vpop.permute.xlu0 %234
        %238 = vset.pattern.permute.xlu0 0
        %239 = vperm.xlu0 %238, %v176
        %v240 = vpop.permute.xlu0 %239
        %243 = vset.pattern.permute.xlu0 0
        %244 = vperm.xlu0 %243, %v177
        %v245 = vpop.permute.xlu0 %244
        %248 = vset.pattern.permute.xlu0 0
        %249 = vperm.xlu0 %248, %v178
        %v250 = vpop.permute.xlu0 %249
        %253 = vset.pattern.permute.xlu0 0
        %254 = vperm.xlu0 %253, %v179
        %v255 = vpop.permute.xlu0 %254
        %258 = vset.pattern.permute.xlu0 0
        %259 = vperm.xlu0 %258, %v180
        %v260 = vpop.permute.xlu0 %259
        %263 = vset.pattern.permute.xlu0 0
        %264 = vperm.xlu0 %263, %v181
        %v265 = vpop.permute.xlu0 %264
        %268 = vset.pattern.permute.xlu0 0
        %269 = vperm.xlu0 %268, %v182
        %v270 = vpop.permute.xlu0 %269
        %273 = vset.pattern.permute.xlu0 0
        %274 = vperm.xlu0 %273, %v183
        %v275 = vpop.permute.xlu0 %274
        %278 = vset.pattern.permute.xlu0 0
        %279 = vperm.xlu0 %278, %v184
        %v280 = vpop.permute.xlu0 %279
        %283 = vset.pattern.permute.xlu0 0
        %284 = vperm.xlu0 %283, %v185
        %v285 = vpop.permute.xlu0 %284
        %288 = vset.pattern.permute.xlu0 0
        %289 = vperm.xlu0 %288, %v186
        %v290 = vpop.permute.xlu0 %289
        %293 = vset.pattern.permute.xlu0 0
        %294 = vperm.xlu0 %293, %v187
        %v295 = vpop.permute.xlu0 %294
        %298 = vset.pattern.permute.xlu0 0
        %299 = vperm.xlu0 %298, %v188
        %v300 = vpop.permute.xlu0 %299
        %303 = vset.pattern.permute.xlu0 0
        %304 = vperm.xlu0 %303, %v189
        %v305 = vpop.permute.xlu0 %304
        %308 = vset.pattern.permute.xlu0 0
        %309 = vperm.xlu0 %308, %v190
        %v310 = vpop.permute.xlu0 %309
        %313 = vset.pattern.permute.xlu0 0
        %314 = vperm.xlu0 %313, %v191
        %v315 = vpop.permute.xlu0 %314
        %318 = vset.pattern.permute.xlu0 0
        %319 = vperm.xlu0 %318, %v192
        %v320 = vpop.permute.xlu0 %319
        %323 = vset.pattern.permute.xlu0 0
        %324 = vperm.xlu0 %323, %v193
        %v325 = vpop.permute.xlu0 %324
        %328 = vset.pattern.permute.xlu0 0
        %329 = vperm.xlu0 %328, %v194
        %v330 = vpop.permute.xlu0 %329
        %333 = vset.pattern.permute.xlu0 0
        %334 = vperm.xlu0 %333, %v195
        %v335 = vpop.permute.xlu0 %334
        %338 = vset.pattern.permute.xlu0 0
        %339 = vperm.xlu0 %338, %v196
        %v340 = vpop.permute.xlu0 %339
        %343 = vset.pattern.permute.xlu0 0
        %344 = vperm.xlu0 %343, %v197
        %v345 = vpop.permute.xlu0 %344
        %348 = vset.pattern.permute.xlu0 0
        %349 = vperm.xlu0 %348, %v198
        %v350 = vpop.permute.xlu0 %349
        %353 = vset.pattern.permute.xlu0 0
        %354 = vperm.xlu0 %353, %v199
        %v355 = vpop.permute.xlu0 %354
        %358 = vset.pattern.permute.xlu0 0
        %359 = vperm.xlu0 %358, %v200
        %v360 = vpop.permute.xlu0 %359
        %v362 = vlaneseq
        %v363 = vshrl.u32 %v362, 7
        %v364 = vsub.s32 0, %v363
        %v365 = vrot.slane %v201, %v364
        %v366 = vmul.f32 %v205, %v365
        %v367 = vmul.f32 %v210, %v365
        %v368 = vmul.f32 %v215, %v365
        %v369 = vmul.f32 %v220, %v365
        %v370 = vmul.f32 %v225, %v365
        %v371 = vmul.f32 %v230, %v365
        %v372 = vmul.f32 %v235, %v365
        %v373 = vmul.f32 %v240, %v365
        %v374 = vmul.f32 %v245, %v365
        %v375 = vmul.f32 %v250, %v365
        %v376 = vmul.f32 %v255, %v365
        %v377 = vmul.f32 %v260, %v365
        %v378 = vmul.f32 %v265, %v365
        %v379 = vmul.f32 %v270, %v365
        %v380 = vmul.f32 %v275, %v365
        %v381 = vmul.f32 %v280, %v365
        %v382 = vmul.f32 %v285, %v365
        %v383 = vmul.f32 %v290, %v365
        %v384 = vmul.f32 %v295, %v365
        %v385 = vmul.f32 %v300, %v365
        %v386 = vmul.f32 %v305, %v365
        %v387 = vmul.f32 %v310, %v365
        %v388 = vmul.f32 %v315, %v365
        %v389 = vmul.f32 %v320, %v365
        %v390 = vmul.f32 %v325, %v365
        %v391 = vmul.f32 %v330, %v365
        %v392 = vmul.f32 %v335, %v365
        %v393 = vmul.f32 %v340, %v365
        %v394 = vmul.f32 %v345, %v365
        %v395 = vmul.f32 %v350, %v365
        %v396 = vmul.f32 %v355, %v365
        %v397 = vmul.f32 %v360, %v365
        %v398 = vld [vmem:[%s0 + $0x1] sm:$0x1]
        %399 = vset.pattern.permute.xlu0 1
        %400 = vperm.xlu0 %399, %v169
        %v401 = vpop.permute.xlu0 %400
        %403 = vset.pattern.permute.xlu0 1
        %404 = vperm.xlu0 %403, %v170
        %v405 = vpop.permute.xlu0 %404
        %407 = vset.pattern.permute.xlu0 1
        %408 = vperm.xlu0 %407, %v171
        %v409 = vpop.permute.xlu0 %408
        %411 = vset.pattern.permute.xlu0 1
        %412 = vperm.xlu0 %411, %v172
        %v413 = vpop.permute.xlu0 %412
        %415 = vset.pattern.permute.xlu0 1
        %416 = vperm.xlu0 %415, %v173
        %v417 = vpop.permute.xlu0 %416
        %419 = vset.pattern.permute.xlu0 1
        %420 = vperm.xlu0 %419, %v174
        %v421 = vpop.permute.xlu0 %420
        %423 = vset.pattern.permute.xlu0 1
        %424 = vperm.xlu0 %423, %v175
        %v425 = vpop.permute.xlu0 %424
        %427 = vset.pattern.permute.xlu0 1
        %428 = vperm.xlu0 %427, %v176
        %v429 = vpop.permute.xlu0 %428
        %431 = vset.pattern.permute.xlu0 1
        %432 = vperm.xlu0 %431, %v177
        %v433 = vpop.permute.xlu0 %432
        %435 = vset.pattern.permute.xlu0 1
        %436 = vperm.xlu0 %435, %v178
        %v437 = vpop.permute.xlu0 %436
        %439 = vset.pattern.permute.xlu0 1
        %440 = vperm.xlu0 %439, %v179
        %v441 = vpop.permute.xlu0 %440
        %443 = vset.pattern.permute.xlu0 1
        %444 = vperm.xlu0 %443, %v180
        %v445 = vpop.permute.xlu0 %444
        %447 = vset.pattern.permute.xlu0 1
        %448 = vperm.xlu0 %447, %v181
        %v449 = vpop.permute.xlu0 %448
        %451 = vset.pattern.permute.xlu0 1
        %452 = vperm.xlu0 %451, %v182
        %v453 = vpop.permute.xlu0 %452
        %455 = vset.pattern.permute.xlu0 1
        %456 = vperm.xlu0 %455, %v183
        %v457 = vpop.permute.xlu0 %456
        %459 = vset.pattern.permute.xlu0 1
        %460 = vperm.xlu0 %459, %v184
        %v461 = vpop.permute.xlu0 %460
        %463 = vset.pattern.permute.xlu0 1
        %464 = vperm.xlu0 %463, %v185
        %v465 = vpop.permute.xlu0 %464
        %467 = vset.pattern.permute.xlu0 1
        %468 = vperm.xlu0 %467, %v186
        %v469 = vpop.permute.xlu0 %468
        %471 = vset.pattern.permute.xlu0 1
        %472 = vperm.xlu0 %471, %v187
        %v473 = vpop.permute.xlu0 %472
        %475 = vset.pattern.permute.xlu0 1
        %476 = vperm.xlu0 %475, %v188
        %v477 = vpop.permute.xlu0 %476
        %479 = vset.pattern.permute.xlu0 1
        %480 = vperm.xlu0 %479, %v189
        %v481 = vpop.permute.xlu0 %480
        %483 = vset.pattern.permute.xlu0 1
        %484 = vperm.xlu0 %483, %v190
        %v485 = vpop.permute.xlu0 %484
        %487 = vset.pattern.permute.xlu0 1
        %488 = vperm.xlu0 %487, %v191
        %v489 = vpop.permute.xlu0 %488
        %491 = vset.pattern.permute.xlu0 1
        %492 = vperm.xlu0 %491, %v192
        %v493 = vpop.permute.xlu0 %492
        %495 = vset.pattern.permute.xlu0 1
        %496 = vperm.xlu0 %495, %v193
        %v497 = vpop.permute.xlu0 %496
        %499 = vset.pattern.permute.xlu0 1
        %500 = vperm.xlu0 %499, %v194
        %v501 = vpop.permute.xlu0 %500
        %503 = vset.pattern.permute.xlu0 1
        %504 = vperm.xlu0 %503, %v195
        %v505 = vpop.permute.xlu0 %504
        %507 = vset.pattern.permute.xlu0 1
        %508 = vperm.xlu0 %507, %v196
        %v509 = vpop.permute.xlu0 %508
        %511 = vset.pattern.permute.xlu0 1
        %512 = vperm.xlu0 %511, %v197
        %v513 = vpop.permute.xlu0 %512
        %515 = vset.pattern.permute.xlu0 1
        %516 = vperm.xlu0 %515, %v198
        %v517 = vpop.permute.xlu0 %516
        %519 = vset.pattern.permute.xlu0 1
        %520 = vperm.xlu0 %519, %v199
        %v521 = vpop.permute.xlu0 %520
        %523 = vset.pattern.permute.xlu0 1
        %524 = vperm.xlu0 %523, %v200
        %v525 = vpop.permute.xlu0 %524
        %v527 = vlaneseq
        %v528 = vshrl.u32 %v527, 7
        %v529 = vsub.s32 0, %v528
        %v530 = vrot.slane %v398, %v529
        %v531 = vmul.f32 %v401, %v530
        %v532 = vmul.f32 %v405, %v530
        %v533 = vmul.f32 %v409, %v530
        %v534 = vmul.f32 %v413, %v530
        %v535 = vmul.f32 %v417, %v530
        %v536 = vmul.f32 %v421, %v530
        %v537 = vmul.f32 %v425, %v530
        %v538 = vmul.f32 %v429, %v530
        %v539 = vmul.f32 %v433, %v530
        %v540 = vmul.f32 %v437, %v530
        %v541 = vmul.f32 %v441, %v530
        %v542 = vmul.f32 %v445, %v530
        %v543 = vmul.f32 %v449, %v530
        %v544 = vmul.f32 %v453, %v530
        %v545 = vmul.f32 %v457, %v530
        %v546 = vmul.f32 %v461, %v530
        %v547 = vmul.f32 %v465, %v530
        %v548 = vmul.f32 %v469, %v530
        %v549 = vmul.f32 %v473, %v530
        %v550 = vmul.f32 %v477, %v530
        %v551 = vmul.f32 %v481, %v530
        %v552 = vmul.f32 %v485, %v530
        %v553 = vmul.f32 %v489, %v530
        %v554 = vmul.f32 %v493, %v530
        %v555 = vmul.f32 %v497, %v530
        %v556 = vmul.f32 %v501, %v530
        %v557 = vmul.f32 %v505, %v530
        %v558 = vmul.f32 %v509, %v530
        %v559 = vmul.f32 %v513, %v530
        %v560 = vmul.f32 %v517, %v530
        %v561 = vmul.f32 %v521, %v530
        %v562 = vmul.f32 %v525, %v530
        %v563 = vadd.f32 %v366, %v531
        %v564 = vadd.f32 %v367, %v532
        %v565 = vadd.f32 %v368, %v533
        %v566 = vadd.f32 %v369, %v534
        %v567 = vadd.f32 %v370, %v535
        %v568 = vadd.f32 %v371, %v536
        %v569 = vadd.f32 %v372, %v537
        %v570 = vadd.f32 %v373, %v538
        %v571 = vadd.f32 %v374, %v539
        %v572 = vadd.f32 %v375, %v540
        %v573 = vadd.f32 %v376, %v541
        %v574 = vadd.f32 %v377, %v542
        %v575 = vadd.f32 %v378, %v543
        %v576 = vadd.f32 %v379, %v544
        %v577 = vadd.f32 %v380, %v545
        %v578 = vadd.f32 %v381, %v546
        %v579 = vadd.f32 %v382, %v547
        %v580 = vadd.f32 %v383, %v548
        %v581 = vadd.f32 %v384, %v549
        %v582 = vadd.f32 %v385, %v550
        %v583 = vadd.f32 %v386, %v551
        %v584 = vadd.f32 %v387, %v552
        %v585 = vadd.f32 %v388, %v553
        %v586 = vadd.f32 %v389, %v554
        %v587 = vadd.f32 %v390, %v555
        %v588 = vadd.f32 %v391, %v556
        %v589 = vadd.f32 %v392, %v557
        %v590 = vadd.f32 %v393, %v558
        %v591 = vadd.f32 %v394, %v559
        %v592 = vadd.f32 %v395, %v560
        %v593 = vadd.f32 %v396, %v561
        %v594 = vadd.f32 %v397, %v562
        %v595 = vld [vmem:[%s0 + $0x2] sm:$0x1]
        %596 = vset.pattern.permute.xlu0 2
        %597 = vperm.xlu0 %596, %v169
        %v598 = vpop.permute.xlu0 %597
        %600 = vset.pattern.permute.xlu0 2
        %601 = vperm.xlu0 %600, %v170
        %v602 = vpop.permute.xlu0 %601
        %604 = vset.pattern.permute.xlu0 2
        %605 = vperm.xlu0 %604, %v171
        %v606 = vpop.permute.xlu0 %605
        %608 = vset.pattern.permute.xlu0 2
        %609 = vperm.xlu0 %608, %v172
        %v610 = vpop.permute.xlu0 %609
        %612 = vset.pattern.permute.xlu0 2
        %613 = vperm.xlu0 %612, %v173
        %v614 = vpop.permute.xlu0 %613
        %616 = vset.pattern.permute.xlu0 2
        %617 = vperm.xlu0 %616, %v174
        %v618 = vpop.permute.xlu0 %617
        %620 = vset.pattern.permute.xlu0 2
        %621 = vperm.xlu0 %620, %v175
        %v622 = vpop.permute.xlu0 %621
        %624 = vset.pattern.permute.xlu0 2
        %625 = vperm.xlu0 %624, %v176
        %v626 = vpop.permute.xlu0 %625
        %628 = vset.pattern.permute.xlu0 2
        %629 = vperm.xlu0 %628, %v177
        %v630 = vpop.permute.xlu0 %629
        %632 = vset.pattern.permute.xlu0 2
        %633 = vperm.xlu0 %632, %v178
        %v634 = vpop.permute.xlu0 %633
        %636 = vset.pattern.permute.xlu0 2
        %637 = vperm.xlu0 %636, %v179
        %v638 = vpop.permute.xlu0 %637
        %640 = vset.pattern.permute.xlu0 2
        %641 = vperm.xlu0 %640, %v180
        %v642 = vpop.permute.xlu0 %641
        %644 = vset.pattern.permute.xlu0 2
        %645 = vperm.xlu0 %644, %v181
        %v646 = vpop.permute.xlu0 %645
        %648 = vset.pattern.permute.xlu0 2
        %649 = vperm.xlu0 %648, %v182
        %v650 = vpop.permute.xlu0 %649
        %652 = vset.pattern.permute.xlu0 2
        %653 = vperm.xlu0 %652, %v183
        %v654 = vpop.permute.xlu0 %653
        %656 = vset.pattern.permute.xlu0 2
        %657 = vperm.xlu0 %656, %v184
        %v658 = vpop.permute.xlu0 %657
        %660 = vset.pattern.permute.xlu0 2
        %661 = vperm.xlu0 %660, %v185
        %v662 = vpop.permute.xlu0 %661
        %664 = vset.pattern.permute.xlu0 2
        %665 = vperm.xlu0 %664, %v186
        %v666 = vpop.permute.xlu0 %665
        %668 = vset.pattern.permute.xlu0 2
        %669 = vperm.xlu0 %668, %v187
        %v670 = vpop.permute.xlu0 %669
        %672 = vset.pattern.permute.xlu0 2
        %673 = vperm.xlu0 %672, %v188
        %v674 = vpop.permute.xlu0 %673
        %676 = vset.pattern.permute.xlu0 2
        %677 = vperm.xlu0 %676, %v189
        %v678 = vpop.permute.xlu0 %677
        %680 = vset.pattern.permute.xlu0 2
        %681 = vperm.xlu0 %680, %v190
        %v682 = vpop.permute.xlu0 %681
        %684 = vset.pattern.permute.xlu0 2
        %685 = vperm.xlu0 %684, %v191
        %v686 = vpop.permute.xlu0 %685
        %688 = vset.pattern.permute.xlu0 2
        %689 = vperm.xlu0 %688, %v192
        %v690 = vpop.permute.xlu0 %689
        %692 = vset.pattern.permute.xlu0 2
        %693 = vperm.xlu0 %692, %v193
        %v694 = vpop.permute.xlu0 %693
        %696 = vset.pattern.permute.xlu0 2
        %697 = vperm.xlu0 %696, %v194
        %v698 = vpop.permute.xlu0 %697
        %700 = vset.pattern.permute.xlu0 2
        %701 = vperm.xlu0 %700, %v195
        %v702 = vpop.permute.xlu0 %701
        %704 = vset.pattern.permute.xlu0 2
        %705 = vperm.xlu0 %704, %v196
        %v706 = vpop.permute.xlu0 %705
        %708 = vset.pattern.permute.xlu0 2
        %709 = vperm.xlu0 %708, %v197
        %v710 = vpop.permute.xlu0 %709
        %712 = vset.pattern.permute.xlu0 2
        %713 = vperm.xlu0 %712, %v198
        %v714 = vpop.permute.xlu0 %713
        %716 = vset.pattern.permute.xlu0 2
        %717 = vperm.xlu0 %716, %v199
        %v718 = vpop.permute.xlu0 %717
        %720 = vset.pattern.permute.xlu0 2
        %721 = vperm.xlu0 %720, %v200
        %v722 = vpop.permute.xlu0 %721
        %v724 = vlaneseq
        %v725 = vshrl.u32 %v724, 7
        %v726 = vsub.s32 0, %v725
        %v727 = vrot.slane %v595, %v726
        %v728 = vmul.f32 %v598, %v727
        %v729 = vmul.f32 %v602, %v727
        %v730 = vmul.f32 %v606, %v727
        %v731 = vmul.f32 %v610, %v727
        %v732 = vmul.f32 %v614, %v727
        %v733 = vmul.f32 %v618, %v727
        %v734 = vmul.f32 %v622, %v727
        %v735 = vmul.f32 %v626, %v727
        %v736 = vmul.f32 %v630, %v727
        %v737 = vmul.f32 %v634, %v727
        %v738 = vmul.f32 %v638, %v727
        %v739 = vmul.f32 %v642, %v727
        %v740 = vmul.f32 %v646, %v727
        %v741 = vmul.f32 %v650, %v727
        %v742 = vmul.f32 %v654, %v727
        %v743 = vmul.f32 %v658, %v727
        %v744 = vmul.f32 %v662, %v727
        %v745 = vmul.f32 %v666, %v727
        %v746 = vmul.f32 %v670, %v727
        %v747 = vmul.f32 %v674, %v727
        %v748 = vmul.f32 %v678, %v727
        %v749 = vmul.f32 %v682, %v727
        %v750 = vmul.f32 %v686, %v727
        %v751 = vmul.f32 %v690, %v727
        %v752 = vmul.f32 %v694, %v727
        %v753 = vmul.f32 %v698, %v727
        %v754 = vmul.f32 %v702, %v727
        %v755 = vmul.f32 %v706, %v727
        %v756 = vmul.f32 %v710, %v727
        %v757 = vmul.f32 %v714, %v727
        %v758 = vmul.f32 %v718, %v727
        %v759 = vmul.f32 %v722, %v727
        %v760 = vadd.f32 %v563, %v728
        %v761 = vadd.f32 %v564, %v729
        %v762 = vadd.f32 %v565, %v730
        %v763 = vadd.f32 %v566, %v731
        %v764 = vadd.f32 %v567, %v732
        %v765 = vadd.f32 %v568, %v733
        %v766 = vadd.f32 %v569, %v734
        %v767 = vadd.f32 %v570, %v735
        %v768 = vadd.f32 %v571, %v736
        %v769 = vadd.f32 %v572, %v737
        %v770 = vadd.f32 %v573, %v738
        %v771 = vadd.f32 %v574, %v739
        %v772 = vadd.f32 %v575, %v740
        %v773 = vadd.f32 %v576, %v741
        %v774 = vadd.f32 %v577, %v742
        %v775 = vadd.f32 %v578, %v743
        %v776 = vadd.f32 %v579, %v744
        %v777 = vadd.f32 %v580, %v745
        %v778 = vadd.f32 %v581, %v746
        %v779 = vadd.f32 %v582, %v747
        %v780 = vadd.f32 %v583, %v748
        %v781 = vadd.f32 %v584, %v749
        %v782 = vadd.f32 %v585, %v750
        %v783 = vadd.f32 %v586, %v751
        %v784 = vadd.f32 %v587, %v752
        %v785 = vadd.f32 %v588, %v753
        %v786 = vadd.f32 %v589, %v754
        %v787 = vadd.f32 %v590, %v755
        %v788 = vadd.f32 %v591, %v756
        %v789 = vadd.f32 %v592, %v757
        %v790 = vadd.f32 %v593, %v758
        %v791 = vadd.f32 %v594, %v759
        %v792 = vld [vmem:[%s0 + $0x3] sm:$0x1]
        %793 = vset.pattern.permute.xlu0 3
        %794 = vperm.xlu0 %793, %v169
        %v795 = vpop.permute.xlu0 %794
        %797 = vset.pattern.permute.xlu0 3
        %798 = vperm.xlu0 %797, %v170
        %v799 = vpop.permute.xlu0 %798
        %801 = vset.pattern.permute.xlu0 3
        %802 = vperm.xlu0 %801, %v171
        %v803 = vpop.permute.xlu0 %802
        %805 = vset.pattern.permute.xlu0 3
        %806 = vperm.xlu0 %805, %v172
        %v807 = vpop.permute.xlu0 %806
        %809 = vset.pattern.permute.xlu0 3
        %810 = vperm.xlu0 %809, %v173
        %v811 = vpop.permute.xlu0 %810
        %813 = vset.pattern.permute.xlu0 3
        %814 = vperm.xlu0 %813, %v174
        %v815 = vpop.permute.xlu0 %814
        %817 = vset.pattern.permute.xlu0 3
        %818 = vperm.xlu0 %817, %v175
        %v819 = vpop.permute.xlu0 %818
        %821 = vset.pattern.permute.xlu0 3
        %822 = vperm.xlu0 %821, %v176
        %v823 = vpop.permute.xlu0 %822
        %825 = vset.pattern.permute.xlu0 3
        %826 = vperm.xlu0 %825, %v177
        %v827 = vpop.permute.xlu0 %826
        %829 = vset.pattern.permute.xlu0 3
        %830 = vperm.xlu0 %829, %v178
        %v831 = vpop.permute.xlu0 %830
        %833 = vset.pattern.permute.xlu0 3
        %834 = vperm.xlu0 %833, %v179
        %v835 = vpop.permute.xlu0 %834
        %837 = vset.pattern.permute.xlu0 3
        %838 = vperm.xlu0 %837, %v180
        %v839 = vpop.permute.xlu0 %838
        %841 = vset.pattern.permute.xlu0 3
        %842 = vperm.xlu0 %841, %v181
        %v843 = vpop.permute.xlu0 %842
        %845 = vset.pattern.permute.xlu0 3
        %846 = vperm.xlu0 %845, %v182
        %v847 = vpop.permute.xlu0 %846
        %849 = vset.pattern.permute.xlu0 3
        %850 = vperm.xlu0 %849, %v183
        %v851 = vpop.permute.xlu0 %850
        %853 = vset.pattern.permute.xlu0 3
        %854 = vperm.xlu0 %853, %v184
        %v855 = vpop.permute.xlu0 %854
        %857 = vset.pattern.permute.xlu0 3
        %858 = vperm.xlu0 %857, %v185
        %v859 = vpop.permute.xlu0 %858
        %861 = vset.pattern.permute.xlu0 3
        %862 = vperm.xlu0 %861, %v186
        %v863 = vpop.permute.xlu0 %862
        %865 = vset.pattern.permute.xlu0 3
        %866 = vperm.xlu0 %865, %v187
        %v867 = vpop.permute.xlu0 %866
        %869 = vset.pattern.permute.xlu0 3
        %870 = vperm.xlu0 %869, %v188
        %v871 = vpop.permute.xlu0 %870
        %873 = vset.pattern.permute.xlu0 3
        %874 = vperm.xlu0 %873, %v189
        %v875 = vpop.permute.xlu0 %874
        %877 = vset.pattern.permute.xlu0 3
        %878 = vperm.xlu0 %877, %v190
        %v879 = vpop.permute.xlu0 %878
        %881 = vset.pattern.permute.xlu0 3
        %882 = vperm.xlu0 %881, %v191
        %v883 = vpop.permute.xlu0 %882
        %885 = vset.pattern.permute.xlu0 3
        %886 = vperm.xlu0 %885, %v192
        %v887 = vpop.permute.xlu0 %886
        %889 = vset.pattern.permute.xlu0 3
        %890 = vperm.xlu0 %889, %v193
        %v891 = vpop.permute.xlu0 %890
        %893 = vset.pattern.permute.xlu0 3
        %894 = vperm.xlu0 %893, %v194
        %v895 = vpop.permute.xlu0 %894
        %897 = vset.pattern.permute.xlu0 3
        %898 = vperm.xlu0 %897, %v195
        %v899 = vpop.permute.xlu0 %898
        %901 = vset.pattern.permute.xlu0 3
        %902 = vperm.xlu0 %901, %v196
        %v903 = vpop.permute.xlu0 %902
        %905 = vset.pattern.permute.xlu0 3
        %906 = vperm.xlu0 %905, %v197
        %v907 = vpop.permute.xlu0 %906
        %909 = vset.pattern.permute.xlu0 3
        %910 = vperm.xlu0 %909, %v198
        %v911 = vpop.permute.xlu0 %910
        %913 = vset.pattern.permute.xlu0 3
        %914 = vperm.xlu0 %913, %v199
        %v915 = vpop.permute.xlu0 %914
        %917 = vset.pattern.permute.xlu0 3
        %918 = vperm.xlu0 %917, %v200
        %v919 = vpop.permute.xlu0 %918
        %v921 = vlaneseq
        %v922 = vshrl.u32 %v921, 7
        %v923 = vsub.s32 0, %v922
        %v924 = vrot.slane %v792, %v923
        %v925 = vmul.f32 %v795, %v924
        %v926 = vmul.f32 %v799, %v924
        %v927 = vmul.f32 %v803, %v924
        %v928 = vmul.f32 %v807, %v924
        %v929 = vmul.f32 %v811, %v924
        %v930 = vmul.f32 %v815, %v924
        %v931 = vmul.f32 %v819, %v924
        %v932 = vmul.f32 %v823, %v924
        %v933 = vmul.f32 %v827, %v924
        %v934 = vmul.f32 %v831, %v924
        %v935 = vmul.f32 %v835, %v924
        %v936 = vmul.f32 %v839, %v924
        %v937 = vmul.f32 %v843, %v924
        %v938 = vmul.f32 %v847, %v924
        %v939 = vmul.f32 %v851, %v924
        %v940 = vmul.f32 %v855, %v924
        %v941 = vmul.f32 %v859, %v924
        %v942 = vmul.f32 %v863, %v924
        %v943 = vmul.f32 %v867, %v924
        %v944 = vmul.f32 %v871, %v924
        %v945 = vmul.f32 %v875, %v924
        %v946 = vmul.f32 %v879, %v924
        %v947 = vmul.f32 %v883, %v924
        %v948 = vmul.f32 %v887, %v924
        %v949 = vmul.f32 %v891, %v924
        %v950 = vmul.f32 %v895, %v924
        %v951 = vmul.f32 %v899, %v924
        %v952 = vmul.f32 %v903, %v924
        %v953 = vmul.f32 %v907, %v924
        %v954 = vmul.f32 %v911, %v924
        %v955 = vmul.f32 %v915, %v924
        %v956 = vmul.f32 %v919, %v924
        %v957 = vadd.f32 %v760, %v925
        %v958 = vadd.f32 %v761, %v926
        %v959 = vadd.f32 %v762, %v927
        %v960 = vadd.f32 %v763, %v928
        %v961 = vadd.f32 %v764, %v929
        %v962 = vadd.f32 %v765, %v930
        %v963 = vadd.f32 %v766, %v931
        %v964 = vadd.f32 %v767, %v932
        %v965 = vadd.f32 %v768, %v933
        %v966 = vadd.f32 %v769, %v934
        %v967 = vadd.f32 %v770, %v935
        %v968 = vadd.f32 %v771, %v936
        %v969 = vadd.f32 %v772, %v937
        %v970 = vadd.f32 %v773, %v938
        %v971 = vadd.f32 %v774, %v939
        %v972 = vadd.f32 %v775, %v940
        %v973 = vadd.f32 %v776, %v941
        %v974 = vadd.f32 %v777, %v942
        %v975 = vadd.f32 %v778, %v943
        %v976 = vadd.f32 %v779, %v944
        %v977 = vadd.f32 %v780, %v945
        %v978 = vadd.f32 %v781, %v946
        %v979 = vadd.f32 %v782, %v947
        %v980 = vadd.f32 %v783, %v948
        %v981 = vadd.f32 %v784, %v949
        %v982 = vadd.f32 %v785, %v950
        %v983 = vadd.f32 %v786, %v951
        %v984 = vadd.f32 %v787, %v952
        %v985 = vadd.f32 %v788, %v953
        %v986 = vadd.f32 %v789, %v954
        %v987 = vadd.f32 %v790, %v955
        %v988 = vadd.f32 %v791, %v956
        %v989 = vld [vmem:[%s0 + $0x4] sm:$0x1]
        %990 = vset.pattern.permute.xlu0 4
        %991 = vperm.xlu0 %990, %v169
        %v992 = vpop.permute.xlu0 %991
        %994 = vset.pattern.permute.xlu0 4
        %995 = vperm.xlu0 %994, %v170
        %v996 = vpop.permute.xlu0 %995
        %998 = vset.pattern.permute.xlu0 4
        %999 = vperm.xlu0 %998, %v171
        %v1000 = vpop.permute.xlu0 %999
        %1002 = vset.pattern.permute.xlu0 4
        %1003 = vperm.xlu0 %1002, %v172
        %v1004 = vpop.permute.xlu0 %1003
        %1006 = vset.pattern.permute.xlu0 4
        %1007 = vperm.xlu0 %1006, %v173
        %v1008 = vpop.permute.xlu0 %1007
        %1010 = vset.pattern.permute.xlu0 4
        %1011 = vperm.xlu0 %1010, %v174
        %v1012 = vpop.permute.xlu0 %1011
        %1014 = vset.pattern.permute.xlu0 4
        %1015 = vperm.xlu0 %1014, %v175
        %v1016 = vpop.permute.xlu0 %1015
        %1018 = vset.pattern.permute.xlu0 4
        %1019 = vperm.xlu0 %1018, %v176
        %v1020 = vpop.permute.xlu0 %1019
        %1022 = vset.pattern.permute.xlu0 4
        %1023 = vperm.xlu0 %1022, %v177
        %v1024 = vpop.permute.xlu0 %1023
        %1026 = vset.pattern.permute.xlu0 4
        %1027 = vperm.xlu0 %1026, %v178
        %v1028 = vpop.permute.xlu0 %1027
        %1030 = vset.pattern.permute.xlu0 4
        %1031 = vperm.xlu0 %1030, %v179
        %v1032 = vpop.permute.xlu0 %1031
        %1034 = vset.pattern.permute.xlu0 4
        %1035 = vperm.xlu0 %1034, %v180
        %v1036 = vpop.permute.xlu0 %1035
        %1038 = vset.pattern.permute.xlu0 4
        %1039 = vperm.xlu0 %1038, %v181
        %v1040 = vpop.permute.xlu0 %1039
        %1042 = vset.pattern.permute.xlu0 4
        %1043 = vperm.xlu0 %1042, %v182
        %v1044 = vpop.permute.xlu0 %1043
        %1046 = vset.pattern.permute.xlu0 4
        %1047 = vperm.xlu0 %1046, %v183
        %v1048 = vpop.permute.xlu0 %1047
        %1050 = vset.pattern.permute.xlu0 4
        %1051 = vperm.xlu0 %1050, %v184
        %v1052 = vpop.permute.xlu0 %1051
        %1054 = vset.pattern.permute.xlu0 4
        %1055 = vperm.xlu0 %1054, %v185
        %v1056 = vpop.permute.xlu0 %1055
        %1058 = vset.pattern.permute.xlu0 4
        %1059 = vperm.xlu0 %1058, %v186
        %v1060 = vpop.permute.xlu0 %1059
        %1062 = vset.pattern.permute.xlu0 4
        %1063 = vperm.xlu0 %1062, %v187
        %v1064 = vpop.permute.xlu0 %1063
        %1066 = vset.pattern.permute.xlu0 4
        %1067 = vperm.xlu0 %1066, %v188
        %v1068 = vpop.permute.xlu0 %1067
        %1070 = vset.pattern.permute.xlu0 4
        %1071 = vperm.xlu0 %1070, %v189
        %v1072 = vpop.permute.xlu0 %1071
        %1074 = vset.pattern.permute.xlu0 4
        %1075 = vperm.xlu0 %1074, %v190
        %v1076 = vpop.permute.xlu0 %1075
        %1078 = vset.pattern.permute.xlu0 4
        %1079 = vperm.xlu0 %1078, %v191
        %v1080 = vpop.permute.xlu0 %1079
        %1082 = vset.pattern.permute.xlu0 4
        %1083 = vperm.xlu0 %1082, %v192
        %v1084 = vpop.permute.xlu0 %1083
        %1086 = vset.pattern.permute.xlu0 4
        %1087 = vperm.xlu0 %1086, %v193
        %v1088 = vpop.permute.xlu0 %1087
        %1090 = vset.pattern.permute.xlu0 4
        %1091 = vperm.xlu0 %1090, %v194
        %v1092 = vpop.permute.xlu0 %1091
        %1094 = vset.pattern.permute.xlu0 4
        %1095 = vperm.xlu0 %1094, %v195
        %v1096 = vpop.permute.xlu0 %1095
        %1098 = vset.pattern.permute.xlu0 4
        %1099 = vperm.xlu0 %1098, %v196
        %v1100 = vpop.permute.xlu0 %1099
        %1102 = vset.pattern.permute.xlu0 4
        %1103 = vperm.xlu0 %1102, %v197
        %v1104 = vpop.permute.xlu0 %1103
        %1106 = vset.pattern.permute.xlu0 4
        %1107 = vperm.xlu0 %1106, %v198
        %v1108 = vpop.permute.xlu0 %1107
        %1110 = vset.pattern.permute.xlu0 4
        %1111 = vperm.xlu0 %1110, %v199
        %v1112 = vpop.permute.xlu0 %1111
        %1114 = vset.pattern.permute.xlu0 4
        %1115 = vperm.xlu0 %1114, %v200
        %v1116 = vpop.permute.xlu0 %1115
        %v1118 = vlaneseq
        %v1119 = vshrl.u32 %v1118, 7
        %v1120 = vsub.s32 0, %v1119
        %v1121 = vrot.slane %v989, %v1120
        %v1122 = vmul.f32 %v992, %v1121
        %v1123 = vmul.f32 %v996, %v1121
        %v1124 = vmul.f32 %v1000, %v1121
        %v1125 = vmul.f32 %v1004, %v1121
        %v1126 = vmul.f32 %v1008, %v1121
        %v1127 = vmul.f32 %v1012, %v1121
        %v1128 = vmul.f32 %v1016, %v1121
        %v1129 = vmul.f32 %v1020, %v1121
        %v1130 = vmul.f32 %v1024, %v1121
        %v1131 = vmul.f32 %v1028, %v1121
        %v1132 = vmul.f32 %v1032, %v1121
        %v1133 = vmul.f32 %v1036, %v1121
        %v1134 = vmul.f32 %v1040, %v1121
        %v1135 = vmul.f32 %v1044, %v1121
        %v1136 = vmul.f32 %v1048, %v1121
        %v1137 = vmul.f32 %v1052, %v1121
        %v1138 = vmul.f32 %v1056, %v1121
        %v1139 = vmul.f32 %v1060, %v1121
        %v1140 = vmul.f32 %v1064, %v1121
        %v1141 = vmul.f32 %v1068, %v1121
        %v1142 = vmul.f32 %v1072, %v1121
        %v1143 = vmul.f32 %v1076, %v1121
        %v1144 = vmul.f32 %v1080, %v1121
        %v1145 = vmul.f32 %v1084, %v1121
        %v1146 = vmul.f32 %v1088, %v1121
        %v1147 = vmul.f32 %v1092, %v1121
        %v1148 = vmul.f32 %v1096, %v1121
        %v1149 = vmul.f32 %v1100, %v1121
        %v1150 = vmul.f32 %v1104, %v1121
        %v1151 = vmul.f32 %v1108, %v1121
        %v1152 = vmul.f32 %v1112, %v1121
        %v1153 = vmul.f32 %v1116, %v1121
        %v1154 = vadd.f32 %v957, %v1122
        %v1155 = vadd.f32 %v958, %v1123
        %v1156 = vadd.f32 %v959, %v1124
        %v1157 = vadd.f32 %v960, %v1125
        %v1158 = vadd.f32 %v961, %v1126
        %v1159 = vadd.f32 %v962, %v1127
        %v1160 = vadd.f32 %v963, %v1128
        %v1161 = vadd.f32 %v964, %v1129
        %v1162 = vadd.f32 %v965, %v1130
        %v1163 = vadd.f32 %v966, %v1131
        %v1164 = vadd.f32 %v967, %v1132
        %v1165 = vadd.f32 %v968, %v1133
        %v1166 = vadd.f32 %v969, %v1134
        %v1167 = vadd.f32 %v970, %v1135
        %v1168 = vadd.f32 %v971, %v1136
        %v1169 = vadd.f32 %v972, %v1137
        %v1170 = vadd.f32 %v973, %v1138
        %v1171 = vadd.f32 %v974, %v1139
        %v1172 = vadd.f32 %v975, %v1140
        %v1173 = vadd.f32 %v976, %v1141
        %v1174 = vadd.f32 %v977, %v1142
        %v1175 = vadd.f32 %v978, %v1143
        %v1176 = vadd.f32 %v979, %v1144
        %v1177 = vadd.f32 %v980, %v1145
        %v1178 = vadd.f32 %v981, %v1146
        %v1179 = vadd.f32 %v982, %v1147
        %v1180 = vadd.f32 %v983, %v1148
        %v1181 = vadd.f32 %v984, %v1149
        %v1182 = vadd.f32 %v985, %v1150
        %v1183 = vadd.f32 %v986, %v1151
        %v1184 = vadd.f32 %v987, %v1152
        %v1185 = vadd.f32 %v988, %v1153
        %v1186 = vld [vmem:[%s0 + $0x5] sm:$0x1]
        %1187 = vset.pattern.permute.xlu0 5
        %1188 = vperm.xlu0 %1187, %v169
        %v1189 = vpop.permute.xlu0 %1188
        %1191 = vset.pattern.permute.xlu0 5
        %1192 = vperm.xlu0 %1191, %v170
        %v1193 = vpop.permute.xlu0 %1192
        %1195 = vset.pattern.permute.xlu0 5
        %1196 = vperm.xlu0 %1195, %v171
        %v1197 = vpop.permute.xlu0 %1196
        %1199 = vset.pattern.permute.xlu0 5
        %1200 = vperm.xlu0 %1199, %v172
        %v1201 = vpop.permute.xlu0 %1200
        %1203 = vset.pattern.permute.xlu0 5
        %1204 = vperm.xlu0 %1203, %v173
        %v1205 = vpop.permute.xlu0 %1204
        %1207 = vset.pattern.permute.xlu0 5
        %1208 = vperm.xlu0 %1207, %v174
        %v1209 = vpop.permute.xlu0 %1208
        %1211 = vset.pattern.permute.xlu0 5
        %1212 = vperm.xlu0 %1211, %v175
        %v1213 = vpop.permute.xlu0 %1212
        %1215 = vset.pattern.permute.xlu0 5
        %1216 = vperm.xlu0 %1215, %v176
        %v1217 = vpop.permute.xlu0 %1216
        %1219 = vset.pattern.permute.xlu0 5
        %1220 = vperm.xlu0 %1219, %v177
        %v1221 = vpop.permute.xlu0 %1220
        %1223 = vset.pattern.permute.xlu0 5
        %1224 = vperm.xlu0 %1223, %v178
        %v1225 = vpop.permute.xlu0 %1224
        %1227 = vset.pattern.permute.xlu0 5
        %1228 = vperm.xlu0 %1227, %v179
        %v1229 = vpop.permute.xlu0 %1228
        %1231 = vset.pattern.permute.xlu0 5
        %1232 = vperm.xlu0 %1231, %v180
        %v1233 = vpop.permute.xlu0 %1232
        %1235 = vset.pattern.permute.xlu0 5
        %1236 = vperm.xlu0 %1235, %v181
        %v1237 = vpop.permute.xlu0 %1236
        %1239 = vset.pattern.permute.xlu0 5
        %1240 = vperm.xlu0 %1239, %v182
        %v1241 = vpop.permute.xlu0 %1240
        %1243 = vset.pattern.permute.xlu0 5
        %1244 = vperm.xlu0 %1243, %v183
        %v1245 = vpop.permute.xlu0 %1244
        %1247 = vset.pattern.permute.xlu0 5
        %1248 = vperm.xlu0 %1247, %v184
        %v1249 = vpop.permute.xlu0 %1248
        %1251 = vset.pattern.permute.xlu0 5
        %1252 = vperm.xlu0 %1251, %v185
        %v1253 = vpop.permute.xlu0 %1252
        %1255 = vset.pattern.permute.xlu0 5
        %1256 = vperm.xlu0 %1255, %v186
        %v1257 = vpop.permute.xlu0 %1256
        %1259 = vset.pattern.permute.xlu0 5
        %1260 = vperm.xlu0 %1259, %v187
        %v1261 = vpop.permute.xlu0 %1260
        %1263 = vset.pattern.permute.xlu0 5
        %1264 = vperm.xlu0 %1263, %v188
        %v1265 = vpop.permute.xlu0 %1264
        %1267 = vset.pattern.permute.xlu0 5
        %1268 = vperm.xlu0 %1267, %v189
        %v1269 = vpop.permute.xlu0 %1268
        %1271 = vset.pattern.permute.xlu0 5
        %1272 = vperm.xlu0 %1271, %v190
        %v1273 = vpop.permute.xlu0 %1272
        %1275 = vset.pattern.permute.xlu0 5
        %1276 = vperm.xlu0 %1275, %v191
        %v1277 = vpop.permute.xlu0 %1276
        %1279 = vset.pattern.permute.xlu0 5
        %1280 = vperm.xlu0 %1279, %v192
        %v1281 = vpop.permute.xlu0 %1280
        %1283 = vset.pattern.permute.xlu0 5
        %1284 = vperm.xlu0 %1283, %v193
        %v1285 = vpop.permute.xlu0 %1284
        %1287 = vset.pattern.permute.xlu0 5
        %1288 = vperm.xlu0 %1287, %v194
        %v1289 = vpop.permute.xlu0 %1288
        %1291 = vset.pattern.permute.xlu0 5
        %1292 = vperm.xlu0 %1291, %v195
        %v1293 = vpop.permute.xlu0 %1292
        %1295 = vset.pattern.permute.xlu0 5
        %1296 = vperm.xlu0 %1295, %v196
        %v1297 = vpop.permute.xlu0 %1296
        %1299 = vset.pattern.permute.xlu0 5
        %1300 = vperm.xlu0 %1299, %v197
        %v1301 = vpop.permute.xlu0 %1300
        %1303 = vset.pattern.permute.xlu0 5
        %1304 = vperm.xlu0 %1303, %v198
        %v1305 = vpop.permute.xlu0 %1304
        %1307 = vset.pattern.permute.xlu0 5
        %1308 = vperm.xlu0 %1307, %v199
        %v1309 = vpop.permute.xlu0 %1308
        %1311 = vset.pattern.permute.xlu0 5
        %1312 = vperm.xlu0 %1311, %v200
        %v1313 = vpop.permute.xlu0 %1312
        %v1315 = vlaneseq
        %v1316 = vshrl.u32 %v1315, 7
        %v1317 = vsub.s32 0, %v1316
        %v1318 = vrot.slane %v1186, %v1317
        %v1319 = vmul.f32 %v1189, %v1318
        %v1320 = vmul.f32 %v1193, %v1318
        %v1321 = vmul.f32 %v1197, %v1318
        %v1322 = vmul.f32 %v1201, %v1318
        %v1323 = vmul.f32 %v1205, %v1318
        %v1324 = vmul.f32 %v1209, %v1318
        %v1325 = vmul.f32 %v1213, %v1318
        %v1326 = vmul.f32 %v1217, %v1318
        %v1327 = vmul.f32 %v1221, %v1318
        %v1328 = vmul.f32 %v1225, %v1318
        %v1329 = vmul.f32 %v1229, %v1318
        %v1330 = vmul.f32 %v1233, %v1318
        %v1331 = vmul.f32 %v1237, %v1318
        %v1332 = vmul.f32 %v1241, %v1318
        %v1333 = vmul.f32 %v1245, %v1318
        %v1334 = vmul.f32 %v1249, %v1318
        %v1335 = vmul.f32 %v1253, %v1318
        %v1336 = vmul.f32 %v1257, %v1318
        %v1337 = vmul.f32 %v1261, %v1318
        %v1338 = vmul.f32 %v1265, %v1318
        %v1339 = vmul.f32 %v1269, %v1318
        %v1340 = vmul.f32 %v1273, %v1318
        %v1341 = vmul.f32 %v1277, %v1318
        %v1342 = vmul.f32 %v1281, %v1318
        %v1343 = vmul.f32 %v1285, %v1318
        %v1344 = vmul.f32 %v1289, %v1318
        %v1345 = vmul.f32 %v1293, %v1318
        %v1346 = vmul.f32 %v1297, %v1318
        %v1347 = vmul.f32 %v1301, %v1318
        %v1348 = vmul.f32 %v1305, %v1318
        %v1349 = vmul.f32 %v1309, %v1318
        %v1350 = vmul.f32 %v1313, %v1318
        %v1351 = vadd.f32 %v1154, %v1319
        %v1352 = vadd.f32 %v1155, %v1320
        %v1353 = vadd.f32 %v1156, %v1321
        %v1354 = vadd.f32 %v1157, %v1322
        %v1355 = vadd.f32 %v1158, %v1323
        %v1356 = vadd.f32 %v1159, %v1324
        %v1357 = vadd.f32 %v1160, %v1325
        %v1358 = vadd.f32 %v1161, %v1326
        %v1359 = vadd.f32 %v1162, %v1327
        %v1360 = vadd.f32 %v1163, %v1328
        %v1361 = vadd.f32 %v1164, %v1329
        %v1362 = vadd.f32 %v1165, %v1330
        %v1363 = vadd.f32 %v1166, %v1331
        %v1364 = vadd.f32 %v1167, %v1332
        %v1365 = vadd.f32 %v1168, %v1333
        %v1366 = vadd.f32 %v1169, %v1334
        %v1367 = vadd.f32 %v1170, %v1335
        %v1368 = vadd.f32 %v1171, %v1336
        %v1369 = vadd.f32 %v1172, %v1337
        %v1370 = vadd.f32 %v1173, %v1338
        %v1371 = vadd.f32 %v1174, %v1339
        %v1372 = vadd.f32 %v1175, %v1340
        %v1373 = vadd.f32 %v1176, %v1341
        %v1374 = vadd.f32 %v1177, %v1342
        %v1375 = vadd.f32 %v1178, %v1343
        %v1376 = vadd.f32 %v1179, %v1344
        %v1377 = vadd.f32 %v1180, %v1345
        %v1378 = vadd.f32 %v1181, %v1346
        %v1379 = vadd.f32 %v1182, %v1347
        %v1380 = vadd.f32 %v1183, %v1348
        %v1381 = vadd.f32 %v1184, %v1349
        %v1382 = vadd.f32 %v1185, %v1350
        %v1383 = vld [vmem:[%s0 + $0x6] sm:$0x1]
        %v1384 = vlaneseq
        %v1385 = vshrl.u32 %v1384, 7
        %v1386 = vsub.s32 0, %v1385
        %v1387 = vrot.slane %v1383, %v1386
        %v1388 = vmul.f32 %v1351, %v1387
        %v1389 = vmul.f32 %v1352, %v1387
        %v1390 = vmul.f32 %v1353, %v1387
        %v1391 = vmul.f32 %v1354, %v1387
        %v1392 = vmul.f32 %v1355, %v1387
        %v1393 = vmul.f32 %v1356, %v1387
        %v1394 = vmul.f32 %v1357, %v1387
        %v1395 = vmul.f32 %v1358, %v1387
        %v1396 = vmul.f32 %v1359, %v1387
        %v1397 = vmul.f32 %v1360, %v1387
        %v1398 = vmul.f32 %v1361, %v1387
        %v1399 = vmul.f32 %v1362, %v1387
        %v1400 = vmul.f32 %v1363, %v1387
        %v1401 = vmul.f32 %v1364, %v1387
        %v1402 = vmul.f32 %v1365, %v1387
        %v1403 = vmul.f32 %v1366, %v1387
        %v1404 = vmul.f32 %v1367, %v1387
        %v1405 = vmul.f32 %v1368, %v1387
        %v1406 = vmul.f32 %v1369, %v1387
        %v1407 = vmul.f32 %v1370, %v1387
        %v1408 = vmul.f32 %v1371, %v1387
        %v1409 = vmul.f32 %v1372, %v1387
        %v1410 = vmul.f32 %v1373, %v1387
        %v1411 = vmul.f32 %v1374, %v1387
        %v1412 = vmul.f32 %v1375, %v1387
        %v1413 = vmul.f32 %v1376, %v1387
        %v1414 = vmul.f32 %v1377, %v1387
        %v1415 = vmul.f32 %v1378, %v1387
        %v1416 = vmul.f32 %v1379, %v1387
        %v1417 = vmul.f32 %v1380, %v1387
        %v1418 = vmul.f32 %v1381, %v1387
        %v1419 = vmul.f32 %v1382, %v1387
        %v1420 = vld [vmem:[%s0 + $0x7] sm:$0x1]
        %v1421 = vld [vmem:[%s0 + $0x8] sm:$0x1]
        %v1422 = vld [vmem:[%s0 + $0x9] sm:$0x1]
        %v1423 = vlaneseq
        %v1424 = vshrl.u32 %v1423, 7
        %v1425 = vsub.s32 0, %v1424
        %v1426 = vrot.slane %v1420, %v1425
        %v1427 = vmul.f32 %v1351, %v1426
        %v1428 = vmul.f32 %v1352, %v1426
        %v1429 = vmul.f32 %v1353, %v1426
        %v1430 = vmul.f32 %v1354, %v1426
        %v1431 = vmul.f32 %v1355, %v1426
        %v1432 = vmul.f32 %v1356, %v1426
        %v1433 = vmul.f32 %v1357, %v1426
        %v1434 = vmul.f32 %v1358, %v1426
        %v1435 = vmul.f32 %v1359, %v1426
        %v1436 = vmul.f32 %v1360, %v1426
        %v1437 = vmul.f32 %v1361, %v1426
        %v1438 = vmul.f32 %v1362, %v1426
        %v1439 = vmul.f32 %v1363, %v1426
        %v1440 = vmul.f32 %v1364, %v1426
        %v1441 = vmul.f32 %v1365, %v1426
        %v1442 = vmul.f32 %v1366, %v1426
        %v1443 = vmul.f32 %v1367, %v1426
        %v1444 = vmul.f32 %v1368, %v1426
        %v1445 = vmul.f32 %v1369, %v1426
        %v1446 = vmul.f32 %v1370, %v1426
        %v1447 = vmul.f32 %v1371, %v1426
        %v1448 = vmul.f32 %v1372, %v1426
        %v1449 = vmul.f32 %v1373, %v1426
        %v1450 = vmul.f32 %v1374, %v1426
        %v1451 = vmul.f32 %v1375, %v1426
        %v1452 = vmul.f32 %v1376, %v1426
        %v1453 = vmul.f32 %v1377, %v1426
        %v1454 = vmul.f32 %v1378, %v1426
        %v1455 = vmul.f32 %v1379, %v1426
        %v1456 = vmul.f32 %v1380, %v1426
        %v1457 = vmul.f32 %v1381, %v1426
        %v1458 = vmul.f32 %v1382, %v1426
        %v1459 = vand.u32 2147483647, %v1388
        %vm1460 = vcmp.le.f32.partialorder %v1459, 0.7853982
        %vm1461 = vcmp.lt.s32.totalorder %v1388, 0
        %v1462 = vand.u32 %v1388, 2139095040
        %v1463 = vshrl.u32 %v1462, 23
        %v1464 = vsub.s32 %v1463, 127
        %v1465 = vand.u32 2147483647, %v1388
        %v1466 = vand.u32 %v1465, 8388607
        %v1467 = vor.u32 %v1466, 8388608
        %v1468 = vsub.s32 0, %v1467
        %v1469 = vadd.s32 %v1464, 1
        %vm1470 = vcmp.gt.s32.totalorder %v1469, 0
        %v1471 = vsel %vm1470, %v1469, 0
        %v1472 = vshrl.u32 %v1471, 5
        %v1473 = vand.u32 %v1471, 31
        %v1474 = vsub.s32 32, %v1473
        %v1475 = vshrl.u32 683565275, %v1474
        %v1476 = vshll.u32 683565275, %v1473
        %v1477 = vshrl.u32 2475754826, %v1474
        %v1478 = vor.u32 %v1476, %v1477
        %v1479 = vshll.u32 2475754826, %v1473
        %v1480 = vshrl.u32 2131351028, %v1474
        %v1481 = vor.u32 %v1479, %v1480
        %v1482 = vshll.u32 2131351028, %v1473
        %v1483 = vshrl.u32 2102212464, %v1474
        %v1484 = vor.u32 %v1482, %v1483
        %v1485 = vshll.u32 2102212464, %v1473
        %v1486 = vshrl.u32 920167782, %v1474
        %v1487 = vor.u32 %v1485, %v1486
        %v1488 = vshll.u32 920167782, %v1473
        %v1489 = vshrl.u32 1326507024, %v1474
        %v1490 = vor.u32 %v1488, %v1489
        %vm1491 = vcmp.lt.s32.totalorder %v1472, 1
        %vm1492 = vcmp.lt.s32.totalorder %v1472, 2
        %vm1493 = vcmp.lt.s32.totalorder %v1472, 3
        %vm1494 = vcmp.lt.s32.totalorder %v1472, 4
        %v1495 = vsel %vm1491, %v1475, %v1478
        %v1496 = vsel %vm1494, %v1484, 2102212464
        %v1497 = vsel %vm1493, %v1481, %v1496
        %v1498 = vsel %vm1492, %v1495, %v1497
        %v1499 = vsel %vm1491, %v1478, %v1481
        %v1500 = vsel %vm1494, %v1487, 920167782
        %v1501 = vsel %vm1493, %v1484, %v1500
        %v1502 = vsel %vm1492, %v1499, %v1501
        %v1503 = vsel %vm1491, %v1481, %v1484
        %v1504 = vsel %vm1494, %v1490, 1326507024
        %v1505 = vsel %vm1493, %v1487, %v1504
        %v1506 = vsel %vm1492, %v1503, %v1505
        %v1507 = vshll.u32 %v1467, 8
        %v1508 = vmul.u32.u64.compose %v1507, %v1506
        %v1509 = vextract.low.u32 %v1508
        %v1510 = vextract.high.u32 %v1508
        %v1511 = vmul.u32.u64.compose %v1507, %v1502
        %v1512 = vextract.low.u32 %v1511
        %v1513 = vextract.high.u32 %v1511
        %v1514 = vmul.u32 %v1507, %v1498
        %v1515 = vadd.s32 %v1510, %v1512
        %vm1516 = vc.u32 %v1510, %v1512
        %v1517 = vadd.s32 %v1513, 1
        %v1518 = vsel %vm1516, %v1517, %v1513
        %v1519 = vadd.s32 %v1514, %v1518
        %v1520 = vadd.s32 %v1519, 536870912
        %v1521 = vshrl.u32 %v1520, 30
        %v1522 = vshll.u32 %v1521, 30
        %v1523 = vsub.s32 %v1519, %v1522
        %vm1524 = vcmp.lt.s32.totalorder %v1523, 0
        %v1525 = vsub.s32 0, %v1523
        %v1526 = vsel %vm1524, %v1525, %v1523
        %v1527 = vclz %v1526
        %v1528 = vsub.s32 %v1527, 2
        %vm1529 = vcmp.gt.s32.totalorder 0, %v1528
        %v1530 = vsel %vm1529, 0, %v1528
        %v1531 = vsub.s32 32, %v1530
        %v1532 = vshll.u32 %v1523, %v1530
        %v1533 = vshrl.u32 %v1515, %v1531
        %v1534 = vor.u32 %v1532, %v1533
        %v1535 = vsub.s32 4294967266, %v1530
        %v1536 = vadd.s32 %v1535, 127
        %v1537 = vshll.u32 %v1536, 23
        %v1538 = vor.u32 4788187, %v1537
        %v1539 = vand.u32 2147483647, %v1538
        %v1541 = vcvt.s32.f32 %v1534
        %v1542 = vmul.f32 %v1541, %v1539
        %v1543 = vxor.u32 %v1542, 2147483648
        %v1544 = vsel %vm1461, %v1543, %v1542
        %v1545 = vsub.s32 4, %v1521
        %v1546 = vsel %vm1461, %v1545, %v1521
        %v1547 = vsel %vm1460, %v1388, %v1544
        %v1548 = vsel %vm1460, 0, %v1546
        %v1549 = vcosq.f32.pop %v1547
        %v1550 = vsinq.f32.pop %v1547
        %vm1551 = vweird.f32 %v1388
        %v1552 = vadd.s32 %v1548, 3
        %v1553 = vand.u32 %v1552, 3
        %vm1554 = vcmp.lt.s32.totalorder %v1553, 2
        %vm1555 = vcmp.eq.s32.totalorder %v1553, 0
        %v1556 = vxor.u32 %v1550, 2147483648
        %v1557 = vsel %vm1555, %v1549, %v1556
        %vm1558 = vcmp.eq.s32.totalorder %v1553, 2
        %v1559 = vxor.u32 %v1549, 2147483648
        %v1560 = vsel %vm1558, %v1559, %v1550
        %v1561 = vsel %vm1554, %v1557, %v1560
        %v1562 = vsel %vm1551, nan, %v1561
        %v1563 = vand.u32 2147483647, %v1389
        %vm1564 = vcmp.le.f32.partialorder %v1563, 0.7853982
        %vm1565 = vcmp.lt.s32.totalorder %v1389, 0
        %v1566 = vand.u32 %v1389, 2139095040
        %v1567 = vshrl.u32 %v1566, 23
        %v1568 = vsub.s32 %v1567, 127
        %v1569 = vand.u32 2147483647, %v1389
        %v1570 = vand.u32 %v1569, 8388607
        %v1571 = vor.u32 %v1570, 8388608
        %v1572 = vsub.s32 0, %v1571
        %v1573 = vadd.s32 %v1568, 1
        %vm1574 = vcmp.gt.s32.totalorder %v1573, 0
        %v1575 = vsel %vm1574, %v1573, 0
        %v1576 = vshrl.u32 %v1575, 5
        %v1577 = vand.u32 %v1575, 31
        %v1578 = vsub.s32 32, %v1577
        %v1579 = vshrl.u32 683565275, %v1578
        %v1580 = vshll.u32 683565275, %v1577
        %v1581 = vshrl.u32 2475754826, %v1578
        %v1582 = vor.u32 %v1580, %v1581
        %v1583 = vshll.u32 2475754826, %v1577
        %v1584 = vshrl.u32 2131351028, %v1578
        %v1585 = vor.u32 %v1583, %v1584
        %v1586 = vshll.u32 2131351028, %v1577
        %v1587 = vshrl.u32 2102212464, %v1578
        %v1588 = vor.u32 %v1586, %v1587
        %v1589 = vshll.u32 2102212464, %v1577
        %v1590 = vshrl.u32 920167782, %v1578
        %v1591 = vor.u32 %v1589, %v1590
        %v1592 = vshll.u32 920167782, %v1577
        %v1593 = vshrl.u32 1326507024, %v1578
        %v1594 = vor.u32 %v1592, %v1593
        %vm1595 = vcmp.lt.s32.totalorder %v1576, 1
        %vm1596 = vcmp.lt.s32.totalorder %v1576, 2
        %vm1597 = vcmp.lt.s32.totalorder %v1576, 3
        %vm1598 = vcmp.lt.s32.totalorder %v1576, 4
        %v1599 = vsel %vm1595, %v1579, %v1582
        %v1600 = vsel %vm1598, %v1588, 2102212464
        %v1601 = vsel %vm1597, %v1585, %v1600
        %v1602 = vsel %vm1596, %v1599, %v1601
        %v1603 = vsel %vm1595, %v1582, %v1585
        %v1604 = vsel %vm1598, %v1591, 920167782
        %v1605 = vsel %vm1597, %v1588, %v1604
        %v1606 = vsel %vm1596, %v1603, %v1605
        %v1607 = vsel %vm1595, %v1585, %v1588
        %v1608 = vsel %vm1598, %v1594, 1326507024
        %v1609 = vsel %vm1597, %v1591, %v1608
        %v1610 = vsel %vm1596, %v1607, %v1609
        %v1611 = vshll.u32 %v1571, 8
        %v1612 = vmul.u32.u64.compose %v1611, %v1610
        %v1613 = vextract.low.u32 %v1612
        %v1614 = vextract.high.u32 %v1612
        %v1615 = vmul.u32.u64.compose %v1611, %v1606
        %v1616 = vextract.low.u32 %v1615
        %v1617 = vextract.high.u32 %v1615
        %v1618 = vmul.u32 %v1611, %v1602
        %v1619 = vadd.s32 %v1614, %v1616
        %vm1620 = vc.u32 %v1614, %v1616
        %v1621 = vadd.s32 %v1617, 1
        %v1622 = vsel %vm1620, %v1621, %v1617
        %v1623 = vadd.s32 %v1618, %v1622
        %v1624 = vadd.s32 %v1623, 536870912
        %v1625 = vshrl.u32 %v1624, 30
        %v1626 = vshll.u32 %v1625, 30
        %v1627 = vsub.s32 %v1623, %v1626
        %vm1628 = vcmp.lt.s32.totalorder %v1627, 0
        %v1629 = vsub.s32 0, %v1627
        %v1630 = vsel %vm1628, %v1629, %v1627
        %v1631 = vclz %v1630
        %v1632 = vsub.s32 %v1631, 2
        %vm1633 = vcmp.gt.s32.totalorder 0, %v1632
        %v1634 = vsel %vm1633, 0, %v1632
        %v1635 = vsub.s32 32, %v1634
        %v1636 = vshll.u32 %v1627, %v1634
        %v1637 = vshrl.u32 %v1619, %v1635
        %v1638 = vor.u32 %v1636, %v1637
        %v1639 = vsub.s32 4294967266, %v1634
        %v1640 = vadd.s32 %v1639, 127
        %v1641 = vshll.u32 %v1640, 23
        %v1642 = vor.u32 4788187, %v1641
        %v1643 = vand.u32 2147483647, %v1642
        %v1645 = vcvt.s32.f32 %v1638
        %v1646 = vmul.f32 %v1645, %v1643
        %v1647 = vxor.u32 %v1646, 2147483648
        %v1648 = vsel %vm1565, %v1647, %v1646
        %v1649 = vsub.s32 4, %v1625
        %v1650 = vsel %vm1565, %v1649, %v1625
        %v1651 = vsel %vm1564, %v1389, %v1648
        %v1652 = vsel %vm1564, 0, %v1650
        %v1653 = vcosq.f32.pop %v1651
        %v1654 = vsinq.f32.pop %v1651
        %vm1655 = vweird.f32 %v1389
        %v1656 = vadd.s32 %v1652, 3
        %v1657 = vand.u32 %v1656, 3
        %vm1658 = vcmp.lt.s32.totalorder %v1657, 2
        %vm1659 = vcmp.eq.s32.totalorder %v1657, 0
        %v1660 = vxor.u32 %v1654, 2147483648
        %v1661 = vsel %vm1659, %v1653, %v1660
        %vm1662 = vcmp.eq.s32.totalorder %v1657, 2
        %v1663 = vxor.u32 %v1653, 2147483648
        %v1664 = vsel %vm1662, %v1663, %v1654
        %v1665 = vsel %vm1658, %v1661, %v1664
        %v1666 = vsel %vm1655, nan, %v1665
        %v1667 = vand.u32 2147483647, %v1390
        %vm1668 = vcmp.le.f32.partialorder %v1667, 0.7853982
        %vm1669 = vcmp.lt.s32.totalorder %v1390, 0
        %v1670 = vand.u32 %v1390, 2139095040
        %v1671 = vshrl.u32 %v1670, 23
        %v1672 = vsub.s32 %v1671, 127
        %v1673 = vand.u32 2147483647, %v1390
        %v1674 = vand.u32 %v1673, 8388607
        %v1675 = vor.u32 %v1674, 8388608
        %v1676 = vsub.s32 0, %v1675
        %v1677 = vadd.s32 %v1672, 1
        %vm1678 = vcmp.gt.s32.totalorder %v1677, 0
        %v1679 = vsel %vm1678, %v1677, 0
        %v1680 = vshrl.u32 %v1679, 5
        %v1681 = vand.u32 %v1679, 31
        %v1682 = vsub.s32 32, %v1681
        %v1683 = vshrl.u32 683565275, %v1682
        %v1684 = vshll.u32 683565275, %v1681
        %v1685 = vshrl.u32 2475754826, %v1682
        %v1686 = vor.u32 %v1684, %v1685
        %v1687 = vshll.u32 2475754826, %v1681
        %v1688 = vshrl.u32 2131351028, %v1682
        %v1689 = vor.u32 %v1687, %v1688
        %v1690 = vshll.u32 2131351028, %v1681
        %v1691 = vshrl.u32 2102212464, %v1682
        %v1692 = vor.u32 %v1690, %v1691
        %v1693 = vshll.u32 2102212464, %v1681
        %v1694 = vshrl.u32 920167782, %v1682
        %v1695 = vor.u32 %v1693, %v1694
        %v1696 = vshll.u32 920167782, %v1681
        %v1697 = vshrl.u32 1326507024, %v1682
        %v1698 = vor.u32 %v1696, %v1697
        %vm1699 = vcmp.lt.s32.totalorder %v1680, 1
        %vm1700 = vcmp.lt.s32.totalorder %v1680, 2
        %vm1701 = vcmp.lt.s32.totalorder %v1680, 3
        %vm1702 = vcmp.lt.s32.totalorder %v1680, 4
        %v1703 = vsel %vm1699, %v1683, %v1686
        %v1704 = vsel %vm1702, %v1692, 2102212464
        %v1705 = vsel %vm1701, %v1689, %v1704
        %v1706 = vsel %vm1700, %v1703, %v1705
        %v1707 = vsel %vm1699, %v1686, %v1689
        %v1708 = vsel %vm1702, %v1695, 920167782
        %v1709 = vsel %vm1701, %v1692, %v1708
        %v1710 = vsel %vm1700, %v1707, %v1709
        %v1711 = vsel %vm1699, %v1689, %v1692
        %v1712 = vsel %vm1702, %v1698, 1326507024
        %v1713 = vsel %vm1701, %v1695, %v1712
        %v1714 = vsel %vm1700, %v1711, %v1713
        %v1715 = vshll.u32 %v1675, 8
        %v1716 = vmul.u32.u64.compose %v1715, %v1714
        %v1717 = vextract.low.u32 %v1716
        %v1718 = vextract.high.u32 %v1716
        %v1719 = vmul.u32.u64.compose %v1715, %v1710
        %v1720 = vextract.low.u32 %v1719
        %v1721 = vextract.high.u32 %v1719
        %v1722 = vmul.u32 %v1715, %v1706
        %v1723 = vadd.s32 %v1718, %v1720
        %vm1724 = vc.u32 %v1718, %v1720
        %v1725 = vadd.s32 %v1721, 1
        %v1726 = vsel %vm1724, %v1725, %v1721
        %v1727 = vadd.s32 %v1722, %v1726
        %v1728 = vadd.s32 %v1727, 536870912
        %v1729 = vshrl.u32 %v1728, 30
        %v1730 = vshll.u32 %v1729, 30
        %v1731 = vsub.s32 %v1727, %v1730
        %vm1732 = vcmp.lt.s32.totalorder %v1731, 0
        %v1733 = vsub.s32 0, %v1731
        %v1734 = vsel %vm1732, %v1733, %v1731
        %v1735 = vclz %v1734
        %v1736 = vsub.s32 %v1735, 2
        %vm1737 = vcmp.gt.s32.totalorder 0, %v1736
        %v1738 = vsel %vm1737, 0, %v1736
        %v1739 = vsub.s32 32, %v1738
        %v1740 = vshll.u32 %v1731, %v1738
        %v1741 = vshrl.u32 %v1723, %v1739
        %v1742 = vor.u32 %v1740, %v1741
        %v1743 = vsub.s32 4294967266, %v1738
        %v1744 = vadd.s32 %v1743, 127
        %v1745 = vshll.u32 %v1744, 23
        %v1746 = vor.u32 4788187, %v1745
        %v1747 = vand.u32 2147483647, %v1746
        %v1749 = vcvt.s32.f32 %v1742
        %v1750 = vmul.f32 %v1749, %v1747
        %v1751 = vxor.u32 %v1750, 2147483648
        %v1752 = vsel %vm1669, %v1751, %v1750
        %v1753 = vsub.s32 4, %v1729
        %v1754 = vsel %vm1669, %v1753, %v1729
        %v1755 = vsel %vm1668, %v1390, %v1752
        %v1756 = vsel %vm1668, 0, %v1754
        %v1757 = vcosq.f32.pop %v1755
        %v1758 = vsinq.f32.pop %v1755
        %vm1759 = vweird.f32 %v1390
        %v1760 = vadd.s32 %v1756, 3
        %v1761 = vand.u32 %v1760, 3
        %vm1762 = vcmp.lt.s32.totalorder %v1761, 2
        %vm1763 = vcmp.eq.s32.totalorder %v1761, 0
        %v1764 = vxor.u32 %v1758, 2147483648
        %v1765 = vsel %vm1763, %v1757, %v1764
        %vm1766 = vcmp.eq.s32.totalorder %v1761, 2
        %v1767 = vxor.u32 %v1757, 2147483648
        %v1768 = vsel %vm1766, %v1767, %v1758
        %v1769 = vsel %vm1762, %v1765, %v1768
        %v1770 = vsel %vm1759, nan, %v1769
        %v1771 = vand.u32 2147483647, %v1391
        %vm1772 = vcmp.le.f32.partialorder %v1771, 0.7853982
        %vm1773 = vcmp.lt.s32.totalorder %v1391, 0
        %v1774 = vand.u32 %v1391, 2139095040
        %v1775 = vshrl.u32 %v1774, 23
        %v1776 = vsub.s32 %v1775, 127
        %v1777 = vand.u32 2147483647, %v1391
        %v1778 = vand.u32 %v1777, 8388607
        %v1779 = vor.u32 %v1778, 8388608
        %v1780 = vsub.s32 0, %v1779
        %v1781 = vadd.s32 %v1776, 1
        %vm1782 = vcmp.gt.s32.totalorder %v1781, 0
        %v1783 = vsel %vm1782, %v1781, 0
        %v1784 = vshrl.u32 %v1783, 5
        %v1785 = vand.u32 %v1783, 31
        %v1786 = vsub.s32 32, %v1785
        %v1787 = vshrl.u32 683565275, %v1786
        %v1788 = vshll.u32 683565275, %v1785
        %v1789 = vshrl.u32 2475754826, %v1786
        %v1790 = vor.u32 %v1788, %v1789
        %v1791 = vshll.u32 2475754826, %v1785
        %v1792 = vshrl.u32 2131351028, %v1786
        %v1793 = vor.u32 %v1791, %v1792
        %v1794 = vshll.u32 2131351028, %v1785
        %v1795 = vshrl.u32 2102212464, %v1786
        %v1796 = vor.u32 %v1794, %v1795
        %v1797 = vshll.u32 2102212464, %v1785
        %v1798 = vshrl.u32 920167782, %v1786
        %v1799 = vor.u32 %v1797, %v1798
        %v1800 = vshll.u32 920167782, %v1785
        %v1801 = vshrl.u32 1326507024, %v1786
        %v1802 = vor.u32 %v1800, %v1801
        %vm1803 = vcmp.lt.s32.totalorder %v1784, 1
        %vm1804 = vcmp.lt.s32.totalorder %v1784, 2
        %vm1805 = vcmp.lt.s32.totalorder %v1784, 3
        %vm1806 = vcmp.lt.s32.totalorder %v1784, 4
        %v1807 = vsel %vm1803, %v1787, %v1790
        %v1808 = vsel %vm1806, %v1796, 2102212464
        %v1809 = vsel %vm1805, %v1793, %v1808
        %v1810 = vsel %vm1804, %v1807, %v1809
        %v1811 = vsel %vm1803, %v1790, %v1793
        %v1812 = vsel %vm1806, %v1799, 920167782
        %v1813 = vsel %vm1805, %v1796, %v1812
        %v1814 = vsel %vm1804, %v1811, %v1813
        %v1815 = vsel %vm1803, %v1793, %v1796
        %v1816 = vsel %vm1806, %v1802, 1326507024
        %v1817 = vsel %vm1805, %v1799, %v1816
        %v1818 = vsel %vm1804, %v1815, %v1817
        %v1819 = vshll.u32 %v1779, 8
        %v1820 = vmul.u32.u64.compose %v1819, %v1818
        %v1821 = vextract.low.u32 %v1820
        %v1822 = vextract.high.u32 %v1820
        %v1823 = vmul.u32.u64.compose %v1819, %v1814
        %v1824 = vextract.low.u32 %v1823
        %v1825 = vextract.high.u32 %v1823
        %v1826 = vmul.u32 %v1819, %v1810
        %v1827 = vadd.s32 %v1822, %v1824
        %vm1828 = vc.u32 %v1822, %v1824
        %v1829 = vadd.s32 %v1825, 1
        %v1830 = vsel %vm1828, %v1829, %v1825
        %v1831 = vadd.s32 %v1826, %v1830
        %v1832 = vadd.s32 %v1831, 536870912
        %v1833 = vshrl.u32 %v1832, 30
        %v1834 = vshll.u32 %v1833, 30
        %v1835 = vsub.s32 %v1831, %v1834
        %vm1836 = vcmp.lt.s32.totalorder %v1835, 0
        %v1837 = vsub.s32 0, %v1835
        %v1838 = vsel %vm1836, %v1837, %v1835
        %v1839 = vclz %v1838
        %v1840 = vsub.s32 %v1839, 2
        %vm1841 = vcmp.gt.s32.totalorder 0, %v1840
        %v1842 = vsel %vm1841, 0, %v1840
        %v1843 = vsub.s32 32, %v1842
        %v1844 = vshll.u32 %v1835, %v1842
        %v1845 = vshrl.u32 %v1827, %v1843
        %v1846 = vor.u32 %v1844, %v1845
        %v1847 = vsub.s32 4294967266, %v1842
        %v1848 = vadd.s32 %v1847, 127
        %v1849 = vshll.u32 %v1848, 23
        %v1850 = vor.u32 4788187, %v1849
        %v1851 = vand.u32 2147483647, %v1850
        %v1853 = vcvt.s32.f32 %v1846
        %v1854 = vmul.f32 %v1853, %v1851
        %v1855 = vxor.u32 %v1854, 2147483648
        %v1856 = vsel %vm1773, %v1855, %v1854
        %v1857 = vsub.s32 4, %v1833
        %v1858 = vsel %vm1773, %v1857, %v1833
        %v1859 = vsel %vm1772, %v1391, %v1856
        %v1860 = vsel %vm1772, 0, %v1858
        %v1861 = vcosq.f32.pop %v1859
        %v1862 = vsinq.f32.pop %v1859
        %vm1863 = vweird.f32 %v1391
        %v1864 = vadd.s32 %v1860, 3
        %v1865 = vand.u32 %v1864, 3
        %vm1866 = vcmp.lt.s32.totalorder %v1865, 2
        %vm1867 = vcmp.eq.s32.totalorder %v1865, 0
        %v1868 = vxor.u32 %v1862, 2147483648
        %v1869 = vsel %vm1867, %v1861, %v1868
        %vm1870 = vcmp.eq.s32.totalorder %v1865, 2
        %v1871 = vxor.u32 %v1861, 2147483648
        %v1872 = vsel %vm1870, %v1871, %v1862
        %v1873 = vsel %vm1866, %v1869, %v1872
        %v1874 = vsel %vm1863, nan, %v1873
        %v1875 = vand.u32 2147483647, %v1392
        %vm1876 = vcmp.le.f32.partialorder %v1875, 0.7853982
        %vm1877 = vcmp.lt.s32.totalorder %v1392, 0
        %v1878 = vand.u32 %v1392, 2139095040
        %v1879 = vshrl.u32 %v1878, 23
        %v1880 = vsub.s32 %v1879, 127
        %v1881 = vand.u32 2147483647, %v1392
        %v1882 = vand.u32 %v1881, 8388607
        %v1883 = vor.u32 %v1882, 8388608
        %v1884 = vsub.s32 0, %v1883
        %v1885 = vadd.s32 %v1880, 1
        %vm1886 = vcmp.gt.s32.totalorder %v1885, 0
        %v1887 = vsel %vm1886, %v1885, 0
        %v1888 = vshrl.u32 %v1887, 5
        %v1889 = vand.u32 %v1887, 31
        %v1890 = vsub.s32 32, %v1889
        %v1891 = vshrl.u32 683565275, %v1890
        %v1892 = vshll.u32 683565275, %v1889
        %v1893 = vshrl.u32 2475754826, %v1890
        %v1894 = vor.u32 %v1892, %v1893
        %v1895 = vshll.u32 2475754826, %v1889
        %v1896 = vshrl.u32 2131351028, %v1890
        %v1897 = vor.u32 %v1895, %v1896
        %v1898 = vshll.u32 2131351028, %v1889
        %v1899 = vshrl.u32 2102212464, %v1890
        %v1900 = vor.u32 %v1898, %v1899
        %v1901 = vshll.u32 2102212464, %v1889
        %v1902 = vshrl.u32 920167782, %v1890
        %v1903 = vor.u32 %v1901, %v1902
        %v1904 = vshll.u32 920167782, %v1889
        %v1905 = vshrl.u32 1326507024, %v1890
        %v1906 = vor.u32 %v1904, %v1905
        %vm1907 = vcmp.lt.s32.totalorder %v1888, 1
        %vm1908 = vcmp.lt.s32.totalorder %v1888, 2
        %vm1909 = vcmp.lt.s32.totalorder %v1888, 3
        %vm1910 = vcmp.lt.s32.totalorder %v1888, 4
        %v1911 = vsel %vm1907, %v1891, %v1894
        %v1912 = vsel %vm1910, %v1900, 2102212464
        %v1913 = vsel %vm1909, %v1897, %v1912
        %v1914 = vsel %vm1908, %v1911, %v1913
        %v1915 = vsel %vm1907, %v1894, %v1897
        %v1916 = vsel %vm1910, %v1903, 920167782
        %v1917 = vsel %vm1909, %v1900, %v1916
        %v1918 = vsel %vm1908, %v1915, %v1917
        %v1919 = vsel %vm1907, %v1897, %v1900
        %v1920 = vsel %vm1910, %v1906, 1326507024
        %v1921 = vsel %vm1909, %v1903, %v1920
        %v1922 = vsel %vm1908, %v1919, %v1921
        %v1923 = vshll.u32 %v1883, 8
        %v1924 = vmul.u32.u64.compose %v1923, %v1922
        %v1925 = vextract.low.u32 %v1924
        %v1926 = vextract.high.u32 %v1924
        %v1927 = vmul.u32.u64.compose %v1923, %v1918
        %v1928 = vextract.low.u32 %v1927
        %v1929 = vextract.high.u32 %v1927
        %v1930 = vmul.u32 %v1923, %v1914
        %v1931 = vadd.s32 %v1926, %v1928
        %vm1932 = vc.u32 %v1926, %v1928
        %v1933 = vadd.s32 %v1929, 1
        %v1934 = vsel %vm1932, %v1933, %v1929
        %v1935 = vadd.s32 %v1930, %v1934
        %v1936 = vadd.s32 %v1935, 536870912
        %v1937 = vshrl.u32 %v1936, 30
        %v1938 = vshll.u32 %v1937, 30
        %v1939 = vsub.s32 %v1935, %v1938
        %vm1940 = vcmp.lt.s32.totalorder %v1939, 0
        %v1941 = vsub.s32 0, %v1939
        %v1942 = vsel %vm1940, %v1941, %v1939
        %v1943 = vclz %v1942
        %v1944 = vsub.s32 %v1943, 2
        %vm1945 = vcmp.gt.s32.totalorder 0, %v1944
        %v1946 = vsel %vm1945, 0, %v1944
        %v1947 = vsub.s32 32, %v1946
        %v1948 = vshll.u32 %v1939, %v1946
        %v1949 = vshrl.u32 %v1931, %v1947
        %v1950 = vor.u32 %v1948, %v1949
        %v1951 = vsub.s32 4294967266, %v1946
        %v1952 = vadd.s32 %v1951, 127
        %v1953 = vshll.u32 %v1952, 23
        %v1954 = vor.u32 4788187, %v1953
        %v1955 = vand.u32 2147483647, %v1954
        %v1957 = vcvt.s32.f32 %v1950
        %v1958 = vmul.f32 %v1957, %v1955
        %v1959 = vxor.u32 %v1958, 2147483648
        %v1960 = vsel %vm1877, %v1959, %v1958
        %v1961 = vsub.s32 4, %v1937
        %v1962 = vsel %vm1877, %v1961, %v1937
        %v1963 = vsel %vm1876, %v1392, %v1960
        %v1964 = vsel %vm1876, 0, %v1962
        %v1965 = vcosq.f32.pop %v1963
        %v1966 = vsinq.f32.pop %v1963
        %vm1967 = vweird.f32 %v1392
        %v1968 = vadd.s32 %v1964, 3
        %v1969 = vand.u32 %v1968, 3
        %vm1970 = vcmp.lt.s32.totalorder %v1969, 2
        %vm1971 = vcmp.eq.s32.totalorder %v1969, 0
        %v1972 = vxor.u32 %v1966, 2147483648
        %v1973 = vsel %vm1971, %v1965, %v1972
        %vm1974 = vcmp.eq.s32.totalorder %v1969, 2
        %v1975 = vxor.u32 %v1965, 2147483648
        %v1976 = vsel %vm1974, %v1975, %v1966
        %v1977 = vsel %vm1970, %v1973, %v1976
        %v1978 = vsel %vm1967, nan, %v1977
        %v1979 = vand.u32 2147483647, %v1393
        %vm1980 = vcmp.le.f32.partialorder %v1979, 0.7853982
        %vm1981 = vcmp.lt.s32.totalorder %v1393, 0
        %v1982 = vand.u32 %v1393, 2139095040
        %v1983 = vshrl.u32 %v1982, 23
        %v1984 = vsub.s32 %v1983, 127
        %v1985 = vand.u32 2147483647, %v1393
        %v1986 = vand.u32 %v1985, 8388607
        %v1987 = vor.u32 %v1986, 8388608
        %v1988 = vsub.s32 0, %v1987
        %v1989 = vadd.s32 %v1984, 1
        %vm1990 = vcmp.gt.s32.totalorder %v1989, 0
        %v1991 = vsel %vm1990, %v1989, 0
        %v1992 = vshrl.u32 %v1991, 5
        %v1993 = vand.u32 %v1991, 31
        %v1994 = vsub.s32 32, %v1993
        %v1995 = vshrl.u32 683565275, %v1994
        %v1996 = vshll.u32 683565275, %v1993
        %v1997 = vshrl.u32 2475754826, %v1994
        %v1998 = vor.u32 %v1996, %v1997
        %v1999 = vshll.u32 2475754826, %v1993
        %v2000 = vshrl.u32 2131351028, %v1994
        %v2001 = vor.u32 %v1999, %v2000
        %v2002 = vshll.u32 2131351028, %v1993
        %v2003 = vshrl.u32 2102212464, %v1994
        %v2004 = vor.u32 %v2002, %v2003
        %v2005 = vshll.u32 2102212464, %v1993
        %v2006 = vshrl.u32 920167782, %v1994
        %v2007 = vor.u32 %v2005, %v2006
        %v2008 = vshll.u32 920167782, %v1993
        %v2009 = vshrl.u32 1326507024, %v1994
        %v2010 = vor.u32 %v2008, %v2009
        %vm2011 = vcmp.lt.s32.totalorder %v1992, 1
        %vm2012 = vcmp.lt.s32.totalorder %v1992, 2
        %vm2013 = vcmp.lt.s32.totalorder %v1992, 3
        %vm2014 = vcmp.lt.s32.totalorder %v1992, 4
        %v2015 = vsel %vm2011, %v1995, %v1998
        %v2016 = vsel %vm2014, %v2004, 2102212464
        %v2017 = vsel %vm2013, %v2001, %v2016
        %v2018 = vsel %vm2012, %v2015, %v2017
        %v2019 = vsel %vm2011, %v1998, %v2001
        %v2020 = vsel %vm2014, %v2007, 920167782
        %v2021 = vsel %vm2013, %v2004, %v2020
        %v2022 = vsel %vm2012, %v2019, %v2021
        %v2023 = vsel %vm2011, %v2001, %v2004
        %v2024 = vsel %vm2014, %v2010, 1326507024
        %v2025 = vsel %vm2013, %v2007, %v2024
        %v2026 = vsel %vm2012, %v2023, %v2025
        %v2027 = vshll.u32 %v1987, 8
        %v2028 = vmul.u32.u64.compose %v2027, %v2026
        %v2029 = vextract.low.u32 %v2028
        %v2030 = vextract.high.u32 %v2028
        %v2031 = vmul.u32.u64.compose %v2027, %v2022
        %v2032 = vextract.low.u32 %v2031
        %v2033 = vextract.high.u32 %v2031
        %v2034 = vmul.u32 %v2027, %v2018
        %v2035 = vadd.s32 %v2030, %v2032
        %vm2036 = vc.u32 %v2030, %v2032
        %v2037 = vadd.s32 %v2033, 1
        %v2038 = vsel %vm2036, %v2037, %v2033
        %v2039 = vadd.s32 %v2034, %v2038
        %v2040 = vadd.s32 %v2039, 536870912
        %v2041 = vshrl.u32 %v2040, 30
        %v2042 = vshll.u32 %v2041, 30
        %v2043 = vsub.s32 %v2039, %v2042
        %vm2044 = vcmp.lt.s32.totalorder %v2043, 0
        %v2045 = vsub.s32 0, %v2043
        %v2046 = vsel %vm2044, %v2045, %v2043
        %v2047 = vclz %v2046
        %v2048 = vsub.s32 %v2047, 2
        %vm2049 = vcmp.gt.s32.totalorder 0, %v2048
        %v2050 = vsel %vm2049, 0, %v2048
        %v2051 = vsub.s32 32, %v2050
        %v2052 = vshll.u32 %v2043, %v2050
        %v2053 = vshrl.u32 %v2035, %v2051
        %v2054 = vor.u32 %v2052, %v2053
        %v2055 = vsub.s32 4294967266, %v2050
        %v2056 = vadd.s32 %v2055, 127
        %v2057 = vshll.u32 %v2056, 23
        %v2058 = vor.u32 4788187, %v2057
        %v2059 = vand.u32 2147483647, %v2058
        %v2061 = vcvt.s32.f32 %v2054
        %v2062 = vmul.f32 %v2061, %v2059
        %v2063 = vxor.u32 %v2062, 2147483648
        %v2064 = vsel %vm1981, %v2063, %v2062
        %v2065 = vsub.s32 4, %v2041
        %v2066 = vsel %vm1981, %v2065, %v2041
        %v2067 = vsel %vm1980, %v1393, %v2064
        %v2068 = vsel %vm1980, 0, %v2066
        %v2069 = vcosq.f32.pop %v2067
        %v2070 = vsinq.f32.pop %v2067
        %vm2071 = vweird.f32 %v1393
        %v2072 = vadd.s32 %v2068, 3
        %v2073 = vand.u32 %v2072, 3
        %vm2074 = vcmp.lt.s32.totalorder %v2073, 2
        %vm2075 = vcmp.eq.s32.totalorder %v2073, 0
        %v2076 = vxor.u32 %v2070, 2147483648
        %v2077 = vsel %vm2075, %v2069, %v2076
        %vm2078 = vcmp.eq.s32.totalorder %v2073, 2
        %v2079 = vxor.u32 %v2069, 2147483648
        %v2080 = vsel %vm2078, %v2079, %v2070
        %v2081 = vsel %vm2074, %v2077, %v2080
        %v2082 = vsel %vm2071, nan, %v2081
        %v2083 = vand.u32 2147483647, %v1394
        %vm2084 = vcmp.le.f32.partialorder %v2083, 0.7853982
        %vm2085 = vcmp.lt.s32.totalorder %v1394, 0
        %v2086 = vand.u32 %v1394, 2139095040
        %v2087 = vshrl.u32 %v2086, 23
        %v2088 = vsub.s32 %v2087, 127
        %v2089 = vand.u32 2147483647, %v1394
        %v2090 = vand.u32 %v2089, 8388607
        %v2091 = vor.u32 %v2090, 8388608
        %v2092 = vsub.s32 0, %v2091
        %v2093 = vadd.s32 %v2088, 1
        %vm2094 = vcmp.gt.s32.totalorder %v2093, 0
        %v2095 = vsel %vm2094, %v2093, 0
        %v2096 = vshrl.u32 %v2095, 5
        %v2097 = vand.u32 %v2095, 31
        %v2098 = vsub.s32 32, %v2097
        %v2099 = vshrl.u32 683565275, %v2098
        %v2100 = vshll.u32 683565275, %v2097
        %v2101 = vshrl.u32 2475754826, %v2098
        %v2102 = vor.u32 %v2100, %v2101
        %v2103 = vshll.u32 2475754826, %v2097
        %v2104 = vshrl.u32 2131351028, %v2098
        %v2105 = vor.u32 %v2103, %v2104
        %v2106 = vshll.u32 2131351028, %v2097
        %v2107 = vshrl.u32 2102212464, %v2098
        %v2108 = vor.u32 %v2106, %v2107
        %v2109 = vshll.u32 2102212464, %v2097
        %v2110 = vshrl.u32 920167782, %v2098
        %v2111 = vor.u32 %v2109, %v2110
        %v2112 = vshll.u32 920167782, %v2097
        %v2113 = vshrl.u32 1326507024, %v2098
        %v2114 = vor.u32 %v2112, %v2113
        %vm2115 = vcmp.lt.s32.totalorder %v2096, 1
        %vm2116 = vcmp.lt.s32.totalorder %v2096, 2
        %vm2117 = vcmp.lt.s32.totalorder %v2096, 3
        %vm2118 = vcmp.lt.s32.totalorder %v2096, 4
        %v2119 = vsel %vm2115, %v2099, %v2102
        %v2120 = vsel %vm2118, %v2108, 2102212464
        %v2121 = vsel %vm2117, %v2105, %v2120
        %v2122 = vsel %vm2116, %v2119, %v2121
        %v2123 = vsel %vm2115, %v2102, %v2105
        %v2124 = vsel %vm2118, %v2111, 920167782
        %v2125 = vsel %vm2117, %v2108, %v2124
        %v2126 = vsel %vm2116, %v2123, %v2125
        %v2127 = vsel %vm2115, %v2105, %v2108
        %v2128 = vsel %vm2118, %v2114, 1326507024
        %v2129 = vsel %vm2117, %v2111, %v2128
        %v2130 = vsel %vm2116, %v2127, %v2129
        %v2131 = vshll.u32 %v2091, 8
        %v2132 = vmul.u32.u64.compose %v2131, %v2130
        %v2133 = vextract.low.u32 %v2132
        %v2134 = vextract.high.u32 %v2132
        %v2135 = vmul.u32.u64.compose %v2131, %v2126
        %v2136 = vextract.low.u32 %v2135
        %v2137 = vextract.high.u32 %v2135
        %v2138 = vmul.u32 %v2131, %v2122
        %v2139 = vadd.s32 %v2134, %v2136
        %vm2140 = vc.u32 %v2134, %v2136
        %v2141 = vadd.s32 %v2137, 1
        %v2142 = vsel %vm2140, %v2141, %v2137
        %v2143 = vadd.s32 %v2138, %v2142
        %v2144 = vadd.s32 %v2143, 536870912
        %v2145 = vshrl.u32 %v2144, 30
        %v2146 = vshll.u32 %v2145, 30
        %v2147 = vsub.s32 %v2143, %v2146
        %vm2148 = vcmp.lt.s32.totalorder %v2147, 0
        %v2149 = vsub.s32 0, %v2147
        %v2150 = vsel %vm2148, %v2149, %v2147
        %v2151 = vclz %v2150
        %v2152 = vsub.s32 %v2151, 2
        %vm2153 = vcmp.gt.s32.totalorder 0, %v2152
        %v2154 = vsel %vm2153, 0, %v2152
        %v2155 = vsub.s32 32, %v2154
        %v2156 = vshll.u32 %v2147, %v2154
        %v2157 = vshrl.u32 %v2139, %v2155
        %v2158 = vor.u32 %v2156, %v2157
        %v2159 = vsub.s32 4294967266, %v2154
        %v2160 = vadd.s32 %v2159, 127
        %v2161 = vshll.u32 %v2160, 23
        %v2162 = vor.u32 4788187, %v2161
        %v2163 = vand.u32 2147483647, %v2162
        %v2165 = vcvt.s32.f32 %v2158
        %v2166 = vmul.f32 %v2165, %v2163
        %v2167 = vxor.u32 %v2166, 2147483648
        %v2168 = vsel %vm2085, %v2167, %v2166
        %v2169 = vsub.s32 4, %v2145
        %v2170 = vsel %vm2085, %v2169, %v2145
        %v2171 = vsel %vm2084, %v1394, %v2168
        %v2172 = vsel %vm2084, 0, %v2170
        %v2173 = vcosq.f32.pop %v2171
        %v2174 = vsinq.f32.pop %v2171
        %vm2175 = vweird.f32 %v1394
        %v2176 = vadd.s32 %v2172, 3
        %v2177 = vand.u32 %v2176, 3
        %vm2178 = vcmp.lt.s32.totalorder %v2177, 2
        %vm2179 = vcmp.eq.s32.totalorder %v2177, 0
        %v2180 = vxor.u32 %v2174, 2147483648
        %v2181 = vsel %vm2179, %v2173, %v2180
        %vm2182 = vcmp.eq.s32.totalorder %v2177, 2
        %v2183 = vxor.u32 %v2173, 2147483648
        %v2184 = vsel %vm2182, %v2183, %v2174
        %v2185 = vsel %vm2178, %v2181, %v2184
        %v2186 = vsel %vm2175, nan, %v2185
        %v2187 = vand.u32 2147483647, %v1395
        %vm2188 = vcmp.le.f32.partialorder %v2187, 0.7853982
        %vm2189 = vcmp.lt.s32.totalorder %v1395, 0
        %v2190 = vand.u32 %v1395, 2139095040
        %v2191 = vshrl.u32 %v2190, 23
        %v2192 = vsub.s32 %v2191, 127
        %v2193 = vand.u32 2147483647, %v1395
        %v2194 = vand.u32 %v2193, 8388607
        %v2195 = vor.u32 %v2194, 8388608
        %v2196 = vsub.s32 0, %v2195
        %v2197 = vadd.s32 %v2192, 1
        %vm2198 = vcmp.gt.s32.totalorder %v2197, 0
        %v2199 = vsel %vm2198, %v2197, 0
        %v2200 = vshrl.u32 %v2199, 5
        %v2201 = vand.u32 %v2199, 31
        %v2202 = vsub.s32 32, %v2201
        %v2203 = vshrl.u32 683565275, %v2202
        %v2204 = vshll.u32 683565275, %v2201
        %v2205 = vshrl.u32 2475754826, %v2202
        %v2206 = vor.u32 %v2204, %v2205
        %v2207 = vshll.u32 2475754826, %v2201
        %v2208 = vshrl.u32 2131351028, %v2202
        %v2209 = vor.u32 %v2207, %v2208
        %v2210 = vshll.u32 2131351028, %v2201
        %v2211 = vshrl.u32 2102212464, %v2202
        %v2212 = vor.u32 %v2210, %v2211
        %v2213 = vshll.u32 2102212464, %v2201
        %v2214 = vshrl.u32 920167782, %v2202
        %v2215 = vor.u32 %v2213, %v2214
        %v2216 = vshll.u32 920167782, %v2201
        %v2217 = vshrl.u32 1326507024, %v2202
        %v2218 = vor.u32 %v2216, %v2217
        %vm2219 = vcmp.lt.s32.totalorder %v2200, 1
        %vm2220 = vcmp.lt.s32.totalorder %v2200, 2
        %vm2221 = vcmp.lt.s32.totalorder %v2200, 3
        %vm2222 = vcmp.lt.s32.totalorder %v2200, 4
        %v2223 = vsel %vm2219, %v2203, %v2206
        %v2224 = vsel %vm2222, %v2212, 2102212464
        %v2225 = vsel %vm2221, %v2209, %v2224
        %v2226 = vsel %vm2220, %v2223, %v2225
        %v2227 = vsel %vm2219, %v2206, %v2209
        %v2228 = vsel %vm2222, %v2215, 920167782
        %v2229 = vsel %vm2221, %v2212, %v2228
        %v2230 = vsel %vm2220, %v2227, %v2229
        %v2231 = vsel %vm2219, %v2209, %v2212
        %v2232 = vsel %vm2222, %v2218, 1326507024
        %v2233 = vsel %vm2221, %v2215, %v2232
        %v2234 = vsel %vm2220, %v2231, %v2233
        %v2235 = vshll.u32 %v2195, 8
        %v2236 = vmul.u32.u64.compose %v2235, %v2234
        %v2237 = vextract.low.u32 %v2236
        %v2238 = vextract.high.u32 %v2236
        %v2239 = vmul.u32.u64.compose %v2235, %v2230
        %v2240 = vextract.low.u32 %v2239
        %v2241 = vextract.high.u32 %v2239
        %v2242 = vmul.u32 %v2235, %v2226
        %v2243 = vadd.s32 %v2238, %v2240
        %vm2244 = vc.u32 %v2238, %v2240
        %v2245 = vadd.s32 %v2241, 1
        %v2246 = vsel %vm2244, %v2245, %v2241
        %v2247 = vadd.s32 %v2242, %v2246
        %v2248 = vadd.s32 %v2247, 536870912
        %v2249 = vshrl.u32 %v2248, 30
        %v2250 = vshll.u32 %v2249, 30
        %v2251 = vsub.s32 %v2247, %v2250
        %vm2252 = vcmp.lt.s32.totalorder %v2251, 0
        %v2253 = vsub.s32 0, %v2251
        %v2254 = vsel %vm2252, %v2253, %v2251
        %v2255 = vclz %v2254
        %v2256 = vsub.s32 %v2255, 2
        %vm2257 = vcmp.gt.s32.totalorder 0, %v2256
        %v2258 = vsel %vm2257, 0, %v2256
        %v2259 = vsub.s32 32, %v2258
        %v2260 = vshll.u32 %v2251, %v2258
        %v2261 = vshrl.u32 %v2243, %v2259
        %v2262 = vor.u32 %v2260, %v2261
        %v2263 = vsub.s32 4294967266, %v2258
        %v2264 = vadd.s32 %v2263, 127
        %v2265 = vshll.u32 %v2264, 23
        %v2266 = vor.u32 4788187, %v2265
        %v2267 = vand.u32 2147483647, %v2266
        %v2269 = vcvt.s32.f32 %v2262
        %v2270 = vmul.f32 %v2269, %v2267
        %v2271 = vxor.u32 %v2270, 2147483648
        %v2272 = vsel %vm2189, %v2271, %v2270
        %v2273 = vsub.s32 4, %v2249
        %v2274 = vsel %vm2189, %v2273, %v2249
        %v2275 = vsel %vm2188, %v1395, %v2272
        %v2276 = vsel %vm2188, 0, %v2274
        %v2277 = vcosq.f32.pop %v2275
        %v2278 = vsinq.f32.pop %v2275
        %vm2279 = vweird.f32 %v1395
        %v2280 = vadd.s32 %v2276, 3
        %v2281 = vand.u32 %v2280, 3
        %vm2282 = vcmp.lt.s32.totalorder %v2281, 2
        %vm2283 = vcmp.eq.s32.totalorder %v2281, 0
        %v2284 = vxor.u32 %v2278, 2147483648
        %v2285 = vsel %vm2283, %v2277, %v2284
        %vm2286 = vcmp.eq.s32.totalorder %v2281, 2
        %v2287 = vxor.u32 %v2277, 2147483648
        %v2288 = vsel %vm2286, %v2287, %v2278
        %v2289 = vsel %vm2282, %v2285, %v2288
        %v2290 = vsel %vm2279, nan, %v2289
        %v2291 = vand.u32 2147483647, %v1396
        %vm2292 = vcmp.le.f32.partialorder %v2291, 0.7853982
        %vm2293 = vcmp.lt.s32.totalorder %v1396, 0
        %v2294 = vand.u32 %v1396, 2139095040
        %v2295 = vshrl.u32 %v2294, 23
        %v2296 = vsub.s32 %v2295, 127
        %v2297 = vand.u32 2147483647, %v1396
        %v2298 = vand.u32 %v2297, 8388607
        %v2299 = vor.u32 %v2298, 8388608
        %v2300 = vsub.s32 0, %v2299
        %v2301 = vadd.s32 %v2296, 1
        %vm2302 = vcmp.gt.s32.totalorder %v2301, 0
        %v2303 = vsel %vm2302, %v2301, 0
        %v2304 = vshrl.u32 %v2303, 5
        %v2305 = vand.u32 %v2303, 31
        %v2306 = vsub.s32 32, %v2305
        %v2307 = vshrl.u32 683565275, %v2306
        %v2308 = vshll.u32 683565275, %v2305
        %v2309 = vshrl.u32 2475754826, %v2306
        %v2310 = vor.u32 %v2308, %v2309
        %v2311 = vshll.u32 2475754826, %v2305
        %v2312 = vshrl.u32 2131351028, %v2306
        %v2313 = vor.u32 %v2311, %v2312
        %v2314 = vshll.u32 2131351028, %v2305
        %v2315 = vshrl.u32 2102212464, %v2306
        %v2316 = vor.u32 %v2314, %v2315
        %v2317 = vshll.u32 2102212464, %v2305
        %v2318 = vshrl.u32 920167782, %v2306
        %v2319 = vor.u32 %v2317, %v2318
        %v2320 = vshll.u32 920167782, %v2305
        %v2321 = vshrl.u32 1326507024, %v2306
        %v2322 = vor.u32 %v2320, %v2321
        %vm2323 = vcmp.lt.s32.totalorder %v2304, 1
        %vm2324 = vcmp.lt.s32.totalorder %v2304, 2
        %vm2325 = vcmp.lt.s32.totalorder %v2304, 3
        %vm2326 = vcmp.lt.s32.totalorder %v2304, 4
        %v2327 = vsel %vm2323, %v2307, %v2310
        %v2328 = vsel %vm2326, %v2316, 2102212464
        %v2329 = vsel %vm2325, %v2313, %v2328
        %v2330 = vsel %vm2324, %v2327, %v2329
        %v2331 = vsel %vm2323, %v2310, %v2313
        %v2332 = vsel %vm2326, %v2319, 920167782
        %v2333 = vsel %vm2325, %v2316, %v2332
        %v2334 = vsel %vm2324, %v2331, %v2333
        %v2335 = vsel %vm2323, %v2313, %v2316
        %v2336 = vsel %vm2326, %v2322, 1326507024
        %v2337 = vsel %vm2325, %v2319, %v2336
        %v2338 = vsel %vm2324, %v2335, %v2337
        %v2339 = vshll.u32 %v2299, 8
        %v2340 = vmul.u32.u64.compose %v2339, %v2338
        %v2341 = vextract.low.u32 %v2340
        %v2342 = vextract.high.u32 %v2340
        %v2343 = vmul.u32.u64.compose %v2339, %v2334
        %v2344 = vextract.low.u32 %v2343
        %v2345 = vextract.high.u32 %v2343
        %v2346 = vmul.u32 %v2339, %v2330
        %v2347 = vadd.s32 %v2342, %v2344
        %vm2348 = vc.u32 %v2342, %v2344
        %v2349 = vadd.s32 %v2345, 1
        %v2350 = vsel %vm2348, %v2349, %v2345
        %v2351 = vadd.s32 %v2346, %v2350
        %v2352 = vadd.s32 %v2351, 536870912
        %v2353 = vshrl.u32 %v2352, 30
        %v2354 = vshll.u32 %v2353, 30
        %v2355 = vsub.s32 %v2351, %v2354
        %vm2356 = vcmp.lt.s32.totalorder %v2355, 0
        %v2357 = vsub.s32 0, %v2355
        %v2358 = vsel %vm2356, %v2357, %v2355
        %v2359 = vclz %v2358
        %v2360 = vsub.s32 %v2359, 2
        %vm2361 = vcmp.gt.s32.totalorder 0, %v2360
        %v2362 = vsel %vm2361, 0, %v2360
        %v2363 = vsub.s32 32, %v2362
        %v2364 = vshll.u32 %v2355, %v2362
        %v2365 = vshrl.u32 %v2347, %v2363
        %v2366 = vor.u32 %v2364, %v2365
        %v2367 = vsub.s32 4294967266, %v2362
        %v2368 = vadd.s32 %v2367, 127
        %v2369 = vshll.u32 %v2368, 23
        %v2370 = vor.u32 4788187, %v2369
        %v2371 = vand.u32 2147483647, %v2370
        %v2373 = vcvt.s32.f32 %v2366
        %v2374 = vmul.f32 %v2373, %v2371
        %v2375 = vxor.u32 %v2374, 2147483648
        %v2376 = vsel %vm2293, %v2375, %v2374
        %v2377 = vsub.s32 4, %v2353
        %v2378 = vsel %vm2293, %v2377, %v2353
        %v2379 = vsel %vm2292, %v1396, %v2376
        %v2380 = vsel %vm2292, 0, %v2378
        %v2381 = vcosq.f32.pop %v2379
        %v2382 = vsinq.f32.pop %v2379
        %vm2383 = vweird.f32 %v1396
        %v2384 = vadd.s32 %v2380, 3
        %v2385 = vand.u32 %v2384, 3
        %vm2386 = vcmp.lt.s32.totalorder %v2385, 2
        %vm2387 = vcmp.eq.s32.totalorder %v2385, 0
        %v2388 = vxor.u32 %v2382, 2147483648
        %v2389 = vsel %vm2387, %v2381, %v2388
        %vm2390 = vcmp.eq.s32.totalorder %v2385, 2
        %v2391 = vxor.u32 %v2381, 2147483648
        %v2392 = vsel %vm2390, %v2391, %v2382
        %v2393 = vsel %vm2386, %v2389, %v2392
        %v2394 = vsel %vm2383, nan, %v2393
        %v2395 = vand.u32 2147483647, %v1397
        %vm2396 = vcmp.le.f32.partialorder %v2395, 0.7853982
        %vm2397 = vcmp.lt.s32.totalorder %v1397, 0
        %v2398 = vand.u32 %v1397, 2139095040
        %v2399 = vshrl.u32 %v2398, 23
        %v2400 = vsub.s32 %v2399, 127
        %v2401 = vand.u32 2147483647, %v1397
        %v2402 = vand.u32 %v2401, 8388607
        %v2403 = vor.u32 %v2402, 8388608
        %v2404 = vsub.s32 0, %v2403
        %v2405 = vadd.s32 %v2400, 1
        %vm2406 = vcmp.gt.s32.totalorder %v2405, 0
        %v2407 = vsel %vm2406, %v2405, 0
        %v2408 = vshrl.u32 %v2407, 5
        %v2409 = vand.u32 %v2407, 31
        %v2410 = vsub.s32 32, %v2409
        %v2411 = vshrl.u32 683565275, %v2410
        %v2412 = vshll.u32 683565275, %v2409
        %v2413 = vshrl.u32 2475754826, %v2410
        %v2414 = vor.u32 %v2412, %v2413
        %v2415 = vshll.u32 2475754826, %v2409
        %v2416 = vshrl.u32 2131351028, %v2410
        %v2417 = vor.u32 %v2415, %v2416
        %v2418 = vshll.u32 2131351028, %v2409
        %v2419 = vshrl.u32 2102212464, %v2410
        %v2420 = vor.u32 %v2418, %v2419
        %v2421 = vshll.u32 2102212464, %v2409
        %v2422 = vshrl.u32 920167782, %v2410
        %v2423 = vor.u32 %v2421, %v2422
        %v2424 = vshll.u32 920167782, %v2409
        %v2425 = vshrl.u32 1326507024, %v2410
        %v2426 = vor.u32 %v2424, %v2425
        %vm2427 = vcmp.lt.s32.totalorder %v2408, 1
        %vm2428 = vcmp.lt.s32.totalorder %v2408, 2
        %vm2429 = vcmp.lt.s32.totalorder %v2408, 3
        %vm2430 = vcmp.lt.s32.totalorder %v2408, 4
        %v2431 = vsel %vm2427, %v2411, %v2414
        %v2432 = vsel %vm2430, %v2420, 2102212464
        %v2433 = vsel %vm2429, %v2417, %v2432
        %v2434 = vsel %vm2428, %v2431, %v2433
        %v2435 = vsel %vm2427, %v2414, %v2417
        %v2436 = vsel %vm2430, %v2423, 920167782
        %v2437 = vsel %vm2429, %v2420, %v2436
        %v2438 = vsel %vm2428, %v2435, %v2437
        %v2439 = vsel %vm2427, %v2417, %v2420
        %v2440 = vsel %vm2430, %v2426, 1326507024
        %v2441 = vsel %vm2429, %v2423, %v2440
        %v2442 = vsel %vm2428, %v2439, %v2441
        %v2443 = vshll.u32 %v2403, 8
        %v2444 = vmul.u32.u64.compose %v2443, %v2442
        %v2445 = vextract.low.u32 %v2444
        %v2446 = vextract.high.u32 %v2444
        %v2447 = vmul.u32.u64.compose %v2443, %v2438
        %v2448 = vextract.low.u32 %v2447
        %v2449 = vextract.high.u32 %v2447
        %v2450 = vmul.u32 %v2443, %v2434
        %v2451 = vadd.s32 %v2446, %v2448
        %vm2452 = vc.u32 %v2446, %v2448
        %v2453 = vadd.s32 %v2449, 1
        %v2454 = vsel %vm2452, %v2453, %v2449
        %v2455 = vadd.s32 %v2450, %v2454
        %v2456 = vadd.s32 %v2455, 536870912
        %v2457 = vshrl.u32 %v2456, 30
        %v2458 = vshll.u32 %v2457, 30
        %v2459 = vsub.s32 %v2455, %v2458
        %vm2460 = vcmp.lt.s32.totalorder %v2459, 0
        %v2461 = vsub.s32 0, %v2459
        %v2462 = vsel %vm2460, %v2461, %v2459
        %v2463 = vclz %v2462
        %v2464 = vsub.s32 %v2463, 2
        %vm2465 = vcmp.gt.s32.totalorder 0, %v2464
        %v2466 = vsel %vm2465, 0, %v2464
        %v2467 = vsub.s32 32, %v2466
        %v2468 = vshll.u32 %v2459, %v2466
        %v2469 = vshrl.u32 %v2451, %v2467
        %v2470 = vor.u32 %v2468, %v2469
        %v2471 = vsub.s32 4294967266, %v2466
        %v2472 = vadd.s32 %v2471, 127
        %v2473 = vshll.u32 %v2472, 23
        %v2474 = vor.u32 4788187, %v2473
        %v2475 = vand.u32 2147483647, %v2474
        %v2477 = vcvt.s32.f32 %v2470
        %v2478 = vmul.f32 %v2477, %v2475
        %v2479 = vxor.u32 %v2478, 2147483648
        %v2480 = vsel %vm2397, %v2479, %v2478
        %v2481 = vsub.s32 4, %v2457
        %v2482 = vsel %vm2397, %v2481, %v2457
        %v2483 = vsel %vm2396, %v1397, %v2480
        %v2484 = vsel %vm2396, 0, %v2482
        %v2485 = vcosq.f32.pop %v2483
        %v2486 = vsinq.f32.pop %v2483
        %vm2487 = vweird.f32 %v1397
        %v2488 = vadd.s32 %v2484, 3
        %v2489 = vand.u32 %v2488, 3
        %vm2490 = vcmp.lt.s32.totalorder %v2489, 2
        %vm2491 = vcmp.eq.s32.totalorder %v2489, 0
        %v2492 = vxor.u32 %v2486, 2147483648
        %v2493 = vsel %vm2491, %v2485, %v2492
        %vm2494 = vcmp.eq.s32.totalorder %v2489, 2
        %v2495 = vxor.u32 %v2485, 2147483648
        %v2496 = vsel %vm2494, %v2495, %v2486
        %v2497 = vsel %vm2490, %v2493, %v2496
        %v2498 = vsel %vm2487, nan, %v2497
        %v2499 = vand.u32 2147483647, %v1398
        %vm2500 = vcmp.le.f32.partialorder %v2499, 0.7853982
        %vm2501 = vcmp.lt.s32.totalorder %v1398, 0
        %v2502 = vand.u32 %v1398, 2139095040
        %v2503 = vshrl.u32 %v2502, 23
        %v2504 = vsub.s32 %v2503, 127
        %v2505 = vand.u32 2147483647, %v1398
        %v2506 = vand.u32 %v2505, 8388607
        %v2507 = vor.u32 %v2506, 8388608
        %v2508 = vsub.s32 0, %v2507
        %v2509 = vadd.s32 %v2504, 1
        %vm2510 = vcmp.gt.s32.totalorder %v2509, 0
        %v2511 = vsel %vm2510, %v2509, 0
        %v2512 = vshrl.u32 %v2511, 5
        %v2513 = vand.u32 %v2511, 31
        %v2514 = vsub.s32 32, %v2513
        %v2515 = vshrl.u32 683565275, %v2514
        %v2516 = vshll.u32 683565275, %v2513
        %v2517 = vshrl.u32 2475754826, %v2514
        %v2518 = vor.u32 %v2516, %v2517
        %v2519 = vshll.u32 2475754826, %v2513
        %v2520 = vshrl.u32 2131351028, %v2514
        %v2521 = vor.u32 %v2519, %v2520
        %v2522 = vshll.u32 2131351028, %v2513
        %v2523 = vshrl.u32 2102212464, %v2514
        %v2524 = vor.u32 %v2522, %v2523
        %v2525 = vshll.u32 2102212464, %v2513
        %v2526 = vshrl.u32 920167782, %v2514
        %v2527 = vor.u32 %v2525, %v2526
        %v2528 = vshll.u32 920167782, %v2513
        %v2529 = vshrl.u32 1326507024, %v2514
        %v2530 = vor.u32 %v2528, %v2529
        %vm2531 = vcmp.lt.s32.totalorder %v2512, 1
        %vm2532 = vcmp.lt.s32.totalorder %v2512, 2
        %vm2533 = vcmp.lt.s32.totalorder %v2512, 3
        %vm2534 = vcmp.lt.s32.totalorder %v2512, 4
        %v2535 = vsel %vm2531, %v2515, %v2518
        %v2536 = vsel %vm2534, %v2524, 2102212464
        %v2537 = vsel %vm2533, %v2521, %v2536
        %v2538 = vsel %vm2532, %v2535, %v2537
        %v2539 = vsel %vm2531, %v2518, %v2521
        %v2540 = vsel %vm2534, %v2527, 920167782
        %v2541 = vsel %vm2533, %v2524, %v2540
        %v2542 = vsel %vm2532, %v2539, %v2541
        %v2543 = vsel %vm2531, %v2521, %v2524
        %v2544 = vsel %vm2534, %v2530, 1326507024
        %v2545 = vsel %vm2533, %v2527, %v2544
        %v2546 = vsel %vm2532, %v2543, %v2545
        %v2547 = vshll.u32 %v2507, 8
        %v2548 = vmul.u32.u64.compose %v2547, %v2546
        %v2549 = vextract.low.u32 %v2548
        %v2550 = vextract.high.u32 %v2548
        %v2551 = vmul.u32.u64.compose %v2547, %v2542
        %v2552 = vextract.low.u32 %v2551
        %v2553 = vextract.high.u32 %v2551
        %v2554 = vmul.u32 %v2547, %v2538
        %v2555 = vadd.s32 %v2550, %v2552
        %vm2556 = vc.u32 %v2550, %v2552
        %v2557 = vadd.s32 %v2553, 1
        %v2558 = vsel %vm2556, %v2557, %v2553
        %v2559 = vadd.s32 %v2554, %v2558
        %v2560 = vadd.s32 %v2559, 536870912
        %v2561 = vshrl.u32 %v2560, 30
        %v2562 = vshll.u32 %v2561, 30
        %v2563 = vsub.s32 %v2559, %v2562
        %vm2564 = vcmp.lt.s32.totalorder %v2563, 0
        %v2565 = vsub.s32 0, %v2563
        %v2566 = vsel %vm2564, %v2565, %v2563
        %v2567 = vclz %v2566
        %v2568 = vsub.s32 %v2567, 2
        %vm2569 = vcmp.gt.s32.totalorder 0, %v2568
        %v2570 = vsel %vm2569, 0, %v2568
        %v2571 = vsub.s32 32, %v2570
        %v2572 = vshll.u32 %v2563, %v2570
        %v2573 = vshrl.u32 %v2555, %v2571
        %v2574 = vor.u32 %v2572, %v2573
        %v2575 = vsub.s32 4294967266, %v2570
        %v2576 = vadd.s32 %v2575, 127
        %v2577 = vshll.u32 %v2576, 23
        %v2578 = vor.u32 4788187, %v2577
        %v2579 = vand.u32 2147483647, %v2578
        %v2581 = vcvt.s32.f32 %v2574
        %v2582 = vmul.f32 %v2581, %v2579
        %v2583 = vxor.u32 %v2582, 2147483648
        %v2584 = vsel %vm2501, %v2583, %v2582
        %v2585 = vsub.s32 4, %v2561
        %v2586 = vsel %vm2501, %v2585, %v2561
        %v2587 = vsel %vm2500, %v1398, %v2584
        %v2588 = vsel %vm2500, 0, %v2586
        %v2589 = vcosq.f32.pop %v2587
        %v2590 = vsinq.f32.pop %v2587
        %vm2591 = vweird.f32 %v1398
        %v2592 = vadd.s32 %v2588, 3
        %v2593 = vand.u32 %v2592, 3
        %vm2594 = vcmp.lt.s32.totalorder %v2593, 2
        %vm2595 = vcmp.eq.s32.totalorder %v2593, 0
        %v2596 = vxor.u32 %v2590, 2147483648
        %v2597 = vsel %vm2595, %v2589, %v2596
        %vm2598 = vcmp.eq.s32.totalorder %v2593, 2
        %v2599 = vxor.u32 %v2589, 2147483648
        %v2600 = vsel %vm2598, %v2599, %v2590
        %v2601 = vsel %vm2594, %v2597, %v2600
        %v2602 = vsel %vm2591, nan, %v2601
        %v2603 = vand.u32 2147483647, %v1399
        %vm2604 = vcmp.le.f32.partialorder %v2603, 0.7853982
        %vm2605 = vcmp.lt.s32.totalorder %v1399, 0
        %v2606 = vand.u32 %v1399, 2139095040
        %v2607 = vshrl.u32 %v2606, 23
        %v2608 = vsub.s32 %v2607, 127
        %v2609 = vand.u32 2147483647, %v1399
        %v2610 = vand.u32 %v2609, 8388607
        %v2611 = vor.u32 %v2610, 8388608
        %v2612 = vsub.s32 0, %v2611
        %v2613 = vadd.s32 %v2608, 1
        %vm2614 = vcmp.gt.s32.totalorder %v2613, 0
        %v2615 = vsel %vm2614, %v2613, 0
        %v2616 = vshrl.u32 %v2615, 5
        %v2617 = vand.u32 %v2615, 31
        %v2618 = vsub.s32 32, %v2617
        %v2619 = vshrl.u32 683565275, %v2618
        %v2620 = vshll.u32 683565275, %v2617
        %v2621 = vshrl.u32 2475754826, %v2618
        %v2622 = vor.u32 %v2620, %v2621
        %v2623 = vshll.u32 2475754826, %v2617
        %v2624 = vshrl.u32 2131351028, %v2618
        %v2625 = vor.u32 %v2623, %v2624
        %v2626 = vshll.u32 2131351028, %v2617
        %v2627 = vshrl.u32 2102212464, %v2618
        %v2628 = vor.u32 %v2626, %v2627
        %v2629 = vshll.u32 2102212464, %v2617
        %v2630 = vshrl.u32 920167782, %v2618
        %v2631 = vor.u32 %v2629, %v2630
        %v2632 = vshll.u32 920167782, %v2617
        %v2633 = vshrl.u32 1326507024, %v2618
        %v2634 = vor.u32 %v2632, %v2633
        %vm2635 = vcmp.lt.s32.totalorder %v2616, 1
        %vm2636 = vcmp.lt.s32.totalorder %v2616, 2
        %vm2637 = vcmp.lt.s32.totalorder %v2616, 3
        %vm2638 = vcmp.lt.s32.totalorder %v2616, 4
        %v2639 = vsel %vm2635, %v2619, %v2622
        %v2640 = vsel %vm2638, %v2628, 2102212464
        %v2641 = vsel %vm2637, %v2625, %v2640
        %v2642 = vsel %vm2636, %v2639, %v2641
        %v2643 = vsel %vm2635, %v2622, %v2625
        %v2644 = vsel %vm2638, %v2631, 920167782
        %v2645 = vsel %vm2637, %v2628, %v2644
        %v2646 = vsel %vm2636, %v2643, %v2645
        %v2647 = vsel %vm2635, %v2625, %v2628
        %v2648 = vsel %vm2638, %v2634, 1326507024
        %v2649 = vsel %vm2637, %v2631, %v2648
        %v2650 = vsel %vm2636, %v2647, %v2649
        %v2651 = vshll.u32 %v2611, 8
        %v2652 = vmul.u32.u64.compose %v2651, %v2650
        %v2653 = vextract.low.u32 %v2652
        %v2654 = vextract.high.u32 %v2652
        %v2655 = vmul.u32.u64.compose %v2651, %v2646
        %v2656 = vextract.low.u32 %v2655
        %v2657 = vextract.high.u32 %v2655
        %v2658 = vmul.u32 %v2651, %v2642
        %v2659 = vadd.s32 %v2654, %v2656
        %vm2660 = vc.u32 %v2654, %v2656
        %v2661 = vadd.s32 %v2657, 1
        %v2662 = vsel %vm2660, %v2661, %v2657
        %v2663 = vadd.s32 %v2658, %v2662
        %v2664 = vadd.s32 %v2663, 536870912
        %v2665 = vshrl.u32 %v2664, 30
        %v2666 = vshll.u32 %v2665, 30
        %v2667 = vsub.s32 %v2663, %v2666
        %vm2668 = vcmp.lt.s32.totalorder %v2667, 0
        %v2669 = vsub.s32 0, %v2667
        %v2670 = vsel %vm2668, %v2669, %v2667
        %v2671 = vclz %v2670
        %v2672 = vsub.s32 %v2671, 2
        %vm2673 = vcmp.gt.s32.totalorder 0, %v2672
        %v2674 = vsel %vm2673, 0, %v2672
        %v2675 = vsub.s32 32, %v2674
        %v2676 = vshll.u32 %v2667, %v2674
        %v2677 = vshrl.u32 %v2659, %v2675
        %v2678 = vor.u32 %v2676, %v2677
        %v2679 = vsub.s32 4294967266, %v2674
        %v2680 = vadd.s32 %v2679, 127
        %v2681 = vshll.u32 %v2680, 23
        %v2682 = vor.u32 4788187, %v2681
        %v2683 = vand.u32 2147483647, %v2682
        %v2685 = vcvt.s32.f32 %v2678
        %v2686 = vmul.f32 %v2685, %v2683
        %v2687 = vxor.u32 %v2686, 2147483648
        %v2688 = vsel %vm2605, %v2687, %v2686
        %v2689 = vsub.s32 4, %v2665
        %v2690 = vsel %vm2605, %v2689, %v2665
        %v2691 = vsel %vm2604, %v1399, %v2688
        %v2692 = vsel %vm2604, 0, %v2690
        %v2693 = vcosq.f32.pop %v2691
        %v2694 = vsinq.f32.pop %v2691
        %vm2695 = vweird.f32 %v1399
        %v2696 = vadd.s32 %v2692, 3
        %v2697 = vand.u32 %v2696, 3
        %vm2698 = vcmp.lt.s32.totalorder %v2697, 2
        %vm2699 = vcmp.eq.s32.totalorder %v2697, 0
        %v2700 = vxor.u32 %v2694, 2147483648
        %v2701 = vsel %vm2699, %v2693, %v2700
        %vm2702 = vcmp.eq.s32.totalorder %v2697, 2
        %v2703 = vxor.u32 %v2693, 2147483648
        %v2704 = vsel %vm2702, %v2703, %v2694
        %v2705 = vsel %vm2698, %v2701, %v2704
        %v2706 = vsel %vm2695, nan, %v2705
        %v2707 = vand.u32 2147483647, %v1400
        %vm2708 = vcmp.le.f32.partialorder %v2707, 0.7853982
        %vm2709 = vcmp.lt.s32.totalorder %v1400, 0
        %v2710 = vand.u32 %v1400, 2139095040
        %v2711 = vshrl.u32 %v2710, 23
        %v2712 = vsub.s32 %v2711, 127
        %v2713 = vand.u32 2147483647, %v1400
        %v2714 = vand.u32 %v2713, 8388607
        %v2715 = vor.u32 %v2714, 8388608
        %v2716 = vsub.s32 0, %v2715
        %v2717 = vadd.s32 %v2712, 1
        %vm2718 = vcmp.gt.s32.totalorder %v2717, 0
        %v2719 = vsel %vm2718, %v2717, 0
        %v2720 = vshrl.u32 %v2719, 5
        %v2721 = vand.u32 %v2719, 31
        %v2722 = vsub.s32 32, %v2721
        %v2723 = vshrl.u32 683565275, %v2722
        %v2724 = vshll.u32 683565275, %v2721
        %v2725 = vshrl.u32 2475754826, %v2722
        %v2726 = vor.u32 %v2724, %v2725
        %v2727 = vshll.u32 2475754826, %v2721
        %v2728 = vshrl.u32 2131351028, %v2722
        %v2729 = vor.u32 %v2727, %v2728
        %v2730 = vshll.u32 2131351028, %v2721
        %v2731 = vshrl.u32 2102212464, %v2722
        %v2732 = vor.u32 %v2730, %v2731
        %v2733 = vshll.u32 2102212464, %v2721
        %v2734 = vshrl.u32 920167782, %v2722
        %v2735 = vor.u32 %v2733, %v2734
        %v2736 = vshll.u32 920167782, %v2721
        %v2737 = vshrl.u32 1326507024, %v2722
        %v2738 = vor.u32 %v2736, %v2737
        %vm2739 = vcmp.lt.s32.totalorder %v2720, 1
        %vm2740 = vcmp.lt.s32.totalorder %v2720, 2
        %vm2741 = vcmp.lt.s32.totalorder %v2720, 3
        %vm2742 = vcmp.lt.s32.totalorder %v2720, 4
        %v2743 = vsel %vm2739, %v2723, %v2726
        %v2744 = vsel %vm2742, %v2732, 2102212464
        %v2745 = vsel %vm2741, %v2729, %v2744
        %v2746 = vsel %vm2740, %v2743, %v2745
        %v2747 = vsel %vm2739, %v2726, %v2729
        %v2748 = vsel %vm2742, %v2735, 920167782
        %v2749 = vsel %vm2741, %v2732, %v2748
        %v2750 = vsel %vm2740, %v2747, %v2749
        %v2751 = vsel %vm2739, %v2729, %v2732
        %v2752 = vsel %vm2742, %v2738, 1326507024
        %v2753 = vsel %vm2741, %v2735, %v2752
        %v2754 = vsel %vm2740, %v2751, %v2753
        %v2755 = vshll.u32 %v2715, 8
        %v2756 = vmul.u32.u64.compose %v2755, %v2754
        %v2757 = vextract.low.u32 %v2756
        %v2758 = vextract.high.u32 %v2756
        %v2759 = vmul.u32.u64.compose %v2755, %v2750
        %v2760 = vextract.low.u32 %v2759
        %v2761 = vextract.high.u32 %v2759
        %v2762 = vmul.u32 %v2755, %v2746
        %v2763 = vadd.s32 %v2758, %v2760
        %vm2764 = vc.u32 %v2758, %v2760
        %v2765 = vadd.s32 %v2761, 1
        %v2766 = vsel %vm2764, %v2765, %v2761
        %v2767 = vadd.s32 %v2762, %v2766
        %v2768 = vadd.s32 %v2767, 536870912
        %v2769 = vshrl.u32 %v2768, 30
        %v2770 = vshll.u32 %v2769, 30
        %v2771 = vsub.s32 %v2767, %v2770
        %vm2772 = vcmp.lt.s32.totalorder %v2771, 0
        %v2773 = vsub.s32 0, %v2771
        %v2774 = vsel %vm2772, %v2773, %v2771
        %v2775 = vclz %v2774
        %v2776 = vsub.s32 %v2775, 2
        %vm2777 = vcmp.gt.s32.totalorder 0, %v2776
        %v2778 = vsel %vm2777, 0, %v2776
        %v2779 = vsub.s32 32, %v2778
        %v2780 = vshll.u32 %v2771, %v2778
        %v2781 = vshrl.u32 %v2763, %v2779
        %v2782 = vor.u32 %v2780, %v2781
        %v2783 = vsub.s32 4294967266, %v2778
        %v2784 = vadd.s32 %v2783, 127
        %v2785 = vshll.u32 %v2784, 23
        %v2786 = vor.u32 4788187, %v2785
        %v2787 = vand.u32 2147483647, %v2786
        %v2789 = vcvt.s32.f32 %v2782
        %v2790 = vmul.f32 %v2789, %v2787
        %v2791 = vxor.u32 %v2790, 2147483648
        %v2792 = vsel %vm2709, %v2791, %v2790
        %v2793 = vsub.s32 4, %v2769
        %v2794 = vsel %vm2709, %v2793, %v2769
        %v2795 = vsel %vm2708, %v1400, %v2792
        %v2796 = vsel %vm2708, 0, %v2794
        %v2797 = vcosq.f32.pop %v2795
        %v2798 = vsinq.f32.pop %v2795
        %vm2799 = vweird.f32 %v1400
        %v2800 = vadd.s32 %v2796, 3
        %v2801 = vand.u32 %v2800, 3
        %vm2802 = vcmp.lt.s32.totalorder %v2801, 2
        %vm2803 = vcmp.eq.s32.totalorder %v2801, 0
        %v2804 = vxor.u32 %v2798, 2147483648
        %v2805 = vsel %vm2803, %v2797, %v2804
        %vm2806 = vcmp.eq.s32.totalorder %v2801, 2
        %v2807 = vxor.u32 %v2797, 2147483648
        %v2808 = vsel %vm2806, %v2807, %v2798
        %v2809 = vsel %vm2802, %v2805, %v2808
        %v2810 = vsel %vm2799, nan, %v2809
        %v2811 = vand.u32 2147483647, %v1401
        %vm2812 = vcmp.le.f32.partialorder %v2811, 0.7853982
        %vm2813 = vcmp.lt.s32.totalorder %v1401, 0
        %v2814 = vand.u32 %v1401, 2139095040
        %v2815 = vshrl.u32 %v2814, 23
        %v2816 = vsub.s32 %v2815, 127
        %v2817 = vand.u32 2147483647, %v1401
        %v2818 = vand.u32 %v2817, 8388607
        %v2819 = vor.u32 %v2818, 8388608
        %v2820 = vsub.s32 0, %v2819
        %v2821 = vadd.s32 %v2816, 1
        %vm2822 = vcmp.gt.s32.totalorder %v2821, 0
        %v2823 = vsel %vm2822, %v2821, 0
        %v2824 = vshrl.u32 %v2823, 5
        %v2825 = vand.u32 %v2823, 31
        %v2826 = vsub.s32 32, %v2825
        %v2827 = vshrl.u32 683565275, %v2826
        %v2828 = vshll.u32 683565275, %v2825
        %v2829 = vshrl.u32 2475754826, %v2826
        %v2830 = vor.u32 %v2828, %v2829
        %v2831 = vshll.u32 2475754826, %v2825
        %v2832 = vshrl.u32 2131351028, %v2826
        %v2833 = vor.u32 %v2831, %v2832
        %v2834 = vshll.u32 2131351028, %v2825
        %v2835 = vshrl.u32 2102212464, %v2826
        %v2836 = vor.u32 %v2834, %v2835
        %v2837 = vshll.u32 2102212464, %v2825
        %v2838 = vshrl.u32 920167782, %v2826
        %v2839 = vor.u32 %v2837, %v2838
        %v2840 = vshll.u32 920167782, %v2825
        %v2841 = vshrl.u32 1326507024, %v2826
        %v2842 = vor.u32 %v2840, %v2841
        %vm2843 = vcmp.lt.s32.totalorder %v2824, 1
        %vm2844 = vcmp.lt.s32.totalorder %v2824, 2
        %vm2845 = vcmp.lt.s32.totalorder %v2824, 3
        %vm2846 = vcmp.lt.s32.totalorder %v2824, 4
        %v2847 = vsel %vm2843, %v2827, %v2830
        %v2848 = vsel %vm2846, %v2836, 2102212464
        %v2849 = vsel %vm2845, %v2833, %v2848
        %v2850 = vsel %vm2844, %v2847, %v2849
        %v2851 = vsel %vm2843, %v2830, %v2833
        %v2852 = vsel %vm2846, %v2839, 920167782
        %v2853 = vsel %vm2845, %v2836, %v2852
        %v2854 = vsel %vm2844, %v2851, %v2853
        %v2855 = vsel %vm2843, %v2833, %v2836
        %v2856 = vsel %vm2846, %v2842, 1326507024
        %v2857 = vsel %vm2845, %v2839, %v2856
        %v2858 = vsel %vm2844, %v2855, %v2857
        %v2859 = vshll.u32 %v2819, 8
        %v2860 = vmul.u32.u64.compose %v2859, %v2858
        %v2861 = vextract.low.u32 %v2860
        %v2862 = vextract.high.u32 %v2860
        %v2863 = vmul.u32.u64.compose %v2859, %v2854
        %v2864 = vextract.low.u32 %v2863
        %v2865 = vextract.high.u32 %v2863
        %v2866 = vmul.u32 %v2859, %v2850
        %v2867 = vadd.s32 %v2862, %v2864
        %vm2868 = vc.u32 %v2862, %v2864
        %v2869 = vadd.s32 %v2865, 1
        %v2870 = vsel %vm2868, %v2869, %v2865
        %v2871 = vadd.s32 %v2866, %v2870
        %v2872 = vadd.s32 %v2871, 536870912
        %v2873 = vshrl.u32 %v2872, 30
        %v2874 = vshll.u32 %v2873, 30
        %v2875 = vsub.s32 %v2871, %v2874
        %vm2876 = vcmp.lt.s32.totalorder %v2875, 0
        %v2877 = vsub.s32 0, %v2875
        %v2878 = vsel %vm2876, %v2877, %v2875
        %v2879 = vclz %v2878
        %v2880 = vsub.s32 %v2879, 2
        %vm2881 = vcmp.gt.s32.totalorder 0, %v2880
        %v2882 = vsel %vm2881, 0, %v2880
        %v2883 = vsub.s32 32, %v2882
        %v2884 = vshll.u32 %v2875, %v2882
        %v2885 = vshrl.u32 %v2867, %v2883
        %v2886 = vor.u32 %v2884, %v2885
        %v2887 = vsub.s32 4294967266, %v2882
        %v2888 = vadd.s32 %v2887, 127
        %v2889 = vshll.u32 %v2888, 23
        %v2890 = vor.u32 4788187, %v2889
        %v2891 = vand.u32 2147483647, %v2890
        %v2893 = vcvt.s32.f32 %v2886
        %v2894 = vmul.f32 %v2893, %v2891
        %v2895 = vxor.u32 %v2894, 2147483648
        %v2896 = vsel %vm2813, %v2895, %v2894
        %v2897 = vsub.s32 4, %v2873
        %v2898 = vsel %vm2813, %v2897, %v2873
        %v2899 = vsel %vm2812, %v1401, %v2896
        %v2900 = vsel %vm2812, 0, %v2898
        %v2901 = vcosq.f32.pop %v2899
        %v2902 = vsinq.f32.pop %v2899
        %vm2903 = vweird.f32 %v1401
        %v2904 = vadd.s32 %v2900, 3
        %v2905 = vand.u32 %v2904, 3
        %vm2906 = vcmp.lt.s32.totalorder %v2905, 2
        %vm2907 = vcmp.eq.s32.totalorder %v2905, 0
        %v2908 = vxor.u32 %v2902, 2147483648
        %v2909 = vsel %vm2907, %v2901, %v2908
        %vm2910 = vcmp.eq.s32.totalorder %v2905, 2
        %v2911 = vxor.u32 %v2901, 2147483648
        %v2912 = vsel %vm2910, %v2911, %v2902
        %v2913 = vsel %vm2906, %v2909, %v2912
        %v2914 = vsel %vm2903, nan, %v2913
        %v2915 = vand.u32 2147483647, %v1402
        %vm2916 = vcmp.le.f32.partialorder %v2915, 0.7853982
        %vm2917 = vcmp.lt.s32.totalorder %v1402, 0
        %v2918 = vand.u32 %v1402, 2139095040
        %v2919 = vshrl.u32 %v2918, 23
        %v2920 = vsub.s32 %v2919, 127
        %v2921 = vand.u32 2147483647, %v1402
        %v2922 = vand.u32 %v2921, 8388607
        %v2923 = vor.u32 %v2922, 8388608
        %v2924 = vsub.s32 0, %v2923
        %v2925 = vadd.s32 %v2920, 1
        %vm2926 = vcmp.gt.s32.totalorder %v2925, 0
        %v2927 = vsel %vm2926, %v2925, 0
        %v2928 = vshrl.u32 %v2927, 5
        %v2929 = vand.u32 %v2927, 31
        %v2930 = vsub.s32 32, %v2929
        %v2931 = vshrl.u32 683565275, %v2930
        %v2932 = vshll.u32 683565275, %v2929
        %v2933 = vshrl.u32 2475754826, %v2930
        %v2934 = vor.u32 %v2932, %v2933
        %v2935 = vshll.u32 2475754826, %v2929
        %v2936 = vshrl.u32 2131351028, %v2930
        %v2937 = vor.u32 %v2935, %v2936
        %v2938 = vshll.u32 2131351028, %v2929
        %v2939 = vshrl.u32 2102212464, %v2930
        %v2940 = vor.u32 %v2938, %v2939
        %v2941 = vshll.u32 2102212464, %v2929
        %v2942 = vshrl.u32 920167782, %v2930
        %v2943 = vor.u32 %v2941, %v2942
        %v2944 = vshll.u32 920167782, %v2929
        %v2945 = vshrl.u32 1326507024, %v2930
        %v2946 = vor.u32 %v2944, %v2945
        %vm2947 = vcmp.lt.s32.totalorder %v2928, 1
        %vm2948 = vcmp.lt.s32.totalorder %v2928, 2
        %vm2949 = vcmp.lt.s32.totalorder %v2928, 3
        %vm2950 = vcmp.lt.s32.totalorder %v2928, 4
        %v2951 = vsel %vm2947, %v2931, %v2934
        %v2952 = vsel %vm2950, %v2940, 2102212464
        %v2953 = vsel %vm2949, %v2937, %v2952
        %v2954 = vsel %vm2948, %v2951, %v2953
        %v2955 = vsel %vm2947, %v2934, %v2937
        %v2956 = vsel %vm2950, %v2943, 920167782
        %v2957 = vsel %vm2949, %v2940, %v2956
        %v2958 = vsel %vm2948, %v2955, %v2957
        %v2959 = vsel %vm2947, %v2937, %v2940
        %v2960 = vsel %vm2950, %v2946, 1326507024
        %v2961 = vsel %vm2949, %v2943, %v2960
        %v2962 = vsel %vm2948, %v2959, %v2961
        %v2963 = vshll.u32 %v2923, 8
        %v2964 = vmul.u32.u64.compose %v2963, %v2962
        %v2965 = vextract.low.u32 %v2964
        %v2966 = vextract.high.u32 %v2964
        %v2967 = vmul.u32.u64.compose %v2963, %v2958
        %v2968 = vextract.low.u32 %v2967
        %v2969 = vextract.high.u32 %v2967
        %v2970 = vmul.u32 %v2963, %v2954
        %v2971 = vadd.s32 %v2966, %v2968
        %vm2972 = vc.u32 %v2966, %v2968
        %v2973 = vadd.s32 %v2969, 1
        %v2974 = vsel %vm2972, %v2973, %v2969
        %v2975 = vadd.s32 %v2970, %v2974
        %v2976 = vadd.s32 %v2975, 536870912
        %v2977 = vshrl.u32 %v2976, 30
        %v2978 = vshll.u32 %v2977, 30
        %v2979 = vsub.s32 %v2975, %v2978
        %vm2980 = vcmp.lt.s32.totalorder %v2979, 0
        %v2981 = vsub.s32 0, %v2979
        %v2982 = vsel %vm2980, %v2981, %v2979
        %v2983 = vclz %v2982
        %v2984 = vsub.s32 %v2983, 2
        %vm2985 = vcmp.gt.s32.totalorder 0, %v2984
        %v2986 = vsel %vm2985, 0, %v2984
        %v2987 = vsub.s32 32, %v2986
        %v2988 = vshll.u32 %v2979, %v2986
        %v2989 = vshrl.u32 %v2971, %v2987
        %v2990 = vor.u32 %v2988, %v2989
        %v2991 = vsub.s32 4294967266, %v2986
        %v2992 = vadd.s32 %v2991, 127
        %v2993 = vshll.u32 %v2992, 23
        %v2994 = vor.u32 4788187, %v2993
        %v2995 = vand.u32 2147483647, %v2994
        %v2997 = vcvt.s32.f32 %v2990
        %v2998 = vmul.f32 %v2997, %v2995
        %v2999 = vxor.u32 %v2998, 2147483648
        %v3000 = vsel %vm2917, %v2999, %v2998
        %v3001 = vsub.s32 4, %v2977
        %v3002 = vsel %vm2917, %v3001, %v2977
        %v3003 = vsel %vm2916, %v1402, %v3000
        %v3004 = vsel %vm2916, 0, %v3002
        %v3005 = vcosq.f32.pop %v3003
        %v3006 = vsinq.f32.pop %v3003
        %vm3007 = vweird.f32 %v1402
        %v3008 = vadd.s32 %v3004, 3
        %v3009 = vand.u32 %v3008, 3
        %vm3010 = vcmp.lt.s32.totalorder %v3009, 2
        %vm3011 = vcmp.eq.s32.totalorder %v3009, 0
        %v3012 = vxor.u32 %v3006, 2147483648
        %v3013 = vsel %vm3011, %v3005, %v3012
        %vm3014 = vcmp.eq.s32.totalorder %v3009, 2
        %v3015 = vxor.u32 %v3005, 2147483648
        %v3016 = vsel %vm3014, %v3015, %v3006
        %v3017 = vsel %vm3010, %v3013, %v3016
        %v3018 = vsel %vm3007, nan, %v3017
        %v3019 = vand.u32 2147483647, %v1403
        %vm3020 = vcmp.le.f32.partialorder %v3019, 0.7853982
        %vm3021 = vcmp.lt.s32.totalorder %v1403, 0
        %v3022 = vand.u32 %v1403, 2139095040
        %v3023 = vshrl.u32 %v3022, 23
        %v3024 = vsub.s32 %v3023, 127
        %v3025 = vand.u32 2147483647, %v1403
        %v3026 = vand.u32 %v3025, 8388607
        %v3027 = vor.u32 %v3026, 8388608
        %v3028 = vsub.s32 0, %v3027
        %v3029 = vadd.s32 %v3024, 1
        %vm3030 = vcmp.gt.s32.totalorder %v3029, 0
        %v3031 = vsel %vm3030, %v3029, 0
        %v3032 = vshrl.u32 %v3031, 5
        %v3033 = vand.u32 %v3031, 31
        %v3034 = vsub.s32 32, %v3033
        %v3035 = vshrl.u32 683565275, %v3034
        %v3036 = vshll.u32 683565275, %v3033
        %v3037 = vshrl.u32 2475754826, %v3034
        %v3038 = vor.u32 %v3036, %v3037
        %v3039 = vshll.u32 2475754826, %v3033
        %v3040 = vshrl.u32 2131351028, %v3034
        %v3041 = vor.u32 %v3039, %v3040
        %v3042 = vshll.u32 2131351028, %v3033
        %v3043 = vshrl.u32 2102212464, %v3034
        %v3044 = vor.u32 %v3042, %v3043
        %v3045 = vshll.u32 2102212464, %v3033
        %v3046 = vshrl.u32 920167782, %v3034
        %v3047 = vor.u32 %v3045, %v3046
        %v3048 = vshll.u32 920167782, %v3033
        %v3049 = vshrl.u32 1326507024, %v3034
        %v3050 = vor.u32 %v3048, %v3049
        %vm3051 = vcmp.lt.s32.totalorder %v3032, 1
        %vm3052 = vcmp.lt.s32.totalorder %v3032, 2
        %vm3053 = vcmp.lt.s32.totalorder %v3032, 3
        %vm3054 = vcmp.lt.s32.totalorder %v3032, 4
        %v3055 = vsel %vm3051, %v3035, %v3038
        %v3056 = vsel %vm3054, %v3044, 2102212464
        %v3057 = vsel %vm3053, %v3041, %v3056
        %v3058 = vsel %vm3052, %v3055, %v3057
        %v3059 = vsel %vm3051, %v3038, %v3041
        %v3060 = vsel %vm3054, %v3047, 920167782
        %v3061 = vsel %vm3053, %v3044, %v3060
        %v3062 = vsel %vm3052, %v3059, %v3061
        %v3063 = vsel %vm3051, %v3041, %v3044
        %v3064 = vsel %vm3054, %v3050, 1326507024
        %v3065 = vsel %vm3053, %v3047, %v3064
        %v3066 = vsel %vm3052, %v3063, %v3065
        %v3067 = vshll.u32 %v3027, 8
        %v3068 = vmul.u32.u64.compose %v3067, %v3066
        %v3069 = vextract.low.u32 %v3068
        %v3070 = vextract.high.u32 %v3068
        %v3071 = vmul.u32.u64.compose %v3067, %v3062
        %v3072 = vextract.low.u32 %v3071
        %v3073 = vextract.high.u32 %v3071
        %v3074 = vmul.u32 %v3067, %v3058
        %v3075 = vadd.s32 %v3070, %v3072
        %vm3076 = vc.u32 %v3070, %v3072
        %v3077 = vadd.s32 %v3073, 1
        %v3078 = vsel %vm3076, %v3077, %v3073
        %v3079 = vadd.s32 %v3074, %v3078
        %v3080 = vadd.s32 %v3079, 536870912
        %v3081 = vshrl.u32 %v3080, 30
        %v3082 = vshll.u32 %v3081, 30
        %v3083 = vsub.s32 %v3079, %v3082
        %vm3084 = vcmp.lt.s32.totalorder %v3083, 0
        %v3085 = vsub.s32 0, %v3083
        %v3086 = vsel %vm3084, %v3085, %v3083
        %v3087 = vclz %v3086
        %v3088 = vsub.s32 %v3087, 2
        %vm3089 = vcmp.gt.s32.totalorder 0, %v3088
        %v3090 = vsel %vm3089, 0, %v3088
        %v3091 = vsub.s32 32, %v3090
        %v3092 = vshll.u32 %v3083, %v3090
        %v3093 = vshrl.u32 %v3075, %v3091
        %v3094 = vor.u32 %v3092, %v3093
        %v3095 = vsub.s32 4294967266, %v3090
        %v3096 = vadd.s32 %v3095, 127
        %v3097 = vshll.u32 %v3096, 23
        %v3098 = vor.u32 4788187, %v3097
        %v3099 = vand.u32 2147483647, %v3098
        %v3101 = vcvt.s32.f32 %v3094
        %v3102 = vmul.f32 %v3101, %v3099
        %v3103 = vxor.u32 %v3102, 2147483648
        %v3104 = vsel %vm3021, %v3103, %v3102
        %v3105 = vsub.s32 4, %v3081
        %v3106 = vsel %vm3021, %v3105, %v3081
        %v3107 = vsel %vm3020, %v1403, %v3104
        %v3108 = vsel %vm3020, 0, %v3106
        %v3109 = vcosq.f32.pop %v3107
        %v3110 = vsinq.f32.pop %v3107
        %vm3111 = vweird.f32 %v1403
        %v3112 = vadd.s32 %v3108, 3
        %v3113 = vand.u32 %v3112, 3
        %vm3114 = vcmp.lt.s32.totalorder %v3113, 2
        %vm3115 = vcmp.eq.s32.totalorder %v3113, 0
        %v3116 = vxor.u32 %v3110, 2147483648
        %v3117 = vsel %vm3115, %v3109, %v3116
        %vm3118 = vcmp.eq.s32.totalorder %v3113, 2
        %v3119 = vxor.u32 %v3109, 2147483648
        %v3120 = vsel %vm3118, %v3119, %v3110
        %v3121 = vsel %vm3114, %v3117, %v3120
        %v3122 = vsel %vm3111, nan, %v3121
        %v3123 = vand.u32 2147483647, %v1404
        %vm3124 = vcmp.le.f32.partialorder %v3123, 0.7853982
        %vm3125 = vcmp.lt.s32.totalorder %v1404, 0
        %v3126 = vand.u32 %v1404, 2139095040
        %v3127 = vshrl.u32 %v3126, 23
        %v3128 = vsub.s32 %v3127, 127
        %v3129 = vand.u32 2147483647, %v1404
        %v3130 = vand.u32 %v3129, 8388607
        %v3131 = vor.u32 %v3130, 8388608
        %v3132 = vsub.s32 0, %v3131
        %v3133 = vadd.s32 %v3128, 1
        %vm3134 = vcmp.gt.s32.totalorder %v3133, 0
        %v3135 = vsel %vm3134, %v3133, 0
        %v3136 = vshrl.u32 %v3135, 5
        %v3137 = vand.u32 %v3135, 31
        %v3138 = vsub.s32 32, %v3137
        %v3139 = vshrl.u32 683565275, %v3138
        %v3140 = vshll.u32 683565275, %v3137
        %v3141 = vshrl.u32 2475754826, %v3138
        %v3142 = vor.u32 %v3140, %v3141
        %v3143 = vshll.u32 2475754826, %v3137
        %v3144 = vshrl.u32 2131351028, %v3138
        %v3145 = vor.u32 %v3143, %v3144
        %v3146 = vshll.u32 2131351028, %v3137
        %v3147 = vshrl.u32 2102212464, %v3138
        %v3148 = vor.u32 %v3146, %v3147
        %v3149 = vshll.u32 2102212464, %v3137
        %v3150 = vshrl.u32 920167782, %v3138
        %v3151 = vor.u32 %v3149, %v3150
        %v3152 = vshll.u32 920167782, %v3137
        %v3153 = vshrl.u32 1326507024, %v3138
        %v3154 = vor.u32 %v3152, %v3153
        %vm3155 = vcmp.lt.s32.totalorder %v3136, 1
        %vm3156 = vcmp.lt.s32.totalorder %v3136, 2
        %vm3157 = vcmp.lt.s32.totalorder %v3136, 3
        %vm3158 = vcmp.lt.s32.totalorder %v3136, 4
        %v3159 = vsel %vm3155, %v3139, %v3142
        %v3160 = vsel %vm3158, %v3148, 2102212464
        %v3161 = vsel %vm3157, %v3145, %v3160
        %v3162 = vsel %vm3156, %v3159, %v3161
        %v3163 = vsel %vm3155, %v3142, %v3145
        %v3164 = vsel %vm3158, %v3151, 920167782
        %v3165 = vsel %vm3157, %v3148, %v3164
        %v3166 = vsel %vm3156, %v3163, %v3165
        %v3167 = vsel %vm3155, %v3145, %v3148
        %v3168 = vsel %vm3158, %v3154, 1326507024
        %v3169 = vsel %vm3157, %v3151, %v3168
        %v3170 = vsel %vm3156, %v3167, %v3169
        %v3171 = vshll.u32 %v3131, 8
        %v3172 = vmul.u32.u64.compose %v3171, %v3170
        %v3173 = vextract.low.u32 %v3172
        %v3174 = vextract.high.u32 %v3172
        %v3175 = vmul.u32.u64.compose %v3171, %v3166
        %v3176 = vextract.low.u32 %v3175
        %v3177 = vextract.high.u32 %v3175
        %v3178 = vmul.u32 %v3171, %v3162
        %v3179 = vadd.s32 %v3174, %v3176
        %vm3180 = vc.u32 %v3174, %v3176
        %v3181 = vadd.s32 %v3177, 1
        %v3182 = vsel %vm3180, %v3181, %v3177
        %v3183 = vadd.s32 %v3178, %v3182
        %v3184 = vadd.s32 %v3183, 536870912
        %v3185 = vshrl.u32 %v3184, 30
        %v3186 = vshll.u32 %v3185, 30
        %v3187 = vsub.s32 %v3183, %v3186
        %vm3188 = vcmp.lt.s32.totalorder %v3187, 0
        %v3189 = vsub.s32 0, %v3187
        %v3190 = vsel %vm3188, %v3189, %v3187
        %v3191 = vclz %v3190
        %v3192 = vsub.s32 %v3191, 2
        %vm3193 = vcmp.gt.s32.totalorder 0, %v3192
        %v3194 = vsel %vm3193, 0, %v3192
        %v3195 = vsub.s32 32, %v3194
        %v3196 = vshll.u32 %v3187, %v3194
        %v3197 = vshrl.u32 %v3179, %v3195
        %v3198 = vor.u32 %v3196, %v3197
        %v3199 = vsub.s32 4294967266, %v3194
        %v3200 = vadd.s32 %v3199, 127
        %v3201 = vshll.u32 %v3200, 23
        %v3202 = vor.u32 4788187, %v3201
        %v3203 = vand.u32 2147483647, %v3202
        %v3205 = vcvt.s32.f32 %v3198
        %v3206 = vmul.f32 %v3205, %v3203
        %v3207 = vxor.u32 %v3206, 2147483648
        %v3208 = vsel %vm3125, %v3207, %v3206
        %v3209 = vsub.s32 4, %v3185
        %v3210 = vsel %vm3125, %v3209, %v3185
        %v3211 = vsel %vm3124, %v1404, %v3208
        %v3212 = vsel %vm3124, 0, %v3210
        %v3213 = vcosq.f32.pop %v3211
        %v3214 = vsinq.f32.pop %v3211
        %vm3215 = vweird.f32 %v1404
        %v3216 = vadd.s32 %v3212, 3
        %v3217 = vand.u32 %v3216, 3
        %vm3218 = vcmp.lt.s32.totalorder %v3217, 2
        %vm3219 = vcmp.eq.s32.totalorder %v3217, 0
        %v3220 = vxor.u32 %v3214, 2147483648
        %v3221 = vsel %vm3219, %v3213, %v3220
        %vm3222 = vcmp.eq.s32.totalorder %v3217, 2
        %v3223 = vxor.u32 %v3213, 2147483648
        %v3224 = vsel %vm3222, %v3223, %v3214
        %v3225 = vsel %vm3218, %v3221, %v3224
        %v3226 = vsel %vm3215, nan, %v3225
        %v3227 = vand.u32 2147483647, %v1405
        %vm3228 = vcmp.le.f32.partialorder %v3227, 0.7853982
        %vm3229 = vcmp.lt.s32.totalorder %v1405, 0
        %v3230 = vand.u32 %v1405, 2139095040
        %v3231 = vshrl.u32 %v3230, 23
        %v3232 = vsub.s32 %v3231, 127
        %v3233 = vand.u32 2147483647, %v1405
        %v3234 = vand.u32 %v3233, 8388607
        %v3235 = vor.u32 %v3234, 8388608
        %v3236 = vsub.s32 0, %v3235
        %v3237 = vadd.s32 %v3232, 1
        %vm3238 = vcmp.gt.s32.totalorder %v3237, 0
        %v3239 = vsel %vm3238, %v3237, 0
        %v3240 = vshrl.u32 %v3239, 5
        %v3241 = vand.u32 %v3239, 31
        %v3242 = vsub.s32 32, %v3241
        %v3243 = vshrl.u32 683565275, %v3242
        %v3244 = vshll.u32 683565275, %v3241
        %v3245 = vshrl.u32 2475754826, %v3242
        %v3246 = vor.u32 %v3244, %v3245
        %v3247 = vshll.u32 2475754826, %v3241
        %v3248 = vshrl.u32 2131351028, %v3242
        %v3249 = vor.u32 %v3247, %v3248
        %v3250 = vshll.u32 2131351028, %v3241
        %v3251 = vshrl.u32 2102212464, %v3242
        %v3252 = vor.u32 %v3250, %v3251
        %v3253 = vshll.u32 2102212464, %v3241
        %v3254 = vshrl.u32 920167782, %v3242
        %v3255 = vor.u32 %v3253, %v3254
        %v3256 = vshll.u32 920167782, %v3241
        %v3257 = vshrl.u32 1326507024, %v3242
        %v3258 = vor.u32 %v3256, %v3257
        %vm3259 = vcmp.lt.s32.totalorder %v3240, 1
        %vm3260 = vcmp.lt.s32.totalorder %v3240, 2
        %vm3261 = vcmp.lt.s32.totalorder %v3240, 3
        %vm3262 = vcmp.lt.s32.totalorder %v3240, 4
        %v3263 = vsel %vm3259, %v3243, %v3246
        %v3264 = vsel %vm3262, %v3252, 2102212464
        %v3265 = vsel %vm3261, %v3249, %v3264
        %v3266 = vsel %vm3260, %v3263, %v3265
        %v3267 = vsel %vm3259, %v3246, %v3249
        %v3268 = vsel %vm3262, %v3255, 920167782
        %v3269 = vsel %vm3261, %v3252, %v3268
        %v3270 = vsel %vm3260, %v3267, %v3269
        %v3271 = vsel %vm3259, %v3249, %v3252
        %v3272 = vsel %vm3262, %v3258, 1326507024
        %v3273 = vsel %vm3261, %v3255, %v3272
        %v3274 = vsel %vm3260, %v3271, %v3273
        %v3275 = vshll.u32 %v3235, 8
        %v3276 = vmul.u32.u64.compose %v3275, %v3274
        %v3277 = vextract.low.u32 %v3276
        %v3278 = vextract.high.u32 %v3276
        %v3279 = vmul.u32.u64.compose %v3275, %v3270
        %v3280 = vextract.low.u32 %v3279
        %v3281 = vextract.high.u32 %v3279
        %v3282 = vmul.u32 %v3275, %v3266
        %v3283 = vadd.s32 %v3278, %v3280
        %vm3284 = vc.u32 %v3278, %v3280
        %v3285 = vadd.s32 %v3281, 1
        %v3286 = vsel %vm3284, %v3285, %v3281
        %v3287 = vadd.s32 %v3282, %v3286
        %v3288 = vadd.s32 %v3287, 536870912
        %v3289 = vshrl.u32 %v3288, 30
        %v3290 = vshll.u32 %v3289, 30
        %v3291 = vsub.s32 %v3287, %v3290
        %vm3292 = vcmp.lt.s32.totalorder %v3291, 0
        %v3293 = vsub.s32 0, %v3291
        %v3294 = vsel %vm3292, %v3293, %v3291
        %v3295 = vclz %v3294
        %v3296 = vsub.s32 %v3295, 2
        %vm3297 = vcmp.gt.s32.totalorder 0, %v3296
        %v3298 = vsel %vm3297, 0, %v3296
        %v3299 = vsub.s32 32, %v3298
        %v3300 = vshll.u32 %v3291, %v3298
        %v3301 = vshrl.u32 %v3283, %v3299
        %v3302 = vor.u32 %v3300, %v3301
        %v3303 = vsub.s32 4294967266, %v3298
        %v3304 = vadd.s32 %v3303, 127
        %v3305 = vshll.u32 %v3304, 23
        %v3306 = vor.u32 4788187, %v3305
        %v3307 = vand.u32 2147483647, %v3306
        %v3309 = vcvt.s32.f32 %v3302
        %v3310 = vmul.f32 %v3309, %v3307
        %v3311 = vxor.u32 %v3310, 2147483648
        %v3312 = vsel %vm3229, %v3311, %v3310
        %v3313 = vsub.s32 4, %v3289
        %v3314 = vsel %vm3229, %v3313, %v3289
        %v3315 = vsel %vm3228, %v1405, %v3312
        %v3316 = vsel %vm3228, 0, %v3314
        %v3317 = vcosq.f32.pop %v3315
        %v3318 = vsinq.f32.pop %v3315
        %vm3319 = vweird.f32 %v1405
        %v3320 = vadd.s32 %v3316, 3
        %v3321 = vand.u32 %v3320, 3
        %vm3322 = vcmp.lt.s32.totalorder %v3321, 2
        %vm3323 = vcmp.eq.s32.totalorder %v3321, 0
        %v3324 = vxor.u32 %v3318, 2147483648
        %v3325 = vsel %vm3323, %v3317, %v3324
        %vm3326 = vcmp.eq.s32.totalorder %v3321, 2
        %v3327 = vxor.u32 %v3317, 2147483648
        %v3328 = vsel %vm3326, %v3327, %v3318
        %v3329 = vsel %vm3322, %v3325, %v3328
        %v3330 = vsel %vm3319, nan, %v3329
        %v3331 = vand.u32 2147483647, %v1406
        %vm3332 = vcmp.le.f32.partialorder %v3331, 0.7853982
        %vm3333 = vcmp.lt.s32.totalorder %v1406, 0
        %v3334 = vand.u32 %v1406, 2139095040
        %v3335 = vshrl.u32 %v3334, 23
        %v3336 = vsub.s32 %v3335, 127
        %v3337 = vand.u32 2147483647, %v1406
        %v3338 = vand.u32 %v3337, 8388607
        %v3339 = vor.u32 %v3338, 8388608
        %v3340 = vsub.s32 0, %v3339
        %v3341 = vadd.s32 %v3336, 1
        %vm3342 = vcmp.gt.s32.totalorder %v3341, 0
        %v3343 = vsel %vm3342, %v3341, 0
        %v3344 = vshrl.u32 %v3343, 5
        %v3345 = vand.u32 %v3343, 31
        %v3346 = vsub.s32 32, %v3345
        %v3347 = vshrl.u32 683565275, %v3346
        %v3348 = vshll.u32 683565275, %v3345
        %v3349 = vshrl.u32 2475754826, %v3346
        %v3350 = vor.u32 %v3348, %v3349
        %v3351 = vshll.u32 2475754826, %v3345
        %v3352 = vshrl.u32 2131351028, %v3346
        %v3353 = vor.u32 %v3351, %v3352
        %v3354 = vshll.u32 2131351028, %v3345
        %v3355 = vshrl.u32 2102212464, %v3346
        %v3356 = vor.u32 %v3354, %v3355
        %v3357 = vshll.u32 2102212464, %v3345
        %v3358 = vshrl.u32 920167782, %v3346
        %v3359 = vor.u32 %v3357, %v3358
        %v3360 = vshll.u32 920167782, %v3345
        %v3361 = vshrl.u32 1326507024, %v3346
        %v3362 = vor.u32 %v3360, %v3361
        %vm3363 = vcmp.lt.s32.totalorder %v3344, 1
        %vm3364 = vcmp.lt.s32.totalorder %v3344, 2
        %vm3365 = vcmp.lt.s32.totalorder %v3344, 3
        %vm3366 = vcmp.lt.s32.totalorder %v3344, 4
        %v3367 = vsel %vm3363, %v3347, %v3350
        %v3368 = vsel %vm3366, %v3356, 2102212464
        %v3369 = vsel %vm3365, %v3353, %v3368
        %v3370 = vsel %vm3364, %v3367, %v3369
        %v3371 = vsel %vm3363, %v3350, %v3353
        %v3372 = vsel %vm3366, %v3359, 920167782
        %v3373 = vsel %vm3365, %v3356, %v3372
        %v3374 = vsel %vm3364, %v3371, %v3373
        %v3375 = vsel %vm3363, %v3353, %v3356
        %v3376 = vsel %vm3366, %v3362, 1326507024
        %v3377 = vsel %vm3365, %v3359, %v3376
        %v3378 = vsel %vm3364, %v3375, %v3377
        %v3379 = vshll.u32 %v3339, 8
        %v3380 = vmul.u32.u64.compose %v3379, %v3378
        %v3381 = vextract.low.u32 %v3380
        %v3382 = vextract.high.u32 %v3380
        %v3383 = vmul.u32.u64.compose %v3379, %v3374
        %v3384 = vextract.low.u32 %v3383
        %v3385 = vextract.high.u32 %v3383
        %v3386 = vmul.u32 %v3379, %v3370
        %v3387 = vadd.s32 %v3382, %v3384
        %vm3388 = vc.u32 %v3382, %v3384
        %v3389 = vadd.s32 %v3385, 1
        %v3390 = vsel %vm3388, %v3389, %v3385
        %v3391 = vadd.s32 %v3386, %v3390
        %v3392 = vadd.s32 %v3391, 536870912
        %v3393 = vshrl.u32 %v3392, 30
        %v3394 = vshll.u32 %v3393, 30
        %v3395 = vsub.s32 %v3391, %v3394
        %vm3396 = vcmp.lt.s32.totalorder %v3395, 0
        %v3397 = vsub.s32 0, %v3395
        %v3398 = vsel %vm3396, %v3397, %v3395
        %v3399 = vclz %v3398
        %v3400 = vsub.s32 %v3399, 2
        %vm3401 = vcmp.gt.s32.totalorder 0, %v3400
        %v3402 = vsel %vm3401, 0, %v3400
        %v3403 = vsub.s32 32, %v3402
        %v3404 = vshll.u32 %v3395, %v3402
        %v3405 = vshrl.u32 %v3387, %v3403
        %v3406 = vor.u32 %v3404, %v3405
        %v3407 = vsub.s32 4294967266, %v3402
        %v3408 = vadd.s32 %v3407, 127
        %v3409 = vshll.u32 %v3408, 23
        %v3410 = vor.u32 4788187, %v3409
        %v3411 = vand.u32 2147483647, %v3410
        %v3413 = vcvt.s32.f32 %v3406
        %v3414 = vmul.f32 %v3413, %v3411
        %v3415 = vxor.u32 %v3414, 2147483648
        %v3416 = vsel %vm3333, %v3415, %v3414
        %v3417 = vsub.s32 4, %v3393
        %v3418 = vsel %vm3333, %v3417, %v3393
        %v3419 = vsel %vm3332, %v1406, %v3416
        %v3420 = vsel %vm3332, 0, %v3418
        %v3421 = vcosq.f32.pop %v3419
        %v3422 = vsinq.f32.pop %v3419
        %vm3423 = vweird.f32 %v1406
        %v3424 = vadd.s32 %v3420, 3
        %v3425 = vand.u32 %v3424, 3
        %vm3426 = vcmp.lt.s32.totalorder %v3425, 2
        %vm3427 = vcmp.eq.s32.totalorder %v3425, 0
        %v3428 = vxor.u32 %v3422, 2147483648
        %v3429 = vsel %vm3427, %v3421, %v3428
        %vm3430 = vcmp.eq.s32.totalorder %v3425, 2
        %v3431 = vxor.u32 %v3421, 2147483648
        %v3432 = vsel %vm3430, %v3431, %v3422
        %v3433 = vsel %vm3426, %v3429, %v3432
        %v3434 = vsel %vm3423, nan, %v3433
        %v3435 = vand.u32 2147483647, %v1407
        %vm3436 = vcmp.le.f32.partialorder %v3435, 0.7853982
        %vm3437 = vcmp.lt.s32.totalorder %v1407, 0
        %v3438 = vand.u32 %v1407, 2139095040
        %v3439 = vshrl.u32 %v3438, 23
        %v3440 = vsub.s32 %v3439, 127
        %v3441 = vand.u32 2147483647, %v1407
        %v3442 = vand.u32 %v3441, 8388607
        %v3443 = vor.u32 %v3442, 8388608
        %v3444 = vsub.s32 0, %v3443
        %v3445 = vadd.s32 %v3440, 1
        %vm3446 = vcmp.gt.s32.totalorder %v3445, 0
        %v3447 = vsel %vm3446, %v3445, 0
        %v3448 = vshrl.u32 %v3447, 5
        %v3449 = vand.u32 %v3447, 31
        %v3450 = vsub.s32 32, %v3449
        %v3451 = vshrl.u32 683565275, %v3450
        %v3452 = vshll.u32 683565275, %v3449
        %v3453 = vshrl.u32 2475754826, %v3450
        %v3454 = vor.u32 %v3452, %v3453
        %v3455 = vshll.u32 2475754826, %v3449
        %v3456 = vshrl.u32 2131351028, %v3450
        %v3457 = vor.u32 %v3455, %v3456
        %v3458 = vshll.u32 2131351028, %v3449
        %v3459 = vshrl.u32 2102212464, %v3450
        %v3460 = vor.u32 %v3458, %v3459
        %v3461 = vshll.u32 2102212464, %v3449
        %v3462 = vshrl.u32 920167782, %v3450
        %v3463 = vor.u32 %v3461, %v3462
        %v3464 = vshll.u32 920167782, %v3449
        %v3465 = vshrl.u32 1326507024, %v3450
        %v3466 = vor.u32 %v3464, %v3465
        %vm3467 = vcmp.lt.s32.totalorder %v3448, 1
        %vm3468 = vcmp.lt.s32.totalorder %v3448, 2
        %vm3469 = vcmp.lt.s32.totalorder %v3448, 3
        %vm3470 = vcmp.lt.s32.totalorder %v3448, 4
        %v3471 = vsel %vm3467, %v3451, %v3454
        %v3472 = vsel %vm3470, %v3460, 2102212464
        %v3473 = vsel %vm3469, %v3457, %v3472
        %v3474 = vsel %vm3468, %v3471, %v3473
        %v3475 = vsel %vm3467, %v3454, %v3457
        %v3476 = vsel %vm3470, %v3463, 920167782
        %v3477 = vsel %vm3469, %v3460, %v3476
        %v3478 = vsel %vm3468, %v3475, %v3477
        %v3479 = vsel %vm3467, %v3457, %v3460
        %v3480 = vsel %vm3470, %v3466, 1326507024
        %v3481 = vsel %vm3469, %v3463, %v3480
        %v3482 = vsel %vm3468, %v3479, %v3481
        %v3483 = vshll.u32 %v3443, 8
        %v3484 = vmul.u32.u64.compose %v3483, %v3482
        %v3485 = vextract.low.u32 %v3484
        %v3486 = vextract.high.u32 %v3484
        %v3487 = vmul.u32.u64.compose %v3483, %v3478
        %v3488 = vextract.low.u32 %v3487
        %v3489 = vextract.high.u32 %v3487
        %v3490 = vmul.u32 %v3483, %v3474
        %v3491 = vadd.s32 %v3486, %v3488
        %vm3492 = vc.u32 %v3486, %v3488
        %v3493 = vadd.s32 %v3489, 1
        %v3494 = vsel %vm3492, %v3493, %v3489
        %v3495 = vadd.s32 %v3490, %v3494
        %v3496 = vadd.s32 %v3495, 536870912
        %v3497 = vshrl.u32 %v3496, 30
        %v3498 = vshll.u32 %v3497, 30
        %v3499 = vsub.s32 %v3495, %v3498
        %vm3500 = vcmp.lt.s32.totalorder %v3499, 0
        %v3501 = vsub.s32 0, %v3499
        %v3502 = vsel %vm3500, %v3501, %v3499
        %v3503 = vclz %v3502
        %v3504 = vsub.s32 %v3503, 2
        %vm3505 = vcmp.gt.s32.totalorder 0, %v3504
        %v3506 = vsel %vm3505, 0, %v3504
        %v3507 = vsub.s32 32, %v3506
        %v3508 = vshll.u32 %v3499, %v3506
        %v3509 = vshrl.u32 %v3491, %v3507
        %v3510 = vor.u32 %v3508, %v3509
        %v3511 = vsub.s32 4294967266, %v3506
        %v3512 = vadd.s32 %v3511, 127
        %v3513 = vshll.u32 %v3512, 23
        %v3514 = vor.u32 4788187, %v3513
        %v3515 = vand.u32 2147483647, %v3514
        %v3517 = vcvt.s32.f32 %v3510
        %v3518 = vmul.f32 %v3517, %v3515
        %v3519 = vxor.u32 %v3518, 2147483648
        %v3520 = vsel %vm3437, %v3519, %v3518
        %v3521 = vsub.s32 4, %v3497
        %v3522 = vsel %vm3437, %v3521, %v3497
        %v3523 = vsel %vm3436, %v1407, %v3520
        %v3524 = vsel %vm3436, 0, %v3522
        %v3525 = vcosq.f32.pop %v3523
        %v3526 = vsinq.f32.pop %v3523
        %vm3527 = vweird.f32 %v1407
        %v3528 = vadd.s32 %v3524, 3
        %v3529 = vand.u32 %v3528, 3
        %vm3530 = vcmp.lt.s32.totalorder %v3529, 2
        %vm3531 = vcmp.eq.s32.totalorder %v3529, 0
        %v3532 = vxor.u32 %v3526, 2147483648
        %v3533 = vsel %vm3531, %v3525, %v3532
        %vm3534 = vcmp.eq.s32.totalorder %v3529, 2
        %v3535 = vxor.u32 %v3525, 2147483648
        %v3536 = vsel %vm3534, %v3535, %v3526
        %v3537 = vsel %vm3530, %v3533, %v3536
        %v3538 = vsel %vm3527, nan, %v3537
        %v3539 = vand.u32 2147483647, %v1408
        %vm3540 = vcmp.le.f32.partialorder %v3539, 0.7853982
        %vm3541 = vcmp.lt.s32.totalorder %v1408, 0
        %v3542 = vand.u32 %v1408, 2139095040
        %v3543 = vshrl.u32 %v3542, 23
        %v3544 = vsub.s32 %v3543, 127
        %v3545 = vand.u32 2147483647, %v1408
        %v3546 = vand.u32 %v3545, 8388607
        %v3547 = vor.u32 %v3546, 8388608
        %v3548 = vsub.s32 0, %v3547
        %v3549 = vadd.s32 %v3544, 1
        %vm3550 = vcmp.gt.s32.totalorder %v3549, 0
        %v3551 = vsel %vm3550, %v3549, 0
        %v3552 = vshrl.u32 %v3551, 5
        %v3553 = vand.u32 %v3551, 31
        %v3554 = vsub.s32 32, %v3553
        %v3555 = vshrl.u32 683565275, %v3554
        %v3556 = vshll.u32 683565275, %v3553
        %v3557 = vshrl.u32 2475754826, %v3554
        %v3558 = vor.u32 %v3556, %v3557
        %v3559 = vshll.u32 2475754826, %v3553
        %v3560 = vshrl.u32 2131351028, %v3554
        %v3561 = vor.u32 %v3559, %v3560
        %v3562 = vshll.u32 2131351028, %v3553
        %v3563 = vshrl.u32 2102212464, %v3554
        %v3564 = vor.u32 %v3562, %v3563
        %v3565 = vshll.u32 2102212464, %v3553
        %v3566 = vshrl.u32 920167782, %v3554
        %v3567 = vor.u32 %v3565, %v3566
        %v3568 = vshll.u32 920167782, %v3553
        %v3569 = vshrl.u32 1326507024, %v3554
        %v3570 = vor.u32 %v3568, %v3569
        %vm3571 = vcmp.lt.s32.totalorder %v3552, 1
        %vm3572 = vcmp.lt.s32.totalorder %v3552, 2
        %vm3573 = vcmp.lt.s32.totalorder %v3552, 3
        %vm3574 = vcmp.lt.s32.totalorder %v3552, 4
        %v3575 = vsel %vm3571, %v3555, %v3558
        %v3576 = vsel %vm3574, %v3564, 2102212464
        %v3577 = vsel %vm3573, %v3561, %v3576
        %v3578 = vsel %vm3572, %v3575, %v3577
        %v3579 = vsel %vm3571, %v3558, %v3561
        %v3580 = vsel %vm3574, %v3567, 920167782
        %v3581 = vsel %vm3573, %v3564, %v3580
        %v3582 = vsel %vm3572, %v3579, %v3581
        %v3583 = vsel %vm3571, %v3561, %v3564
        %v3584 = vsel %vm3574, %v3570, 1326507024
        %v3585 = vsel %vm3573, %v3567, %v3584
        %v3586 = vsel %vm3572, %v3583, %v3585
        %v3587 = vshll.u32 %v3547, 8
        %v3588 = vmul.u32.u64.compose %v3587, %v3586
        %v3589 = vextract.low.u32 %v3588
        %v3590 = vextract.high.u32 %v3588
        %v3591 = vmul.u32.u64.compose %v3587, %v3582
        %v3592 = vextract.low.u32 %v3591
        %v3593 = vextract.high.u32 %v3591
        %v3594 = vmul.u32 %v3587, %v3578
        %v3595 = vadd.s32 %v3590, %v3592
        %vm3596 = vc.u32 %v3590, %v3592
        %v3597 = vadd.s32 %v3593, 1
        %v3598 = vsel %vm3596, %v3597, %v3593
        %v3599 = vadd.s32 %v3594, %v3598
        %v3600 = vadd.s32 %v3599, 536870912
        %v3601 = vshrl.u32 %v3600, 30
        %v3602 = vshll.u32 %v3601, 30
        %v3603 = vsub.s32 %v3599, %v3602
        %vm3604 = vcmp.lt.s32.totalorder %v3603, 0
        %v3605 = vsub.s32 0, %v3603
        %v3606 = vsel %vm3604, %v3605, %v3603
        %v3607 = vclz %v3606
        %v3608 = vsub.s32 %v3607, 2
        %vm3609 = vcmp.gt.s32.totalorder 0, %v3608
        %v3610 = vsel %vm3609, 0, %v3608
        %v3611 = vsub.s32 32, %v3610
        %v3612 = vshll.u32 %v3603, %v3610
        %v3613 = vshrl.u32 %v3595, %v3611
        %v3614 = vor.u32 %v3612, %v3613
        %v3615 = vsub.s32 4294967266, %v3610
        %v3616 = vadd.s32 %v3615, 127
        %v3617 = vshll.u32 %v3616, 23
        %v3618 = vor.u32 4788187, %v3617
        %v3619 = vand.u32 2147483647, %v3618
        %v3621 = vcvt.s32.f32 %v3614
        %v3622 = vmul.f32 %v3621, %v3619
        %v3623 = vxor.u32 %v3622, 2147483648
        %v3624 = vsel %vm3541, %v3623, %v3622
        %v3625 = vsub.s32 4, %v3601
        %v3626 = vsel %vm3541, %v3625, %v3601
        %v3627 = vsel %vm3540, %v1408, %v3624
        %v3628 = vsel %vm3540, 0, %v3626
        %v3629 = vcosq.f32.pop %v3627
        %v3630 = vsinq.f32.pop %v3627
        %vm3631 = vweird.f32 %v1408
        %v3632 = vadd.s32 %v3628, 3
        %v3633 = vand.u32 %v3632, 3
        %vm3634 = vcmp.lt.s32.totalorder %v3633, 2
        %vm3635 = vcmp.eq.s32.totalorder %v3633, 0
        %v3636 = vxor.u32 %v3630, 2147483648
        %v3637 = vsel %vm3635, %v3629, %v3636
        %vm3638 = vcmp.eq.s32.totalorder %v3633, 2
        %v3639 = vxor.u32 %v3629, 2147483648
        %v3640 = vsel %vm3638, %v3639, %v3630
        %v3641 = vsel %vm3634, %v3637, %v3640
        %v3642 = vsel %vm3631, nan, %v3641
        %v3643 = vand.u32 2147483647, %v1409
        %vm3644 = vcmp.le.f32.partialorder %v3643, 0.7853982
        %vm3645 = vcmp.lt.s32.totalorder %v1409, 0
        %v3646 = vand.u32 %v1409, 2139095040
        %v3647 = vshrl.u32 %v3646, 23
        %v3648 = vsub.s32 %v3647, 127
        %v3649 = vand.u32 2147483647, %v1409
        %v3650 = vand.u32 %v3649, 8388607
        %v3651 = vor.u32 %v3650, 8388608
        %v3652 = vsub.s32 0, %v3651
        %v3653 = vadd.s32 %v3648, 1
        %vm3654 = vcmp.gt.s32.totalorder %v3653, 0
        %v3655 = vsel %vm3654, %v3653, 0
        %v3656 = vshrl.u32 %v3655, 5
        %v3657 = vand.u32 %v3655, 31
        %v3658 = vsub.s32 32, %v3657
        %v3659 = vshrl.u32 683565275, %v3658
        %v3660 = vshll.u32 683565275, %v3657
        %v3661 = vshrl.u32 2475754826, %v3658
        %v3662 = vor.u32 %v3660, %v3661
        %v3663 = vshll.u32 2475754826, %v3657
        %v3664 = vshrl.u32 2131351028, %v3658
        %v3665 = vor.u32 %v3663, %v3664
        %v3666 = vshll.u32 2131351028, %v3657
        %v3667 = vshrl.u32 2102212464, %v3658
        %v3668 = vor.u32 %v3666, %v3667
        %v3669 = vshll.u32 2102212464, %v3657
        %v3670 = vshrl.u32 920167782, %v3658
        %v3671 = vor.u32 %v3669, %v3670
        %v3672 = vshll.u32 920167782, %v3657
        %v3673 = vshrl.u32 1326507024, %v3658
        %v3674 = vor.u32 %v3672, %v3673
        %vm3675 = vcmp.lt.s32.totalorder %v3656, 1
        %vm3676 = vcmp.lt.s32.totalorder %v3656, 2
        %vm3677 = vcmp.lt.s32.totalorder %v3656, 3
        %vm3678 = vcmp.lt.s32.totalorder %v3656, 4
        %v3679 = vsel %vm3675, %v3659, %v3662
        %v3680 = vsel %vm3678, %v3668, 2102212464
        %v3681 = vsel %vm3677, %v3665, %v3680
        %v3682 = vsel %vm3676, %v3679, %v3681
        %v3683 = vsel %vm3675, %v3662, %v3665
        %v3684 = vsel %vm3678, %v3671, 920167782
        %v3685 = vsel %vm3677, %v3668, %v3684
        %v3686 = vsel %vm3676, %v3683, %v3685
        %v3687 = vsel %vm3675, %v3665, %v3668
        %v3688 = vsel %vm3678, %v3674, 1326507024
        %v3689 = vsel %vm3677, %v3671, %v3688
        %v3690 = vsel %vm3676, %v3687, %v3689
        %v3691 = vshll.u32 %v3651, 8
        %v3692 = vmul.u32.u64.compose %v3691, %v3690
        %v3693 = vextract.low.u32 %v3692
        %v3694 = vextract.high.u32 %v3692
        %v3695 = vmul.u32.u64.compose %v3691, %v3686
        %v3696 = vextract.low.u32 %v3695
        %v3697 = vextract.high.u32 %v3695
        %v3698 = vmul.u32 %v3691, %v3682
        %v3699 = vadd.s32 %v3694, %v3696
        %vm3700 = vc.u32 %v3694, %v3696
        %v3701 = vadd.s32 %v3697, 1
        %v3702 = vsel %vm3700, %v3701, %v3697
        %v3703 = vadd.s32 %v3698, %v3702
        %v3704 = vadd.s32 %v3703, 536870912
        %v3705 = vshrl.u32 %v3704, 30
        %v3706 = vshll.u32 %v3705, 30
        %v3707 = vsub.s32 %v3703, %v3706
        %vm3708 = vcmp.lt.s32.totalorder %v3707, 0
        %v3709 = vsub.s32 0, %v3707
        %v3710 = vsel %vm3708, %v3709, %v3707
        %v3711 = vclz %v3710
        %v3712 = vsub.s32 %v3711, 2
        %vm3713 = vcmp.gt.s32.totalorder 0, %v3712
        %v3714 = vsel %vm3713, 0, %v3712
        %v3715 = vsub.s32 32, %v3714
        %v3716 = vshll.u32 %v3707, %v3714
        %v3717 = vshrl.u32 %v3699, %v3715
        %v3718 = vor.u32 %v3716, %v3717
        %v3719 = vsub.s32 4294967266, %v3714
        %v3720 = vadd.s32 %v3719, 127
        %v3721 = vshll.u32 %v3720, 23
        %v3722 = vor.u32 4788187, %v3721
        %v3723 = vand.u32 2147483647, %v3722
        %v3725 = vcvt.s32.f32 %v3718
        %v3726 = vmul.f32 %v3725, %v3723
        %v3727 = vxor.u32 %v3726, 2147483648
        %v3728 = vsel %vm3645, %v3727, %v3726
        %v3729 = vsub.s32 4, %v3705
        %v3730 = vsel %vm3645, %v3729, %v3705
        %v3731 = vsel %vm3644, %v1409, %v3728
        %v3732 = vsel %vm3644, 0, %v3730
        %v3733 = vcosq.f32.pop %v3731
        %v3734 = vsinq.f32.pop %v3731
        %vm3735 = vweird.f32 %v1409
        %v3736 = vadd.s32 %v3732, 3
        %v3737 = vand.u32 %v3736, 3
        %vm3738 = vcmp.lt.s32.totalorder %v3737, 2
        %vm3739 = vcmp.eq.s32.totalorder %v3737, 0
        %v3740 = vxor.u32 %v3734, 2147483648
        %v3741 = vsel %vm3739, %v3733, %v3740
        %vm3742 = vcmp.eq.s32.totalorder %v3737, 2
        %v3743 = vxor.u32 %v3733, 2147483648
        %v3744 = vsel %vm3742, %v3743, %v3734
        %v3745 = vsel %vm3738, %v3741, %v3744
        %v3746 = vsel %vm3735, nan, %v3745
        %v3747 = vand.u32 2147483647, %v1410
        %vm3748 = vcmp.le.f32.partialorder %v3747, 0.7853982
        %vm3749 = vcmp.lt.s32.totalorder %v1410, 0
        %v3750 = vand.u32 %v1410, 2139095040
        %v3751 = vshrl.u32 %v3750, 23
        %v3752 = vsub.s32 %v3751, 127
        %v3753 = vand.u32 2147483647, %v1410
        %v3754 = vand.u32 %v3753, 8388607
        %v3755 = vor.u32 %v3754, 8388608
        %v3756 = vsub.s32 0, %v3755
        %v3757 = vadd.s32 %v3752, 1
        %vm3758 = vcmp.gt.s32.totalorder %v3757, 0
        %v3759 = vsel %vm3758, %v3757, 0
        %v3760 = vshrl.u32 %v3759, 5
        %v3761 = vand.u32 %v3759, 31
        %v3762 = vsub.s32 32, %v3761
        %v3763 = vshrl.u32 683565275, %v3762
        %v3764 = vshll.u32 683565275, %v3761
        %v3765 = vshrl.u32 2475754826, %v3762
        %v3766 = vor.u32 %v3764, %v3765
        %v3767 = vshll.u32 2475754826, %v3761
        %v3768 = vshrl.u32 2131351028, %v3762
        %v3769 = vor.u32 %v3767, %v3768
        %v3770 = vshll.u32 2131351028, %v3761
        %v3771 = vshrl.u32 2102212464, %v3762
        %v3772 = vor.u32 %v3770, %v3771
        %v3773 = vshll.u32 2102212464, %v3761
        %v3774 = vshrl.u32 920167782, %v3762
        %v3775 = vor.u32 %v3773, %v3774
        %v3776 = vshll.u32 920167782, %v3761
        %v3777 = vshrl.u32 1326507024, %v3762
        %v3778 = vor.u32 %v3776, %v3777
        %vm3779 = vcmp.lt.s32.totalorder %v3760, 1
        %vm3780 = vcmp.lt.s32.totalorder %v3760, 2
        %vm3781 = vcmp.lt.s32.totalorder %v3760, 3
        %vm3782 = vcmp.lt.s32.totalorder %v3760, 4
        %v3783 = vsel %vm3779, %v3763, %v3766
        %v3784 = vsel %vm3782, %v3772, 2102212464
        %v3785 = vsel %vm3781, %v3769, %v3784
        %v3786 = vsel %vm3780, %v3783, %v3785
        %v3787 = vsel %vm3779, %v3766, %v3769
        %v3788 = vsel %vm3782, %v3775, 920167782
        %v3789 = vsel %vm3781, %v3772, %v3788
        %v3790 = vsel %vm3780, %v3787, %v3789
        %v3791 = vsel %vm3779, %v3769, %v3772
        %v3792 = vsel %vm3782, %v3778, 1326507024
        %v3793 = vsel %vm3781, %v3775, %v3792
        %v3794 = vsel %vm3780, %v3791, %v3793
        %v3795 = vshll.u32 %v3755, 8
        %v3796 = vmul.u32.u64.compose %v3795, %v3794
        %v3797 = vextract.low.u32 %v3796
        %v3798 = vextract.high.u32 %v3796
        %v3799 = vmul.u32.u64.compose %v3795, %v3790
        %v3800 = vextract.low.u32 %v3799
        %v3801 = vextract.high.u32 %v3799
        %v3802 = vmul.u32 %v3795, %v3786
        %v3803 = vadd.s32 %v3798, %v3800
        %vm3804 = vc.u32 %v3798, %v3800
        %v3805 = vadd.s32 %v3801, 1
        %v3806 = vsel %vm3804, %v3805, %v3801
        %v3807 = vadd.s32 %v3802, %v3806
        %v3808 = vadd.s32 %v3807, 536870912
        %v3809 = vshrl.u32 %v3808, 30
        %v3810 = vshll.u32 %v3809, 30
        %v3811 = vsub.s32 %v3807, %v3810
        %vm3812 = vcmp.lt.s32.totalorder %v3811, 0
        %v3813 = vsub.s32 0, %v3811
        %v3814 = vsel %vm3812, %v3813, %v3811
        %v3815 = vclz %v3814
        %v3816 = vsub.s32 %v3815, 2
        %vm3817 = vcmp.gt.s32.totalorder 0, %v3816
        %v3818 = vsel %vm3817, 0, %v3816
        %v3819 = vsub.s32 32, %v3818
        %v3820 = vshll.u32 %v3811, %v3818
        %v3821 = vshrl.u32 %v3803, %v3819
        %v3822 = vor.u32 %v3820, %v3821
        %v3823 = vsub.s32 4294967266, %v3818
        %v3824 = vadd.s32 %v3823, 127
        %v3825 = vshll.u32 %v3824, 23
        %v3826 = vor.u32 4788187, %v3825
        %v3827 = vand.u32 2147483647, %v3826
        %v3829 = vcvt.s32.f32 %v3822
        %v3830 = vmul.f32 %v3829, %v3827
        %v3831 = vxor.u32 %v3830, 2147483648
        %v3832 = vsel %vm3749, %v3831, %v3830
        %v3833 = vsub.s32 4, %v3809
        %v3834 = vsel %vm3749, %v3833, %v3809
        %v3835 = vsel %vm3748, %v1410, %v3832
        %v3836 = vsel %vm3748, 0, %v3834
        %v3837 = vcosq.f32.pop %v3835
        %v3838 = vsinq.f32.pop %v3835
        %vm3839 = vweird.f32 %v1410
        %v3840 = vadd.s32 %v3836, 3
        %v3841 = vand.u32 %v3840, 3
        %vm3842 = vcmp.lt.s32.totalorder %v3841, 2
        %vm3843 = vcmp.eq.s32.totalorder %v3841, 0
        %v3844 = vxor.u32 %v3838, 2147483648
        %v3845 = vsel %vm3843, %v3837, %v3844
        %vm3846 = vcmp.eq.s32.totalorder %v3841, 2
        %v3847 = vxor.u32 %v3837, 2147483648
        %v3848 = vsel %vm3846, %v3847, %v3838
        %v3849 = vsel %vm3842, %v3845, %v3848
        %v3850 = vsel %vm3839, nan, %v3849
        %v3851 = vand.u32 2147483647, %v1411
        %vm3852 = vcmp.le.f32.partialorder %v3851, 0.7853982
        %vm3853 = vcmp.lt.s32.totalorder %v1411, 0
        %v3854 = vand.u32 %v1411, 2139095040
        %v3855 = vshrl.u32 %v3854, 23
        %v3856 = vsub.s32 %v3855, 127
        %v3857 = vand.u32 2147483647, %v1411
        %v3858 = vand.u32 %v3857, 8388607
        %v3859 = vor.u32 %v3858, 8388608
        %v3860 = vsub.s32 0, %v3859
        %v3861 = vadd.s32 %v3856, 1
        %vm3862 = vcmp.gt.s32.totalorder %v3861, 0
        %v3863 = vsel %vm3862, %v3861, 0
        %v3864 = vshrl.u32 %v3863, 5
        %v3865 = vand.u32 %v3863, 31
        %v3866 = vsub.s32 32, %v3865
        %v3867 = vshrl.u32 683565275, %v3866
        %v3868 = vshll.u32 683565275, %v3865
        %v3869 = vshrl.u32 2475754826, %v3866
        %v3870 = vor.u32 %v3868, %v3869
        %v3871 = vshll.u32 2475754826, %v3865
        %v3872 = vshrl.u32 2131351028, %v3866
        %v3873 = vor.u32 %v3871, %v3872
        %v3874 = vshll.u32 2131351028, %v3865
        %v3875 = vshrl.u32 2102212464, %v3866
        %v3876 = vor.u32 %v3874, %v3875
        %v3877 = vshll.u32 2102212464, %v3865
        %v3878 = vshrl.u32 920167782, %v3866
        %v3879 = vor.u32 %v3877, %v3878
        %v3880 = vshll.u32 920167782, %v3865
        %v3881 = vshrl.u32 1326507024, %v3866
        %v3882 = vor.u32 %v3880, %v3881
        %vm3883 = vcmp.lt.s32.totalorder %v3864, 1
        %vm3884 = vcmp.lt.s32.totalorder %v3864, 2
        %vm3885 = vcmp.lt.s32.totalorder %v3864, 3
        %vm3886 = vcmp.lt.s32.totalorder %v3864, 4
        %v3887 = vsel %vm3883, %v3867, %v3870
        %v3888 = vsel %vm3886, %v3876, 2102212464
        %v3889 = vsel %vm3885, %v3873, %v3888
        %v3890 = vsel %vm3884, %v3887, %v3889
        %v3891 = vsel %vm3883, %v3870, %v3873
        %v3892 = vsel %vm3886, %v3879, 920167782
        %v3893 = vsel %vm3885, %v3876, %v3892
        %v3894 = vsel %vm3884, %v3891, %v3893
        %v3895 = vsel %vm3883, %v3873, %v3876
        %v3896 = vsel %vm3886, %v3882, 1326507024
        %v3897 = vsel %vm3885, %v3879, %v3896
        %v3898 = vsel %vm3884, %v3895, %v3897
        %v3899 = vshll.u32 %v3859, 8
        %v3900 = vmul.u32.u64.compose %v3899, %v3898
        %v3901 = vextract.low.u32 %v3900
        %v3902 = vextract.high.u32 %v3900
        %v3903 = vmul.u32.u64.compose %v3899, %v3894
        %v3904 = vextract.low.u32 %v3903
        %v3905 = vextract.high.u32 %v3903
        %v3906 = vmul.u32 %v3899, %v3890
        %v3907 = vadd.s32 %v3902, %v3904
        %vm3908 = vc.u32 %v3902, %v3904
        %v3909 = vadd.s32 %v3905, 1
        %v3910 = vsel %vm3908, %v3909, %v3905
        %v3911 = vadd.s32 %v3906, %v3910
        %v3912 = vadd.s32 %v3911, 536870912
        %v3913 = vshrl.u32 %v3912, 30
        %v3914 = vshll.u32 %v3913, 30
        %v3915 = vsub.s32 %v3911, %v3914
        %vm3916 = vcmp.lt.s32.totalorder %v3915, 0
        %v3917 = vsub.s32 0, %v3915
        %v3918 = vsel %vm3916, %v3917, %v3915
        %v3919 = vclz %v3918
        %v3920 = vsub.s32 %v3919, 2
        %vm3921 = vcmp.gt.s32.totalorder 0, %v3920
        %v3922 = vsel %vm3921, 0, %v3920
        %v3923 = vsub.s32 32, %v3922
        %v3924 = vshll.u32 %v3915, %v3922
        %v3925 = vshrl.u32 %v3907, %v3923
        %v3926 = vor.u32 %v3924, %v3925
        %v3927 = vsub.s32 4294967266, %v3922
        %v3928 = vadd.s32 %v3927, 127
        %v3929 = vshll.u32 %v3928, 23
        %v3930 = vor.u32 4788187, %v3929
        %v3931 = vand.u32 2147483647, %v3930
        %v3933 = vcvt.s32.f32 %v3926
        %v3934 = vmul.f32 %v3933, %v3931
        %v3935 = vxor.u32 %v3934, 2147483648
        %v3936 = vsel %vm3853, %v3935, %v3934
        %v3937 = vsub.s32 4, %v3913
        %v3938 = vsel %vm3853, %v3937, %v3913
        %v3939 = vsel %vm3852, %v1411, %v3936
        %v3940 = vsel %vm3852, 0, %v3938
        %v3941 = vcosq.f32.pop %v3939
        %v3942 = vsinq.f32.pop %v3939
        %vm3943 = vweird.f32 %v1411
        %v3944 = vadd.s32 %v3940, 3
        %v3945 = vand.u32 %v3944, 3
        %vm3946 = vcmp.lt.s32.totalorder %v3945, 2
        %vm3947 = vcmp.eq.s32.totalorder %v3945, 0
        %v3948 = vxor.u32 %v3942, 2147483648
        %v3949 = vsel %vm3947, %v3941, %v3948
        %vm3950 = vcmp.eq.s32.totalorder %v3945, 2
        %v3951 = vxor.u32 %v3941, 2147483648
        %v3952 = vsel %vm3950, %v3951, %v3942
        %v3953 = vsel %vm3946, %v3949, %v3952
        %v3954 = vsel %vm3943, nan, %v3953
        %v3955 = vand.u32 2147483647, %v1412
        %vm3956 = vcmp.le.f32.partialorder %v3955, 0.7853982
        %vm3957 = vcmp.lt.s32.totalorder %v1412, 0
        %v3958 = vand.u32 %v1412, 2139095040
        %v3959 = vshrl.u32 %v3958, 23
        %v3960 = vsub.s32 %v3959, 127
        %v3961 = vand.u32 2147483647, %v1412
        %v3962 = vand.u32 %v3961, 8388607
        %v3963 = vor.u32 %v3962, 8388608
        %v3964 = vsub.s32 0, %v3963
        %v3965 = vadd.s32 %v3960, 1
        %vm3966 = vcmp.gt.s32.totalorder %v3965, 0
        %v3967 = vsel %vm3966, %v3965, 0
        %v3968 = vshrl.u32 %v3967, 5
        %v3969 = vand.u32 %v3967, 31
        %v3970 = vsub.s32 32, %v3969
        %v3971 = vshrl.u32 683565275, %v3970
        %v3972 = vshll.u32 683565275, %v3969
        %v3973 = vshrl.u32 2475754826, %v3970
        %v3974 = vor.u32 %v3972, %v3973
        %v3975 = vshll.u32 2475754826, %v3969
        %v3976 = vshrl.u32 2131351028, %v3970
        %v3977 = vor.u32 %v3975, %v3976
        %v3978 = vshll.u32 2131351028, %v3969
        %v3979 = vshrl.u32 2102212464, %v3970
        %v3980 = vor.u32 %v3978, %v3979
        %v3981 = vshll.u32 2102212464, %v3969
        %v3982 = vshrl.u32 920167782, %v3970
        %v3983 = vor.u32 %v3981, %v3982
        %v3984 = vshll.u32 920167782, %v3969
        %v3985 = vshrl.u32 1326507024, %v3970
        %v3986 = vor.u32 %v3984, %v3985
        %vm3987 = vcmp.lt.s32.totalorder %v3968, 1
        %vm3988 = vcmp.lt.s32.totalorder %v3968, 2
        %vm3989 = vcmp.lt.s32.totalorder %v3968, 3
        %vm3990 = vcmp.lt.s32.totalorder %v3968, 4
        %v3991 = vsel %vm3987, %v3971, %v3974
        %v3992 = vsel %vm3990, %v3980, 2102212464
        %v3993 = vsel %vm3989, %v3977, %v3992
        %v3994 = vsel %vm3988, %v3991, %v3993
        %v3995 = vsel %vm3987, %v3974, %v3977
        %v3996 = vsel %vm3990, %v3983, 920167782
        %v3997 = vsel %vm3989, %v3980, %v3996
        %v3998 = vsel %vm3988, %v3995, %v3997
        %v3999 = vsel %vm3987, %v3977, %v3980
        %v4000 = vsel %vm3990, %v3986, 1326507024
        %v4001 = vsel %vm3989, %v3983, %v4000
        %v4002 = vsel %vm3988, %v3999, %v4001
        %v4003 = vshll.u32 %v3963, 8
        %v4004 = vmul.u32.u64.compose %v4003, %v4002
        %v4005 = vextract.low.u32 %v4004
        %v4006 = vextract.high.u32 %v4004
        %v4007 = vmul.u32.u64.compose %v4003, %v3998
        %v4008 = vextract.low.u32 %v4007
        %v4009 = vextract.high.u32 %v4007
        %v4010 = vmul.u32 %v4003, %v3994
        %v4011 = vadd.s32 %v4006, %v4008
        %vm4012 = vc.u32 %v4006, %v4008
        %v4013 = vadd.s32 %v4009, 1
        %v4014 = vsel %vm4012, %v4013, %v4009
        %v4015 = vadd.s32 %v4010, %v4014
        %v4016 = vadd.s32 %v4015, 536870912
        %v4017 = vshrl.u32 %v4016, 30
        %v4018 = vshll.u32 %v4017, 30
        %v4019 = vsub.s32 %v4015, %v4018
        %vm4020 = vcmp.lt.s32.totalorder %v4019, 0
        %v4021 = vsub.s32 0, %v4019
        %v4022 = vsel %vm4020, %v4021, %v4019
        %v4023 = vclz %v4022
        %v4024 = vsub.s32 %v4023, 2
        %vm4025 = vcmp.gt.s32.totalorder 0, %v4024
        %v4026 = vsel %vm4025, 0, %v4024
        %v4027 = vsub.s32 32, %v4026
        %v4028 = vshll.u32 %v4019, %v4026
        %v4029 = vshrl.u32 %v4011, %v4027
        %v4030 = vor.u32 %v4028, %v4029
        %v4031 = vsub.s32 4294967266, %v4026
        %v4032 = vadd.s32 %v4031, 127
        %v4033 = vshll.u32 %v4032, 23
        %v4034 = vor.u32 4788187, %v4033
        %v4035 = vand.u32 2147483647, %v4034
        %v4037 = vcvt.s32.f32 %v4030
        %v4038 = vmul.f32 %v4037, %v4035
        %v4039 = vxor.u32 %v4038, 2147483648
        %v4040 = vsel %vm3957, %v4039, %v4038
        %v4041 = vsub.s32 4, %v4017
        %v4042 = vsel %vm3957, %v4041, %v4017
        %v4043 = vsel %vm3956, %v1412, %v4040
        %v4044 = vsel %vm3956, 0, %v4042
        %v4045 = vcosq.f32.pop %v4043
        %v4046 = vsinq.f32.pop %v4043
        %vm4047 = vweird.f32 %v1412
        %v4048 = vadd.s32 %v4044, 3
        %v4049 = vand.u32 %v4048, 3
        %vm4050 = vcmp.lt.s32.totalorder %v4049, 2
        %vm4051 = vcmp.eq.s32.totalorder %v4049, 0
        %v4052 = vxor.u32 %v4046, 2147483648
        %v4053 = vsel %vm4051, %v4045, %v4052
        %vm4054 = vcmp.eq.s32.totalorder %v4049, 2
        %v4055 = vxor.u32 %v4045, 2147483648
        %v4056 = vsel %vm4054, %v4055, %v4046
        %v4057 = vsel %vm4050, %v4053, %v4056
        %v4058 = vsel %vm4047, nan, %v4057
        %v4059 = vand.u32 2147483647, %v1413
        %vm4060 = vcmp.le.f32.partialorder %v4059, 0.7853982
        %vm4061 = vcmp.lt.s32.totalorder %v1413, 0
        %v4062 = vand.u32 %v1413, 2139095040
        %v4063 = vshrl.u32 %v4062, 23
        %v4064 = vsub.s32 %v4063, 127
        %v4065 = vand.u32 2147483647, %v1413
        %v4066 = vand.u32 %v4065, 8388607
        %v4067 = vor.u32 %v4066, 8388608
        %v4068 = vsub.s32 0, %v4067
        %v4069 = vadd.s32 %v4064, 1
        %vm4070 = vcmp.gt.s32.totalorder %v4069, 0
        %v4071 = vsel %vm4070, %v4069, 0
        %v4072 = vshrl.u32 %v4071, 5
        %v4073 = vand.u32 %v4071, 31
        %v4074 = vsub.s32 32, %v4073
        %v4075 = vshrl.u32 683565275, %v4074
        %v4076 = vshll.u32 683565275, %v4073
        %v4077 = vshrl.u32 2475754826, %v4074
        %v4078 = vor.u32 %v4076, %v4077
        %v4079 = vshll.u32 2475754826, %v4073
        %v4080 = vshrl.u32 2131351028, %v4074
        %v4081 = vor.u32 %v4079, %v4080
        %v4082 = vshll.u32 2131351028, %v4073
        %v4083 = vshrl.u32 2102212464, %v4074
        %v4084 = vor.u32 %v4082, %v4083
        %v4085 = vshll.u32 2102212464, %v4073
        %v4086 = vshrl.u32 920167782, %v4074
        %v4087 = vor.u32 %v4085, %v4086
        %v4088 = vshll.u32 920167782, %v4073
        %v4089 = vshrl.u32 1326507024, %v4074
        %v4090 = vor.u32 %v4088, %v4089
        %vm4091 = vcmp.lt.s32.totalorder %v4072, 1
        %vm4092 = vcmp.lt.s32.totalorder %v4072, 2
        %vm4093 = vcmp.lt.s32.totalorder %v4072, 3
        %vm4094 = vcmp.lt.s32.totalorder %v4072, 4
        %v4095 = vsel %vm4091, %v4075, %v4078
        %v4096 = vsel %vm4094, %v4084, 2102212464
        %v4097 = vsel %vm4093, %v4081, %v4096
        %v4098 = vsel %vm4092, %v4095, %v4097
        %v4099 = vsel %vm4091, %v4078, %v4081
        %v4100 = vsel %vm4094, %v4087, 920167782
        %v4101 = vsel %vm4093, %v4084, %v4100
        %v4102 = vsel %vm4092, %v4099, %v4101
        %v4103 = vsel %vm4091, %v4081, %v4084
        %v4104 = vsel %vm4094, %v4090, 1326507024
        %v4105 = vsel %vm4093, %v4087, %v4104
        %v4106 = vsel %vm4092, %v4103, %v4105
        %v4107 = vshll.u32 %v4067, 8
        %v4108 = vmul.u32.u64.compose %v4107, %v4106
        %v4109 = vextract.low.u32 %v4108
        %v4110 = vextract.high.u32 %v4108
        %v4111 = vmul.u32.u64.compose %v4107, %v4102
        %v4112 = vextract.low.u32 %v4111
        %v4113 = vextract.high.u32 %v4111
        %v4114 = vmul.u32 %v4107, %v4098
        %v4115 = vadd.s32 %v4110, %v4112
        %vm4116 = vc.u32 %v4110, %v4112
        %v4117 = vadd.s32 %v4113, 1
        %v4118 = vsel %vm4116, %v4117, %v4113
        %v4119 = vadd.s32 %v4114, %v4118
        %v4120 = vadd.s32 %v4119, 536870912
        %v4121 = vshrl.u32 %v4120, 30
        %v4122 = vshll.u32 %v4121, 30
        %v4123 = vsub.s32 %v4119, %v4122
        %vm4124 = vcmp.lt.s32.totalorder %v4123, 0
        %v4125 = vsub.s32 0, %v4123
        %v4126 = vsel %vm4124, %v4125, %v4123
        %v4127 = vclz %v4126
        %v4128 = vsub.s32 %v4127, 2
        %vm4129 = vcmp.gt.s32.totalorder 0, %v4128
        %v4130 = vsel %vm4129, 0, %v4128
        %v4131 = vsub.s32 32, %v4130
        %v4132 = vshll.u32 %v4123, %v4130
        %v4133 = vshrl.u32 %v4115, %v4131
        %v4134 = vor.u32 %v4132, %v4133
        %v4135 = vsub.s32 4294967266, %v4130
        %v4136 = vadd.s32 %v4135, 127
        %v4137 = vshll.u32 %v4136, 23
        %v4138 = vor.u32 4788187, %v4137
        %v4139 = vand.u32 2147483647, %v4138
        %v4141 = vcvt.s32.f32 %v4134
        %v4142 = vmul.f32 %v4141, %v4139
        %v4143 = vxor.u32 %v4142, 2147483648
        %v4144 = vsel %vm4061, %v4143, %v4142
        %v4145 = vsub.s32 4, %v4121
        %v4146 = vsel %vm4061, %v4145, %v4121
        %v4147 = vsel %vm4060, %v1413, %v4144
        %v4148 = vsel %vm4060, 0, %v4146
        %v4149 = vcosq.f32.pop %v4147
        %v4150 = vsinq.f32.pop %v4147
        %vm4151 = vweird.f32 %v1413
        %v4152 = vadd.s32 %v4148, 3
        %v4153 = vand.u32 %v4152, 3
        %vm4154 = vcmp.lt.s32.totalorder %v4153, 2
        %vm4155 = vcmp.eq.s32.totalorder %v4153, 0
        %v4156 = vxor.u32 %v4150, 2147483648
        %v4157 = vsel %vm4155, %v4149, %v4156
        %vm4158 = vcmp.eq.s32.totalorder %v4153, 2
        %v4159 = vxor.u32 %v4149, 2147483648
        %v4160 = vsel %vm4158, %v4159, %v4150
        %v4161 = vsel %vm4154, %v4157, %v4160
        %v4162 = vsel %vm4151, nan, %v4161
        %v4163 = vand.u32 2147483647, %v1414
        %vm4164 = vcmp.le.f32.partialorder %v4163, 0.7853982
        %vm4165 = vcmp.lt.s32.totalorder %v1414, 0
        %v4166 = vand.u32 %v1414, 2139095040
        %v4167 = vshrl.u32 %v4166, 23
        %v4168 = vsub.s32 %v4167, 127
        %v4169 = vand.u32 2147483647, %v1414
        %v4170 = vand.u32 %v4169, 8388607
        %v4171 = vor.u32 %v4170, 8388608
        %v4172 = vsub.s32 0, %v4171
        %v4173 = vadd.s32 %v4168, 1
        %vm4174 = vcmp.gt.s32.totalorder %v4173, 0
        %v4175 = vsel %vm4174, %v4173, 0
        %v4176 = vshrl.u32 %v4175, 5
        %v4177 = vand.u32 %v4175, 31
        %v4178 = vsub.s32 32, %v4177
        %v4179 = vshrl.u32 683565275, %v4178
        %v4180 = vshll.u32 683565275, %v4177
        %v4181 = vshrl.u32 2475754826, %v4178
        %v4182 = vor.u32 %v4180, %v4181
        %v4183 = vshll.u32 2475754826, %v4177
        %v4184 = vshrl.u32 2131351028, %v4178
        %v4185 = vor.u32 %v4183, %v4184
        %v4186 = vshll.u32 2131351028, %v4177
        %v4187 = vshrl.u32 2102212464, %v4178
        %v4188 = vor.u32 %v4186, %v4187
        %v4189 = vshll.u32 2102212464, %v4177
        %v4190 = vshrl.u32 920167782, %v4178
        %v4191 = vor.u32 %v4189, %v4190
        %v4192 = vshll.u32 920167782, %v4177
        %v4193 = vshrl.u32 1326507024, %v4178
        %v4194 = vor.u32 %v4192, %v4193
        %vm4195 = vcmp.lt.s32.totalorder %v4176, 1
        %vm4196 = vcmp.lt.s32.totalorder %v4176, 2
        %vm4197 = vcmp.lt.s32.totalorder %v4176, 3
        %vm4198 = vcmp.lt.s32.totalorder %v4176, 4
        %v4199 = vsel %vm4195, %v4179, %v4182
        %v4200 = vsel %vm4198, %v4188, 2102212464
        %v4201 = vsel %vm4197, %v4185, %v4200
        %v4202 = vsel %vm4196, %v4199, %v4201
        %v4203 = vsel %vm4195, %v4182, %v4185
        %v4204 = vsel %vm4198, %v4191, 920167782
        %v4205 = vsel %vm4197, %v4188, %v4204
        %v4206 = vsel %vm4196, %v4203, %v4205
        %v4207 = vsel %vm4195, %v4185, %v4188
        %v4208 = vsel %vm4198, %v4194, 1326507024
        %v4209 = vsel %vm4197, %v4191, %v4208
        %v4210 = vsel %vm4196, %v4207, %v4209
        %v4211 = vshll.u32 %v4171, 8
        %v4212 = vmul.u32.u64.compose %v4211, %v4210
        %v4213 = vextract.low.u32 %v4212
        %v4214 = vextract.high.u32 %v4212
        %v4215 = vmul.u32.u64.compose %v4211, %v4206
        %v4216 = vextract.low.u32 %v4215
        %v4217 = vextract.high.u32 %v4215
        %v4218 = vmul.u32 %v4211, %v4202
        %v4219 = vadd.s32 %v4214, %v4216
        %vm4220 = vc.u32 %v4214, %v4216
        %v4221 = vadd.s32 %v4217, 1
        %v4222 = vsel %vm4220, %v4221, %v4217
        %v4223 = vadd.s32 %v4218, %v4222
        %v4224 = vadd.s32 %v4223, 536870912
        %v4225 = vshrl.u32 %v4224, 30
        %v4226 = vshll.u32 %v4225, 30
        %v4227 = vsub.s32 %v4223, %v4226
        %vm4228 = vcmp.lt.s32.totalorder %v4227, 0
        %v4229 = vsub.s32 0, %v4227
        %v4230 = vsel %vm4228, %v4229, %v4227
        %v4231 = vclz %v4230
        %v4232 = vsub.s32 %v4231, 2
        %vm4233 = vcmp.gt.s32.totalorder 0, %v4232
        %v4234 = vsel %vm4233, 0, %v4232
        %v4235 = vsub.s32 32, %v4234
        %v4236 = vshll.u32 %v4227, %v4234
        %v4237 = vshrl.u32 %v4219, %v4235
        %v4238 = vor.u32 %v4236, %v4237
        %v4239 = vsub.s32 4294967266, %v4234
        %v4240 = vadd.s32 %v4239, 127
        %v4241 = vshll.u32 %v4240, 23
        %v4242 = vor.u32 4788187, %v4241
        %v4243 = vand.u32 2147483647, %v4242
        %v4245 = vcvt.s32.f32 %v4238
        %v4246 = vmul.f32 %v4245, %v4243
        %v4247 = vxor.u32 %v4246, 2147483648
        %v4248 = vsel %vm4165, %v4247, %v4246
        %v4249 = vsub.s32 4, %v4225
        %v4250 = vsel %vm4165, %v4249, %v4225
        %v4251 = vsel %vm4164, %v1414, %v4248
        %v4252 = vsel %vm4164, 0, %v4250
        %v4253 = vcosq.f32.pop %v4251
        %v4254 = vsinq.f32.pop %v4251
        %vm4255 = vweird.f32 %v1414
        %v4256 = vadd.s32 %v4252, 3
        %v4257 = vand.u32 %v4256, 3
        %vm4258 = vcmp.lt.s32.totalorder %v4257, 2
        %vm4259 = vcmp.eq.s32.totalorder %v4257, 0
        %v4260 = vxor.u32 %v4254, 2147483648
        %v4261 = vsel %vm4259, %v4253, %v4260
        %vm4262 = vcmp.eq.s32.totalorder %v4257, 2
        %v4263 = vxor.u32 %v4253, 2147483648
        %v4264 = vsel %vm4262, %v4263, %v4254
        %v4265 = vsel %vm4258, %v4261, %v4264
        %v4266 = vsel %vm4255, nan, %v4265
        %v4267 = vand.u32 2147483647, %v1415
        %vm4268 = vcmp.le.f32.partialorder %v4267, 0.7853982
        %vm4269 = vcmp.lt.s32.totalorder %v1415, 0
        %v4270 = vand.u32 %v1415, 2139095040
        %v4271 = vshrl.u32 %v4270, 23
        %v4272 = vsub.s32 %v4271, 127
        %v4273 = vand.u32 2147483647, %v1415
        %v4274 = vand.u32 %v4273, 8388607
        %v4275 = vor.u32 %v4274, 8388608
        %v4276 = vsub.s32 0, %v4275
        %v4277 = vadd.s32 %v4272, 1
        %vm4278 = vcmp.gt.s32.totalorder %v4277, 0
        %v4279 = vsel %vm4278, %v4277, 0
        %v4280 = vshrl.u32 %v4279, 5
        %v4281 = vand.u32 %v4279, 31
        %v4282 = vsub.s32 32, %v4281
        %v4283 = vshrl.u32 683565275, %v4282
        %v4284 = vshll.u32 683565275, %v4281
        %v4285 = vshrl.u32 2475754826, %v4282
        %v4286 = vor.u32 %v4284, %v4285
        %v4287 = vshll.u32 2475754826, %v4281
        %v4288 = vshrl.u32 2131351028, %v4282
        %v4289 = vor.u32 %v4287, %v4288
        %v4290 = vshll.u32 2131351028, %v4281
        %v4291 = vshrl.u32 2102212464, %v4282
        %v4292 = vor.u32 %v4290, %v4291
        %v4293 = vshll.u32 2102212464, %v4281
        %v4294 = vshrl.u32 920167782, %v4282
        %v4295 = vor.u32 %v4293, %v4294
        %v4296 = vshll.u32 920167782, %v4281
        %v4297 = vshrl.u32 1326507024, %v4282
        %v4298 = vor.u32 %v4296, %v4297
        %vm4299 = vcmp.lt.s32.totalorder %v4280, 1
        %vm4300 = vcmp.lt.s32.totalorder %v4280, 2
        %vm4301 = vcmp.lt.s32.totalorder %v4280, 3
        %vm4302 = vcmp.lt.s32.totalorder %v4280, 4
        %v4303 = vsel %vm4299, %v4283, %v4286
        %v4304 = vsel %vm4302, %v4292, 2102212464
        %v4305 = vsel %vm4301, %v4289, %v4304
        %v4306 = vsel %vm4300, %v4303, %v4305
        %v4307 = vsel %vm4299, %v4286, %v4289
        %v4308 = vsel %vm4302, %v4295, 920167782
        %v4309 = vsel %vm4301, %v4292, %v4308
        %v4310 = vsel %vm4300, %v4307, %v4309
        %v4311 = vsel %vm4299, %v4289, %v4292
        %v4312 = vsel %vm4302, %v4298, 1326507024
        %v4313 = vsel %vm4301, %v4295, %v4312
        %v4314 = vsel %vm4300, %v4311, %v4313
        %v4315 = vshll.u32 %v4275, 8
        %v4316 = vmul.u32.u64.compose %v4315, %v4314
        %v4317 = vextract.low.u32 %v4316
        %v4318 = vextract.high.u32 %v4316
        %v4319 = vmul.u32.u64.compose %v4315, %v4310
        %v4320 = vextract.low.u32 %v4319
        %v4321 = vextract.high.u32 %v4319
        %v4322 = vmul.u32 %v4315, %v4306
        %v4323 = vadd.s32 %v4318, %v4320
        %vm4324 = vc.u32 %v4318, %v4320
        %v4325 = vadd.s32 %v4321, 1
        %v4326 = vsel %vm4324, %v4325, %v4321
        %v4327 = vadd.s32 %v4322, %v4326
        %v4328 = vadd.s32 %v4327, 536870912
        %v4329 = vshrl.u32 %v4328, 30
        %v4330 = vshll.u32 %v4329, 30
        %v4331 = vsub.s32 %v4327, %v4330
        %vm4332 = vcmp.lt.s32.totalorder %v4331, 0
        %v4333 = vsub.s32 0, %v4331
        %v4334 = vsel %vm4332, %v4333, %v4331
        %v4335 = vclz %v4334
        %v4336 = vsub.s32 %v4335, 2
        %vm4337 = vcmp.gt.s32.totalorder 0, %v4336
        %v4338 = vsel %vm4337, 0, %v4336
        %v4339 = vsub.s32 32, %v4338
        %v4340 = vshll.u32 %v4331, %v4338
        %v4341 = vshrl.u32 %v4323, %v4339
        %v4342 = vor.u32 %v4340, %v4341
        %v4343 = vsub.s32 4294967266, %v4338
        %v4344 = vadd.s32 %v4343, 127
        %v4345 = vshll.u32 %v4344, 23
        %v4346 = vor.u32 4788187, %v4345
        %v4347 = vand.u32 2147483647, %v4346
        %v4349 = vcvt.s32.f32 %v4342
        %v4350 = vmul.f32 %v4349, %v4347
        %v4351 = vxor.u32 %v4350, 2147483648
        %v4352 = vsel %vm4269, %v4351, %v4350
        %v4353 = vsub.s32 4, %v4329
        %v4354 = vsel %vm4269, %v4353, %v4329
        %v4355 = vsel %vm4268, %v1415, %v4352
        %v4356 = vsel %vm4268, 0, %v4354
        %v4357 = vcosq.f32.pop %v4355
        %v4358 = vsinq.f32.pop %v4355
        %vm4359 = vweird.f32 %v1415
        %v4360 = vadd.s32 %v4356, 3
        %v4361 = vand.u32 %v4360, 3
        %vm4362 = vcmp.lt.s32.totalorder %v4361, 2
        %vm4363 = vcmp.eq.s32.totalorder %v4361, 0
        %v4364 = vxor.u32 %v4358, 2147483648
        %v4365 = vsel %vm4363, %v4357, %v4364
        %vm4366 = vcmp.eq.s32.totalorder %v4361, 2
        %v4367 = vxor.u32 %v4357, 2147483648
        %v4368 = vsel %vm4366, %v4367, %v4358
        %v4369 = vsel %vm4362, %v4365, %v4368
        %v4370 = vsel %vm4359, nan, %v4369
        %v4371 = vand.u32 2147483647, %v1416
        %vm4372 = vcmp.le.f32.partialorder %v4371, 0.7853982
        %vm4373 = vcmp.lt.s32.totalorder %v1416, 0
        %v4374 = vand.u32 %v1416, 2139095040
        %v4375 = vshrl.u32 %v4374, 23
        %v4376 = vsub.s32 %v4375, 127
        %v4377 = vand.u32 2147483647, %v1416
        %v4378 = vand.u32 %v4377, 8388607
        %v4379 = vor.u32 %v4378, 8388608
        %v4380 = vsub.s32 0, %v4379
        %v4381 = vadd.s32 %v4376, 1
        %vm4382 = vcmp.gt.s32.totalorder %v4381, 0
        %v4383 = vsel %vm4382, %v4381, 0
        %v4384 = vshrl.u32 %v4383, 5
        %v4385 = vand.u32 %v4383, 31
        %v4386 = vsub.s32 32, %v4385
        %v4387 = vshrl.u32 683565275, %v4386
        %v4388 = vshll.u32 683565275, %v4385
        %v4389 = vshrl.u32 2475754826, %v4386
        %v4390 = vor.u32 %v4388, %v4389
        %v4391 = vshll.u32 2475754826, %v4385
        %v4392 = vshrl.u32 2131351028, %v4386
        %v4393 = vor.u32 %v4391, %v4392
        %v4394 = vshll.u32 2131351028, %v4385
        %v4395 = vshrl.u32 2102212464, %v4386
        %v4396 = vor.u32 %v4394, %v4395
        %v4397 = vshll.u32 2102212464, %v4385
        %v4398 = vshrl.u32 920167782, %v4386
        %v4399 = vor.u32 %v4397, %v4398
        %v4400 = vshll.u32 920167782, %v4385
        %v4401 = vshrl.u32 1326507024, %v4386
        %v4402 = vor.u32 %v4400, %v4401
        %vm4403 = vcmp.lt.s32.totalorder %v4384, 1
        %vm4404 = vcmp.lt.s32.totalorder %v4384, 2
        %vm4405 = vcmp.lt.s32.totalorder %v4384, 3
        %vm4406 = vcmp.lt.s32.totalorder %v4384, 4
        %v4407 = vsel %vm4403, %v4387, %v4390
        %v4408 = vsel %vm4406, %v4396, 2102212464
        %v4409 = vsel %vm4405, %v4393, %v4408
        %v4410 = vsel %vm4404, %v4407, %v4409
        %v4411 = vsel %vm4403, %v4390, %v4393
        %v4412 = vsel %vm4406, %v4399, 920167782
        %v4413 = vsel %vm4405, %v4396, %v4412
        %v4414 = vsel %vm4404, %v4411, %v4413
        %v4415 = vsel %vm4403, %v4393, %v4396
        %v4416 = vsel %vm4406, %v4402, 1326507024
        %v4417 = vsel %vm4405, %v4399, %v4416
        %v4418 = vsel %vm4404, %v4415, %v4417
        %v4419 = vshll.u32 %v4379, 8
        %v4420 = vmul.u32.u64.compose %v4419, %v4418
        %v4421 = vextract.low.u32 %v4420
        %v4422 = vextract.high.u32 %v4420
        %v4423 = vmul.u32.u64.compose %v4419, %v4414
        %v4424 = vextract.low.u32 %v4423
        %v4425 = vextract.high.u32 %v4423
        %v4426 = vmul.u32 %v4419, %v4410
        %v4427 = vadd.s32 %v4422, %v4424
        %vm4428 = vc.u32 %v4422, %v4424
        %v4429 = vadd.s32 %v4425, 1
        %v4430 = vsel %vm4428, %v4429, %v4425
        %v4431 = vadd.s32 %v4426, %v4430
        %v4432 = vadd.s32 %v4431, 536870912
        %v4433 = vshrl.u32 %v4432, 30
        %v4434 = vshll.u32 %v4433, 30
        %v4435 = vsub.s32 %v4431, %v4434
        %vm4436 = vcmp.lt.s32.totalorder %v4435, 0
        %v4437 = vsub.s32 0, %v4435
        %v4438 = vsel %vm4436, %v4437, %v4435
        %v4439 = vclz %v4438
        %v4440 = vsub.s32 %v4439, 2
        %vm4441 = vcmp.gt.s32.totalorder 0, %v4440
        %v4442 = vsel %vm4441, 0, %v4440
        %v4443 = vsub.s32 32, %v4442
        %v4444 = vshll.u32 %v4435, %v4442
        %v4445 = vshrl.u32 %v4427, %v4443
        %v4446 = vor.u32 %v4444, %v4445
        %v4447 = vsub.s32 4294967266, %v4442
        %v4448 = vadd.s32 %v4447, 127
        %v4449 = vshll.u32 %v4448, 23
        %v4450 = vor.u32 4788187, %v4449
        %v4451 = vand.u32 2147483647, %v4450
        %v4453 = vcvt.s32.f32 %v4446
        %v4454 = vmul.f32 %v4453, %v4451
        %v4455 = vxor.u32 %v4454, 2147483648
        %v4456 = vsel %vm4373, %v4455, %v4454
        %v4457 = vsub.s32 4, %v4433
        %v4458 = vsel %vm4373, %v4457, %v4433
        %v4459 = vsel %vm4372, %v1416, %v4456
        %v4460 = vsel %vm4372, 0, %v4458
        %v4461 = vcosq.f32.pop %v4459
        %v4462 = vsinq.f32.pop %v4459
        %vm4463 = vweird.f32 %v1416
        %v4464 = vadd.s32 %v4460, 3
        %v4465 = vand.u32 %v4464, 3
        %vm4466 = vcmp.lt.s32.totalorder %v4465, 2
        %vm4467 = vcmp.eq.s32.totalorder %v4465, 0
        %v4468 = vxor.u32 %v4462, 2147483648
        %v4469 = vsel %vm4467, %v4461, %v4468
        %vm4470 = vcmp.eq.s32.totalorder %v4465, 2
        %v4471 = vxor.u32 %v4461, 2147483648
        %v4472 = vsel %vm4470, %v4471, %v4462
        %v4473 = vsel %vm4466, %v4469, %v4472
        %v4474 = vsel %vm4463, nan, %v4473
        %v4475 = vand.u32 2147483647, %v1417
        %vm4476 = vcmp.le.f32.partialorder %v4475, 0.7853982
        %vm4477 = vcmp.lt.s32.totalorder %v1417, 0
        %v4478 = vand.u32 %v1417, 2139095040
        %v4479 = vshrl.u32 %v4478, 23
        %v4480 = vsub.s32 %v4479, 127
        %v4481 = vand.u32 2147483647, %v1417
        %v4482 = vand.u32 %v4481, 8388607
        %v4483 = vor.u32 %v4482, 8388608
        %v4484 = vsub.s32 0, %v4483
        %v4485 = vadd.s32 %v4480, 1
        %vm4486 = vcmp.gt.s32.totalorder %v4485, 0
        %v4487 = vsel %vm4486, %v4485, 0
        %v4488 = vshrl.u32 %v4487, 5
        %v4489 = vand.u32 %v4487, 31
        %v4490 = vsub.s32 32, %v4489
        %v4491 = vshrl.u32 683565275, %v4490
        %v4492 = vshll.u32 683565275, %v4489
        %v4493 = vshrl.u32 2475754826, %v4490
        %v4494 = vor.u32 %v4492, %v4493
        %v4495 = vshll.u32 2475754826, %v4489
        %v4496 = vshrl.u32 2131351028, %v4490
        %v4497 = vor.u32 %v4495, %v4496
        %v4498 = vshll.u32 2131351028, %v4489
        %v4499 = vshrl.u32 2102212464, %v4490
        %v4500 = vor.u32 %v4498, %v4499
        %v4501 = vshll.u32 2102212464, %v4489
        %v4502 = vshrl.u32 920167782, %v4490
        %v4503 = vor.u32 %v4501, %v4502
        %v4504 = vshll.u32 920167782, %v4489
        %v4505 = vshrl.u32 1326507024, %v4490
        %v4506 = vor.u32 %v4504, %v4505
        %vm4507 = vcmp.lt.s32.totalorder %v4488, 1
        %vm4508 = vcmp.lt.s32.totalorder %v4488, 2
        %vm4509 = vcmp.lt.s32.totalorder %v4488, 3
        %vm4510 = vcmp.lt.s32.totalorder %v4488, 4
        %v4511 = vsel %vm4507, %v4491, %v4494
        %v4512 = vsel %vm4510, %v4500, 2102212464
        %v4513 = vsel %vm4509, %v4497, %v4512
        %v4514 = vsel %vm4508, %v4511, %v4513
        %v4515 = vsel %vm4507, %v4494, %v4497
        %v4516 = vsel %vm4510, %v4503, 920167782
        %v4517 = vsel %vm4509, %v4500, %v4516
        %v4518 = vsel %vm4508, %v4515, %v4517
        %v4519 = vsel %vm4507, %v4497, %v4500
        %v4520 = vsel %vm4510, %v4506, 1326507024
        %v4521 = vsel %vm4509, %v4503, %v4520
        %v4522 = vsel %vm4508, %v4519, %v4521
        %v4523 = vshll.u32 %v4483, 8
        %v4524 = vmul.u32.u64.compose %v4523, %v4522
        %v4525 = vextract.low.u32 %v4524
        %v4526 = vextract.high.u32 %v4524
        %v4527 = vmul.u32.u64.compose %v4523, %v4518
        %v4528 = vextract.low.u32 %v4527
        %v4529 = vextract.high.u32 %v4527
        %v4530 = vmul.u32 %v4523, %v4514
        %v4531 = vadd.s32 %v4526, %v4528
        %vm4532 = vc.u32 %v4526, %v4528
        %v4533 = vadd.s32 %v4529, 1
        %v4534 = vsel %vm4532, %v4533, %v4529
        %v4535 = vadd.s32 %v4530, %v4534
        %v4536 = vadd.s32 %v4535, 536870912
        %v4537 = vshrl.u32 %v4536, 30
        %v4538 = vshll.u32 %v4537, 30
        %v4539 = vsub.s32 %v4535, %v4538
        %vm4540 = vcmp.lt.s32.totalorder %v4539, 0
        %v4541 = vsub.s32 0, %v4539
        %v4542 = vsel %vm4540, %v4541, %v4539
        %v4543 = vclz %v4542
        %v4544 = vsub.s32 %v4543, 2
        %vm4545 = vcmp.gt.s32.totalorder 0, %v4544
        %v4546 = vsel %vm4545, 0, %v4544
        %v4547 = vsub.s32 32, %v4546
        %v4548 = vshll.u32 %v4539, %v4546
        %v4549 = vshrl.u32 %v4531, %v4547
        %v4550 = vor.u32 %v4548, %v4549
        %v4551 = vsub.s32 4294967266, %v4546
        %v4552 = vadd.s32 %v4551, 127
        %v4553 = vshll.u32 %v4552, 23
        %v4554 = vor.u32 4788187, %v4553
        %v4555 = vand.u32 2147483647, %v4554
        %v4557 = vcvt.s32.f32 %v4550
        %v4558 = vmul.f32 %v4557, %v4555
        %v4559 = vxor.u32 %v4558, 2147483648
        %v4560 = vsel %vm4477, %v4559, %v4558
        %v4561 = vsub.s32 4, %v4537
        %v4562 = vsel %vm4477, %v4561, %v4537
        %v4563 = vsel %vm4476, %v1417, %v4560
        %v4564 = vsel %vm4476, 0, %v4562
        %v4565 = vcosq.f32.pop %v4563
        %v4566 = vsinq.f32.pop %v4563
        %vm4567 = vweird.f32 %v1417
        %v4568 = vadd.s32 %v4564, 3
        %v4569 = vand.u32 %v4568, 3
        %vm4570 = vcmp.lt.s32.totalorder %v4569, 2
        %vm4571 = vcmp.eq.s32.totalorder %v4569, 0
        %v4572 = vxor.u32 %v4566, 2147483648
        %v4573 = vsel %vm4571, %v4565, %v4572
        %vm4574 = vcmp.eq.s32.totalorder %v4569, 2
        %v4575 = vxor.u32 %v4565, 2147483648
        %v4576 = vsel %vm4574, %v4575, %v4566
        %v4577 = vsel %vm4570, %v4573, %v4576
        %v4578 = vsel %vm4567, nan, %v4577
        %v4579 = vand.u32 2147483647, %v1418
        %vm4580 = vcmp.le.f32.partialorder %v4579, 0.7853982
        %vm4581 = vcmp.lt.s32.totalorder %v1418, 0
        %v4582 = vand.u32 %v1418, 2139095040
        %v4583 = vshrl.u32 %v4582, 23
        %v4584 = vsub.s32 %v4583, 127
        %v4585 = vand.u32 2147483647, %v1418
        %v4586 = vand.u32 %v4585, 8388607
        %v4587 = vor.u32 %v4586, 8388608
        %v4588 = vsub.s32 0, %v4587
        %v4589 = vadd.s32 %v4584, 1
        %vm4590 = vcmp.gt.s32.totalorder %v4589, 0
        %v4591 = vsel %vm4590, %v4589, 0
        %v4592 = vshrl.u32 %v4591, 5
        %v4593 = vand.u32 %v4591, 31
        %v4594 = vsub.s32 32, %v4593
        %v4595 = vshrl.u32 683565275, %v4594
        %v4596 = vshll.u32 683565275, %v4593
        %v4597 = vshrl.u32 2475754826, %v4594
        %v4598 = vor.u32 %v4596, %v4597
        %v4599 = vshll.u32 2475754826, %v4593
        %v4600 = vshrl.u32 2131351028, %v4594
        %v4601 = vor.u32 %v4599, %v4600
        %v4602 = vshll.u32 2131351028, %v4593
        %v4603 = vshrl.u32 2102212464, %v4594
        %v4604 = vor.u32 %v4602, %v4603
        %v4605 = vshll.u32 2102212464, %v4593
        %v4606 = vshrl.u32 920167782, %v4594
        %v4607 = vor.u32 %v4605, %v4606
        %v4608 = vshll.u32 920167782, %v4593
        %v4609 = vshrl.u32 1326507024, %v4594
        %v4610 = vor.u32 %v4608, %v4609
        %vm4611 = vcmp.lt.s32.totalorder %v4592, 1
        %vm4612 = vcmp.lt.s32.totalorder %v4592, 2
        %vm4613 = vcmp.lt.s32.totalorder %v4592, 3
        %vm4614 = vcmp.lt.s32.totalorder %v4592, 4
        %v4615 = vsel %vm4611, %v4595, %v4598
        %v4616 = vsel %vm4614, %v4604, 2102212464
        %v4617 = vsel %vm4613, %v4601, %v4616
        %v4618 = vsel %vm4612, %v4615, %v4617
        %v4619 = vsel %vm4611, %v4598, %v4601
        %v4620 = vsel %vm4614, %v4607, 920167782
        %v4621 = vsel %vm4613, %v4604, %v4620
        %v4622 = vsel %vm4612, %v4619, %v4621
        %v4623 = vsel %vm4611, %v4601, %v4604
        %v4624 = vsel %vm4614, %v4610, 1326507024
        %v4625 = vsel %vm4613, %v4607, %v4624
        %v4626 = vsel %vm4612, %v4623, %v4625
        %v4627 = vshll.u32 %v4587, 8
        %v4628 = vmul.u32.u64.compose %v4627, %v4626
        %v4629 = vextract.low.u32 %v4628
        %v4630 = vextract.high.u32 %v4628
        %v4631 = vmul.u32.u64.compose %v4627, %v4622
        %v4632 = vextract.low.u32 %v4631
        %v4633 = vextract.high.u32 %v4631
        %v4634 = vmul.u32 %v4627, %v4618
        %v4635 = vadd.s32 %v4630, %v4632
        %vm4636 = vc.u32 %v4630, %v4632
        %v4637 = vadd.s32 %v4633, 1
        %v4638 = vsel %vm4636, %v4637, %v4633
        %v4639 = vadd.s32 %v4634, %v4638
        %v4640 = vadd.s32 %v4639, 536870912
        %v4641 = vshrl.u32 %v4640, 30
        %v4642 = vshll.u32 %v4641, 30
        %v4643 = vsub.s32 %v4639, %v4642
        %vm4644 = vcmp.lt.s32.totalorder %v4643, 0
        %v4645 = vsub.s32 0, %v4643
        %v4646 = vsel %vm4644, %v4645, %v4643
        %v4647 = vclz %v4646
        %v4648 = vsub.s32 %v4647, 2
        %vm4649 = vcmp.gt.s32.totalorder 0, %v4648
        %v4650 = vsel %vm4649, 0, %v4648
        %v4651 = vsub.s32 32, %v4650
        %v4652 = vshll.u32 %v4643, %v4650
        %v4653 = vshrl.u32 %v4635, %v4651
        %v4654 = vor.u32 %v4652, %v4653
        %v4655 = vsub.s32 4294967266, %v4650
        %v4656 = vadd.s32 %v4655, 127
        %v4657 = vshll.u32 %v4656, 23
        %v4658 = vor.u32 4788187, %v4657
        %v4659 = vand.u32 2147483647, %v4658
        %v4661 = vcvt.s32.f32 %v4654
        %v4662 = vmul.f32 %v4661, %v4659
        %v4663 = vxor.u32 %v4662, 2147483648
        %v4664 = vsel %vm4581, %v4663, %v4662
        %v4665 = vsub.s32 4, %v4641
        %v4666 = vsel %vm4581, %v4665, %v4641
        %v4667 = vsel %vm4580, %v1418, %v4664
        %v4668 = vsel %vm4580, 0, %v4666
        %v4669 = vcosq.f32.pop %v4667
        %v4670 = vsinq.f32.pop %v4667
        %vm4671 = vweird.f32 %v1418
        %v4672 = vadd.s32 %v4668, 3
        %v4673 = vand.u32 %v4672, 3
        %vm4674 = vcmp.lt.s32.totalorder %v4673, 2
        %vm4675 = vcmp.eq.s32.totalorder %v4673, 0
        %v4676 = vxor.u32 %v4670, 2147483648
        %v4677 = vsel %vm4675, %v4669, %v4676
        %vm4678 = vcmp.eq.s32.totalorder %v4673, 2
        %v4679 = vxor.u32 %v4669, 2147483648
        %v4680 = vsel %vm4678, %v4679, %v4670
        %v4681 = vsel %vm4674, %v4677, %v4680
        %v4682 = vsel %vm4671, nan, %v4681
        %v4683 = vand.u32 2147483647, %v1419
        %vm4684 = vcmp.le.f32.partialorder %v4683, 0.7853982
        %vm4685 = vcmp.lt.s32.totalorder %v1419, 0
        %v4686 = vand.u32 %v1419, 2139095040
        %v4687 = vshrl.u32 %v4686, 23
        %v4688 = vsub.s32 %v4687, 127
        %v4689 = vand.u32 2147483647, %v1419
        %v4690 = vand.u32 %v4689, 8388607
        %v4691 = vor.u32 %v4690, 8388608
        %v4692 = vsub.s32 0, %v4691
        %v4693 = vadd.s32 %v4688, 1
        %vm4694 = vcmp.gt.s32.totalorder %v4693, 0
        %v4695 = vsel %vm4694, %v4693, 0
        %v4696 = vshrl.u32 %v4695, 5
        %v4697 = vand.u32 %v4695, 31
        %v4698 = vsub.s32 32, %v4697
        %v4699 = vshrl.u32 683565275, %v4698
        %v4700 = vshll.u32 683565275, %v4697
        %v4701 = vshrl.u32 2475754826, %v4698
        %v4702 = vor.u32 %v4700, %v4701
        %v4703 = vshll.u32 2475754826, %v4697
        %v4704 = vshrl.u32 2131351028, %v4698
        %v4705 = vor.u32 %v4703, %v4704
        %v4706 = vshll.u32 2131351028, %v4697
        %v4707 = vshrl.u32 2102212464, %v4698
        %v4708 = vor.u32 %v4706, %v4707
        %v4709 = vshll.u32 2102212464, %v4697
        %v4710 = vshrl.u32 920167782, %v4698
        %v4711 = vor.u32 %v4709, %v4710
        %v4712 = vshll.u32 920167782, %v4697
        %v4713 = vshrl.u32 1326507024, %v4698
        %v4714 = vor.u32 %v4712, %v4713
        %vm4715 = vcmp.lt.s32.totalorder %v4696, 1
        %vm4716 = vcmp.lt.s32.totalorder %v4696, 2
        %vm4717 = vcmp.lt.s32.totalorder %v4696, 3
        %vm4718 = vcmp.lt.s32.totalorder %v4696, 4
        %v4719 = vsel %vm4715, %v4699, %v4702
        %v4720 = vsel %vm4718, %v4708, 2102212464
        %v4721 = vsel %vm4717, %v4705, %v4720
        %v4722 = vsel %vm4716, %v4719, %v4721
        %v4723 = vsel %vm4715, %v4702, %v4705
        %v4724 = vsel %vm4718, %v4711, 920167782
        %v4725 = vsel %vm4717, %v4708, %v4724
        %v4726 = vsel %vm4716, %v4723, %v4725
        %v4727 = vsel %vm4715, %v4705, %v4708
        %v4728 = vsel %vm4718, %v4714, 1326507024
        %v4729 = vsel %vm4717, %v4711, %v4728
        %v4730 = vsel %vm4716, %v4727, %v4729
        %v4731 = vshll.u32 %v4691, 8
        %v4732 = vmul.u32.u64.compose %v4731, %v4730
        %v4733 = vextract.low.u32 %v4732
        %v4734 = vextract.high.u32 %v4732
        %v4735 = vmul.u32.u64.compose %v4731, %v4726
        %v4736 = vextract.low.u32 %v4735
        %v4737 = vextract.high.u32 %v4735
        %v4738 = vmul.u32 %v4731, %v4722
        %v4739 = vadd.s32 %v4734, %v4736
        %vm4740 = vc.u32 %v4734, %v4736
        %v4741 = vadd.s32 %v4737, 1
        %v4742 = vsel %vm4740, %v4741, %v4737
        %v4743 = vadd.s32 %v4738, %v4742
        %v4744 = vadd.s32 %v4743, 536870912
        %v4745 = vshrl.u32 %v4744, 30
        %v4746 = vshll.u32 %v4745, 30
        %v4747 = vsub.s32 %v4743, %v4746
        %vm4748 = vcmp.lt.s32.totalorder %v4747, 0
        %v4749 = vsub.s32 0, %v4747
        %v4750 = vsel %vm4748, %v4749, %v4747
        %v4751 = vclz %v4750
        %v4752 = vsub.s32 %v4751, 2
        %vm4753 = vcmp.gt.s32.totalorder 0, %v4752
        %v4754 = vsel %vm4753, 0, %v4752
        %v4755 = vsub.s32 32, %v4754
        %v4756 = vshll.u32 %v4747, %v4754
        %v4757 = vshrl.u32 %v4739, %v4755
        %v4758 = vor.u32 %v4756, %v4757
        %v4759 = vsub.s32 4294967266, %v4754
        %v4760 = vadd.s32 %v4759, 127
        %v4761 = vshll.u32 %v4760, 23
        %v4762 = vor.u32 4788187, %v4761
        %v4763 = vand.u32 2147483647, %v4762
        %v4765 = vcvt.s32.f32 %v4758
        %v4766 = vmul.f32 %v4765, %v4763
        %v4767 = vxor.u32 %v4766, 2147483648
        %v4768 = vsel %vm4685, %v4767, %v4766
        %v4769 = vsub.s32 4, %v4745
        %v4770 = vsel %vm4685, %v4769, %v4745
        %v4771 = vsel %vm4684, %v1419, %v4768
        %v4772 = vsel %vm4684, 0, %v4770
        %v4773 = vcosq.f32.pop %v4771
        %v4774 = vsinq.f32.pop %v4771
        %vm4775 = vweird.f32 %v1419
        %v4776 = vadd.s32 %v4772, 3
        %v4777 = vand.u32 %v4776, 3
        %vm4778 = vcmp.lt.s32.totalorder %v4777, 2
        %vm4779 = vcmp.eq.s32.totalorder %v4777, 0
        %v4780 = vxor.u32 %v4774, 2147483648
        %v4781 = vsel %vm4779, %v4773, %v4780
        %vm4782 = vcmp.eq.s32.totalorder %v4777, 2
        %v4783 = vxor.u32 %v4773, 2147483648
        %v4784 = vsel %vm4782, %v4783, %v4774
        %v4785 = vsel %vm4778, %v4781, %v4784
        %v4786 = vsel %vm4775, nan, %v4785
        %v4787 = vlaneseq
        %v4788 = vshrl.u32 %v4787, 7
        %v4789 = vsub.s32 0, %v4788
        %v4790 = vrot.slane %v1421, %v4789
        %v4791 = vmul.f32 %v1562, %v4790
        %v4792 = vmul.f32 %v1666, %v4790
        %v4793 = vmul.f32 %v1770, %v4790
        %v4794 = vmul.f32 %v1874, %v4790
        %v4795 = vmul.f32 %v1978, %v4790
        %v4796 = vmul.f32 %v2082, %v4790
        %v4797 = vmul.f32 %v2186, %v4790
        %v4798 = vmul.f32 %v2290, %v4790
        %v4799 = vmul.f32 %v2394, %v4790
        %v4800 = vmul.f32 %v2498, %v4790
        %v4801 = vmul.f32 %v2602, %v4790
        %v4802 = vmul.f32 %v2706, %v4790
        %v4803 = vmul.f32 %v2810, %v4790
        %v4804 = vmul.f32 %v2914, %v4790
        %v4805 = vmul.f32 %v3018, %v4790
        %v4806 = vmul.f32 %v3122, %v4790
        %v4807 = vmul.f32 %v3226, %v4790
        %v4808 = vmul.f32 %v3330, %v4790
        %v4809 = vmul.f32 %v3434, %v4790
        %v4810 = vmul.f32 %v3538, %v4790
        %v4811 = vmul.f32 %v3642, %v4790
        %v4812 = vmul.f32 %v3746, %v4790
        %v4813 = vmul.f32 %v3850, %v4790
        %v4814 = vmul.f32 %v3954, %v4790
        %v4815 = vmul.f32 %v4058, %v4790
        %v4816 = vmul.f32 %v4162, %v4790
        %v4817 = vmul.f32 %v4266, %v4790
        %v4818 = vmul.f32 %v4370, %v4790
        %v4819 = vmul.f32 %v4474, %v4790
        %v4820 = vmul.f32 %v4578, %v4790
        %v4821 = vmul.f32 %v4682, %v4790
        %v4822 = vmul.f32 %v4786, %v4790
        %v4823 = vadd.f32 %v1427, %v4791
        %v4824 = vadd.f32 %v1428, %v4792
        %v4825 = vadd.f32 %v1429, %v4793
        %v4826 = vadd.f32 %v1430, %v4794
        %v4827 = vadd.f32 %v1431, %v4795
        %v4828 = vadd.f32 %v1432, %v4796
        %v4829 = vadd.f32 %v1433, %v4797
        %v4830 = vadd.f32 %v1434, %v4798
        %v4831 = vadd.f32 %v1435, %v4799
        %v4832 = vadd.f32 %v1436, %v4800
        %v4833 = vadd.f32 %v1437, %v4801
        %v4834 = vadd.f32 %v1438, %v4802
        %v4835 = vadd.f32 %v1439, %v4803
        %v4836 = vadd.f32 %v1440, %v4804
        %v4837 = vadd.f32 %v1441, %v4805
        %v4838 = vadd.f32 %v1442, %v4806
        %v4839 = vadd.f32 %v1443, %v4807
        %v4840 = vadd.f32 %v1444, %v4808
        %v4841 = vadd.f32 %v1445, %v4809
        %v4842 = vadd.f32 %v1446, %v4810
        %v4843 = vadd.f32 %v1447, %v4811
        %v4844 = vadd.f32 %v1448, %v4812
        %v4845 = vadd.f32 %v1449, %v4813
        %v4846 = vadd.f32 %v1450, %v4814
        %v4847 = vadd.f32 %v1451, %v4815
        %v4848 = vadd.f32 %v1452, %v4816
        %v4849 = vadd.f32 %v1453, %v4817
        %v4850 = vadd.f32 %v1454, %v4818
        %v4851 = vadd.f32 %v1455, %v4819
        %v4852 = vadd.f32 %v1456, %v4820
        %v4853 = vadd.f32 %v1457, %v4821
        %v4854 = vadd.f32 %v1458, %v4822
        %v4855 = vand.u32 2147483647, %v1388
        %vm4856 = vcmp.le.f32.partialorder %v4855, 0.7853982
        %vm4857 = vcmp.lt.s32.totalorder %v1388, 0
        %v4858 = vand.u32 %v1388, 2139095040
        %v4859 = vshrl.u32 %v4858, 23
        %v4860 = vsub.s32 %v4859, 127
        %v4861 = vand.u32 2147483647, %v1388
        %v4862 = vand.u32 %v4861, 8388607
        %v4863 = vor.u32 %v4862, 8388608
        %v4864 = vsub.s32 0, %v4863
        %v4865 = vadd.s32 %v4860, 1
        %vm4866 = vcmp.gt.s32.totalorder %v4865, 0
        %v4867 = vsel %vm4866, %v4865, 0
        %v4868 = vshrl.u32 %v4867, 5
        %v4869 = vand.u32 %v4867, 31
        %v4870 = vsub.s32 32, %v4869
        %v4871 = vshrl.u32 683565275, %v4870
        %v4872 = vshll.u32 683565275, %v4869
        %v4873 = vshrl.u32 2475754826, %v4870
        %v4874 = vor.u32 %v4872, %v4873
        %v4875 = vshll.u32 2475754826, %v4869
        %v4876 = vshrl.u32 2131351028, %v4870
        %v4877 = vor.u32 %v4875, %v4876
        %v4878 = vshll.u32 2131351028, %v4869
        %v4879 = vshrl.u32 2102212464, %v4870
        %v4880 = vor.u32 %v4878, %v4879
        %v4881 = vshll.u32 2102212464, %v4869
        %v4882 = vshrl.u32 920167782, %v4870
        %v4883 = vor.u32 %v4881, %v4882
        %v4884 = vshll.u32 920167782, %v4869
        %v4885 = vshrl.u32 1326507024, %v4870
        %v4886 = vor.u32 %v4884, %v4885
        %vm4887 = vcmp.lt.s32.totalorder %v4868, 1
        %vm4888 = vcmp.lt.s32.totalorder %v4868, 2
        %vm4889 = vcmp.lt.s32.totalorder %v4868, 3
        %vm4890 = vcmp.lt.s32.totalorder %v4868, 4
        %v4891 = vsel %vm4887, %v4871, %v4874
        %v4892 = vsel %vm4890, %v4880, 2102212464
        %v4893 = vsel %vm4889, %v4877, %v4892
        %v4894 = vsel %vm4888, %v4891, %v4893
        %v4895 = vsel %vm4887, %v4874, %v4877
        %v4896 = vsel %vm4890, %v4883, 920167782
        %v4897 = vsel %vm4889, %v4880, %v4896
        %v4898 = vsel %vm4888, %v4895, %v4897
        %v4899 = vsel %vm4887, %v4877, %v4880
        %v4900 = vsel %vm4890, %v4886, 1326507024
        %v4901 = vsel %vm4889, %v4883, %v4900
        %v4902 = vsel %vm4888, %v4899, %v4901
        %v4903 = vshll.u32 %v4863, 8
        %v4904 = vmul.u32.u64.compose %v4903, %v4902
        %v4905 = vextract.low.u32 %v4904
        %v4906 = vextract.high.u32 %v4904
        %v4907 = vmul.u32.u64.compose %v4903, %v4898
        %v4908 = vextract.low.u32 %v4907
        %v4909 = vextract.high.u32 %v4907
        %v4910 = vmul.u32 %v4903, %v4894
        %v4911 = vadd.s32 %v4906, %v4908
        %vm4912 = vc.u32 %v4906, %v4908
        %v4913 = vadd.s32 %v4909, 1
        %v4914 = vsel %vm4912, %v4913, %v4909
        %v4915 = vadd.s32 %v4910, %v4914
        %v4916 = vadd.s32 %v4915, 536870912
        %v4917 = vshrl.u32 %v4916, 30
        %v4918 = vshll.u32 %v4917, 30
        %v4919 = vsub.s32 %v4915, %v4918
        %vm4920 = vcmp.lt.s32.totalorder %v4919, 0
        %v4921 = vsub.s32 0, %v4919
        %v4922 = vsel %vm4920, %v4921, %v4919
        %v4923 = vclz %v4922
        %v4924 = vsub.s32 %v4923, 2
        %vm4925 = vcmp.gt.s32.totalorder 0, %v4924
        %v4926 = vsel %vm4925, 0, %v4924
        %v4927 = vsub.s32 32, %v4926
        %v4928 = vshll.u32 %v4919, %v4926
        %v4929 = vshrl.u32 %v4911, %v4927
        %v4930 = vor.u32 %v4928, %v4929
        %v4931 = vsub.s32 4294967266, %v4926
        %v4932 = vadd.s32 %v4931, 127
        %v4933 = vshll.u32 %v4932, 23
        %v4934 = vor.u32 4788187, %v4933
        %v4935 = vand.u32 2147483647, %v4934
        %v4937 = vcvt.s32.f32 %v4930
        %v4938 = vmul.f32 %v4937, %v4935
        %v4939 = vxor.u32 %v4938, 2147483648
        %v4940 = vsel %vm4857, %v4939, %v4938
        %v4941 = vsub.s32 4, %v4917
        %v4942 = vsel %vm4857, %v4941, %v4917
        %v4943 = vsel %vm4856, %v1388, %v4940
        %v4944 = vsel %vm4856, 0, %v4942
        %v4945 = vcosq.f32.pop %v4943
        %v4946 = vsinq.f32.pop %v4943
        %vm4947 = vweird.f32 %v1388
        %v4948 = vand.u32 %v4944, 3
        %vm4949 = vcmp.lt.s32.totalorder %v4948, 2
        %vm4950 = vcmp.eq.s32.totalorder %v4948, 0
        %v4951 = vxor.u32 %v4946, 2147483648
        %v4952 = vsel %vm4950, %v4945, %v4951
        %vm4953 = vcmp.eq.s32.totalorder %v4948, 2
        %v4954 = vxor.u32 %v4945, 2147483648
        %v4955 = vsel %vm4953, %v4954, %v4946
        %v4956 = vsel %vm4949, %v4952, %v4955
        %v4957 = vsel %vm4947, nan, %v4956
        %v4958 = vand.u32 2147483647, %v1389
        %vm4959 = vcmp.le.f32.partialorder %v4958, 0.7853982
        %vm4960 = vcmp.lt.s32.totalorder %v1389, 0
        %v4961 = vand.u32 %v1389, 2139095040
        %v4962 = vshrl.u32 %v4961, 23
        %v4963 = vsub.s32 %v4962, 127
        %v4964 = vand.u32 2147483647, %v1389
        %v4965 = vand.u32 %v4964, 8388607
        %v4966 = vor.u32 %v4965, 8388608
        %v4967 = vsub.s32 0, %v4966
        %v4968 = vadd.s32 %v4963, 1
        %vm4969 = vcmp.gt.s32.totalorder %v4968, 0
        %v4970 = vsel %vm4969, %v4968, 0
        %v4971 = vshrl.u32 %v4970, 5
        %v4972 = vand.u32 %v4970, 31
        %v4973 = vsub.s32 32, %v4972
        %v4974 = vshrl.u32 683565275, %v4973
        %v4975 = vshll.u32 683565275, %v4972
        %v4976 = vshrl.u32 2475754826, %v4973
        %v4977 = vor.u32 %v4975, %v4976
        %v4978 = vshll.u32 2475754826, %v4972
        %v4979 = vshrl.u32 2131351028, %v4973
        %v4980 = vor.u32 %v4978, %v4979
        %v4981 = vshll.u32 2131351028, %v4972
        %v4982 = vshrl.u32 2102212464, %v4973
        %v4983 = vor.u32 %v4981, %v4982
        %v4984 = vshll.u32 2102212464, %v4972
        %v4985 = vshrl.u32 920167782, %v4973
        %v4986 = vor.u32 %v4984, %v4985
        %v4987 = vshll.u32 920167782, %v4972
        %v4988 = vshrl.u32 1326507024, %v4973
        %v4989 = vor.u32 %v4987, %v4988
        %vm4990 = vcmp.lt.s32.totalorder %v4971, 1
        %vm4991 = vcmp.lt.s32.totalorder %v4971, 2
        %vm4992 = vcmp.lt.s32.totalorder %v4971, 3
        %vm4993 = vcmp.lt.s32.totalorder %v4971, 4
        %v4994 = vsel %vm4990, %v4974, %v4977
        %v4995 = vsel %vm4993, %v4983, 2102212464
        %v4996 = vsel %vm4992, %v4980, %v4995
        %v4997 = vsel %vm4991, %v4994, %v4996
        %v4998 = vsel %vm4990, %v4977, %v4980
        %v4999 = vsel %vm4993, %v4986, 920167782
        %v5000 = vsel %vm4992, %v4983, %v4999
        %v5001 = vsel %vm4991, %v4998, %v5000
        %v5002 = vsel %vm4990, %v4980, %v4983
        %v5003 = vsel %vm4993, %v4989, 1326507024
        %v5004 = vsel %vm4992, %v4986, %v5003
        %v5005 = vsel %vm4991, %v5002, %v5004
        %v5006 = vshll.u32 %v4966, 8
        %v5007 = vmul.u32.u64.compose %v5006, %v5005
        %v5008 = vextract.low.u32 %v5007
        %v5009 = vextract.high.u32 %v5007
        %v5010 = vmul.u32.u64.compose %v5006, %v5001
        %v5011 = vextract.low.u32 %v5010
        %v5012 = vextract.high.u32 %v5010
        %v5013 = vmul.u32 %v5006, %v4997
        %v5014 = vadd.s32 %v5009, %v5011
        %vm5015 = vc.u32 %v5009, %v5011
        %v5016 = vadd.s32 %v5012, 1
        %v5017 = vsel %vm5015, %v5016, %v5012
        %v5018 = vadd.s32 %v5013, %v5017
        %v5019 = vadd.s32 %v5018, 536870912
        %v5020 = vshrl.u32 %v5019, 30
        %v5021 = vshll.u32 %v5020, 30
        %v5022 = vsub.s32 %v5018, %v5021
        %vm5023 = vcmp.lt.s32.totalorder %v5022, 0
        %v5024 = vsub.s32 0, %v5022
        %v5025 = vsel %vm5023, %v5024, %v5022
        %v5026 = vclz %v5025
        %v5027 = vsub.s32 %v5026, 2
        %vm5028 = vcmp.gt.s32.totalorder 0, %v5027
        %v5029 = vsel %vm5028, 0, %v5027
        %v5030 = vsub.s32 32, %v5029
        %v5031 = vshll.u32 %v5022, %v5029
        %v5032 = vshrl.u32 %v5014, %v5030
        %v5033 = vor.u32 %v5031, %v5032
        %v5034 = vsub.s32 4294967266, %v5029
        %v5035 = vadd.s32 %v5034, 127
        %v5036 = vshll.u32 %v5035, 23
        %v5037 = vor.u32 4788187, %v5036
        %v5038 = vand.u32 2147483647, %v5037
        %v5040 = vcvt.s32.f32 %v5033
        %v5041 = vmul.f32 %v5040, %v5038
        %v5042 = vxor.u32 %v5041, 2147483648
        %v5043 = vsel %vm4960, %v5042, %v5041
        %v5044 = vsub.s32 4, %v5020
        %v5045 = vsel %vm4960, %v5044, %v5020
        %v5046 = vsel %vm4959, %v1389, %v5043
        %v5047 = vsel %vm4959, 0, %v5045
        %v5048 = vcosq.f32.pop %v5046
        %v5049 = vsinq.f32.pop %v5046
        %vm5050 = vweird.f32 %v1389
        %v5051 = vand.u32 %v5047, 3
        %vm5052 = vcmp.lt.s32.totalorder %v5051, 2
        %vm5053 = vcmp.eq.s32.totalorder %v5051, 0
        %v5054 = vxor.u32 %v5049, 2147483648
        %v5055 = vsel %vm5053, %v5048, %v5054
        %vm5056 = vcmp.eq.s32.totalorder %v5051, 2
        %v5057 = vxor.u32 %v5048, 2147483648
        %v5058 = vsel %vm5056, %v5057, %v5049
        %v5059 = vsel %vm5052, %v5055, %v5058
        %v5060 = vsel %vm5050, nan, %v5059
        %v5061 = vand.u32 2147483647, %v1390
        %vm5062 = vcmp.le.f32.partialorder %v5061, 0.7853982
        %vm5063 = vcmp.lt.s32.totalorder %v1390, 0
        %v5064 = vand.u32 %v1390, 2139095040
        %v5065 = vshrl.u32 %v5064, 23
        %v5066 = vsub.s32 %v5065, 127
        %v5067 = vand.u32 2147483647, %v1390
        %v5068 = vand.u32 %v5067, 8388607
        %v5069 = vor.u32 %v5068, 8388608
        %v5070 = vsub.s32 0, %v5069
        %v5071 = vadd.s32 %v5066, 1
        %vm5072 = vcmp.gt.s32.totalorder %v5071, 0
        %v5073 = vsel %vm5072, %v5071, 0
        %v5074 = vshrl.u32 %v5073, 5
        %v5075 = vand.u32 %v5073, 31
        %v5076 = vsub.s32 32, %v5075
        %v5077 = vshrl.u32 683565275, %v5076
        %v5078 = vshll.u32 683565275, %v5075
        %v5079 = vshrl.u32 2475754826, %v5076
        %v5080 = vor.u32 %v5078, %v5079
        %v5081 = vshll.u32 2475754826, %v5075
        %v5082 = vshrl.u32 2131351028, %v5076
        %v5083 = vor.u32 %v5081, %v5082
        %v5084 = vshll.u32 2131351028, %v5075
        %v5085 = vshrl.u32 2102212464, %v5076
        %v5086 = vor.u32 %v5084, %v5085
        %v5087 = vshll.u32 2102212464, %v5075
        %v5088 = vshrl.u32 920167782, %v5076
        %v5089 = vor.u32 %v5087, %v5088
        %v5090 = vshll.u32 920167782, %v5075
        %v5091 = vshrl.u32 1326507024, %v5076
        %v5092 = vor.u32 %v5090, %v5091
        %vm5093 = vcmp.lt.s32.totalorder %v5074, 1
        %vm5094 = vcmp.lt.s32.totalorder %v5074, 2
        %vm5095 = vcmp.lt.s32.totalorder %v5074, 3
        %vm5096 = vcmp.lt.s32.totalorder %v5074, 4
        %v5097 = vsel %vm5093, %v5077, %v5080
        %v5098 = vsel %vm5096, %v5086, 2102212464
        %v5099 = vsel %vm5095, %v5083, %v5098
        %v5100 = vsel %vm5094, %v5097, %v5099
        %v5101 = vsel %vm5093, %v5080, %v5083
        %v5102 = vsel %vm5096, %v5089, 920167782
        %v5103 = vsel %vm5095, %v5086, %v5102
        %v5104 = vsel %vm5094, %v5101, %v5103
        %v5105 = vsel %vm5093, %v5083, %v5086
        %v5106 = vsel %vm5096, %v5092, 1326507024
        %v5107 = vsel %vm5095, %v5089, %v5106
        %v5108 = vsel %vm5094, %v5105, %v5107
        %v5109 = vshll.u32 %v5069, 8
        %v5110 = vmul.u32.u64.compose %v5109, %v5108
        %v5111 = vextract.low.u32 %v5110
        %v5112 = vextract.high.u32 %v5110
        %v5113 = vmul.u32.u64.compose %v5109, %v5104
        %v5114 = vextract.low.u32 %v5113
        %v5115 = vextract.high.u32 %v5113
        %v5116 = vmul.u32 %v5109, %v5100
        %v5117 = vadd.s32 %v5112, %v5114
        %vm5118 = vc.u32 %v5112, %v5114
        %v5119 = vadd.s32 %v5115, 1
        %v5120 = vsel %vm5118, %v5119, %v5115
        %v5121 = vadd.s32 %v5116, %v5120
        %v5122 = vadd.s32 %v5121, 536870912
        %v5123 = vshrl.u32 %v5122, 30
        %v5124 = vshll.u32 %v5123, 30
        %v5125 = vsub.s32 %v5121, %v5124
        %vm5126 = vcmp.lt.s32.totalorder %v5125, 0
        %v5127 = vsub.s32 0, %v5125
        %v5128 = vsel %vm5126, %v5127, %v5125
        %v5129 = vclz %v5128
        %v5130 = vsub.s32 %v5129, 2
        %vm5131 = vcmp.gt.s32.totalorder 0, %v5130
        %v5132 = vsel %vm5131, 0, %v5130
        %v5133 = vsub.s32 32, %v5132
        %v5134 = vshll.u32 %v5125, %v5132
        %v5135 = vshrl.u32 %v5117, %v5133
        %v5136 = vor.u32 %v5134, %v5135
        %v5137 = vsub.s32 4294967266, %v5132
        %v5138 = vadd.s32 %v5137, 127
        %v5139 = vshll.u32 %v5138, 23
        %v5140 = vor.u32 4788187, %v5139
        %v5141 = vand.u32 2147483647, %v5140
        %v5143 = vcvt.s32.f32 %v5136
        %v5144 = vmul.f32 %v5143, %v5141
        %v5145 = vxor.u32 %v5144, 2147483648
        %v5146 = vsel %vm5063, %v5145, %v5144
        %v5147 = vsub.s32 4, %v5123
        %v5148 = vsel %vm5063, %v5147, %v5123
        %v5149 = vsel %vm5062, %v1390, %v5146
        %v5150 = vsel %vm5062, 0, %v5148
        %v5151 = vcosq.f32.pop %v5149
        %v5152 = vsinq.f32.pop %v5149
        %vm5153 = vweird.f32 %v1390
        %v5154 = vand.u32 %v5150, 3
        %vm5155 = vcmp.lt.s32.totalorder %v5154, 2
        %vm5156 = vcmp.eq.s32.totalorder %v5154, 0
        %v5157 = vxor.u32 %v5152, 2147483648
        %v5158 = vsel %vm5156, %v5151, %v5157
        %vm5159 = vcmp.eq.s32.totalorder %v5154, 2
        %v5160 = vxor.u32 %v5151, 2147483648
        %v5161 = vsel %vm5159, %v5160, %v5152
        %v5162 = vsel %vm5155, %v5158, %v5161
        %v5163 = vsel %vm5153, nan, %v5162
        %v5164 = vand.u32 2147483647, %v1391
        %vm5165 = vcmp.le.f32.partialorder %v5164, 0.7853982
        %vm5166 = vcmp.lt.s32.totalorder %v1391, 0
        %v5167 = vand.u32 %v1391, 2139095040
        %v5168 = vshrl.u32 %v5167, 23
        %v5169 = vsub.s32 %v5168, 127
        %v5170 = vand.u32 2147483647, %v1391
        %v5171 = vand.u32 %v5170, 8388607
        %v5172 = vor.u32 %v5171, 8388608
        %v5173 = vsub.s32 0, %v5172
        %v5174 = vadd.s32 %v5169, 1
        %vm5175 = vcmp.gt.s32.totalorder %v5174, 0
        %v5176 = vsel %vm5175, %v5174, 0
        %v5177 = vshrl.u32 %v5176, 5
        %v5178 = vand.u32 %v5176, 31
        %v5179 = vsub.s32 32, %v5178
        %v5180 = vshrl.u32 683565275, %v5179
        %v5181 = vshll.u32 683565275, %v5178
        %v5182 = vshrl.u32 2475754826, %v5179
        %v5183 = vor.u32 %v5181, %v5182
        %v5184 = vshll.u32 2475754826, %v5178
        %v5185 = vshrl.u32 2131351028, %v5179
        %v5186 = vor.u32 %v5184, %v5185
        %v5187 = vshll.u32 2131351028, %v5178
        %v5188 = vshrl.u32 2102212464, %v5179
        %v5189 = vor.u32 %v5187, %v5188
        %v5190 = vshll.u32 2102212464, %v5178
        %v5191 = vshrl.u32 920167782, %v5179
        %v5192 = vor.u32 %v5190, %v5191
        %v5193 = vshll.u32 920167782, %v5178
        %v5194 = vshrl.u32 1326507024, %v5179
        %v5195 = vor.u32 %v5193, %v5194
        %vm5196 = vcmp.lt.s32.totalorder %v5177, 1
        %vm5197 = vcmp.lt.s32.totalorder %v5177, 2
        %vm5198 = vcmp.lt.s32.totalorder %v5177, 3
        %vm5199 = vcmp.lt.s32.totalorder %v5177, 4
        %v5200 = vsel %vm5196, %v5180, %v5183
        %v5201 = vsel %vm5199, %v5189, 2102212464
        %v5202 = vsel %vm5198, %v5186, %v5201
        %v5203 = vsel %vm5197, %v5200, %v5202
        %v5204 = vsel %vm5196, %v5183, %v5186
        %v5205 = vsel %vm5199, %v5192, 920167782
        %v5206 = vsel %vm5198, %v5189, %v5205
        %v5207 = vsel %vm5197, %v5204, %v5206
        %v5208 = vsel %vm5196, %v5186, %v5189
        %v5209 = vsel %vm5199, %v5195, 1326507024
        %v5210 = vsel %vm5198, %v5192, %v5209
        %v5211 = vsel %vm5197, %v5208, %v5210
        %v5212 = vshll.u32 %v5172, 8
        %v5213 = vmul.u32.u64.compose %v5212, %v5211
        %v5214 = vextract.low.u32 %v5213
        %v5215 = vextract.high.u32 %v5213
        %v5216 = vmul.u32.u64.compose %v5212, %v5207
        %v5217 = vextract.low.u32 %v5216
        %v5218 = vextract.high.u32 %v5216
        %v5219 = vmul.u32 %v5212, %v5203
        %v5220 = vadd.s32 %v5215, %v5217
        %vm5221 = vc.u32 %v5215, %v5217
        %v5222 = vadd.s32 %v5218, 1
        %v5223 = vsel %vm5221, %v5222, %v5218
        %v5224 = vadd.s32 %v5219, %v5223
        %v5225 = vadd.s32 %v5224, 536870912
        %v5226 = vshrl.u32 %v5225, 30
        %v5227 = vshll.u32 %v5226, 30
        %v5228 = vsub.s32 %v5224, %v5227
        %vm5229 = vcmp.lt.s32.totalorder %v5228, 0
        %v5230 = vsub.s32 0, %v5228
        %v5231 = vsel %vm5229, %v5230, %v5228
        %v5232 = vclz %v5231
        %v5233 = vsub.s32 %v5232, 2
        %vm5234 = vcmp.gt.s32.totalorder 0, %v5233
        %v5235 = vsel %vm5234, 0, %v5233
        %v5236 = vsub.s32 32, %v5235
        %v5237 = vshll.u32 %v5228, %v5235
        %v5238 = vshrl.u32 %v5220, %v5236
        %v5239 = vor.u32 %v5237, %v5238
        %v5240 = vsub.s32 4294967266, %v5235
        %v5241 = vadd.s32 %v5240, 127
        %v5242 = vshll.u32 %v5241, 23
        %v5243 = vor.u32 4788187, %v5242
        %v5244 = vand.u32 2147483647, %v5243
        %v5246 = vcvt.s32.f32 %v5239
        %v5247 = vmul.f32 %v5246, %v5244
        %v5248 = vxor.u32 %v5247, 2147483648
        %v5249 = vsel %vm5166, %v5248, %v5247
        %v5250 = vsub.s32 4, %v5226
        %v5251 = vsel %vm5166, %v5250, %v5226
        %v5252 = vsel %vm5165, %v1391, %v5249
        %v5253 = vsel %vm5165, 0, %v5251
        %v5254 = vcosq.f32.pop %v5252
        %v5255 = vsinq.f32.pop %v5252
        %vm5256 = vweird.f32 %v1391
        %v5257 = vand.u32 %v5253, 3
        %vm5258 = vcmp.lt.s32.totalorder %v5257, 2
        %vm5259 = vcmp.eq.s32.totalorder %v5257, 0
        %v5260 = vxor.u32 %v5255, 2147483648
        %v5261 = vsel %vm5259, %v5254, %v5260
        %vm5262 = vcmp.eq.s32.totalorder %v5257, 2
        %v5263 = vxor.u32 %v5254, 2147483648
        %v5264 = vsel %vm5262, %v5263, %v5255
        %v5265 = vsel %vm5258, %v5261, %v5264
        %v5266 = vsel %vm5256, nan, %v5265
        %v5267 = vand.u32 2147483647, %v1392
        %vm5268 = vcmp.le.f32.partialorder %v5267, 0.7853982
        %vm5269 = vcmp.lt.s32.totalorder %v1392, 0
        %v5270 = vand.u32 %v1392, 2139095040
        %v5271 = vshrl.u32 %v5270, 23
        %v5272 = vsub.s32 %v5271, 127
        %v5273 = vand.u32 2147483647, %v1392
        %v5274 = vand.u32 %v5273, 8388607
        %v5275 = vor.u32 %v5274, 8388608
        %v5276 = vsub.s32 0, %v5275
        %v5277 = vadd.s32 %v5272, 1
        %vm5278 = vcmp.gt.s32.totalorder %v5277, 0
        %v5279 = vsel %vm5278, %v5277, 0
        %v5280 = vshrl.u32 %v5279, 5
        %v5281 = vand.u32 %v5279, 31
        %v5282 = vsub.s32 32, %v5281
        %v5283 = vshrl.u32 683565275, %v5282
        %v5284 = vshll.u32 683565275, %v5281
        %v5285 = vshrl.u32 2475754826, %v5282
        %v5286 = vor.u32 %v5284, %v5285
        %v5287 = vshll.u32 2475754826, %v5281
        %v5288 = vshrl.u32 2131351028, %v5282
        %v5289 = vor.u32 %v5287, %v5288
        %v5290 = vshll.u32 2131351028, %v5281
        %v5291 = vshrl.u32 2102212464, %v5282
        %v5292 = vor.u32 %v5290, %v5291
        %v5293 = vshll.u32 2102212464, %v5281
        %v5294 = vshrl.u32 920167782, %v5282
        %v5295 = vor.u32 %v5293, %v5294
        %v5296 = vshll.u32 920167782, %v5281
        %v5297 = vshrl.u32 1326507024, %v5282
        %v5298 = vor.u32 %v5296, %v5297
        %vm5299 = vcmp.lt.s32.totalorder %v5280, 1
        %vm5300 = vcmp.lt.s32.totalorder %v5280, 2
        %vm5301 = vcmp.lt.s32.totalorder %v5280, 3
        %vm5302 = vcmp.lt.s32.totalorder %v5280, 4
        %v5303 = vsel %vm5299, %v5283, %v5286
        %v5304 = vsel %vm5302, %v5292, 2102212464
        %v5305 = vsel %vm5301, %v5289, %v5304
        %v5306 = vsel %vm5300, %v5303, %v5305
        %v5307 = vsel %vm5299, %v5286, %v5289
        %v5308 = vsel %vm5302, %v5295, 920167782
        %v5309 = vsel %vm5301, %v5292, %v5308
        %v5310 = vsel %vm5300, %v5307, %v5309
        %v5311 = vsel %vm5299, %v5289, %v5292
        %v5312 = vsel %vm5302, %v5298, 1326507024
        %v5313 = vsel %vm5301, %v5295, %v5312
        %v5314 = vsel %vm5300, %v5311, %v5313
        %v5315 = vshll.u32 %v5275, 8
        %v5316 = vmul.u32.u64.compose %v5315, %v5314
        %v5317 = vextract.low.u32 %v5316
        %v5318 = vextract.high.u32 %v5316
        %v5319 = vmul.u32.u64.compose %v5315, %v5310
        %v5320 = vextract.low.u32 %v5319
        %v5321 = vextract.high.u32 %v5319
        %v5322 = vmul.u32 %v5315, %v5306
        %v5323 = vadd.s32 %v5318, %v5320
        %vm5324 = vc.u32 %v5318, %v5320
        %v5325 = vadd.s32 %v5321, 1
        %v5326 = vsel %vm5324, %v5325, %v5321
        %v5327 = vadd.s32 %v5322, %v5326
        %v5328 = vadd.s32 %v5327, 536870912
        %v5329 = vshrl.u32 %v5328, 30
        %v5330 = vshll.u32 %v5329, 30
        %v5331 = vsub.s32 %v5327, %v5330
        %vm5332 = vcmp.lt.s32.totalorder %v5331, 0
        %v5333 = vsub.s32 0, %v5331
        %v5334 = vsel %vm5332, %v5333, %v5331
        %v5335 = vclz %v5334
        %v5336 = vsub.s32 %v5335, 2
        %vm5337 = vcmp.gt.s32.totalorder 0, %v5336
        %v5338 = vsel %vm5337, 0, %v5336
        %v5339 = vsub.s32 32, %v5338
        %v5340 = vshll.u32 %v5331, %v5338
        %v5341 = vshrl.u32 %v5323, %v5339
        %v5342 = vor.u32 %v5340, %v5341
        %v5343 = vsub.s32 4294967266, %v5338
        %v5344 = vadd.s32 %v5343, 127
        %v5345 = vshll.u32 %v5344, 23
        %v5346 = vor.u32 4788187, %v5345
        %v5347 = vand.u32 2147483647, %v5346
        %v5349 = vcvt.s32.f32 %v5342
        %v5350 = vmul.f32 %v5349, %v5347
        %v5351 = vxor.u32 %v5350, 2147483648
        %v5352 = vsel %vm5269, %v5351, %v5350
        %v5353 = vsub.s32 4, %v5329
        %v5354 = vsel %vm5269, %v5353, %v5329
        %v5355 = vsel %vm5268, %v1392, %v5352
        %v5356 = vsel %vm5268, 0, %v5354
        %v5357 = vcosq.f32.pop %v5355
        %v5358 = vsinq.f32.pop %v5355
        %vm5359 = vweird.f32 %v1392
        %v5360 = vand.u32 %v5356, 3
        %vm5361 = vcmp.lt.s32.totalorder %v5360, 2
        %vm5362 = vcmp.eq.s32.totalorder %v5360, 0
        %v5363 = vxor.u32 %v5358, 2147483648
        %v5364 = vsel %vm5362, %v5357, %v5363
        %vm5365 = vcmp.eq.s32.totalorder %v5360, 2
        %v5366 = vxor.u32 %v5357, 2147483648
        %v5367 = vsel %vm5365, %v5366, %v5358
        %v5368 = vsel %vm5361, %v5364, %v5367
        %v5369 = vsel %vm5359, nan, %v5368
        %v5370 = vand.u32 2147483647, %v1393
        %vm5371 = vcmp.le.f32.partialorder %v5370, 0.7853982
        %vm5372 = vcmp.lt.s32.totalorder %v1393, 0
        %v5373 = vand.u32 %v1393, 2139095040
        %v5374 = vshrl.u32 %v5373, 23
        %v5375 = vsub.s32 %v5374, 127
        %v5376 = vand.u32 2147483647, %v1393
        %v5377 = vand.u32 %v5376, 8388607
        %v5378 = vor.u32 %v5377, 8388608
        %v5379 = vsub.s32 0, %v5378
        %v5380 = vadd.s32 %v5375, 1
        %vm5381 = vcmp.gt.s32.totalorder %v5380, 0
        %v5382 = vsel %vm5381, %v5380, 0
        %v5383 = vshrl.u32 %v5382, 5
        %v5384 = vand.u32 %v5382, 31
        %v5385 = vsub.s32 32, %v5384
        %v5386 = vshrl.u32 683565275, %v5385
        %v5387 = vshll.u32 683565275, %v5384
        %v5388 = vshrl.u32 2475754826, %v5385
        %v5389 = vor.u32 %v5387, %v5388
        %v5390 = vshll.u32 2475754826, %v5384
        %v5391 = vshrl.u32 2131351028, %v5385
        %v5392 = vor.u32 %v5390, %v5391
        %v5393 = vshll.u32 2131351028, %v5384
        %v5394 = vshrl.u32 2102212464, %v5385
        %v5395 = vor.u32 %v5393, %v5394
        %v5396 = vshll.u32 2102212464, %v5384
        %v5397 = vshrl.u32 920167782, %v5385
        %v5398 = vor.u32 %v5396, %v5397
        %v5399 = vshll.u32 920167782, %v5384
        %v5400 = vshrl.u32 1326507024, %v5385
        %v5401 = vor.u32 %v5399, %v5400
        %vm5402 = vcmp.lt.s32.totalorder %v5383, 1
        %vm5403 = vcmp.lt.s32.totalorder %v5383, 2
        %vm5404 = vcmp.lt.s32.totalorder %v5383, 3
        %vm5405 = vcmp.lt.s32.totalorder %v5383, 4
        %v5406 = vsel %vm5402, %v5386, %v5389
        %v5407 = vsel %vm5405, %v5395, 2102212464
        %v5408 = vsel %vm5404, %v5392, %v5407
        %v5409 = vsel %vm5403, %v5406, %v5408
        %v5410 = vsel %vm5402, %v5389, %v5392
        %v5411 = vsel %vm5405, %v5398, 920167782
        %v5412 = vsel %vm5404, %v5395, %v5411
        %v5413 = vsel %vm5403, %v5410, %v5412
        %v5414 = vsel %vm5402, %v5392, %v5395
        %v5415 = vsel %vm5405, %v5401, 1326507024
        %v5416 = vsel %vm5404, %v5398, %v5415
        %v5417 = vsel %vm5403, %v5414, %v5416
        %v5418 = vshll.u32 %v5378, 8
        %v5419 = vmul.u32.u64.compose %v5418, %v5417
        %v5420 = vextract.low.u32 %v5419
        %v5421 = vextract.high.u32 %v5419
        %v5422 = vmul.u32.u64.compose %v5418, %v5413
        %v5423 = vextract.low.u32 %v5422
        %v5424 = vextract.high.u32 %v5422
        %v5425 = vmul.u32 %v5418, %v5409
        %v5426 = vadd.s32 %v5421, %v5423
        %vm5427 = vc.u32 %v5421, %v5423
        %v5428 = vadd.s32 %v5424, 1
        %v5429 = vsel %vm5427, %v5428, %v5424
        %v5430 = vadd.s32 %v5425, %v5429
        %v5431 = vadd.s32 %v5430, 536870912
        %v5432 = vshrl.u32 %v5431, 30
        %v5433 = vshll.u32 %v5432, 30
        %v5434 = vsub.s32 %v5430, %v5433
        %vm5435 = vcmp.lt.s32.totalorder %v5434, 0
        %v5436 = vsub.s32 0, %v5434
        %v5437 = vsel %vm5435, %v5436, %v5434
        %v5438 = vclz %v5437
        %v5439 = vsub.s32 %v5438, 2
        %vm5440 = vcmp.gt.s32.totalorder 0, %v5439
        %v5441 = vsel %vm5440, 0, %v5439
        %v5442 = vsub.s32 32, %v5441
        %v5443 = vshll.u32 %v5434, %v5441
        %v5444 = vshrl.u32 %v5426, %v5442
        %v5445 = vor.u32 %v5443, %v5444
        %v5446 = vsub.s32 4294967266, %v5441
        %v5447 = vadd.s32 %v5446, 127
        %v5448 = vshll.u32 %v5447, 23
        %v5449 = vor.u32 4788187, %v5448
        %v5450 = vand.u32 2147483647, %v5449
        %v5452 = vcvt.s32.f32 %v5445
        %v5453 = vmul.f32 %v5452, %v5450
        %v5454 = vxor.u32 %v5453, 2147483648
        %v5455 = vsel %vm5372, %v5454, %v5453
        %v5456 = vsub.s32 4, %v5432
        %v5457 = vsel %vm5372, %v5456, %v5432
        %v5458 = vsel %vm5371, %v1393, %v5455
        %v5459 = vsel %vm5371, 0, %v5457
        %v5460 = vcosq.f32.pop %v5458
        %v5461 = vsinq.f32.pop %v5458
        %vm5462 = vweird.f32 %v1393
        %v5463 = vand.u32 %v5459, 3
        %vm5464 = vcmp.lt.s32.totalorder %v5463, 2
        %vm5465 = vcmp.eq.s32.totalorder %v5463, 0
        %v5466 = vxor.u32 %v5461, 2147483648
        %v5467 = vsel %vm5465, %v5460, %v5466
        %vm5468 = vcmp.eq.s32.totalorder %v5463, 2
        %v5469 = vxor.u32 %v5460, 2147483648
        %v5470 = vsel %vm5468, %v5469, %v5461
        %v5471 = vsel %vm5464, %v5467, %v5470
        %v5472 = vsel %vm5462, nan, %v5471
        %v5473 = vand.u32 2147483647, %v1394
        %vm5474 = vcmp.le.f32.partialorder %v5473, 0.7853982
        %vm5475 = vcmp.lt.s32.totalorder %v1394, 0
        %v5476 = vand.u32 %v1394, 2139095040
        %v5477 = vshrl.u32 %v5476, 23
        %v5478 = vsub.s32 %v5477, 127
        %v5479 = vand.u32 2147483647, %v1394
        %v5480 = vand.u32 %v5479, 8388607
        %v5481 = vor.u32 %v5480, 8388608
        %v5482 = vsub.s32 0, %v5481
        %v5483 = vadd.s32 %v5478, 1
        %vm5484 = vcmp.gt.s32.totalorder %v5483, 0
        %v5485 = vsel %vm5484, %v5483, 0
        %v5486 = vshrl.u32 %v5485, 5
        %v5487 = vand.u32 %v5485, 31
        %v5488 = vsub.s32 32, %v5487
        %v5489 = vshrl.u32 683565275, %v5488
        %v5490 = vshll.u32 683565275, %v5487
        %v5491 = vshrl.u32 2475754826, %v5488
        %v5492 = vor.u32 %v5490, %v5491
        %v5493 = vshll.u32 2475754826, %v5487
        %v5494 = vshrl.u32 2131351028, %v5488
        %v5495 = vor.u32 %v5493, %v5494
        %v5496 = vshll.u32 2131351028, %v5487
        %v5497 = vshrl.u32 2102212464, %v5488
        %v5498 = vor.u32 %v5496, %v5497
        %v5499 = vshll.u32 2102212464, %v5487
        %v5500 = vshrl.u32 920167782, %v5488
        %v5501 = vor.u32 %v5499, %v5500
        %v5502 = vshll.u32 920167782, %v5487
        %v5503 = vshrl.u32 1326507024, %v5488
        %v5504 = vor.u32 %v5502, %v5503
        %vm5505 = vcmp.lt.s32.totalorder %v5486, 1
        %vm5506 = vcmp.lt.s32.totalorder %v5486, 2
        %vm5507 = vcmp.lt.s32.totalorder %v5486, 3
        %vm5508 = vcmp.lt.s32.totalorder %v5486, 4
        %v5509 = vsel %vm5505, %v5489, %v5492
        %v5510 = vsel %vm5508, %v5498, 2102212464
        %v5511 = vsel %vm5507, %v5495, %v5510
        %v5512 = vsel %vm5506, %v5509, %v5511
        %v5513 = vsel %vm5505, %v5492, %v5495
        %v5514 = vsel %vm5508, %v5501, 920167782
        %v5515 = vsel %vm5507, %v5498, %v5514
        %v5516 = vsel %vm5506, %v5513, %v5515
        %v5517 = vsel %vm5505, %v5495, %v5498
        %v5518 = vsel %vm5508, %v5504, 1326507024
        %v5519 = vsel %vm5507, %v5501, %v5518
        %v5520 = vsel %vm5506, %v5517, %v5519
        %v5521 = vshll.u32 %v5481, 8
        %v5522 = vmul.u32.u64.compose %v5521, %v5520
        %v5523 = vextract.low.u32 %v5522
        %v5524 = vextract.high.u32 %v5522
        %v5525 = vmul.u32.u64.compose %v5521, %v5516
        %v5526 = vextract.low.u32 %v5525
        %v5527 = vextract.high.u32 %v5525
        %v5528 = vmul.u32 %v5521, %v5512
        %v5529 = vadd.s32 %v5524, %v5526
        %vm5530 = vc.u32 %v5524, %v5526
        %v5531 = vadd.s32 %v5527, 1
        %v5532 = vsel %vm5530, %v5531, %v5527
        %v5533 = vadd.s32 %v5528, %v5532
        %v5534 = vadd.s32 %v5533, 536870912
        %v5535 = vshrl.u32 %v5534, 30
        %v5536 = vshll.u32 %v5535, 30
        %v5537 = vsub.s32 %v5533, %v5536
        %vm5538 = vcmp.lt.s32.totalorder %v5537, 0
        %v5539 = vsub.s32 0, %v5537
        %v5540 = vsel %vm5538, %v5539, %v5537
        %v5541 = vclz %v5540
        %v5542 = vsub.s32 %v5541, 2
        %vm5543 = vcmp.gt.s32.totalorder 0, %v5542
        %v5544 = vsel %vm5543, 0, %v5542
        %v5545 = vsub.s32 32, %v5544
        %v5546 = vshll.u32 %v5537, %v5544
        %v5547 = vshrl.u32 %v5529, %v5545
        %v5548 = vor.u32 %v5546, %v5547
        %v5549 = vsub.s32 4294967266, %v5544
        %v5550 = vadd.s32 %v5549, 127
        %v5551 = vshll.u32 %v5550, 23
        %v5552 = vor.u32 4788187, %v5551
        %v5553 = vand.u32 2147483647, %v5552
        %v5555 = vcvt.s32.f32 %v5548
        %v5556 = vmul.f32 %v5555, %v5553
        %v5557 = vxor.u32 %v5556, 2147483648
        %v5558 = vsel %vm5475, %v5557, %v5556
        %v5559 = vsub.s32 4, %v5535
        %v5560 = vsel %vm5475, %v5559, %v5535
        %v5561 = vsel %vm5474, %v1394, %v5558
        %v5562 = vsel %vm5474, 0, %v5560
        %v5563 = vcosq.f32.pop %v5561
        %v5564 = vsinq.f32.pop %v5561
        %vm5565 = vweird.f32 %v1394
        %v5566 = vand.u32 %v5562, 3
        %vm5567 = vcmp.lt.s32.totalorder %v5566, 2
        %vm5568 = vcmp.eq.s32.totalorder %v5566, 0
        %v5569 = vxor.u32 %v5564, 2147483648
        %v5570 = vsel %vm5568, %v5563, %v5569
        %vm5571 = vcmp.eq.s32.totalorder %v5566, 2
        %v5572 = vxor.u32 %v5563, 2147483648
        %v5573 = vsel %vm5571, %v5572, %v5564
        %v5574 = vsel %vm5567, %v5570, %v5573
        %v5575 = vsel %vm5565, nan, %v5574
        %v5576 = vand.u32 2147483647, %v1395
        %vm5577 = vcmp.le.f32.partialorder %v5576, 0.7853982
        %vm5578 = vcmp.lt.s32.totalorder %v1395, 0
        %v5579 = vand.u32 %v1395, 2139095040
        %v5580 = vshrl.u32 %v5579, 23
        %v5581 = vsub.s32 %v5580, 127
        %v5582 = vand.u32 2147483647, %v1395
        %v5583 = vand.u32 %v5582, 8388607
        %v5584 = vor.u32 %v5583, 8388608
        %v5585 = vsub.s32 0, %v5584
        %v5586 = vadd.s32 %v5581, 1
        %vm5587 = vcmp.gt.s32.totalorder %v5586, 0
        %v5588 = vsel %vm5587, %v5586, 0
        %v5589 = vshrl.u32 %v5588, 5
        %v5590 = vand.u32 %v5588, 31
        %v5591 = vsub.s32 32, %v5590
        %v5592 = vshrl.u32 683565275, %v5591
        %v5593 = vshll.u32 683565275, %v5590
        %v5594 = vshrl.u32 2475754826, %v5591
        %v5595 = vor.u32 %v5593, %v5594
        %v5596 = vshll.u32 2475754826, %v5590
        %v5597 = vshrl.u32 2131351028, %v5591
        %v5598 = vor.u32 %v5596, %v5597
        %v5599 = vshll.u32 2131351028, %v5590
        %v5600 = vshrl.u32 2102212464, %v5591
        %v5601 = vor.u32 %v5599, %v5600
        %v5602 = vshll.u32 2102212464, %v5590
        %v5603 = vshrl.u32 920167782, %v5591
        %v5604 = vor.u32 %v5602, %v5603
        %v5605 = vshll.u32 920167782, %v5590
        %v5606 = vshrl.u32 1326507024, %v5591
        %v5607 = vor.u32 %v5605, %v5606
        %vm5608 = vcmp.lt.s32.totalorder %v5589, 1
        %vm5609 = vcmp.lt.s32.totalorder %v5589, 2
        %vm5610 = vcmp.lt.s32.totalorder %v5589, 3
        %vm5611 = vcmp.lt.s32.totalorder %v5589, 4
        %v5612 = vsel %vm5608, %v5592, %v5595
        %v5613 = vsel %vm5611, %v5601, 2102212464
        %v5614 = vsel %vm5610, %v5598, %v5613
        %v5615 = vsel %vm5609, %v5612, %v5614
        %v5616 = vsel %vm5608, %v5595, %v5598
        %v5617 = vsel %vm5611, %v5604, 920167782
        %v5618 = vsel %vm5610, %v5601, %v5617
        %v5619 = vsel %vm5609, %v5616, %v5618
        %v5620 = vsel %vm5608, %v5598, %v5601
        %v5621 = vsel %vm5611, %v5607, 1326507024
        %v5622 = vsel %vm5610, %v5604, %v5621
        %v5623 = vsel %vm5609, %v5620, %v5622
        %v5624 = vshll.u32 %v5584, 8
        %v5625 = vmul.u32.u64.compose %v5624, %v5623
        %v5626 = vextract.low.u32 %v5625
        %v5627 = vextract.high.u32 %v5625
        %v5628 = vmul.u32.u64.compose %v5624, %v5619
        %v5629 = vextract.low.u32 %v5628
        %v5630 = vextract.high.u32 %v5628
        %v5631 = vmul.u32 %v5624, %v5615
        %v5632 = vadd.s32 %v5627, %v5629
        %vm5633 = vc.u32 %v5627, %v5629
        %v5634 = vadd.s32 %v5630, 1
        %v5635 = vsel %vm5633, %v5634, %v5630
        %v5636 = vadd.s32 %v5631, %v5635
        %v5637 = vadd.s32 %v5636, 536870912
        %v5638 = vshrl.u32 %v5637, 30
        %v5639 = vshll.u32 %v5638, 30
        %v5640 = vsub.s32 %v5636, %v5639
        %vm5641 = vcmp.lt.s32.totalorder %v5640, 0
        %v5642 = vsub.s32 0, %v5640
        %v5643 = vsel %vm5641, %v5642, %v5640
        %v5644 = vclz %v5643
        %v5645 = vsub.s32 %v5644, 2
        %vm5646 = vcmp.gt.s32.totalorder 0, %v5645
        %v5647 = vsel %vm5646, 0, %v5645
        %v5648 = vsub.s32 32, %v5647
        %v5649 = vshll.u32 %v5640, %v5647
        %v5650 = vshrl.u32 %v5632, %v5648
        %v5651 = vor.u32 %v5649, %v5650
        %v5652 = vsub.s32 4294967266, %v5647
        %v5653 = vadd.s32 %v5652, 127
        %v5654 = vshll.u32 %v5653, 23
        %v5655 = vor.u32 4788187, %v5654
        %v5656 = vand.u32 2147483647, %v5655
        %v5658 = vcvt.s32.f32 %v5651
        %v5659 = vmul.f32 %v5658, %v5656
        %v5660 = vxor.u32 %v5659, 2147483648
        %v5661 = vsel %vm5578, %v5660, %v5659
        %v5662 = vsub.s32 4, %v5638
        %v5663 = vsel %vm5578, %v5662, %v5638
        %v5664 = vsel %vm5577, %v1395, %v5661
        %v5665 = vsel %vm5577, 0, %v5663
        %v5666 = vcosq.f32.pop %v5664
        %v5667 = vsinq.f32.pop %v5664
        %vm5668 = vweird.f32 %v1395
        %v5669 = vand.u32 %v5665, 3
        %vm5670 = vcmp.lt.s32.totalorder %v5669, 2
        %vm5671 = vcmp.eq.s32.totalorder %v5669, 0
        %v5672 = vxor.u32 %v5667, 2147483648
        %v5673 = vsel %vm5671, %v5666, %v5672
        %vm5674 = vcmp.eq.s32.totalorder %v5669, 2
        %v5675 = vxor.u32 %v5666, 2147483648
        %v5676 = vsel %vm5674, %v5675, %v5667
        %v5677 = vsel %vm5670, %v5673, %v5676
        %v5678 = vsel %vm5668, nan, %v5677
        %v5679 = vand.u32 2147483647, %v1396
        %vm5680 = vcmp.le.f32.partialorder %v5679, 0.7853982
        %vm5681 = vcmp.lt.s32.totalorder %v1396, 0
        %v5682 = vand.u32 %v1396, 2139095040
        %v5683 = vshrl.u32 %v5682, 23
        %v5684 = vsub.s32 %v5683, 127
        %v5685 = vand.u32 2147483647, %v1396
        %v5686 = vand.u32 %v5685, 8388607
        %v5687 = vor.u32 %v5686, 8388608
        %v5688 = vsub.s32 0, %v5687
        %v5689 = vadd.s32 %v5684, 1
        %vm5690 = vcmp.gt.s32.totalorder %v5689, 0
        %v5691 = vsel %vm5690, %v5689, 0
        %v5692 = vshrl.u32 %v5691, 5
        %v5693 = vand.u32 %v5691, 31
        %v5694 = vsub.s32 32, %v5693
        %v5695 = vshrl.u32 683565275, %v5694
        %v5696 = vshll.u32 683565275, %v5693
        %v5697 = vshrl.u32 2475754826, %v5694
        %v5698 = vor.u32 %v5696, %v5697
        %v5699 = vshll.u32 2475754826, %v5693
        %v5700 = vshrl.u32 2131351028, %v5694
        %v5701 = vor.u32 %v5699, %v5700
        %v5702 = vshll.u32 2131351028, %v5693
        %v5703 = vshrl.u32 2102212464, %v5694
        %v5704 = vor.u32 %v5702, %v5703
        %v5705 = vshll.u32 2102212464, %v5693
        %v5706 = vshrl.u32 920167782, %v5694
        %v5707 = vor.u32 %v5705, %v5706
        %v5708 = vshll.u32 920167782, %v5693
        %v5709 = vshrl.u32 1326507024, %v5694
        %v5710 = vor.u32 %v5708, %v5709
        %vm5711 = vcmp.lt.s32.totalorder %v5692, 1
        %vm5712 = vcmp.lt.s32.totalorder %v5692, 2
        %vm5713 = vcmp.lt.s32.totalorder %v5692, 3
        %vm5714 = vcmp.lt.s32.totalorder %v5692, 4
        %v5715 = vsel %vm5711, %v5695, %v5698
        %v5716 = vsel %vm5714, %v5704, 2102212464
        %v5717 = vsel %vm5713, %v5701, %v5716
        %v5718 = vsel %vm5712, %v5715, %v5717
        %v5719 = vsel %vm5711, %v5698, %v5701
        %v5720 = vsel %vm5714, %v5707, 920167782
        %v5721 = vsel %vm5713, %v5704, %v5720
        %v5722 = vsel %vm5712, %v5719, %v5721
        %v5723 = vsel %vm5711, %v5701, %v5704
        %v5724 = vsel %vm5714, %v5710, 1326507024
        %v5725 = vsel %vm5713, %v5707, %v5724
        %v5726 = vsel %vm5712, %v5723, %v5725
        %v5727 = vshll.u32 %v5687, 8
        %v5728 = vmul.u32.u64.compose %v5727, %v5726
        %v5729 = vextract.low.u32 %v5728
        %v5730 = vextract.high.u32 %v5728
        %v5731 = vmul.u32.u64.compose %v5727, %v5722
        %v5732 = vextract.low.u32 %v5731
        %v5733 = vextract.high.u32 %v5731
        %v5734 = vmul.u32 %v5727, %v5718
        %v5735 = vadd.s32 %v5730, %v5732
        %vm5736 = vc.u32 %v5730, %v5732
        %v5737 = vadd.s32 %v5733, 1
        %v5738 = vsel %vm5736, %v5737, %v5733
        %v5739 = vadd.s32 %v5734, %v5738
        %v5740 = vadd.s32 %v5739, 536870912
        %v5741 = vshrl.u32 %v5740, 30
        %v5742 = vshll.u32 %v5741, 30
        %v5743 = vsub.s32 %v5739, %v5742
        %vm5744 = vcmp.lt.s32.totalorder %v5743, 0
        %v5745 = vsub.s32 0, %v5743
        %v5746 = vsel %vm5744, %v5745, %v5743
        %v5747 = vclz %v5746
        %v5748 = vsub.s32 %v5747, 2
        %vm5749 = vcmp.gt.s32.totalorder 0, %v5748
        %v5750 = vsel %vm5749, 0, %v5748
        %v5751 = vsub.s32 32, %v5750
        %v5752 = vshll.u32 %v5743, %v5750
        %v5753 = vshrl.u32 %v5735, %v5751
        %v5754 = vor.u32 %v5752, %v5753
        %v5755 = vsub.s32 4294967266, %v5750
        %v5756 = vadd.s32 %v5755, 127
        %v5757 = vshll.u32 %v5756, 23
        %v5758 = vor.u32 4788187, %v5757
        %v5759 = vand.u32 2147483647, %v5758
        %v5761 = vcvt.s32.f32 %v5754
        %v5762 = vmul.f32 %v5761, %v5759
        %v5763 = vxor.u32 %v5762, 2147483648
        %v5764 = vsel %vm5681, %v5763, %v5762
        %v5765 = vsub.s32 4, %v5741
        %v5766 = vsel %vm5681, %v5765, %v5741
        %v5767 = vsel %vm5680, %v1396, %v5764
        %v5768 = vsel %vm5680, 0, %v5766
        %v5769 = vcosq.f32.pop %v5767
        %v5770 = vsinq.f32.pop %v5767
        %vm5771 = vweird.f32 %v1396
        %v5772 = vand.u32 %v5768, 3
        %vm5773 = vcmp.lt.s32.totalorder %v5772, 2
        %vm5774 = vcmp.eq.s32.totalorder %v5772, 0
        %v5775 = vxor.u32 %v5770, 2147483648
        %v5776 = vsel %vm5774, %v5769, %v5775
        %vm5777 = vcmp.eq.s32.totalorder %v5772, 2
        %v5778 = vxor.u32 %v5769, 2147483648
        %v5779 = vsel %vm5777, %v5778, %v5770
        %v5780 = vsel %vm5773, %v5776, %v5779
        %v5781 = vsel %vm5771, nan, %v5780
        %v5782 = vand.u32 2147483647, %v1397
        %vm5783 = vcmp.le.f32.partialorder %v5782, 0.7853982
        %vm5784 = vcmp.lt.s32.totalorder %v1397, 0
        %v5785 = vand.u32 %v1397, 2139095040
        %v5786 = vshrl.u32 %v5785, 23
        %v5787 = vsub.s32 %v5786, 127
        %v5788 = vand.u32 2147483647, %v1397
        %v5789 = vand.u32 %v5788, 8388607
        %v5790 = vor.u32 %v5789, 8388608
        %v5791 = vsub.s32 0, %v5790
        %v5792 = vadd.s32 %v5787, 1
        %vm5793 = vcmp.gt.s32.totalorder %v5792, 0
        %v5794 = vsel %vm5793, %v5792, 0
        %v5795 = vshrl.u32 %v5794, 5
        %v5796 = vand.u32 %v5794, 31
        %v5797 = vsub.s32 32, %v5796
        %v5798 = vshrl.u32 683565275, %v5797
        %v5799 = vshll.u32 683565275, %v5796
        %v5800 = vshrl.u32 2475754826, %v5797
        %v5801 = vor.u32 %v5799, %v5800
        %v5802 = vshll.u32 2475754826, %v5796
        %v5803 = vshrl.u32 2131351028, %v5797
        %v5804 = vor.u32 %v5802, %v5803
        %v5805 = vshll.u32 2131351028, %v5796
        %v5806 = vshrl.u32 2102212464, %v5797
        %v5807 = vor.u32 %v5805, %v5806
        %v5808 = vshll.u32 2102212464, %v5796
        %v5809 = vshrl.u32 920167782, %v5797
        %v5810 = vor.u32 %v5808, %v5809
        %v5811 = vshll.u32 920167782, %v5796
        %v5812 = vshrl.u32 1326507024, %v5797
        %v5813 = vor.u32 %v5811, %v5812
        %vm5814 = vcmp.lt.s32.totalorder %v5795, 1
        %vm5815 = vcmp.lt.s32.totalorder %v5795, 2
        %vm5816 = vcmp.lt.s32.totalorder %v5795, 3
        %vm5817 = vcmp.lt.s32.totalorder %v5795, 4
        %v5818 = vsel %vm5814, %v5798, %v5801
        %v5819 = vsel %vm5817, %v5807, 2102212464
        %v5820 = vsel %vm5816, %v5804, %v5819
        %v5821 = vsel %vm5815, %v5818, %v5820
        %v5822 = vsel %vm5814, %v5801, %v5804
        %v5823 = vsel %vm5817, %v5810, 920167782
        %v5824 = vsel %vm5816, %v5807, %v5823
        %v5825 = vsel %vm5815, %v5822, %v5824
        %v5826 = vsel %vm5814, %v5804, %v5807
        %v5827 = vsel %vm5817, %v5813, 1326507024
        %v5828 = vsel %vm5816, %v5810, %v5827
        %v5829 = vsel %vm5815, %v5826, %v5828
        %v5830 = vshll.u32 %v5790, 8
        %v5831 = vmul.u32.u64.compose %v5830, %v5829
        %v5832 = vextract.low.u32 %v5831
        %v5833 = vextract.high.u32 %v5831
        %v5834 = vmul.u32.u64.compose %v5830, %v5825
        %v5835 = vextract.low.u32 %v5834
        %v5836 = vextract.high.u32 %v5834
        %v5837 = vmul.u32 %v5830, %v5821
        %v5838 = vadd.s32 %v5833, %v5835
        %vm5839 = vc.u32 %v5833, %v5835
        %v5840 = vadd.s32 %v5836, 1
        %v5841 = vsel %vm5839, %v5840, %v5836
        %v5842 = vadd.s32 %v5837, %v5841
        %v5843 = vadd.s32 %v5842, 536870912
        %v5844 = vshrl.u32 %v5843, 30
        %v5845 = vshll.u32 %v5844, 30
        %v5846 = vsub.s32 %v5842, %v5845
        %vm5847 = vcmp.lt.s32.totalorder %v5846, 0
        %v5848 = vsub.s32 0, %v5846
        %v5849 = vsel %vm5847, %v5848, %v5846
        %v5850 = vclz %v5849
        %v5851 = vsub.s32 %v5850, 2
        %vm5852 = vcmp.gt.s32.totalorder 0, %v5851
        %v5853 = vsel %vm5852, 0, %v5851
        %v5854 = vsub.s32 32, %v5853
        %v5855 = vshll.u32 %v5846, %v5853
        %v5856 = vshrl.u32 %v5838, %v5854
        %v5857 = vor.u32 %v5855, %v5856
        %v5858 = vsub.s32 4294967266, %v5853
        %v5859 = vadd.s32 %v5858, 127
        %v5860 = vshll.u32 %v5859, 23
        %v5861 = vor.u32 4788187, %v5860
        %v5862 = vand.u32 2147483647, %v5861
        %v5864 = vcvt.s32.f32 %v5857
        %v5865 = vmul.f32 %v5864, %v5862
        %v5866 = vxor.u32 %v5865, 2147483648
        %v5867 = vsel %vm5784, %v5866, %v5865
        %v5868 = vsub.s32 4, %v5844
        %v5869 = vsel %vm5784, %v5868, %v5844
        %v5870 = vsel %vm5783, %v1397, %v5867
        %v5871 = vsel %vm5783, 0, %v5869
        %v5872 = vcosq.f32.pop %v5870
        %v5873 = vsinq.f32.pop %v5870
        %vm5874 = vweird.f32 %v1397
        %v5875 = vand.u32 %v5871, 3
        %vm5876 = vcmp.lt.s32.totalorder %v5875, 2
        %vm5877 = vcmp.eq.s32.totalorder %v5875, 0
        %v5878 = vxor.u32 %v5873, 2147483648
        %v5879 = vsel %vm5877, %v5872, %v5878
        %vm5880 = vcmp.eq.s32.totalorder %v5875, 2
        %v5881 = vxor.u32 %v5872, 2147483648
        %v5882 = vsel %vm5880, %v5881, %v5873
        %v5883 = vsel %vm5876, %v5879, %v5882
        %v5884 = vsel %vm5874, nan, %v5883
        %v5885 = vand.u32 2147483647, %v1398
        %vm5886 = vcmp.le.f32.partialorder %v5885, 0.7853982
        %vm5887 = vcmp.lt.s32.totalorder %v1398, 0
        %v5888 = vand.u32 %v1398, 2139095040
        %v5889 = vshrl.u32 %v5888, 23
        %v5890 = vsub.s32 %v5889, 127
        %v5891 = vand.u32 2147483647, %v1398
        %v5892 = vand.u32 %v5891, 8388607
        %v5893 = vor.u32 %v5892, 8388608
        %v5894 = vsub.s32 0, %v5893
        %v5895 = vadd.s32 %v5890, 1
        %vm5896 = vcmp.gt.s32.totalorder %v5895, 0
        %v5897 = vsel %vm5896, %v5895, 0
        %v5898 = vshrl.u32 %v5897, 5
        %v5899 = vand.u32 %v5897, 31
        %v5900 = vsub.s32 32, %v5899
        %v5901 = vshrl.u32 683565275, %v5900
        %v5902 = vshll.u32 683565275, %v5899
        %v5903 = vshrl.u32 2475754826, %v5900
        %v5904 = vor.u32 %v5902, %v5903
        %v5905 = vshll.u32 2475754826, %v5899
        %v5906 = vshrl.u32 2131351028, %v5900
        %v5907 = vor.u32 %v5905, %v5906
        %v5908 = vshll.u32 2131351028, %v5899
        %v5909 = vshrl.u32 2102212464, %v5900
        %v5910 = vor.u32 %v5908, %v5909
        %v5911 = vshll.u32 2102212464, %v5899
        %v5912 = vshrl.u32 920167782, %v5900
        %v5913 = vor.u32 %v5911, %v5912
        %v5914 = vshll.u32 920167782, %v5899
        %v5915 = vshrl.u32 1326507024, %v5900
        %v5916 = vor.u32 %v5914, %v5915
        %vm5917 = vcmp.lt.s32.totalorder %v5898, 1
        %vm5918 = vcmp.lt.s32.totalorder %v5898, 2
        %vm5919 = vcmp.lt.s32.totalorder %v5898, 3
        %vm5920 = vcmp.lt.s32.totalorder %v5898, 4
        %v5921 = vsel %vm5917, %v5901, %v5904
        %v5922 = vsel %vm5920, %v5910, 2102212464
        %v5923 = vsel %vm5919, %v5907, %v5922
        %v5924 = vsel %vm5918, %v5921, %v5923
        %v5925 = vsel %vm5917, %v5904, %v5907
        %v5926 = vsel %vm5920, %v5913, 920167782
        %v5927 = vsel %vm5919, %v5910, %v5926
        %v5928 = vsel %vm5918, %v5925, %v5927
        %v5929 = vsel %vm5917, %v5907, %v5910
        %v5930 = vsel %vm5920, %v5916, 1326507024
        %v5931 = vsel %vm5919, %v5913, %v5930
        %v5932 = vsel %vm5918, %v5929, %v5931
        %v5933 = vshll.u32 %v5893, 8
        %v5934 = vmul.u32.u64.compose %v5933, %v5932
        %v5935 = vextract.low.u32 %v5934
        %v5936 = vextract.high.u32 %v5934
        %v5937 = vmul.u32.u64.compose %v5933, %v5928
        %v5938 = vextract.low.u32 %v5937
        %v5939 = vextract.high.u32 %v5937
        %v5940 = vmul.u32 %v5933, %v5924
        %v5941 = vadd.s32 %v5936, %v5938
        %vm5942 = vc.u32 %v5936, %v5938
        %v5943 = vadd.s32 %v5939, 1
        %v5944 = vsel %vm5942, %v5943, %v5939
        %v5945 = vadd.s32 %v5940, %v5944
        %v5946 = vadd.s32 %v5945, 536870912
        %v5947 = vshrl.u32 %v5946, 30
        %v5948 = vshll.u32 %v5947, 30
        %v5949 = vsub.s32 %v5945, %v5948
        %vm5950 = vcmp.lt.s32.totalorder %v5949, 0
        %v5951 = vsub.s32 0, %v5949
        %v5952 = vsel %vm5950, %v5951, %v5949
        %v5953 = vclz %v5952
        %v5954 = vsub.s32 %v5953, 2
        %vm5955 = vcmp.gt.s32.totalorder 0, %v5954
        %v5956 = vsel %vm5955, 0, %v5954
        %v5957 = vsub.s32 32, %v5956
        %v5958 = vshll.u32 %v5949, %v5956
        %v5959 = vshrl.u32 %v5941, %v5957
        %v5960 = vor.u32 %v5958, %v5959
        %v5961 = vsub.s32 4294967266, %v5956
        %v5962 = vadd.s32 %v5961, 127
        %v5963 = vshll.u32 %v5962, 23
        %v5964 = vor.u32 4788187, %v5963
        %v5965 = vand.u32 2147483647, %v5964
        %v5967 = vcvt.s32.f32 %v5960
        %v5968 = vmul.f32 %v5967, %v5965
        %v5969 = vxor.u32 %v5968, 2147483648
        %v5970 = vsel %vm5887, %v5969, %v5968
        %v5971 = vsub.s32 4, %v5947
        %v5972 = vsel %vm5887, %v5971, %v5947
        %v5973 = vsel %vm5886, %v1398, %v5970
        %v5974 = vsel %vm5886, 0, %v5972
        %v5975 = vcosq.f32.pop %v5973
        %v5976 = vsinq.f32.pop %v5973
        %vm5977 = vweird.f32 %v1398
        %v5978 = vand.u32 %v5974, 3
        %vm5979 = vcmp.lt.s32.totalorder %v5978, 2
        %vm5980 = vcmp.eq.s32.totalorder %v5978, 0
        %v5981 = vxor.u32 %v5976, 2147483648
        %v5982 = vsel %vm5980, %v5975, %v5981
        %vm5983 = vcmp.eq.s32.totalorder %v5978, 2
        %v5984 = vxor.u32 %v5975, 2147483648
        %v5985 = vsel %vm5983, %v5984, %v5976
        %v5986 = vsel %vm5979, %v5982, %v5985
        %v5987 = vsel %vm5977, nan, %v5986
        %v5988 = vand.u32 2147483647, %v1399
        %vm5989 = vcmp.le.f32.partialorder %v5988, 0.7853982
        %vm5990 = vcmp.lt.s32.totalorder %v1399, 0
        %v5991 = vand.u32 %v1399, 2139095040
        %v5992 = vshrl.u32 %v5991, 23
        %v5993 = vsub.s32 %v5992, 127
        %v5994 = vand.u32 2147483647, %v1399
        %v5995 = vand.u32 %v5994, 8388607
        %v5996 = vor.u32 %v5995, 8388608
        %v5997 = vsub.s32 0, %v5996
        %v5998 = vadd.s32 %v5993, 1
        %vm5999 = vcmp.gt.s32.totalorder %v5998, 0
        %v6000 = vsel %vm5999, %v5998, 0
        %v6001 = vshrl.u32 %v6000, 5
        %v6002 = vand.u32 %v6000, 31
        %v6003 = vsub.s32 32, %v6002
        %v6004 = vshrl.u32 683565275, %v6003
        %v6005 = vshll.u32 683565275, %v6002
        %v6006 = vshrl.u32 2475754826, %v6003
        %v6007 = vor.u32 %v6005, %v6006
        %v6008 = vshll.u32 2475754826, %v6002
        %v6009 = vshrl.u32 2131351028, %v6003
        %v6010 = vor.u32 %v6008, %v6009
        %v6011 = vshll.u32 2131351028, %v6002
        %v6012 = vshrl.u32 2102212464, %v6003
        %v6013 = vor.u32 %v6011, %v6012
        %v6014 = vshll.u32 2102212464, %v6002
        %v6015 = vshrl.u32 920167782, %v6003
        %v6016 = vor.u32 %v6014, %v6015
        %v6017 = vshll.u32 920167782, %v6002
        %v6018 = vshrl.u32 1326507024, %v6003
        %v6019 = vor.u32 %v6017, %v6018
        %vm6020 = vcmp.lt.s32.totalorder %v6001, 1
        %vm6021 = vcmp.lt.s32.totalorder %v6001, 2
        %vm6022 = vcmp.lt.s32.totalorder %v6001, 3
        %vm6023 = vcmp.lt.s32.totalorder %v6001, 4
        %v6024 = vsel %vm6020, %v6004, %v6007
        %v6025 = vsel %vm6023, %v6013, 2102212464
        %v6026 = vsel %vm6022, %v6010, %v6025
        %v6027 = vsel %vm6021, %v6024, %v6026
        %v6028 = vsel %vm6020, %v6007, %v6010
        %v6029 = vsel %vm6023, %v6016, 920167782
        %v6030 = vsel %vm6022, %v6013, %v6029
        %v6031 = vsel %vm6021, %v6028, %v6030
        %v6032 = vsel %vm6020, %v6010, %v6013
        %v6033 = vsel %vm6023, %v6019, 1326507024
        %v6034 = vsel %vm6022, %v6016, %v6033
        %v6035 = vsel %vm6021, %v6032, %v6034
        %v6036 = vshll.u32 %v5996, 8
        %v6037 = vmul.u32.u64.compose %v6036, %v6035
        %v6038 = vextract.low.u32 %v6037
        %v6039 = vextract.high.u32 %v6037
        %v6040 = vmul.u32.u64.compose %v6036, %v6031
        %v6041 = vextract.low.u32 %v6040
        %v6042 = vextract.high.u32 %v6040
        %v6043 = vmul.u32 %v6036, %v6027
        %v6044 = vadd.s32 %v6039, %v6041
        %vm6045 = vc.u32 %v6039, %v6041
        %v6046 = vadd.s32 %v6042, 1
        %v6047 = vsel %vm6045, %v6046, %v6042
        %v6048 = vadd.s32 %v6043, %v6047
        %v6049 = vadd.s32 %v6048, 536870912
        %v6050 = vshrl.u32 %v6049, 30
        %v6051 = vshll.u32 %v6050, 30
        %v6052 = vsub.s32 %v6048, %v6051
        %vm6053 = vcmp.lt.s32.totalorder %v6052, 0
        %v6054 = vsub.s32 0, %v6052
        %v6055 = vsel %vm6053, %v6054, %v6052
        %v6056 = vclz %v6055
        %v6057 = vsub.s32 %v6056, 2
        %vm6058 = vcmp.gt.s32.totalorder 0, %v6057
        %v6059 = vsel %vm6058, 0, %v6057
        %v6060 = vsub.s32 32, %v6059
        %v6061 = vshll.u32 %v6052, %v6059
        %v6062 = vshrl.u32 %v6044, %v6060
        %v6063 = vor.u32 %v6061, %v6062
        %v6064 = vsub.s32 4294967266, %v6059
        %v6065 = vadd.s32 %v6064, 127
        %v6066 = vshll.u32 %v6065, 23
        %v6067 = vor.u32 4788187, %v6066
        %v6068 = vand.u32 2147483647, %v6067
        %v6070 = vcvt.s32.f32 %v6063
        %v6071 = vmul.f32 %v6070, %v6068
        %v6072 = vxor.u32 %v6071, 2147483648
        %v6073 = vsel %vm5990, %v6072, %v6071
        %v6074 = vsub.s32 4, %v6050
        %v6075 = vsel %vm5990, %v6074, %v6050
        %v6076 = vsel %vm5989, %v1399, %v6073
        %v6077 = vsel %vm5989, 0, %v6075
        %v6078 = vcosq.f32.pop %v6076
        %v6079 = vsinq.f32.pop %v6076
        %vm6080 = vweird.f32 %v1399
        %v6081 = vand.u32 %v6077, 3
        %vm6082 = vcmp.lt.s32.totalorder %v6081, 2
        %vm6083 = vcmp.eq.s32.totalorder %v6081, 0
        %v6084 = vxor.u32 %v6079, 2147483648
        %v6085 = vsel %vm6083, %v6078, %v6084
        %vm6086 = vcmp.eq.s32.totalorder %v6081, 2
        %v6087 = vxor.u32 %v6078, 2147483648
        %v6088 = vsel %vm6086, %v6087, %v6079
        %v6089 = vsel %vm6082, %v6085, %v6088
        %v6090 = vsel %vm6080, nan, %v6089
        %v6091 = vand.u32 2147483647, %v1400
        %vm6092 = vcmp.le.f32.partialorder %v6091, 0.7853982
        %vm6093 = vcmp.lt.s32.totalorder %v1400, 0
        %v6094 = vand.u32 %v1400, 2139095040
        %v6095 = vshrl.u32 %v6094, 23
        %v6096 = vsub.s32 %v6095, 127
        %v6097 = vand.u32 2147483647, %v1400
        %v6098 = vand.u32 %v6097, 8388607
        %v6099 = vor.u32 %v6098, 8388608
        %v6100 = vsub.s32 0, %v6099
        %v6101 = vadd.s32 %v6096, 1
        %vm6102 = vcmp.gt.s32.totalorder %v6101, 0
        %v6103 = vsel %vm6102, %v6101, 0
        %v6104 = vshrl.u32 %v6103, 5
        %v6105 = vand.u32 %v6103, 31
        %v6106 = vsub.s32 32, %v6105
        %v6107 = vshrl.u32 683565275, %v6106
        %v6108 = vshll.u32 683565275, %v6105
        %v6109 = vshrl.u32 2475754826, %v6106
        %v6110 = vor.u32 %v6108, %v6109
        %v6111 = vshll.u32 2475754826, %v6105
        %v6112 = vshrl.u32 2131351028, %v6106
        %v6113 = vor.u32 %v6111, %v6112
        %v6114 = vshll.u32 2131351028, %v6105
        %v6115 = vshrl.u32 2102212464, %v6106
        %v6116 = vor.u32 %v6114, %v6115
        %v6117 = vshll.u32 2102212464, %v6105
        %v6118 = vshrl.u32 920167782, %v6106
        %v6119 = vor.u32 %v6117, %v6118
        %v6120 = vshll.u32 920167782, %v6105
        %v6121 = vshrl.u32 1326507024, %v6106
        %v6122 = vor.u32 %v6120, %v6121
        %vm6123 = vcmp.lt.s32.totalorder %v6104, 1
        %vm6124 = vcmp.lt.s32.totalorder %v6104, 2
        %vm6125 = vcmp.lt.s32.totalorder %v6104, 3
        %vm6126 = vcmp.lt.s32.totalorder %v6104, 4
        %v6127 = vsel %vm6123, %v6107, %v6110
        %v6128 = vsel %vm6126, %v6116, 2102212464
        %v6129 = vsel %vm6125, %v6113, %v6128
        %v6130 = vsel %vm6124, %v6127, %v6129
        %v6131 = vsel %vm6123, %v6110, %v6113
        %v6132 = vsel %vm6126, %v6119, 920167782
        %v6133 = vsel %vm6125, %v6116, %v6132
        %v6134 = vsel %vm6124, %v6131, %v6133
        %v6135 = vsel %vm6123, %v6113, %v6116
        %v6136 = vsel %vm6126, %v6122, 1326507024
        %v6137 = vsel %vm6125, %v6119, %v6136
        %v6138 = vsel %vm6124, %v6135, %v6137
        %v6139 = vshll.u32 %v6099, 8
        %v6140 = vmul.u32.u64.compose %v6139, %v6138
        %v6141 = vextract.low.u32 %v6140
        %v6142 = vextract.high.u32 %v6140
        %v6143 = vmul.u32.u64.compose %v6139, %v6134
        %v6144 = vextract.low.u32 %v6143
        %v6145 = vextract.high.u32 %v6143
        %v6146 = vmul.u32 %v6139, %v6130
        %v6147 = vadd.s32 %v6142, %v6144
        %vm6148 = vc.u32 %v6142, %v6144
        %v6149 = vadd.s32 %v6145, 1
        %v6150 = vsel %vm6148, %v6149, %v6145
        %v6151 = vadd.s32 %v6146, %v6150
        %v6152 = vadd.s32 %v6151, 536870912
        %v6153 = vshrl.u32 %v6152, 30
        %v6154 = vshll.u32 %v6153, 30
        %v6155 = vsub.s32 %v6151, %v6154
        %vm6156 = vcmp.lt.s32.totalorder %v6155, 0
        %v6157 = vsub.s32 0, %v6155
        %v6158 = vsel %vm6156, %v6157, %v6155
        %v6159 = vclz %v6158
        %v6160 = vsub.s32 %v6159, 2
        %vm6161 = vcmp.gt.s32.totalorder 0, %v6160
        %v6162 = vsel %vm6161, 0, %v6160
        %v6163 = vsub.s32 32, %v6162
        %v6164 = vshll.u32 %v6155, %v6162
        %v6165 = vshrl.u32 %v6147, %v6163
        %v6166 = vor.u32 %v6164, %v6165
        %v6167 = vsub.s32 4294967266, %v6162
        %v6168 = vadd.s32 %v6167, 127
        %v6169 = vshll.u32 %v6168, 23
        %v6170 = vor.u32 4788187, %v6169
        %v6171 = vand.u32 2147483647, %v6170
        %v6173 = vcvt.s32.f32 %v6166
        %v6174 = vmul.f32 %v6173, %v6171
        %v6175 = vxor.u32 %v6174, 2147483648
        %v6176 = vsel %vm6093, %v6175, %v6174
        %v6177 = vsub.s32 4, %v6153
        %v6178 = vsel %vm6093, %v6177, %v6153
        %v6179 = vsel %vm6092, %v1400, %v6176
        %v6180 = vsel %vm6092, 0, %v6178
        %v6181 = vcosq.f32.pop %v6179
        %v6182 = vsinq.f32.pop %v6179
        %vm6183 = vweird.f32 %v1400
        %v6184 = vand.u32 %v6180, 3
        %vm6185 = vcmp.lt.s32.totalorder %v6184, 2
        %vm6186 = vcmp.eq.s32.totalorder %v6184, 0
        %v6187 = vxor.u32 %v6182, 2147483648
        %v6188 = vsel %vm6186, %v6181, %v6187
        %vm6189 = vcmp.eq.s32.totalorder %v6184, 2
        %v6190 = vxor.u32 %v6181, 2147483648
        %v6191 = vsel %vm6189, %v6190, %v6182
        %v6192 = vsel %vm6185, %v6188, %v6191
        %v6193 = vsel %vm6183, nan, %v6192
        %v6194 = vand.u32 2147483647, %v1401
        %vm6195 = vcmp.le.f32.partialorder %v6194, 0.7853982
        %vm6196 = vcmp.lt.s32.totalorder %v1401, 0
        %v6197 = vand.u32 %v1401, 2139095040
        %v6198 = vshrl.u32 %v6197, 23
        %v6199 = vsub.s32 %v6198, 127
        %v6200 = vand.u32 2147483647, %v1401
        %v6201 = vand.u32 %v6200, 8388607
        %v6202 = vor.u32 %v6201, 8388608
        %v6203 = vsub.s32 0, %v6202
        %v6204 = vadd.s32 %v6199, 1
        %vm6205 = vcmp.gt.s32.totalorder %v6204, 0
        %v6206 = vsel %vm6205, %v6204, 0
        %v6207 = vshrl.u32 %v6206, 5
        %v6208 = vand.u32 %v6206, 31
        %v6209 = vsub.s32 32, %v6208
        %v6210 = vshrl.u32 683565275, %v6209
        %v6211 = vshll.u32 683565275, %v6208
        %v6212 = vshrl.u32 2475754826, %v6209
        %v6213 = vor.u32 %v6211, %v6212
        %v6214 = vshll.u32 2475754826, %v6208
        %v6215 = vshrl.u32 2131351028, %v6209
        %v6216 = vor.u32 %v6214, %v6215
        %v6217 = vshll.u32 2131351028, %v6208
        %v6218 = vshrl.u32 2102212464, %v6209
        %v6219 = vor.u32 %v6217, %v6218
        %v6220 = vshll.u32 2102212464, %v6208
        %v6221 = vshrl.u32 920167782, %v6209
        %v6222 = vor.u32 %v6220, %v6221
        %v6223 = vshll.u32 920167782, %v6208
        %v6224 = vshrl.u32 1326507024, %v6209
        %v6225 = vor.u32 %v6223, %v6224
        %vm6226 = vcmp.lt.s32.totalorder %v6207, 1
        %vm6227 = vcmp.lt.s32.totalorder %v6207, 2
        %vm6228 = vcmp.lt.s32.totalorder %v6207, 3
        %vm6229 = vcmp.lt.s32.totalorder %v6207, 4
        %v6230 = vsel %vm6226, %v6210, %v6213
        %v6231 = vsel %vm6229, %v6219, 2102212464
        %v6232 = vsel %vm6228, %v6216, %v6231
        %v6233 = vsel %vm6227, %v6230, %v6232
        %v6234 = vsel %vm6226, %v6213, %v6216
        %v6235 = vsel %vm6229, %v6222, 920167782
        %v6236 = vsel %vm6228, %v6219, %v6235
        %v6237 = vsel %vm6227, %v6234, %v6236
        %v6238 = vsel %vm6226, %v6216, %v6219
        %v6239 = vsel %vm6229, %v6225, 1326507024
        %v6240 = vsel %vm6228, %v6222, %v6239
        %v6241 = vsel %vm6227, %v6238, %v6240
        %v6242 = vshll.u32 %v6202, 8
        %v6243 = vmul.u32.u64.compose %v6242, %v6241
        %v6244 = vextract.low.u32 %v6243
        %v6245 = vextract.high.u32 %v6243
        %v6246 = vmul.u32.u64.compose %v6242, %v6237
        %v6247 = vextract.low.u32 %v6246
        %v6248 = vextract.high.u32 %v6246
        %v6249 = vmul.u32 %v6242, %v6233
        %v6250 = vadd.s32 %v6245, %v6247
        %vm6251 = vc.u32 %v6245, %v6247
        %v6252 = vadd.s32 %v6248, 1
        %v6253 = vsel %vm6251, %v6252, %v6248
        %v6254 = vadd.s32 %v6249, %v6253
        %v6255 = vadd.s32 %v6254, 536870912
        %v6256 = vshrl.u32 %v6255, 30
        %v6257 = vshll.u32 %v6256, 30
        %v6258 = vsub.s32 %v6254, %v6257
        %vm6259 = vcmp.lt.s32.totalorder %v6258, 0
        %v6260 = vsub.s32 0, %v6258
        %v6261 = vsel %vm6259, %v6260, %v6258
        %v6262 = vclz %v6261
        %v6263 = vsub.s32 %v6262, 2
        %vm6264 = vcmp.gt.s32.totalorder 0, %v6263
        %v6265 = vsel %vm6264, 0, %v6263
        %v6266 = vsub.s32 32, %v6265
        %v6267 = vshll.u32 %v6258, %v6265
        %v6268 = vshrl.u32 %v6250, %v6266
        %v6269 = vor.u32 %v6267, %v6268
        %v6270 = vsub.s32 4294967266, %v6265
        %v6271 = vadd.s32 %v6270, 127
        %v6272 = vshll.u32 %v6271, 23
        %v6273 = vor.u32 4788187, %v6272
        %v6274 = vand.u32 2147483647, %v6273
        %v6276 = vcvt.s32.f32 %v6269
        %v6277 = vmul.f32 %v6276, %v6274
        %v6278 = vxor.u32 %v6277, 2147483648
        %v6279 = vsel %vm6196, %v6278, %v6277
        %v6280 = vsub.s32 4, %v6256
        %v6281 = vsel %vm6196, %v6280, %v6256
        %v6282 = vsel %vm6195, %v1401, %v6279
        %v6283 = vsel %vm6195, 0, %v6281
        %v6284 = vcosq.f32.pop %v6282
        %v6285 = vsinq.f32.pop %v6282
        %vm6286 = vweird.f32 %v1401
        %v6287 = vand.u32 %v6283, 3
        %vm6288 = vcmp.lt.s32.totalorder %v6287, 2
        %vm6289 = vcmp.eq.s32.totalorder %v6287, 0
        %v6290 = vxor.u32 %v6285, 2147483648
        %v6291 = vsel %vm6289, %v6284, %v6290
        %vm6292 = vcmp.eq.s32.totalorder %v6287, 2
        %v6293 = vxor.u32 %v6284, 2147483648
        %v6294 = vsel %vm6292, %v6293, %v6285
        %v6295 = vsel %vm6288, %v6291, %v6294
        %v6296 = vsel %vm6286, nan, %v6295
        %v6297 = vand.u32 2147483647, %v1402
        %vm6298 = vcmp.le.f32.partialorder %v6297, 0.7853982
        %vm6299 = vcmp.lt.s32.totalorder %v1402, 0
        %v6300 = vand.u32 %v1402, 2139095040
        %v6301 = vshrl.u32 %v6300, 23
        %v6302 = vsub.s32 %v6301, 127
        %v6303 = vand.u32 2147483647, %v1402
        %v6304 = vand.u32 %v6303, 8388607
        %v6305 = vor.u32 %v6304, 8388608
        %v6306 = vsub.s32 0, %v6305
        %v6307 = vadd.s32 %v6302, 1
        %vm6308 = vcmp.gt.s32.totalorder %v6307, 0
        %v6309 = vsel %vm6308, %v6307, 0
        %v6310 = vshrl.u32 %v6309, 5
        %v6311 = vand.u32 %v6309, 31
        %v6312 = vsub.s32 32, %v6311
        %v6313 = vshrl.u32 683565275, %v6312
        %v6314 = vshll.u32 683565275, %v6311
        %v6315 = vshrl.u32 2475754826, %v6312
        %v6316 = vor.u32 %v6314, %v6315
        %v6317 = vshll.u32 2475754826, %v6311
        %v6318 = vshrl.u32 2131351028, %v6312
        %v6319 = vor.u32 %v6317, %v6318
        %v6320 = vshll.u32 2131351028, %v6311
        %v6321 = vshrl.u32 2102212464, %v6312
        %v6322 = vor.u32 %v6320, %v6321
        %v6323 = vshll.u32 2102212464, %v6311
        %v6324 = vshrl.u32 920167782, %v6312
        %v6325 = vor.u32 %v6323, %v6324
        %v6326 = vshll.u32 920167782, %v6311
        %v6327 = vshrl.u32 1326507024, %v6312
        %v6328 = vor.u32 %v6326, %v6327
        %vm6329 = vcmp.lt.s32.totalorder %v6310, 1
        %vm6330 = vcmp.lt.s32.totalorder %v6310, 2
        %vm6331 = vcmp.lt.s32.totalorder %v6310, 3
        %vm6332 = vcmp.lt.s32.totalorder %v6310, 4
        %v6333 = vsel %vm6329, %v6313, %v6316
        %v6334 = vsel %vm6332, %v6322, 2102212464
        %v6335 = vsel %vm6331, %v6319, %v6334
        %v6336 = vsel %vm6330, %v6333, %v6335
        %v6337 = vsel %vm6329, %v6316, %v6319
        %v6338 = vsel %vm6332, %v6325, 920167782
        %v6339 = vsel %vm6331, %v6322, %v6338
        %v6340 = vsel %vm6330, %v6337, %v6339
        %v6341 = vsel %vm6329, %v6319, %v6322
        %v6342 = vsel %vm6332, %v6328, 1326507024
        %v6343 = vsel %vm6331, %v6325, %v6342
        %v6344 = vsel %vm6330, %v6341, %v6343
        %v6345 = vshll.u32 %v6305, 8
        %v6346 = vmul.u32.u64.compose %v6345, %v6344
        %v6347 = vextract.low.u32 %v6346
        %v6348 = vextract.high.u32 %v6346
        %v6349 = vmul.u32.u64.compose %v6345, %v6340
        %v6350 = vextract.low.u32 %v6349
        %v6351 = vextract.high.u32 %v6349
        %v6352 = vmul.u32 %v6345, %v6336
        %v6353 = vadd.s32 %v6348, %v6350
        %vm6354 = vc.u32 %v6348, %v6350
        %v6355 = vadd.s32 %v6351, 1
        %v6356 = vsel %vm6354, %v6355, %v6351
        %v6357 = vadd.s32 %v6352, %v6356
        %v6358 = vadd.s32 %v6357, 536870912
        %v6359 = vshrl.u32 %v6358, 30
        %v6360 = vshll.u32 %v6359, 30
        %v6361 = vsub.s32 %v6357, %v6360
        %vm6362 = vcmp.lt.s32.totalorder %v6361, 0
        %v6363 = vsub.s32 0, %v6361
        %v6364 = vsel %vm6362, %v6363, %v6361
        %v6365 = vclz %v6364
        %v6366 = vsub.s32 %v6365, 2
        %vm6367 = vcmp.gt.s32.totalorder 0, %v6366
        %v6368 = vsel %vm6367, 0, %v6366
        %v6369 = vsub.s32 32, %v6368
        %v6370 = vshll.u32 %v6361, %v6368
        %v6371 = vshrl.u32 %v6353, %v6369
        %v6372 = vor.u32 %v6370, %v6371
        %v6373 = vsub.s32 4294967266, %v6368
        %v6374 = vadd.s32 %v6373, 127
        %v6375 = vshll.u32 %v6374, 23
        %v6376 = vor.u32 4788187, %v6375
        %v6377 = vand.u32 2147483647, %v6376
        %v6379 = vcvt.s32.f32 %v6372
        %v6380 = vmul.f32 %v6379, %v6377
        %v6381 = vxor.u32 %v6380, 2147483648
        %v6382 = vsel %vm6299, %v6381, %v6380
        %v6383 = vsub.s32 4, %v6359
        %v6384 = vsel %vm6299, %v6383, %v6359
        %v6385 = vsel %vm6298, %v1402, %v6382
        %v6386 = vsel %vm6298, 0, %v6384
        %v6387 = vcosq.f32.pop %v6385
        %v6388 = vsinq.f32.pop %v6385
        %vm6389 = vweird.f32 %v1402
        %v6390 = vand.u32 %v6386, 3
        %vm6391 = vcmp.lt.s32.totalorder %v6390, 2
        %vm6392 = vcmp.eq.s32.totalorder %v6390, 0
        %v6393 = vxor.u32 %v6388, 2147483648
        %v6394 = vsel %vm6392, %v6387, %v6393
        %vm6395 = vcmp.eq.s32.totalorder %v6390, 2
        %v6396 = vxor.u32 %v6387, 2147483648
        %v6397 = vsel %vm6395, %v6396, %v6388
        %v6398 = vsel %vm6391, %v6394, %v6397
        %v6399 = vsel %vm6389, nan, %v6398
        %v6400 = vand.u32 2147483647, %v1403
        %vm6401 = vcmp.le.f32.partialorder %v6400, 0.7853982
        %vm6402 = vcmp.lt.s32.totalorder %v1403, 0
        %v6403 = vand.u32 %v1403, 2139095040
        %v6404 = vshrl.u32 %v6403, 23
        %v6405 = vsub.s32 %v6404, 127
        %v6406 = vand.u32 2147483647, %v1403
        %v6407 = vand.u32 %v6406, 8388607
        %v6408 = vor.u32 %v6407, 8388608
        %v6409 = vsub.s32 0, %v6408
        %v6410 = vadd.s32 %v6405, 1
        %vm6411 = vcmp.gt.s32.totalorder %v6410, 0
        %v6412 = vsel %vm6411, %v6410, 0
        %v6413 = vshrl.u32 %v6412, 5
        %v6414 = vand.u32 %v6412, 31
        %v6415 = vsub.s32 32, %v6414
        %v6416 = vshrl.u32 683565275, %v6415
        %v6417 = vshll.u32 683565275, %v6414
        %v6418 = vshrl.u32 2475754826, %v6415
        %v6419 = vor.u32 %v6417, %v6418
        %v6420 = vshll.u32 2475754826, %v6414
        %v6421 = vshrl.u32 2131351028, %v6415
        %v6422 = vor.u32 %v6420, %v6421
        %v6423 = vshll.u32 2131351028, %v6414
        %v6424 = vshrl.u32 2102212464, %v6415
        %v6425 = vor.u32 %v6423, %v6424
        %v6426 = vshll.u32 2102212464, %v6414
        %v6427 = vshrl.u32 920167782, %v6415
        %v6428 = vor.u32 %v6426, %v6427
        %v6429 = vshll.u32 920167782, %v6414
        %v6430 = vshrl.u32 1326507024, %v6415
        %v6431 = vor.u32 %v6429, %v6430
        %vm6432 = vcmp.lt.s32.totalorder %v6413, 1
        %vm6433 = vcmp.lt.s32.totalorder %v6413, 2
        %vm6434 = vcmp.lt.s32.totalorder %v6413, 3
        %vm6435 = vcmp.lt.s32.totalorder %v6413, 4
        %v6436 = vsel %vm6432, %v6416, %v6419
        %v6437 = vsel %vm6435, %v6425, 2102212464
        %v6438 = vsel %vm6434, %v6422, %v6437
        %v6439 = vsel %vm6433, %v6436, %v6438
        %v6440 = vsel %vm6432, %v6419, %v6422
        %v6441 = vsel %vm6435, %v6428, 920167782
        %v6442 = vsel %vm6434, %v6425, %v6441
        %v6443 = vsel %vm6433, %v6440, %v6442
        %v6444 = vsel %vm6432, %v6422, %v6425
        %v6445 = vsel %vm6435, %v6431, 1326507024
        %v6446 = vsel %vm6434, %v6428, %v6445
        %v6447 = vsel %vm6433, %v6444, %v6446
        %v6448 = vshll.u32 %v6408, 8
        %v6449 = vmul.u32.u64.compose %v6448, %v6447
        %v6450 = vextract.low.u32 %v6449
        %v6451 = vextract.high.u32 %v6449
        %v6452 = vmul.u32.u64.compose %v6448, %v6443
        %v6453 = vextract.low.u32 %v6452
        %v6454 = vextract.high.u32 %v6452
        %v6455 = vmul.u32 %v6448, %v6439
        %v6456 = vadd.s32 %v6451, %v6453
        %vm6457 = vc.u32 %v6451, %v6453
        %v6458 = vadd.s32 %v6454, 1
        %v6459 = vsel %vm6457, %v6458, %v6454
        %v6460 = vadd.s32 %v6455, %v6459
        %v6461 = vadd.s32 %v6460, 536870912
        %v6462 = vshrl.u32 %v6461, 30
        %v6463 = vshll.u32 %v6462, 30
        %v6464 = vsub.s32 %v6460, %v6463
        %vm6465 = vcmp.lt.s32.totalorder %v6464, 0
        %v6466 = vsub.s32 0, %v6464
        %v6467 = vsel %vm6465, %v6466, %v6464
        %v6468 = vclz %v6467
        %v6469 = vsub.s32 %v6468, 2
        %vm6470 = vcmp.gt.s32.totalorder 0, %v6469
        %v6471 = vsel %vm6470, 0, %v6469
        %v6472 = vsub.s32 32, %v6471
        %v6473 = vshll.u32 %v6464, %v6471
        %v6474 = vshrl.u32 %v6456, %v6472
        %v6475 = vor.u32 %v6473, %v6474
        %v6476 = vsub.s32 4294967266, %v6471
        %v6477 = vadd.s32 %v6476, 127
        %v6478 = vshll.u32 %v6477, 23
        %v6479 = vor.u32 4788187, %v6478
        %v6480 = vand.u32 2147483647, %v6479
        %v6482 = vcvt.s32.f32 %v6475
        %v6483 = vmul.f32 %v6482, %v6480
        %v6484 = vxor.u32 %v6483, 2147483648
        %v6485 = vsel %vm6402, %v6484, %v6483
        %v6486 = vsub.s32 4, %v6462
        %v6487 = vsel %vm6402, %v6486, %v6462
        %v6488 = vsel %vm6401, %v1403, %v6485
        %v6489 = vsel %vm6401, 0, %v6487
        %v6490 = vcosq.f32.pop %v6488
        %v6491 = vsinq.f32.pop %v6488
        %vm6492 = vweird.f32 %v1403
        %v6493 = vand.u32 %v6489, 3
        %vm6494 = vcmp.lt.s32.totalorder %v6493, 2
        %vm6495 = vcmp.eq.s32.totalorder %v6493, 0
        %v6496 = vxor.u32 %v6491, 2147483648
        %v6497 = vsel %vm6495, %v6490, %v6496
        %vm6498 = vcmp.eq.s32.totalorder %v6493, 2
        %v6499 = vxor.u32 %v6490, 2147483648
        %v6500 = vsel %vm6498, %v6499, %v6491
        %v6501 = vsel %vm6494, %v6497, %v6500
        %v6502 = vsel %vm6492, nan, %v6501
        %v6503 = vand.u32 2147483647, %v1404
        %vm6504 = vcmp.le.f32.partialorder %v6503, 0.7853982
        %vm6505 = vcmp.lt.s32.totalorder %v1404, 0
        %v6506 = vand.u32 %v1404, 2139095040
        %v6507 = vshrl.u32 %v6506, 23
        %v6508 = vsub.s32 %v6507, 127
        %v6509 = vand.u32 2147483647, %v1404
        %v6510 = vand.u32 %v6509, 8388607
        %v6511 = vor.u32 %v6510, 8388608
        %v6512 = vsub.s32 0, %v6511
        %v6513 = vadd.s32 %v6508, 1
        %vm6514 = vcmp.gt.s32.totalorder %v6513, 0
        %v6515 = vsel %vm6514, %v6513, 0
        %v6516 = vshrl.u32 %v6515, 5
        %v6517 = vand.u32 %v6515, 31
        %v6518 = vsub.s32 32, %v6517
        %v6519 = vshrl.u32 683565275, %v6518
        %v6520 = vshll.u32 683565275, %v6517
        %v6521 = vshrl.u32 2475754826, %v6518
        %v6522 = vor.u32 %v6520, %v6521
        %v6523 = vshll.u32 2475754826, %v6517
        %v6524 = vshrl.u32 2131351028, %v6518
        %v6525 = vor.u32 %v6523, %v6524
        %v6526 = vshll.u32 2131351028, %v6517
        %v6527 = vshrl.u32 2102212464, %v6518
        %v6528 = vor.u32 %v6526, %v6527
        %v6529 = vshll.u32 2102212464, %v6517
        %v6530 = vshrl.u32 920167782, %v6518
        %v6531 = vor.u32 %v6529, %v6530
        %v6532 = vshll.u32 920167782, %v6517
        %v6533 = vshrl.u32 1326507024, %v6518
        %v6534 = vor.u32 %v6532, %v6533
        %vm6535 = vcmp.lt.s32.totalorder %v6516, 1
        %vm6536 = vcmp.lt.s32.totalorder %v6516, 2
        %vm6537 = vcmp.lt.s32.totalorder %v6516, 3
        %vm6538 = vcmp.lt.s32.totalorder %v6516, 4
        %v6539 = vsel %vm6535, %v6519, %v6522
        %v6540 = vsel %vm6538, %v6528, 2102212464
        %v6541 = vsel %vm6537, %v6525, %v6540
        %v6542 = vsel %vm6536, %v6539, %v6541
        %v6543 = vsel %vm6535, %v6522, %v6525
        %v6544 = vsel %vm6538, %v6531, 920167782
        %v6545 = vsel %vm6537, %v6528, %v6544
        %v6546 = vsel %vm6536, %v6543, %v6545
        %v6547 = vsel %vm6535, %v6525, %v6528
        %v6548 = vsel %vm6538, %v6534, 1326507024
        %v6549 = vsel %vm6537, %v6531, %v6548
        %v6550 = vsel %vm6536, %v6547, %v6549
        %v6551 = vshll.u32 %v6511, 8
        %v6552 = vmul.u32.u64.compose %v6551, %v6550
        %v6553 = vextract.low.u32 %v6552
        %v6554 = vextract.high.u32 %v6552
        %v6555 = vmul.u32.u64.compose %v6551, %v6546
        %v6556 = vextract.low.u32 %v6555
        %v6557 = vextract.high.u32 %v6555
        %v6558 = vmul.u32 %v6551, %v6542
        %v6559 = vadd.s32 %v6554, %v6556
        %vm6560 = vc.u32 %v6554, %v6556
        %v6561 = vadd.s32 %v6557, 1
        %v6562 = vsel %vm6560, %v6561, %v6557
        %v6563 = vadd.s32 %v6558, %v6562
        %v6564 = vadd.s32 %v6563, 536870912
        %v6565 = vshrl.u32 %v6564, 30
        %v6566 = vshll.u32 %v6565, 30
        %v6567 = vsub.s32 %v6563, %v6566
        %vm6568 = vcmp.lt.s32.totalorder %v6567, 0
        %v6569 = vsub.s32 0, %v6567
        %v6570 = vsel %vm6568, %v6569, %v6567
        %v6571 = vclz %v6570
        %v6572 = vsub.s32 %v6571, 2
        %vm6573 = vcmp.gt.s32.totalorder 0, %v6572
        %v6574 = vsel %vm6573, 0, %v6572
        %v6575 = vsub.s32 32, %v6574
        %v6576 = vshll.u32 %v6567, %v6574
        %v6577 = vshrl.u32 %v6559, %v6575
        %v6578 = vor.u32 %v6576, %v6577
        %v6579 = vsub.s32 4294967266, %v6574
        %v6580 = vadd.s32 %v6579, 127
        %v6581 = vshll.u32 %v6580, 23
        %v6582 = vor.u32 4788187, %v6581
        %v6583 = vand.u32 2147483647, %v6582
        %v6585 = vcvt.s32.f32 %v6578
        %v6586 = vmul.f32 %v6585, %v6583
        %v6587 = vxor.u32 %v6586, 2147483648
        %v6588 = vsel %vm6505, %v6587, %v6586
        %v6589 = vsub.s32 4, %v6565
        %v6590 = vsel %vm6505, %v6589, %v6565
        %v6591 = vsel %vm6504, %v1404, %v6588
        %v6592 = vsel %vm6504, 0, %v6590
        %v6593 = vcosq.f32.pop %v6591
        %v6594 = vsinq.f32.pop %v6591
        %vm6595 = vweird.f32 %v1404
        %v6596 = vand.u32 %v6592, 3
        %vm6597 = vcmp.lt.s32.totalorder %v6596, 2
        %vm6598 = vcmp.eq.s32.totalorder %v6596, 0
        %v6599 = vxor.u32 %v6594, 2147483648
        %v6600 = vsel %vm6598, %v6593, %v6599
        %vm6601 = vcmp.eq.s32.totalorder %v6596, 2
        %v6602 = vxor.u32 %v6593, 2147483648
        %v6603 = vsel %vm6601, %v6602, %v6594
        %v6604 = vsel %vm6597, %v6600, %v6603
        %v6605 = vsel %vm6595, nan, %v6604
        %v6606 = vand.u32 2147483647, %v1405
        %vm6607 = vcmp.le.f32.partialorder %v6606, 0.7853982
        %vm6608 = vcmp.lt.s32.totalorder %v1405, 0
        %v6609 = vand.u32 %v1405, 2139095040
        %v6610 = vshrl.u32 %v6609, 23
        %v6611 = vsub.s32 %v6610, 127
        %v6612 = vand.u32 2147483647, %v1405
        %v6613 = vand.u32 %v6612, 8388607
        %v6614 = vor.u32 %v6613, 8388608
        %v6615 = vsub.s32 0, %v6614
        %v6616 = vadd.s32 %v6611, 1
        %vm6617 = vcmp.gt.s32.totalorder %v6616, 0
        %v6618 = vsel %vm6617, %v6616, 0
        %v6619 = vshrl.u32 %v6618, 5
        %v6620 = vand.u32 %v6618, 31
        %v6621 = vsub.s32 32, %v6620
        %v6622 = vshrl.u32 683565275, %v6621
        %v6623 = vshll.u32 683565275, %v6620
        %v6624 = vshrl.u32 2475754826, %v6621
        %v6625 = vor.u32 %v6623, %v6624
        %v6626 = vshll.u32 2475754826, %v6620
        %v6627 = vshrl.u32 2131351028, %v6621
        %v6628 = vor.u32 %v6626, %v6627
        %v6629 = vshll.u32 2131351028, %v6620
        %v6630 = vshrl.u32 2102212464, %v6621
        %v6631 = vor.u32 %v6629, %v6630
        %v6632 = vshll.u32 2102212464, %v6620
        %v6633 = vshrl.u32 920167782, %v6621
        %v6634 = vor.u32 %v6632, %v6633
        %v6635 = vshll.u32 920167782, %v6620
        %v6636 = vshrl.u32 1326507024, %v6621
        %v6637 = vor.u32 %v6635, %v6636
        %vm6638 = vcmp.lt.s32.totalorder %v6619, 1
        %vm6639 = vcmp.lt.s32.totalorder %v6619, 2
        %vm6640 = vcmp.lt.s32.totalorder %v6619, 3
        %vm6641 = vcmp.lt.s32.totalorder %v6619, 4
        %v6642 = vsel %vm6638, %v6622, %v6625
        %v6643 = vsel %vm6641, %v6631, 2102212464
        %v6644 = vsel %vm6640, %v6628, %v6643
        %v6645 = vsel %vm6639, %v6642, %v6644
        %v6646 = vsel %vm6638, %v6625, %v6628
        %v6647 = vsel %vm6641, %v6634, 920167782
        %v6648 = vsel %vm6640, %v6631, %v6647
        %v6649 = vsel %vm6639, %v6646, %v6648
        %v6650 = vsel %vm6638, %v6628, %v6631
        %v6651 = vsel %vm6641, %v6637, 1326507024
        %v6652 = vsel %vm6640, %v6634, %v6651
        %v6653 = vsel %vm6639, %v6650, %v6652
        %v6654 = vshll.u32 %v6614, 8
        %v6655 = vmul.u32.u64.compose %v6654, %v6653
        %v6656 = vextract.low.u32 %v6655
        %v6657 = vextract.high.u32 %v6655
        %v6658 = vmul.u32.u64.compose %v6654, %v6649
        %v6659 = vextract.low.u32 %v6658
        %v6660 = vextract.high.u32 %v6658
        %v6661 = vmul.u32 %v6654, %v6645
        %v6662 = vadd.s32 %v6657, %v6659
        %vm6663 = vc.u32 %v6657, %v6659
        %v6664 = vadd.s32 %v6660, 1
        %v6665 = vsel %vm6663, %v6664, %v6660
        %v6666 = vadd.s32 %v6661, %v6665
        %v6667 = vadd.s32 %v6666, 536870912
        %v6668 = vshrl.u32 %v6667, 30
        %v6669 = vshll.u32 %v6668, 30
        %v6670 = vsub.s32 %v6666, %v6669
        %vm6671 = vcmp.lt.s32.totalorder %v6670, 0
        %v6672 = vsub.s32 0, %v6670
        %v6673 = vsel %vm6671, %v6672, %v6670
        %v6674 = vclz %v6673
        %v6675 = vsub.s32 %v6674, 2
        %vm6676 = vcmp.gt.s32.totalorder 0, %v6675
        %v6677 = vsel %vm6676, 0, %v6675
        %v6678 = vsub.s32 32, %v6677
        %v6679 = vshll.u32 %v6670, %v6677
        %v6680 = vshrl.u32 %v6662, %v6678
        %v6681 = vor.u32 %v6679, %v6680
        %v6682 = vsub.s32 4294967266, %v6677
        %v6683 = vadd.s32 %v6682, 127
        %v6684 = vshll.u32 %v6683, 23
        %v6685 = vor.u32 4788187, %v6684
        %v6686 = vand.u32 2147483647, %v6685
        %v6688 = vcvt.s32.f32 %v6681
        %v6689 = vmul.f32 %v6688, %v6686
        %v6690 = vxor.u32 %v6689, 2147483648
        %v6691 = vsel %vm6608, %v6690, %v6689
        %v6692 = vsub.s32 4, %v6668
        %v6693 = vsel %vm6608, %v6692, %v6668
        %v6694 = vsel %vm6607, %v1405, %v6691
        %v6695 = vsel %vm6607, 0, %v6693
        %v6696 = vcosq.f32.pop %v6694
        %v6697 = vsinq.f32.pop %v6694
        %vm6698 = vweird.f32 %v1405
        %v6699 = vand.u32 %v6695, 3
        %vm6700 = vcmp.lt.s32.totalorder %v6699, 2
        %vm6701 = vcmp.eq.s32.totalorder %v6699, 0
        %v6702 = vxor.u32 %v6697, 2147483648
        %v6703 = vsel %vm6701, %v6696, %v6702
        %vm6704 = vcmp.eq.s32.totalorder %v6699, 2
        %v6705 = vxor.u32 %v6696, 2147483648
        %v6706 = vsel %vm6704, %v6705, %v6697
        %v6707 = vsel %vm6700, %v6703, %v6706
        %v6708 = vsel %vm6698, nan, %v6707
        %v6709 = vand.u32 2147483647, %v1406
        %vm6710 = vcmp.le.f32.partialorder %v6709, 0.7853982
        %vm6711 = vcmp.lt.s32.totalorder %v1406, 0
        %v6712 = vand.u32 %v1406, 2139095040
        %v6713 = vshrl.u32 %v6712, 23
        %v6714 = vsub.s32 %v6713, 127
        %v6715 = vand.u32 2147483647, %v1406
        %v6716 = vand.u32 %v6715, 8388607
        %v6717 = vor.u32 %v6716, 8388608
        %v6718 = vsub.s32 0, %v6717
        %v6719 = vadd.s32 %v6714, 1
        %vm6720 = vcmp.gt.s32.totalorder %v6719, 0
        %v6721 = vsel %vm6720, %v6719, 0
        %v6722 = vshrl.u32 %v6721, 5
        %v6723 = vand.u32 %v6721, 31
        %v6724 = vsub.s32 32, %v6723
        %v6725 = vshrl.u32 683565275, %v6724
        %v6726 = vshll.u32 683565275, %v6723
        %v6727 = vshrl.u32 2475754826, %v6724
        %v6728 = vor.u32 %v6726, %v6727
        %v6729 = vshll.u32 2475754826, %v6723
        %v6730 = vshrl.u32 2131351028, %v6724
        %v6731 = vor.u32 %v6729, %v6730
        %v6732 = vshll.u32 2131351028, %v6723
        %v6733 = vshrl.u32 2102212464, %v6724
        %v6734 = vor.u32 %v6732, %v6733
        %v6735 = vshll.u32 2102212464, %v6723
        %v6736 = vshrl.u32 920167782, %v6724
        %v6737 = vor.u32 %v6735, %v6736
        %v6738 = vshll.u32 920167782, %v6723
        %v6739 = vshrl.u32 1326507024, %v6724
        %v6740 = vor.u32 %v6738, %v6739
        %vm6741 = vcmp.lt.s32.totalorder %v6722, 1
        %vm6742 = vcmp.lt.s32.totalorder %v6722, 2
        %vm6743 = vcmp.lt.s32.totalorder %v6722, 3
        %vm6744 = vcmp.lt.s32.totalorder %v6722, 4
        %v6745 = vsel %vm6741, %v6725, %v6728
        %v6746 = vsel %vm6744, %v6734, 2102212464
        %v6747 = vsel %vm6743, %v6731, %v6746
        %v6748 = vsel %vm6742, %v6745, %v6747
        %v6749 = vsel %vm6741, %v6728, %v6731
        %v6750 = vsel %vm6744, %v6737, 920167782
        %v6751 = vsel %vm6743, %v6734, %v6750
        %v6752 = vsel %vm6742, %v6749, %v6751
        %v6753 = vsel %vm6741, %v6731, %v6734
        %v6754 = vsel %vm6744, %v6740, 1326507024
        %v6755 = vsel %vm6743, %v6737, %v6754
        %v6756 = vsel %vm6742, %v6753, %v6755
        %v6757 = vshll.u32 %v6717, 8
        %v6758 = vmul.u32.u64.compose %v6757, %v6756
        %v6759 = vextract.low.u32 %v6758
        %v6760 = vextract.high.u32 %v6758
        %v6761 = vmul.u32.u64.compose %v6757, %v6752
        %v6762 = vextract.low.u32 %v6761
        %v6763 = vextract.high.u32 %v6761
        %v6764 = vmul.u32 %v6757, %v6748
        %v6765 = vadd.s32 %v6760, %v6762
        %vm6766 = vc.u32 %v6760, %v6762
        %v6767 = vadd.s32 %v6763, 1
        %v6768 = vsel %vm6766, %v6767, %v6763
        %v6769 = vadd.s32 %v6764, %v6768
        %v6770 = vadd.s32 %v6769, 536870912
        %v6771 = vshrl.u32 %v6770, 30
        %v6772 = vshll.u32 %v6771, 30
        %v6773 = vsub.s32 %v6769, %v6772
        %vm6774 = vcmp.lt.s32.totalorder %v6773, 0
        %v6775 = vsub.s32 0, %v6773
        %v6776 = vsel %vm6774, %v6775, %v6773
        %v6777 = vclz %v6776
        %v6778 = vsub.s32 %v6777, 2
        %vm6779 = vcmp.gt.s32.totalorder 0, %v6778
        %v6780 = vsel %vm6779, 0, %v6778
        %v6781 = vsub.s32 32, %v6780
        %v6782 = vshll.u32 %v6773, %v6780
        %v6783 = vshrl.u32 %v6765, %v6781
        %v6784 = vor.u32 %v6782, %v6783
        %v6785 = vsub.s32 4294967266, %v6780
        %v6786 = vadd.s32 %v6785, 127
        %v6787 = vshll.u32 %v6786, 23
        %v6788 = vor.u32 4788187, %v6787
        %v6789 = vand.u32 2147483647, %v6788
        %v6791 = vcvt.s32.f32 %v6784
        %v6792 = vmul.f32 %v6791, %v6789
        %v6793 = vxor.u32 %v6792, 2147483648
        %v6794 = vsel %vm6711, %v6793, %v6792
        %v6795 = vsub.s32 4, %v6771
        %v6796 = vsel %vm6711, %v6795, %v6771
        %v6797 = vsel %vm6710, %v1406, %v6794
        %v6798 = vsel %vm6710, 0, %v6796
        %v6799 = vcosq.f32.pop %v6797
        %v6800 = vsinq.f32.pop %v6797
        %vm6801 = vweird.f32 %v1406
        %v6802 = vand.u32 %v6798, 3
        %vm6803 = vcmp.lt.s32.totalorder %v6802, 2
        %vm6804 = vcmp.eq.s32.totalorder %v6802, 0
        %v6805 = vxor.u32 %v6800, 2147483648
        %v6806 = vsel %vm6804, %v6799, %v6805
        %vm6807 = vcmp.eq.s32.totalorder %v6802, 2
        %v6808 = vxor.u32 %v6799, 2147483648
        %v6809 = vsel %vm6807, %v6808, %v6800
        %v6810 = vsel %vm6803, %v6806, %v6809
        %v6811 = vsel %vm6801, nan, %v6810
        %v6812 = vand.u32 2147483647, %v1407
        %vm6813 = vcmp.le.f32.partialorder %v6812, 0.7853982
        %vm6814 = vcmp.lt.s32.totalorder %v1407, 0
        %v6815 = vand.u32 %v1407, 2139095040
        %v6816 = vshrl.u32 %v6815, 23
        %v6817 = vsub.s32 %v6816, 127
        %v6818 = vand.u32 2147483647, %v1407
        %v6819 = vand.u32 %v6818, 8388607
        %v6820 = vor.u32 %v6819, 8388608
        %v6821 = vsub.s32 0, %v6820
        %v6822 = vadd.s32 %v6817, 1
        %vm6823 = vcmp.gt.s32.totalorder %v6822, 0
        %v6824 = vsel %vm6823, %v6822, 0
        %v6825 = vshrl.u32 %v6824, 5
        %v6826 = vand.u32 %v6824, 31
        %v6827 = vsub.s32 32, %v6826
        %v6828 = vshrl.u32 683565275, %v6827
        %v6829 = vshll.u32 683565275, %v6826
        %v6830 = vshrl.u32 2475754826, %v6827
        %v6831 = vor.u32 %v6829, %v6830
        %v6832 = vshll.u32 2475754826, %v6826
        %v6833 = vshrl.u32 2131351028, %v6827
        %v6834 = vor.u32 %v6832, %v6833
        %v6835 = vshll.u32 2131351028, %v6826
        %v6836 = vshrl.u32 2102212464, %v6827
        %v6837 = vor.u32 %v6835, %v6836
        %v6838 = vshll.u32 2102212464, %v6826
        %v6839 = vshrl.u32 920167782, %v6827
        %v6840 = vor.u32 %v6838, %v6839
        %v6841 = vshll.u32 920167782, %v6826
        %v6842 = vshrl.u32 1326507024, %v6827
        %v6843 = vor.u32 %v6841, %v6842
        %vm6844 = vcmp.lt.s32.totalorder %v6825, 1
        %vm6845 = vcmp.lt.s32.totalorder %v6825, 2
        %vm6846 = vcmp.lt.s32.totalorder %v6825, 3
        %vm6847 = vcmp.lt.s32.totalorder %v6825, 4
        %v6848 = vsel %vm6844, %v6828, %v6831
        %v6849 = vsel %vm6847, %v6837, 2102212464
        %v6850 = vsel %vm6846, %v6834, %v6849
        %v6851 = vsel %vm6845, %v6848, %v6850
        %v6852 = vsel %vm6844, %v6831, %v6834
        %v6853 = vsel %vm6847, %v6840, 920167782
        %v6854 = vsel %vm6846, %v6837, %v6853
        %v6855 = vsel %vm6845, %v6852, %v6854
        %v6856 = vsel %vm6844, %v6834, %v6837
        %v6857 = vsel %vm6847, %v6843, 1326507024
        %v6858 = vsel %vm6846, %v6840, %v6857
        %v6859 = vsel %vm6845, %v6856, %v6858
        %v6860 = vshll.u32 %v6820, 8
        %v6861 = vmul.u32.u64.compose %v6860, %v6859
        %v6862 = vextract.low.u32 %v6861
        %v6863 = vextract.high.u32 %v6861
        %v6864 = vmul.u32.u64.compose %v6860, %v6855
        %v6865 = vextract.low.u32 %v6864
        %v6866 = vextract.high.u32 %v6864
        %v6867 = vmul.u32 %v6860, %v6851
        %v6868 = vadd.s32 %v6863, %v6865
        %vm6869 = vc.u32 %v6863, %v6865
        %v6870 = vadd.s32 %v6866, 1
        %v6871 = vsel %vm6869, %v6870, %v6866
        %v6872 = vadd.s32 %v6867, %v6871
        %v6873 = vadd.s32 %v6872, 536870912
        %v6874 = vshrl.u32 %v6873, 30
        %v6875 = vshll.u32 %v6874, 30
        %v6876 = vsub.s32 %v6872, %v6875
        %vm6877 = vcmp.lt.s32.totalorder %v6876, 0
        %v6878 = vsub.s32 0, %v6876
        %v6879 = vsel %vm6877, %v6878, %v6876
        %v6880 = vclz %v6879
        %v6881 = vsub.s32 %v6880, 2
        %vm6882 = vcmp.gt.s32.totalorder 0, %v6881
        %v6883 = vsel %vm6882, 0, %v6881
        %v6884 = vsub.s32 32, %v6883
        %v6885 = vshll.u32 %v6876, %v6883
        %v6886 = vshrl.u32 %v6868, %v6884
        %v6887 = vor.u32 %v6885, %v6886
        %v6888 = vsub.s32 4294967266, %v6883
        %v6889 = vadd.s32 %v6888, 127
        %v6890 = vshll.u32 %v6889, 23
        %v6891 = vor.u32 4788187, %v6890
        %v6892 = vand.u32 2147483647, %v6891
        %v6894 = vcvt.s32.f32 %v6887
        %v6895 = vmul.f32 %v6894, %v6892
        %v6896 = vxor.u32 %v6895, 2147483648
        %v6897 = vsel %vm6814, %v6896, %v6895
        %v6898 = vsub.s32 4, %v6874
        %v6899 = vsel %vm6814, %v6898, %v6874
        %v6900 = vsel %vm6813, %v1407, %v6897
        %v6901 = vsel %vm6813, 0, %v6899
        %v6902 = vcosq.f32.pop %v6900
        %v6903 = vsinq.f32.pop %v6900
        %vm6904 = vweird.f32 %v1407
        %v6905 = vand.u32 %v6901, 3
        %vm6906 = vcmp.lt.s32.totalorder %v6905, 2
        %vm6907 = vcmp.eq.s32.totalorder %v6905, 0
        %v6908 = vxor.u32 %v6903, 2147483648
        %v6909 = vsel %vm6907, %v6902, %v6908
        %vm6910 = vcmp.eq.s32.totalorder %v6905, 2
        %v6911 = vxor.u32 %v6902, 2147483648
        %v6912 = vsel %vm6910, %v6911, %v6903
        %v6913 = vsel %vm6906, %v6909, %v6912
        %v6914 = vsel %vm6904, nan, %v6913
        %v6915 = vand.u32 2147483647, %v1408
        %vm6916 = vcmp.le.f32.partialorder %v6915, 0.7853982
        %vm6917 = vcmp.lt.s32.totalorder %v1408, 0
        %v6918 = vand.u32 %v1408, 2139095040
        %v6919 = vshrl.u32 %v6918, 23
        %v6920 = vsub.s32 %v6919, 127
        %v6921 = vand.u32 2147483647, %v1408
        %v6922 = vand.u32 %v6921, 8388607
        %v6923 = vor.u32 %v6922, 8388608
        %v6924 = vsub.s32 0, %v6923
        %v6925 = vadd.s32 %v6920, 1
        %vm6926 = vcmp.gt.s32.totalorder %v6925, 0
        %v6927 = vsel %vm6926, %v6925, 0
        %v6928 = vshrl.u32 %v6927, 5
        %v6929 = vand.u32 %v6927, 31
        %v6930 = vsub.s32 32, %v6929
        %v6931 = vshrl.u32 683565275, %v6930
        %v6932 = vshll.u32 683565275, %v6929
        %v6933 = vshrl.u32 2475754826, %v6930
        %v6934 = vor.u32 %v6932, %v6933
        %v6935 = vshll.u32 2475754826, %v6929
        %v6936 = vshrl.u32 2131351028, %v6930
        %v6937 = vor.u32 %v6935, %v6936
        %v6938 = vshll.u32 2131351028, %v6929
        %v6939 = vshrl.u32 2102212464, %v6930
        %v6940 = vor.u32 %v6938, %v6939
        %v6941 = vshll.u32 2102212464, %v6929
        %v6942 = vshrl.u32 920167782, %v6930
        %v6943 = vor.u32 %v6941, %v6942
        %v6944 = vshll.u32 920167782, %v6929
        %v6945 = vshrl.u32 1326507024, %v6930
        %v6946 = vor.u32 %v6944, %v6945
        %vm6947 = vcmp.lt.s32.totalorder %v6928, 1
        %vm6948 = vcmp.lt.s32.totalorder %v6928, 2
        %vm6949 = vcmp.lt.s32.totalorder %v6928, 3
        %vm6950 = vcmp.lt.s32.totalorder %v6928, 4
        %v6951 = vsel %vm6947, %v6931, %v6934
        %v6952 = vsel %vm6950, %v6940, 2102212464
        %v6953 = vsel %vm6949, %v6937, %v6952
        %v6954 = vsel %vm6948, %v6951, %v6953
        %v6955 = vsel %vm6947, %v6934, %v6937
        %v6956 = vsel %vm6950, %v6943, 920167782
        %v6957 = vsel %vm6949, %v6940, %v6956
        %v6958 = vsel %vm6948, %v6955, %v6957
        %v6959 = vsel %vm6947, %v6937, %v6940
        %v6960 = vsel %vm6950, %v6946, 1326507024
        %v6961 = vsel %vm6949, %v6943, %v6960
        %v6962 = vsel %vm6948, %v6959, %v6961
        %v6963 = vshll.u32 %v6923, 8
        %v6964 = vmul.u32.u64.compose %v6963, %v6962
        %v6965 = vextract.low.u32 %v6964
        %v6966 = vextract.high.u32 %v6964
        %v6967 = vmul.u32.u64.compose %v6963, %v6958
        %v6968 = vextract.low.u32 %v6967
        %v6969 = vextract.high.u32 %v6967
        %v6970 = vmul.u32 %v6963, %v6954
        %v6971 = vadd.s32 %v6966, %v6968
        %vm6972 = vc.u32 %v6966, %v6968
        %v6973 = vadd.s32 %v6969, 1
        %v6974 = vsel %vm6972, %v6973, %v6969
        %v6975 = vadd.s32 %v6970, %v6974
        %v6976 = vadd.s32 %v6975, 536870912
        %v6977 = vshrl.u32 %v6976, 30
        %v6978 = vshll.u32 %v6977, 30
        %v6979 = vsub.s32 %v6975, %v6978
        %vm6980 = vcmp.lt.s32.totalorder %v6979, 0
        %v6981 = vsub.s32 0, %v6979
        %v6982 = vsel %vm6980, %v6981, %v6979
        %v6983 = vclz %v6982
        %v6984 = vsub.s32 %v6983, 2
        %vm6985 = vcmp.gt.s32.totalorder 0, %v6984
        %v6986 = vsel %vm6985, 0, %v6984
        %v6987 = vsub.s32 32, %v6986
        %v6988 = vshll.u32 %v6979, %v6986
        %v6989 = vshrl.u32 %v6971, %v6987
        %v6990 = vor.u32 %v6988, %v6989
        %v6991 = vsub.s32 4294967266, %v6986
        %v6992 = vadd.s32 %v6991, 127
        %v6993 = vshll.u32 %v6992, 23
        %v6994 = vor.u32 4788187, %v6993
        %v6995 = vand.u32 2147483647, %v6994
        %v6997 = vcvt.s32.f32 %v6990
        %v6998 = vmul.f32 %v6997, %v6995
        %v6999 = vxor.u32 %v6998, 2147483648
        %v7000 = vsel %vm6917, %v6999, %v6998
        %v7001 = vsub.s32 4, %v6977
        %v7002 = vsel %vm6917, %v7001, %v6977
        %v7003 = vsel %vm6916, %v1408, %v7000
        %v7004 = vsel %vm6916, 0, %v7002
        %v7005 = vcosq.f32.pop %v7003
        %v7006 = vsinq.f32.pop %v7003
        %vm7007 = vweird.f32 %v1408
        %v7008 = vand.u32 %v7004, 3
        %vm7009 = vcmp.lt.s32.totalorder %v7008, 2
        %vm7010 = vcmp.eq.s32.totalorder %v7008, 0
        %v7011 = vxor.u32 %v7006, 2147483648
        %v7012 = vsel %vm7010, %v7005, %v7011
        %vm7013 = vcmp.eq.s32.totalorder %v7008, 2
        %v7014 = vxor.u32 %v7005, 2147483648
        %v7015 = vsel %vm7013, %v7014, %v7006
        %v7016 = vsel %vm7009, %v7012, %v7015
        %v7017 = vsel %vm7007, nan, %v7016
        %v7018 = vand.u32 2147483647, %v1409
        %vm7019 = vcmp.le.f32.partialorder %v7018, 0.7853982
        %vm7020 = vcmp.lt.s32.totalorder %v1409, 0
        %v7021 = vand.u32 %v1409, 2139095040
        %v7022 = vshrl.u32 %v7021, 23
        %v7023 = vsub.s32 %v7022, 127
        %v7024 = vand.u32 2147483647, %v1409
        %v7025 = vand.u32 %v7024, 8388607
        %v7026 = vor.u32 %v7025, 8388608
        %v7027 = vsub.s32 0, %v7026
        %v7028 = vadd.s32 %v7023, 1
        %vm7029 = vcmp.gt.s32.totalorder %v7028, 0
        %v7030 = vsel %vm7029, %v7028, 0
        %v7031 = vshrl.u32 %v7030, 5
        %v7032 = vand.u32 %v7030, 31
        %v7033 = vsub.s32 32, %v7032
        %v7034 = vshrl.u32 683565275, %v7033
        %v7035 = vshll.u32 683565275, %v7032
        %v7036 = vshrl.u32 2475754826, %v7033
        %v7037 = vor.u32 %v7035, %v7036
        %v7038 = vshll.u32 2475754826, %v7032
        %v7039 = vshrl.u32 2131351028, %v7033
        %v7040 = vor.u32 %v7038, %v7039
        %v7041 = vshll.u32 2131351028, %v7032
        %v7042 = vshrl.u32 2102212464, %v7033
        %v7043 = vor.u32 %v7041, %v7042
        %v7044 = vshll.u32 2102212464, %v7032
        %v7045 = vshrl.u32 920167782, %v7033
        %v7046 = vor.u32 %v7044, %v7045
        %v7047 = vshll.u32 920167782, %v7032
        %v7048 = vshrl.u32 1326507024, %v7033
        %v7049 = vor.u32 %v7047, %v7048
        %vm7050 = vcmp.lt.s32.totalorder %v7031, 1
        %vm7051 = vcmp.lt.s32.totalorder %v7031, 2
        %vm7052 = vcmp.lt.s32.totalorder %v7031, 3
        %vm7053 = vcmp.lt.s32.totalorder %v7031, 4
        %v7054 = vsel %vm7050, %v7034, %v7037
        %v7055 = vsel %vm7053, %v7043, 2102212464
        %v7056 = vsel %vm7052, %v7040, %v7055
        %v7057 = vsel %vm7051, %v7054, %v7056
        %v7058 = vsel %vm7050, %v7037, %v7040
        %v7059 = vsel %vm7053, %v7046, 920167782
        %v7060 = vsel %vm7052, %v7043, %v7059
        %v7061 = vsel %vm7051, %v7058, %v7060
        %v7062 = vsel %vm7050, %v7040, %v7043
        %v7063 = vsel %vm7053, %v7049, 1326507024
        %v7064 = vsel %vm7052, %v7046, %v7063
        %v7065 = vsel %vm7051, %v7062, %v7064
        %v7066 = vshll.u32 %v7026, 8
        %v7067 = vmul.u32.u64.compose %v7066, %v7065
        %v7068 = vextract.low.u32 %v7067
        %v7069 = vextract.high.u32 %v7067
        %v7070 = vmul.u32.u64.compose %v7066, %v7061
        %v7071 = vextract.low.u32 %v7070
        %v7072 = vextract.high.u32 %v7070
        %v7073 = vmul.u32 %v7066, %v7057
        %v7074 = vadd.s32 %v7069, %v7071
        %vm7075 = vc.u32 %v7069, %v7071
        %v7076 = vadd.s32 %v7072, 1
        %v7077 = vsel %vm7075, %v7076, %v7072
        %v7078 = vadd.s32 %v7073, %v7077
        %v7079 = vadd.s32 %v7078, 536870912
        %v7080 = vshrl.u32 %v7079, 30
        %v7081 = vshll.u32 %v7080, 30
        %v7082 = vsub.s32 %v7078, %v7081
        %vm7083 = vcmp.lt.s32.totalorder %v7082, 0
        %v7084 = vsub.s32 0, %v7082
        %v7085 = vsel %vm7083, %v7084, %v7082
        %v7086 = vclz %v7085
        %v7087 = vsub.s32 %v7086, 2
        %vm7088 = vcmp.gt.s32.totalorder 0, %v7087
        %v7089 = vsel %vm7088, 0, %v7087
        %v7090 = vsub.s32 32, %v7089
        %v7091 = vshll.u32 %v7082, %v7089
        %v7092 = vshrl.u32 %v7074, %v7090
        %v7093 = vor.u32 %v7091, %v7092
        %v7094 = vsub.s32 4294967266, %v7089
        %v7095 = vadd.s32 %v7094, 127
        %v7096 = vshll.u32 %v7095, 23
        %v7097 = vor.u32 4788187, %v7096
        %v7098 = vand.u32 2147483647, %v7097
        %v7100 = vcvt.s32.f32 %v7093
        %v7101 = vmul.f32 %v7100, %v7098
        %v7102 = vxor.u32 %v7101, 2147483648
        %v7103 = vsel %vm7020, %v7102, %v7101
        %v7104 = vsub.s32 4, %v7080
        %v7105 = vsel %vm7020, %v7104, %v7080
        %v7106 = vsel %vm7019, %v1409, %v7103
        %v7107 = vsel %vm7019, 0, %v7105
        %v7108 = vcosq.f32.pop %v7106
        %v7109 = vsinq.f32.pop %v7106
        %vm7110 = vweird.f32 %v1409
        %v7111 = vand.u32 %v7107, 3
        %vm7112 = vcmp.lt.s32.totalorder %v7111, 2
        %vm7113 = vcmp.eq.s32.totalorder %v7111, 0
        %v7114 = vxor.u32 %v7109, 2147483648
        %v7115 = vsel %vm7113, %v7108, %v7114
        %vm7116 = vcmp.eq.s32.totalorder %v7111, 2
        %v7117 = vxor.u32 %v7108, 2147483648
        %v7118 = vsel %vm7116, %v7117, %v7109
        %v7119 = vsel %vm7112, %v7115, %v7118
        %v7120 = vsel %vm7110, nan, %v7119
        %v7121 = vand.u32 2147483647, %v1410
        %vm7122 = vcmp.le.f32.partialorder %v7121, 0.7853982
        %vm7123 = vcmp.lt.s32.totalorder %v1410, 0
        %v7124 = vand.u32 %v1410, 2139095040
        %v7125 = vshrl.u32 %v7124, 23
        %v7126 = vsub.s32 %v7125, 127
        %v7127 = vand.u32 2147483647, %v1410
        %v7128 = vand.u32 %v7127, 8388607
        %v7129 = vor.u32 %v7128, 8388608
        %v7130 = vsub.s32 0, %v7129
        %v7131 = vadd.s32 %v7126, 1
        %vm7132 = vcmp.gt.s32.totalorder %v7131, 0
        %v7133 = vsel %vm7132, %v7131, 0
        %v7134 = vshrl.u32 %v7133, 5
        %v7135 = vand.u32 %v7133, 31
        %v7136 = vsub.s32 32, %v7135
        %v7137 = vshrl.u32 683565275, %v7136
        %v7138 = vshll.u32 683565275, %v7135
        %v7139 = vshrl.u32 2475754826, %v7136
        %v7140 = vor.u32 %v7138, %v7139
        %v7141 = vshll.u32 2475754826, %v7135
        %v7142 = vshrl.u32 2131351028, %v7136
        %v7143 = vor.u32 %v7141, %v7142
        %v7144 = vshll.u32 2131351028, %v7135
        %v7145 = vshrl.u32 2102212464, %v7136
        %v7146 = vor.u32 %v7144, %v7145
        %v7147 = vshll.u32 2102212464, %v7135
        %v7148 = vshrl.u32 920167782, %v7136
        %v7149 = vor.u32 %v7147, %v7148
        %v7150 = vshll.u32 920167782, %v7135
        %v7151 = vshrl.u32 1326507024, %v7136
        %v7152 = vor.u32 %v7150, %v7151
        %vm7153 = vcmp.lt.s32.totalorder %v7134, 1
        %vm7154 = vcmp.lt.s32.totalorder %v7134, 2
        %vm7155 = vcmp.lt.s32.totalorder %v7134, 3
        %vm7156 = vcmp.lt.s32.totalorder %v7134, 4
        %v7157 = vsel %vm7153, %v7137, %v7140
        %v7158 = vsel %vm7156, %v7146, 2102212464
        %v7159 = vsel %vm7155, %v7143, %v7158
        %v7160 = vsel %vm7154, %v7157, %v7159
        %v7161 = vsel %vm7153, %v7140, %v7143
        %v7162 = vsel %vm7156, %v7149, 920167782
        %v7163 = vsel %vm7155, %v7146, %v7162
        %v7164 = vsel %vm7154, %v7161, %v7163
        %v7165 = vsel %vm7153, %v7143, %v7146
        %v7166 = vsel %vm7156, %v7152, 1326507024
        %v7167 = vsel %vm7155, %v7149, %v7166
        %v7168 = vsel %vm7154, %v7165, %v7167
        %v7169 = vshll.u32 %v7129, 8
        %v7170 = vmul.u32.u64.compose %v7169, %v7168
        %v7171 = vextract.low.u32 %v7170
        %v7172 = vextract.high.u32 %v7170
        %v7173 = vmul.u32.u64.compose %v7169, %v7164
        %v7174 = vextract.low.u32 %v7173
        %v7175 = vextract.high.u32 %v7173
        %v7176 = vmul.u32 %v7169, %v7160
        %v7177 = vadd.s32 %v7172, %v7174
        %vm7178 = vc.u32 %v7172, %v7174
        %v7179 = vadd.s32 %v7175, 1
        %v7180 = vsel %vm7178, %v7179, %v7175
        %v7181 = vadd.s32 %v7176, %v7180
        %v7182 = vadd.s32 %v7181, 536870912
        %v7183 = vshrl.u32 %v7182, 30
        %v7184 = vshll.u32 %v7183, 30
        %v7185 = vsub.s32 %v7181, %v7184
        %vm7186 = vcmp.lt.s32.totalorder %v7185, 0
        %v7187 = vsub.s32 0, %v7185
        %v7188 = vsel %vm7186, %v7187, %v7185
        %v7189 = vclz %v7188
        %v7190 = vsub.s32 %v7189, 2
        %vm7191 = vcmp.gt.s32.totalorder 0, %v7190
        %v7192 = vsel %vm7191, 0, %v7190
        %v7193 = vsub.s32 32, %v7192
        %v7194 = vshll.u32 %v7185, %v7192
        %v7195 = vshrl.u32 %v7177, %v7193
        %v7196 = vor.u32 %v7194, %v7195
        %v7197 = vsub.s32 4294967266, %v7192
        %v7198 = vadd.s32 %v7197, 127
        %v7199 = vshll.u32 %v7198, 23
        %v7200 = vor.u32 4788187, %v7199
        %v7201 = vand.u32 2147483647, %v7200
        %v7203 = vcvt.s32.f32 %v7196
        %v7204 = vmul.f32 %v7203, %v7201
        %v7205 = vxor.u32 %v7204, 2147483648
        %v7206 = vsel %vm7123, %v7205, %v7204
        %v7207 = vsub.s32 4, %v7183
        %v7208 = vsel %vm7123, %v7207, %v7183
        %v7209 = vsel %vm7122, %v1410, %v7206
        %v7210 = vsel %vm7122, 0, %v7208
        %v7211 = vcosq.f32.pop %v7209
        %v7212 = vsinq.f32.pop %v7209
        %vm7213 = vweird.f32 %v1410
        %v7214 = vand.u32 %v7210, 3
        %vm7215 = vcmp.lt.s32.totalorder %v7214, 2
        %vm7216 = vcmp.eq.s32.totalorder %v7214, 0
        %v7217 = vxor.u32 %v7212, 2147483648
        %v7218 = vsel %vm7216, %v7211, %v7217
        %vm7219 = vcmp.eq.s32.totalorder %v7214, 2
        %v7220 = vxor.u32 %v7211, 2147483648
        %v7221 = vsel %vm7219, %v7220, %v7212
        %v7222 = vsel %vm7215, %v7218, %v7221
        %v7223 = vsel %vm7213, nan, %v7222
        %v7224 = vand.u32 2147483647, %v1411
        %vm7225 = vcmp.le.f32.partialorder %v7224, 0.7853982
        %vm7226 = vcmp.lt.s32.totalorder %v1411, 0
        %v7227 = vand.u32 %v1411, 2139095040
        %v7228 = vshrl.u32 %v7227, 23
        %v7229 = vsub.s32 %v7228, 127
        %v7230 = vand.u32 2147483647, %v1411
        %v7231 = vand.u32 %v7230, 8388607
        %v7232 = vor.u32 %v7231, 8388608
        %v7233 = vsub.s32 0, %v7232
        %v7234 = vadd.s32 %v7229, 1
        %vm7235 = vcmp.gt.s32.totalorder %v7234, 0
        %v7236 = vsel %vm7235, %v7234, 0
        %v7237 = vshrl.u32 %v7236, 5
        %v7238 = vand.u32 %v7236, 31
        %v7239 = vsub.s32 32, %v7238
        %v7240 = vshrl.u32 683565275, %v7239
        %v7241 = vshll.u32 683565275, %v7238
        %v7242 = vshrl.u32 2475754826, %v7239
        %v7243 = vor.u32 %v7241, %v7242
        %v7244 = vshll.u32 2475754826, %v7238
        %v7245 = vshrl.u32 2131351028, %v7239
        %v7246 = vor.u32 %v7244, %v7245
        %v7247 = vshll.u32 2131351028, %v7238
        %v7248 = vshrl.u32 2102212464, %v7239
        %v7249 = vor.u32 %v7247, %v7248
        %v7250 = vshll.u32 2102212464, %v7238
        %v7251 = vshrl.u32 920167782, %v7239
        %v7252 = vor.u32 %v7250, %v7251
        %v7253 = vshll.u32 920167782, %v7238
        %v7254 = vshrl.u32 1326507024, %v7239
        %v7255 = vor.u32 %v7253, %v7254
        %vm7256 = vcmp.lt.s32.totalorder %v7237, 1
        %vm7257 = vcmp.lt.s32.totalorder %v7237, 2
        %vm7258 = vcmp.lt.s32.totalorder %v7237, 3
        %vm7259 = vcmp.lt.s32.totalorder %v7237, 4
        %v7260 = vsel %vm7256, %v7240, %v7243
        %v7261 = vsel %vm7259, %v7249, 2102212464
        %v7262 = vsel %vm7258, %v7246, %v7261
        %v7263 = vsel %vm7257, %v7260, %v7262
        %v7264 = vsel %vm7256, %v7243, %v7246
        %v7265 = vsel %vm7259, %v7252, 920167782
        %v7266 = vsel %vm7258, %v7249, %v7265
        %v7267 = vsel %vm7257, %v7264, %v7266
        %v7268 = vsel %vm7256, %v7246, %v7249
        %v7269 = vsel %vm7259, %v7255, 1326507024
        %v7270 = vsel %vm7258, %v7252, %v7269
        %v7271 = vsel %vm7257, %v7268, %v7270
        %v7272 = vshll.u32 %v7232, 8
        %v7273 = vmul.u32.u64.compose %v7272, %v7271
        %v7274 = vextract.low.u32 %v7273
        %v7275 = vextract.high.u32 %v7273
        %v7276 = vmul.u32.u64.compose %v7272, %v7267
        %v7277 = vextract.low.u32 %v7276
        %v7278 = vextract.high.u32 %v7276
        %v7279 = vmul.u32 %v7272, %v7263
        %v7280 = vadd.s32 %v7275, %v7277
        %vm7281 = vc.u32 %v7275, %v7277
        %v7282 = vadd.s32 %v7278, 1
        %v7283 = vsel %vm7281, %v7282, %v7278
        %v7284 = vadd.s32 %v7279, %v7283
        %v7285 = vadd.s32 %v7284, 536870912
        %v7286 = vshrl.u32 %v7285, 30
        %v7287 = vshll.u32 %v7286, 30
        %v7288 = vsub.s32 %v7284, %v7287
        %vm7289 = vcmp.lt.s32.totalorder %v7288, 0
        %v7290 = vsub.s32 0, %v7288
        %v7291 = vsel %vm7289, %v7290, %v7288
        %v7292 = vclz %v7291
        %v7293 = vsub.s32 %v7292, 2
        %vm7294 = vcmp.gt.s32.totalorder 0, %v7293
        %v7295 = vsel %vm7294, 0, %v7293
        %v7296 = vsub.s32 32, %v7295
        %v7297 = vshll.u32 %v7288, %v7295
        %v7298 = vshrl.u32 %v7280, %v7296
        %v7299 = vor.u32 %v7297, %v7298
        %v7300 = vsub.s32 4294967266, %v7295
        %v7301 = vadd.s32 %v7300, 127
        %v7302 = vshll.u32 %v7301, 23
        %v7303 = vor.u32 4788187, %v7302
        %v7304 = vand.u32 2147483647, %v7303
        %v7306 = vcvt.s32.f32 %v7299
        %v7307 = vmul.f32 %v7306, %v7304
        %v7308 = vxor.u32 %v7307, 2147483648
        %v7309 = vsel %vm7226, %v7308, %v7307
        %v7310 = vsub.s32 4, %v7286
        %v7311 = vsel %vm7226, %v7310, %v7286
        %v7312 = vsel %vm7225, %v1411, %v7309
        %v7313 = vsel %vm7225, 0, %v7311
        %v7314 = vcosq.f32.pop %v7312
        %v7315 = vsinq.f32.pop %v7312
        %vm7316 = vweird.f32 %v1411
        %v7317 = vand.u32 %v7313, 3
        %vm7318 = vcmp.lt.s32.totalorder %v7317, 2
        %vm7319 = vcmp.eq.s32.totalorder %v7317, 0
        %v7320 = vxor.u32 %v7315, 2147483648
        %v7321 = vsel %vm7319, %v7314, %v7320
        %vm7322 = vcmp.eq.s32.totalorder %v7317, 2
        %v7323 = vxor.u32 %v7314, 2147483648
        %v7324 = vsel %vm7322, %v7323, %v7315
        %v7325 = vsel %vm7318, %v7321, %v7324
        %v7326 = vsel %vm7316, nan, %v7325
        %v7327 = vand.u32 2147483647, %v1412
        %vm7328 = vcmp.le.f32.partialorder %v7327, 0.7853982
        %vm7329 = vcmp.lt.s32.totalorder %v1412, 0
        %v7330 = vand.u32 %v1412, 2139095040
        %v7331 = vshrl.u32 %v7330, 23
        %v7332 = vsub.s32 %v7331, 127
        %v7333 = vand.u32 2147483647, %v1412
        %v7334 = vand.u32 %v7333, 8388607
        %v7335 = vor.u32 %v7334, 8388608
        %v7336 = vsub.s32 0, %v7335
        %v7337 = vadd.s32 %v7332, 1
        %vm7338 = vcmp.gt.s32.totalorder %v7337, 0
        %v7339 = vsel %vm7338, %v7337, 0
        %v7340 = vshrl.u32 %v7339, 5
        %v7341 = vand.u32 %v7339, 31
        %v7342 = vsub.s32 32, %v7341
        %v7343 = vshrl.u32 683565275, %v7342
        %v7344 = vshll.u32 683565275, %v7341
        %v7345 = vshrl.u32 2475754826, %v7342
        %v7346 = vor.u32 %v7344, %v7345
        %v7347 = vshll.u32 2475754826, %v7341
        %v7348 = vshrl.u32 2131351028, %v7342
        %v7349 = vor.u32 %v7347, %v7348
        %v7350 = vshll.u32 2131351028, %v7341
        %v7351 = vshrl.u32 2102212464, %v7342
        %v7352 = vor.u32 %v7350, %v7351
        %v7353 = vshll.u32 2102212464, %v7341
        %v7354 = vshrl.u32 920167782, %v7342
        %v7355 = vor.u32 %v7353, %v7354
        %v7356 = vshll.u32 920167782, %v7341
        %v7357 = vshrl.u32 1326507024, %v7342
        %v7358 = vor.u32 %v7356, %v7357
        %vm7359 = vcmp.lt.s32.totalorder %v7340, 1
        %vm7360 = vcmp.lt.s32.totalorder %v7340, 2
        %vm7361 = vcmp.lt.s32.totalorder %v7340, 3
        %vm7362 = vcmp.lt.s32.totalorder %v7340, 4
        %v7363 = vsel %vm7359, %v7343, %v7346
        %v7364 = vsel %vm7362, %v7352, 2102212464
        %v7365 = vsel %vm7361, %v7349, %v7364
        %v7366 = vsel %vm7360, %v7363, %v7365
        %v7367 = vsel %vm7359, %v7346, %v7349
        %v7368 = vsel %vm7362, %v7355, 920167782
        %v7369 = vsel %vm7361, %v7352, %v7368
        %v7370 = vsel %vm7360, %v7367, %v7369
        %v7371 = vsel %vm7359, %v7349, %v7352
        %v7372 = vsel %vm7362, %v7358, 1326507024
        %v7373 = vsel %vm7361, %v7355, %v7372
        %v7374 = vsel %vm7360, %v7371, %v7373
        %v7375 = vshll.u32 %v7335, 8
        %v7376 = vmul.u32.u64.compose %v7375, %v7374
        %v7377 = vextract.low.u32 %v7376
        %v7378 = vextract.high.u32 %v7376
        %v7379 = vmul.u32.u64.compose %v7375, %v7370
        %v7380 = vextract.low.u32 %v7379
        %v7381 = vextract.high.u32 %v7379
        %v7382 = vmul.u32 %v7375, %v7366
        %v7383 = vadd.s32 %v7378, %v7380
        %vm7384 = vc.u32 %v7378, %v7380
        %v7385 = vadd.s32 %v7381, 1
        %v7386 = vsel %vm7384, %v7385, %v7381
        %v7387 = vadd.s32 %v7382, %v7386
        %v7388 = vadd.s32 %v7387, 536870912
        %v7389 = vshrl.u32 %v7388, 30
        %v7390 = vshll.u32 %v7389, 30
        %v7391 = vsub.s32 %v7387, %v7390
        %vm7392 = vcmp.lt.s32.totalorder %v7391, 0
        %v7393 = vsub.s32 0, %v7391
        %v7394 = vsel %vm7392, %v7393, %v7391
        %v7395 = vclz %v7394
        %v7396 = vsub.s32 %v7395, 2
        %vm7397 = vcmp.gt.s32.totalorder 0, %v7396
        %v7398 = vsel %vm7397, 0, %v7396
        %v7399 = vsub.s32 32, %v7398
        %v7400 = vshll.u32 %v7391, %v7398
        %v7401 = vshrl.u32 %v7383, %v7399
        %v7402 = vor.u32 %v7400, %v7401
        %v7403 = vsub.s32 4294967266, %v7398
        %v7404 = vadd.s32 %v7403, 127
        %v7405 = vshll.u32 %v7404, 23
        %v7406 = vor.u32 4788187, %v7405
        %v7407 = vand.u32 2147483647, %v7406
        %v7409 = vcvt.s32.f32 %v7402
        %v7410 = vmul.f32 %v7409, %v7407
        %v7411 = vxor.u32 %v7410, 2147483648
        %v7412 = vsel %vm7329, %v7411, %v7410
        %v7413 = vsub.s32 4, %v7389
        %v7414 = vsel %vm7329, %v7413, %v7389
        %v7415 = vsel %vm7328, %v1412, %v7412
        %v7416 = vsel %vm7328, 0, %v7414
        %v7417 = vcosq.f32.pop %v7415
        %v7418 = vsinq.f32.pop %v7415
        %vm7419 = vweird.f32 %v1412
        %v7420 = vand.u32 %v7416, 3
        %vm7421 = vcmp.lt.s32.totalorder %v7420, 2
        %vm7422 = vcmp.eq.s32.totalorder %v7420, 0
        %v7423 = vxor.u32 %v7418, 2147483648
        %v7424 = vsel %vm7422, %v7417, %v7423
        %vm7425 = vcmp.eq.s32.totalorder %v7420, 2
        %v7426 = vxor.u32 %v7417, 2147483648
        %v7427 = vsel %vm7425, %v7426, %v7418
        %v7428 = vsel %vm7421, %v7424, %v7427
        %v7429 = vsel %vm7419, nan, %v7428
        %v7430 = vand.u32 2147483647, %v1413
        %vm7431 = vcmp.le.f32.partialorder %v7430, 0.7853982
        %vm7432 = vcmp.lt.s32.totalorder %v1413, 0
        %v7433 = vand.u32 %v1413, 2139095040
        %v7434 = vshrl.u32 %v7433, 23
        %v7435 = vsub.s32 %v7434, 127
        %v7436 = vand.u32 2147483647, %v1413
        %v7437 = vand.u32 %v7436, 8388607
        %v7438 = vor.u32 %v7437, 8388608
        %v7439 = vsub.s32 0, %v7438
        %v7440 = vadd.s32 %v7435, 1
        %vm7441 = vcmp.gt.s32.totalorder %v7440, 0
        %v7442 = vsel %vm7441, %v7440, 0
        %v7443 = vshrl.u32 %v7442, 5
        %v7444 = vand.u32 %v7442, 31
        %v7445 = vsub.s32 32, %v7444
        %v7446 = vshrl.u32 683565275, %v7445
        %v7447 = vshll.u32 683565275, %v7444
        %v7448 = vshrl.u32 2475754826, %v7445
        %v7449 = vor.u32 %v7447, %v7448
        %v7450 = vshll.u32 2475754826, %v7444
        %v7451 = vshrl.u32 2131351028, %v7445
        %v7452 = vor.u32 %v7450, %v7451
        %v7453 = vshll.u32 2131351028, %v7444
        %v7454 = vshrl.u32 2102212464, %v7445
        %v7455 = vor.u32 %v7453, %v7454
        %v7456 = vshll.u32 2102212464, %v7444
        %v7457 = vshrl.u32 920167782, %v7445
        %v7458 = vor.u32 %v7456, %v7457
        %v7459 = vshll.u32 920167782, %v7444
        %v7460 = vshrl.u32 1326507024, %v7445
        %v7461 = vor.u32 %v7459, %v7460
        %vm7462 = vcmp.lt.s32.totalorder %v7443, 1
        %vm7463 = vcmp.lt.s32.totalorder %v7443, 2
        %vm7464 = vcmp.lt.s32.totalorder %v7443, 3
        %vm7465 = vcmp.lt.s32.totalorder %v7443, 4
        %v7466 = vsel %vm7462, %v7446, %v7449
        %v7467 = vsel %vm7465, %v7455, 2102212464
        %v7468 = vsel %vm7464, %v7452, %v7467
        %v7469 = vsel %vm7463, %v7466, %v7468
        %v7470 = vsel %vm7462, %v7449, %v7452
        %v7471 = vsel %vm7465, %v7458, 920167782
        %v7472 = vsel %vm7464, %v7455, %v7471
        %v7473 = vsel %vm7463, %v7470, %v7472
        %v7474 = vsel %vm7462, %v7452, %v7455
        %v7475 = vsel %vm7465, %v7461, 1326507024
        %v7476 = vsel %vm7464, %v7458, %v7475
        %v7477 = vsel %vm7463, %v7474, %v7476
        %v7478 = vshll.u32 %v7438, 8
        %v7479 = vmul.u32.u64.compose %v7478, %v7477
        %v7480 = vextract.low.u32 %v7479
        %v7481 = vextract.high.u32 %v7479
        %v7482 = vmul.u32.u64.compose %v7478, %v7473
        %v7483 = vextract.low.u32 %v7482
        %v7484 = vextract.high.u32 %v7482
        %v7485 = vmul.u32 %v7478, %v7469
        %v7486 = vadd.s32 %v7481, %v7483
        %vm7487 = vc.u32 %v7481, %v7483
        %v7488 = vadd.s32 %v7484, 1
        %v7489 = vsel %vm7487, %v7488, %v7484
        %v7490 = vadd.s32 %v7485, %v7489
        %v7491 = vadd.s32 %v7490, 536870912
        %v7492 = vshrl.u32 %v7491, 30
        %v7493 = vshll.u32 %v7492, 30
        %v7494 = vsub.s32 %v7490, %v7493
        %vm7495 = vcmp.lt.s32.totalorder %v7494, 0
        %v7496 = vsub.s32 0, %v7494
        %v7497 = vsel %vm7495, %v7496, %v7494
        %v7498 = vclz %v7497
        %v7499 = vsub.s32 %v7498, 2
        %vm7500 = vcmp.gt.s32.totalorder 0, %v7499
        %v7501 = vsel %vm7500, 0, %v7499
        %v7502 = vsub.s32 32, %v7501
        %v7503 = vshll.u32 %v7494, %v7501
        %v7504 = vshrl.u32 %v7486, %v7502
        %v7505 = vor.u32 %v7503, %v7504
        %v7506 = vsub.s32 4294967266, %v7501
        %v7507 = vadd.s32 %v7506, 127
        %v7508 = vshll.u32 %v7507, 23
        %v7509 = vor.u32 4788187, %v7508
        %v7510 = vand.u32 2147483647, %v7509
        %v7512 = vcvt.s32.f32 %v7505
        %v7513 = vmul.f32 %v7512, %v7510
        %v7514 = vxor.u32 %v7513, 2147483648
        %v7515 = vsel %vm7432, %v7514, %v7513
        %v7516 = vsub.s32 4, %v7492
        %v7517 = vsel %vm7432, %v7516, %v7492
        %v7518 = vsel %vm7431, %v1413, %v7515
        %v7519 = vsel %vm7431, 0, %v7517
        %v7520 = vcosq.f32.pop %v7518
        %v7521 = vsinq.f32.pop %v7518
        %vm7522 = vweird.f32 %v1413
        %v7523 = vand.u32 %v7519, 3
        %vm7524 = vcmp.lt.s32.totalorder %v7523, 2
        %vm7525 = vcmp.eq.s32.totalorder %v7523, 0
        %v7526 = vxor.u32 %v7521, 2147483648
        %v7527 = vsel %vm7525, %v7520, %v7526
        %vm7528 = vcmp.eq.s32.totalorder %v7523, 2
        %v7529 = vxor.u32 %v7520, 2147483648
        %v7530 = vsel %vm7528, %v7529, %v7521
        %v7531 = vsel %vm7524, %v7527, %v7530
        %v7532 = vsel %vm7522, nan, %v7531
        %v7533 = vand.u32 2147483647, %v1414
        %vm7534 = vcmp.le.f32.partialorder %v7533, 0.7853982
        %vm7535 = vcmp.lt.s32.totalorder %v1414, 0
        %v7536 = vand.u32 %v1414, 2139095040
        %v7537 = vshrl.u32 %v7536, 23
        %v7538 = vsub.s32 %v7537, 127
        %v7539 = vand.u32 2147483647, %v1414
        %v7540 = vand.u32 %v7539, 8388607
        %v7541 = vor.u32 %v7540, 8388608
        %v7542 = vsub.s32 0, %v7541
        %v7543 = vadd.s32 %v7538, 1
        %vm7544 = vcmp.gt.s32.totalorder %v7543, 0
        %v7545 = vsel %vm7544, %v7543, 0
        %v7546 = vshrl.u32 %v7545, 5
        %v7547 = vand.u32 %v7545, 31
        %v7548 = vsub.s32 32, %v7547
        %v7549 = vshrl.u32 683565275, %v7548
        %v7550 = vshll.u32 683565275, %v7547
        %v7551 = vshrl.u32 2475754826, %v7548
        %v7552 = vor.u32 %v7550, %v7551
        %v7553 = vshll.u32 2475754826, %v7547
        %v7554 = vshrl.u32 2131351028, %v7548
        %v7555 = vor.u32 %v7553, %v7554
        %v7556 = vshll.u32 2131351028, %v7547
        %v7557 = vshrl.u32 2102212464, %v7548
        %v7558 = vor.u32 %v7556, %v7557
        %v7559 = vshll.u32 2102212464, %v7547
        %v7560 = vshrl.u32 920167782, %v7548
        %v7561 = vor.u32 %v7559, %v7560
        %v7562 = vshll.u32 920167782, %v7547
        %v7563 = vshrl.u32 1326507024, %v7548
        %v7564 = vor.u32 %v7562, %v7563
        %vm7565 = vcmp.lt.s32.totalorder %v7546, 1
        %vm7566 = vcmp.lt.s32.totalorder %v7546, 2
        %vm7567 = vcmp.lt.s32.totalorder %v7546, 3
        %vm7568 = vcmp.lt.s32.totalorder %v7546, 4
        %v7569 = vsel %vm7565, %v7549, %v7552
        %v7570 = vsel %vm7568, %v7558, 2102212464
        %v7571 = vsel %vm7567, %v7555, %v7570
        %v7572 = vsel %vm7566, %v7569, %v7571
        %v7573 = vsel %vm7565, %v7552, %v7555
        %v7574 = vsel %vm7568, %v7561, 920167782
        %v7575 = vsel %vm7567, %v7558, %v7574
        %v7576 = vsel %vm7566, %v7573, %v7575
        %v7577 = vsel %vm7565, %v7555, %v7558
        %v7578 = vsel %vm7568, %v7564, 1326507024
        %v7579 = vsel %vm7567, %v7561, %v7578
        %v7580 = vsel %vm7566, %v7577, %v7579
        %v7581 = vshll.u32 %v7541, 8
        %v7582 = vmul.u32.u64.compose %v7581, %v7580
        %v7583 = vextract.low.u32 %v7582
        %v7584 = vextract.high.u32 %v7582
        %v7585 = vmul.u32.u64.compose %v7581, %v7576
        %v7586 = vextract.low.u32 %v7585
        %v7587 = vextract.high.u32 %v7585
        %v7588 = vmul.u32 %v7581, %v7572
        %v7589 = vadd.s32 %v7584, %v7586
        %vm7590 = vc.u32 %v7584, %v7586
        %v7591 = vadd.s32 %v7587, 1
        %v7592 = vsel %vm7590, %v7591, %v7587
        %v7593 = vadd.s32 %v7588, %v7592
        %v7594 = vadd.s32 %v7593, 536870912
        %v7595 = vshrl.u32 %v7594, 30
        %v7596 = vshll.u32 %v7595, 30
        %v7597 = vsub.s32 %v7593, %v7596
        %vm7598 = vcmp.lt.s32.totalorder %v7597, 0
        %v7599 = vsub.s32 0, %v7597
        %v7600 = vsel %vm7598, %v7599, %v7597
        %v7601 = vclz %v7600
        %v7602 = vsub.s32 %v7601, 2
        %vm7603 = vcmp.gt.s32.totalorder 0, %v7602
        %v7604 = vsel %vm7603, 0, %v7602
        %v7605 = vsub.s32 32, %v7604
        %v7606 = vshll.u32 %v7597, %v7604
        %v7607 = vshrl.u32 %v7589, %v7605
        %v7608 = vor.u32 %v7606, %v7607
        %v7609 = vsub.s32 4294967266, %v7604
        %v7610 = vadd.s32 %v7609, 127
        %v7611 = vshll.u32 %v7610, 23
        %v7612 = vor.u32 4788187, %v7611
        %v7613 = vand.u32 2147483647, %v7612
        %v7615 = vcvt.s32.f32 %v7608
        %v7616 = vmul.f32 %v7615, %v7613
        %v7617 = vxor.u32 %v7616, 2147483648
        %v7618 = vsel %vm7535, %v7617, %v7616
        %v7619 = vsub.s32 4, %v7595
        %v7620 = vsel %vm7535, %v7619, %v7595
        %v7621 = vsel %vm7534, %v1414, %v7618
        %v7622 = vsel %vm7534, 0, %v7620
        %v7623 = vcosq.f32.pop %v7621
        %v7624 = vsinq.f32.pop %v7621
        %vm7625 = vweird.f32 %v1414
        %v7626 = vand.u32 %v7622, 3
        %vm7627 = vcmp.lt.s32.totalorder %v7626, 2
        %vm7628 = vcmp.eq.s32.totalorder %v7626, 0
        %v7629 = vxor.u32 %v7624, 2147483648
        %v7630 = vsel %vm7628, %v7623, %v7629
        %vm7631 = vcmp.eq.s32.totalorder %v7626, 2
        %v7632 = vxor.u32 %v7623, 2147483648
        %v7633 = vsel %vm7631, %v7632, %v7624
        %v7634 = vsel %vm7627, %v7630, %v7633
        %v7635 = vsel %vm7625, nan, %v7634
        %v7636 = vand.u32 2147483647, %v1415
        %vm7637 = vcmp.le.f32.partialorder %v7636, 0.7853982
        %vm7638 = vcmp.lt.s32.totalorder %v1415, 0
        %v7639 = vand.u32 %v1415, 2139095040
        %v7640 = vshrl.u32 %v7639, 23
        %v7641 = vsub.s32 %v7640, 127
        %v7642 = vand.u32 2147483647, %v1415
        %v7643 = vand.u32 %v7642, 8388607
        %v7644 = vor.u32 %v7643, 8388608
        %v7645 = vsub.s32 0, %v7644
        %v7646 = vadd.s32 %v7641, 1
        %vm7647 = vcmp.gt.s32.totalorder %v7646, 0
        %v7648 = vsel %vm7647, %v7646, 0
        %v7649 = vshrl.u32 %v7648, 5
        %v7650 = vand.u32 %v7648, 31
        %v7651 = vsub.s32 32, %v7650
        %v7652 = vshrl.u32 683565275, %v7651
        %v7653 = vshll.u32 683565275, %v7650
        %v7654 = vshrl.u32 2475754826, %v7651
        %v7655 = vor.u32 %v7653, %v7654
        %v7656 = vshll.u32 2475754826, %v7650
        %v7657 = vshrl.u32 2131351028, %v7651
        %v7658 = vor.u32 %v7656, %v7657
        %v7659 = vshll.u32 2131351028, %v7650
        %v7660 = vshrl.u32 2102212464, %v7651
        %v7661 = vor.u32 %v7659, %v7660
        %v7662 = vshll.u32 2102212464, %v7650
        %v7663 = vshrl.u32 920167782, %v7651
        %v7664 = vor.u32 %v7662, %v7663
        %v7665 = vshll.u32 920167782, %v7650
        %v7666 = vshrl.u32 1326507024, %v7651
        %v7667 = vor.u32 %v7665, %v7666
        %vm7668 = vcmp.lt.s32.totalorder %v7649, 1
        %vm7669 = vcmp.lt.s32.totalorder %v7649, 2
        %vm7670 = vcmp.lt.s32.totalorder %v7649, 3
        %vm7671 = vcmp.lt.s32.totalorder %v7649, 4
        %v7672 = vsel %vm7668, %v7652, %v7655
        %v7673 = vsel %vm7671, %v7661, 2102212464
        %v7674 = vsel %vm7670, %v7658, %v7673
        %v7675 = vsel %vm7669, %v7672, %v7674
        %v7676 = vsel %vm7668, %v7655, %v7658
        %v7677 = vsel %vm7671, %v7664, 920167782
        %v7678 = vsel %vm7670, %v7661, %v7677
        %v7679 = vsel %vm7669, %v7676, %v7678
        %v7680 = vsel %vm7668, %v7658, %v7661
        %v7681 = vsel %vm7671, %v7667, 1326507024
        %v7682 = vsel %vm7670, %v7664, %v7681
        %v7683 = vsel %vm7669, %v7680, %v7682
        %v7684 = vshll.u32 %v7644, 8
        %v7685 = vmul.u32.u64.compose %v7684, %v7683
        %v7686 = vextract.low.u32 %v7685
        %v7687 = vextract.high.u32 %v7685
        %v7688 = vmul.u32.u64.compose %v7684, %v7679
        %v7689 = vextract.low.u32 %v7688
        %v7690 = vextract.high.u32 %v7688
        %v7691 = vmul.u32 %v7684, %v7675
        %v7692 = vadd.s32 %v7687, %v7689
        %vm7693 = vc.u32 %v7687, %v7689
        %v7694 = vadd.s32 %v7690, 1
        %v7695 = vsel %vm7693, %v7694, %v7690
        %v7696 = vadd.s32 %v7691, %v7695
        %v7697 = vadd.s32 %v7696, 536870912
        %v7698 = vshrl.u32 %v7697, 30
        %v7699 = vshll.u32 %v7698, 30
        %v7700 = vsub.s32 %v7696, %v7699
        %vm7701 = vcmp.lt.s32.totalorder %v7700, 0
        %v7702 = vsub.s32 0, %v7700
        %v7703 = vsel %vm7701, %v7702, %v7700
        %v7704 = vclz %v7703
        %v7705 = vsub.s32 %v7704, 2
        %vm7706 = vcmp.gt.s32.totalorder 0, %v7705
        %v7707 = vsel %vm7706, 0, %v7705
        %v7708 = vsub.s32 32, %v7707
        %v7709 = vshll.u32 %v7700, %v7707
        %v7710 = vshrl.u32 %v7692, %v7708
        %v7711 = vor.u32 %v7709, %v7710
        %v7712 = vsub.s32 4294967266, %v7707
        %v7713 = vadd.s32 %v7712, 127
        %v7714 = vshll.u32 %v7713, 23
        %v7715 = vor.u32 4788187, %v7714
        %v7716 = vand.u32 2147483647, %v7715
        %v7718 = vcvt.s32.f32 %v7711
        %v7719 = vmul.f32 %v7718, %v7716
        %v7720 = vxor.u32 %v7719, 2147483648
        %v7721 = vsel %vm7638, %v7720, %v7719
        %v7722 = vsub.s32 4, %v7698
        %v7723 = vsel %vm7638, %v7722, %v7698
        %v7724 = vsel %vm7637, %v1415, %v7721
        %v7725 = vsel %vm7637, 0, %v7723
        %v7726 = vcosq.f32.pop %v7724
        %v7727 = vsinq.f32.pop %v7724
        %vm7728 = vweird.f32 %v1415
        %v7729 = vand.u32 %v7725, 3
        %vm7730 = vcmp.lt.s32.totalorder %v7729, 2
        %vm7731 = vcmp.eq.s32.totalorder %v7729, 0
        %v7732 = vxor.u32 %v7727, 2147483648
        %v7733 = vsel %vm7731, %v7726, %v7732
        %vm7734 = vcmp.eq.s32.totalorder %v7729, 2
        %v7735 = vxor.u32 %v7726, 2147483648
        %v7736 = vsel %vm7734, %v7735, %v7727
        %v7737 = vsel %vm7730, %v7733, %v7736
        %v7738 = vsel %vm7728, nan, %v7737
        %v7739 = vand.u32 2147483647, %v1416
        %vm7740 = vcmp.le.f32.partialorder %v7739, 0.7853982
        %vm7741 = vcmp.lt.s32.totalorder %v1416, 0
        %v7742 = vand.u32 %v1416, 2139095040
        %v7743 = vshrl.u32 %v7742, 23
        %v7744 = vsub.s32 %v7743, 127
        %v7745 = vand.u32 2147483647, %v1416
        %v7746 = vand.u32 %v7745, 8388607
        %v7747 = vor.u32 %v7746, 8388608
        %v7748 = vsub.s32 0, %v7747
        %v7749 = vadd.s32 %v7744, 1
        %vm7750 = vcmp.gt.s32.totalorder %v7749, 0
        %v7751 = vsel %vm7750, %v7749, 0
        %v7752 = vshrl.u32 %v7751, 5
        %v7753 = vand.u32 %v7751, 31
        %v7754 = vsub.s32 32, %v7753
        %v7755 = vshrl.u32 683565275, %v7754
        %v7756 = vshll.u32 683565275, %v7753
        %v7757 = vshrl.u32 2475754826, %v7754
        %v7758 = vor.u32 %v7756, %v7757
        %v7759 = vshll.u32 2475754826, %v7753
        %v7760 = vshrl.u32 2131351028, %v7754
        %v7761 = vor.u32 %v7759, %v7760
        %v7762 = vshll.u32 2131351028, %v7753
        %v7763 = vshrl.u32 2102212464, %v7754
        %v7764 = vor.u32 %v7762, %v7763
        %v7765 = vshll.u32 2102212464, %v7753
        %v7766 = vshrl.u32 920167782, %v7754
        %v7767 = vor.u32 %v7765, %v7766
        %v7768 = vshll.u32 920167782, %v7753
        %v7769 = vshrl.u32 1326507024, %v7754
        %v7770 = vor.u32 %v7768, %v7769
        %vm7771 = vcmp.lt.s32.totalorder %v7752, 1
        %vm7772 = vcmp.lt.s32.totalorder %v7752, 2
        %vm7773 = vcmp.lt.s32.totalorder %v7752, 3
        %vm7774 = vcmp.lt.s32.totalorder %v7752, 4
        %v7775 = vsel %vm7771, %v7755, %v7758
        %v7776 = vsel %vm7774, %v7764, 2102212464
        %v7777 = vsel %vm7773, %v7761, %v7776
        %v7778 = vsel %vm7772, %v7775, %v7777
        %v7779 = vsel %vm7771, %v7758, %v7761
        %v7780 = vsel %vm7774, %v7767, 920167782
        %v7781 = vsel %vm7773, %v7764, %v7780
        %v7782 = vsel %vm7772, %v7779, %v7781
        %v7783 = vsel %vm7771, %v7761, %v7764
        %v7784 = vsel %vm7774, %v7770, 1326507024
        %v7785 = vsel %vm7773, %v7767, %v7784
        %v7786 = vsel %vm7772, %v7783, %v7785
        %v7787 = vshll.u32 %v7747, 8
        %v7788 = vmul.u32.u64.compose %v7787, %v7786
        %v7789 = vextract.low.u32 %v7788
        %v7790 = vextract.high.u32 %v7788
        %v7791 = vmul.u32.u64.compose %v7787, %v7782
        %v7792 = vextract.low.u32 %v7791
        %v7793 = vextract.high.u32 %v7791
        %v7794 = vmul.u32 %v7787, %v7778
        %v7795 = vadd.s32 %v7790, %v7792
        %vm7796 = vc.u32 %v7790, %v7792
        %v7797 = vadd.s32 %v7793, 1
        %v7798 = vsel %vm7796, %v7797, %v7793
        %v7799 = vadd.s32 %v7794, %v7798
        %v7800 = vadd.s32 %v7799, 536870912
        %v7801 = vshrl.u32 %v7800, 30
        %v7802 = vshll.u32 %v7801, 30
        %v7803 = vsub.s32 %v7799, %v7802
        %vm7804 = vcmp.lt.s32.totalorder %v7803, 0
        %v7805 = vsub.s32 0, %v7803
        %v7806 = vsel %vm7804, %v7805, %v7803
        %v7807 = vclz %v7806
        %v7808 = vsub.s32 %v7807, 2
        %vm7809 = vcmp.gt.s32.totalorder 0, %v7808
        %v7810 = vsel %vm7809, 0, %v7808
        %v7811 = vsub.s32 32, %v7810
        %v7812 = vshll.u32 %v7803, %v7810
        %v7813 = vshrl.u32 %v7795, %v7811
        %v7814 = vor.u32 %v7812, %v7813
        %v7815 = vsub.s32 4294967266, %v7810
        %v7816 = vadd.s32 %v7815, 127
        %v7817 = vshll.u32 %v7816, 23
        %v7818 = vor.u32 4788187, %v7817
        %v7819 = vand.u32 2147483647, %v7818
        %v7821 = vcvt.s32.f32 %v7814
        %v7822 = vmul.f32 %v7821, %v7819
        %v7823 = vxor.u32 %v7822, 2147483648
        %v7824 = vsel %vm7741, %v7823, %v7822
        %v7825 = vsub.s32 4, %v7801
        %v7826 = vsel %vm7741, %v7825, %v7801
        %v7827 = vsel %vm7740, %v1416, %v7824
        %v7828 = vsel %vm7740, 0, %v7826
        %v7829 = vcosq.f32.pop %v7827
        %v7830 = vsinq.f32.pop %v7827
        %vm7831 = vweird.f32 %v1416
        %v7832 = vand.u32 %v7828, 3
        %vm7833 = vcmp.lt.s32.totalorder %v7832, 2
        %vm7834 = vcmp.eq.s32.totalorder %v7832, 0
        %v7835 = vxor.u32 %v7830, 2147483648
        %v7836 = vsel %vm7834, %v7829, %v7835
        %vm7837 = vcmp.eq.s32.totalorder %v7832, 2
        %v7838 = vxor.u32 %v7829, 2147483648
        %v7839 = vsel %vm7837, %v7838, %v7830
        %v7840 = vsel %vm7833, %v7836, %v7839
        %v7841 = vsel %vm7831, nan, %v7840
        %v7842 = vand.u32 2147483647, %v1417
        %vm7843 = vcmp.le.f32.partialorder %v7842, 0.7853982
        %vm7844 = vcmp.lt.s32.totalorder %v1417, 0
        %v7845 = vand.u32 %v1417, 2139095040
        %v7846 = vshrl.u32 %v7845, 23
        %v7847 = vsub.s32 %v7846, 127
        %v7848 = vand.u32 2147483647, %v1417
        %v7849 = vand.u32 %v7848, 8388607
        %v7850 = vor.u32 %v7849, 8388608
        %v7851 = vsub.s32 0, %v7850
        %v7852 = vadd.s32 %v7847, 1
        %vm7853 = vcmp.gt.s32.totalorder %v7852, 0
        %v7854 = vsel %vm7853, %v7852, 0
        %v7855 = vshrl.u32 %v7854, 5
        %v7856 = vand.u32 %v7854, 31
        %v7857 = vsub.s32 32, %v7856
        %v7858 = vshrl.u32 683565275, %v7857
        %v7859 = vshll.u32 683565275, %v7856
        %v7860 = vshrl.u32 2475754826, %v7857
        %v7861 = vor.u32 %v7859, %v7860
        %v7862 = vshll.u32 2475754826, %v7856
        %v7863 = vshrl.u32 2131351028, %v7857
        %v7864 = vor.u32 %v7862, %v7863
        %v7865 = vshll.u32 2131351028, %v7856
        %v7866 = vshrl.u32 2102212464, %v7857
        %v7867 = vor.u32 %v7865, %v7866
        %v7868 = vshll.u32 2102212464, %v7856
        %v7869 = vshrl.u32 920167782, %v7857
        %v7870 = vor.u32 %v7868, %v7869
        %v7871 = vshll.u32 920167782, %v7856
        %v7872 = vshrl.u32 1326507024, %v7857
        %v7873 = vor.u32 %v7871, %v7872
        %vm7874 = vcmp.lt.s32.totalorder %v7855, 1
        %vm7875 = vcmp.lt.s32.totalorder %v7855, 2
        %vm7876 = vcmp.lt.s32.totalorder %v7855, 3
        %vm7877 = vcmp.lt.s32.totalorder %v7855, 4
        %v7878 = vsel %vm7874, %v7858, %v7861
        %v7879 = vsel %vm7877, %v7867, 2102212464
        %v7880 = vsel %vm7876, %v7864, %v7879
        %v7881 = vsel %vm7875, %v7878, %v7880
        %v7882 = vsel %vm7874, %v7861, %v7864
        %v7883 = vsel %vm7877, %v7870, 920167782
        %v7884 = vsel %vm7876, %v7867, %v7883
        %v7885 = vsel %vm7875, %v7882, %v7884
        %v7886 = vsel %vm7874, %v7864, %v7867
        %v7887 = vsel %vm7877, %v7873, 1326507024
        %v7888 = vsel %vm7876, %v7870, %v7887
        %v7889 = vsel %vm7875, %v7886, %v7888
        %v7890 = vshll.u32 %v7850, 8
        %v7891 = vmul.u32.u64.compose %v7890, %v7889
        %v7892 = vextract.low.u32 %v7891
        %v7893 = vextract.high.u32 %v7891
        %v7894 = vmul.u32.u64.compose %v7890, %v7885
        %v7895 = vextract.low.u32 %v7894
        %v7896 = vextract.high.u32 %v7894
        %v7897 = vmul.u32 %v7890, %v7881
        %v7898 = vadd.s32 %v7893, %v7895
        %vm7899 = vc.u32 %v7893, %v7895
        %v7900 = vadd.s32 %v7896, 1
        %v7901 = vsel %vm7899, %v7900, %v7896
        %v7902 = vadd.s32 %v7897, %v7901
        %v7903 = vadd.s32 %v7902, 536870912
        %v7904 = vshrl.u32 %v7903, 30
        %v7905 = vshll.u32 %v7904, 30
        %v7906 = vsub.s32 %v7902, %v7905
        %vm7907 = vcmp.lt.s32.totalorder %v7906, 0
        %v7908 = vsub.s32 0, %v7906
        %v7909 = vsel %vm7907, %v7908, %v7906
        %v7910 = vclz %v7909
        %v7911 = vsub.s32 %v7910, 2
        %vm7912 = vcmp.gt.s32.totalorder 0, %v7911
        %v7913 = vsel %vm7912, 0, %v7911
        %v7914 = vsub.s32 32, %v7913
        %v7915 = vshll.u32 %v7906, %v7913
        %v7916 = vshrl.u32 %v7898, %v7914
        %v7917 = vor.u32 %v7915, %v7916
        %v7918 = vsub.s32 4294967266, %v7913
        %v7919 = vadd.s32 %v7918, 127
        %v7920 = vshll.u32 %v7919, 23
        %v7921 = vor.u32 4788187, %v7920
        %v7922 = vand.u32 2147483647, %v7921
        %v7924 = vcvt.s32.f32 %v7917
        %v7925 = vmul.f32 %v7924, %v7922
        %v7926 = vxor.u32 %v7925, 2147483648
        %v7927 = vsel %vm7844, %v7926, %v7925
        %v7928 = vsub.s32 4, %v7904
        %v7929 = vsel %vm7844, %v7928, %v7904
        %v7930 = vsel %vm7843, %v1417, %v7927
        %v7931 = vsel %vm7843, 0, %v7929
        %v7932 = vcosq.f32.pop %v7930
        %v7933 = vsinq.f32.pop %v7930
        %vm7934 = vweird.f32 %v1417
        %v7935 = vand.u32 %v7931, 3
        %vm7936 = vcmp.lt.s32.totalorder %v7935, 2
        %vm7937 = vcmp.eq.s32.totalorder %v7935, 0
        %v7938 = vxor.u32 %v7933, 2147483648
        %v7939 = vsel %vm7937, %v7932, %v7938
        %vm7940 = vcmp.eq.s32.totalorder %v7935, 2
        %v7941 = vxor.u32 %v7932, 2147483648
        %v7942 = vsel %vm7940, %v7941, %v7933
        %v7943 = vsel %vm7936, %v7939, %v7942
        %v7944 = vsel %vm7934, nan, %v7943
        %v7945 = vand.u32 2147483647, %v1418
        %vm7946 = vcmp.le.f32.partialorder %v7945, 0.7853982
        %vm7947 = vcmp.lt.s32.totalorder %v1418, 0
        %v7948 = vand.u32 %v1418, 2139095040
        %v7949 = vshrl.u32 %v7948, 23
        %v7950 = vsub.s32 %v7949, 127
        %v7951 = vand.u32 2147483647, %v1418
        %v7952 = vand.u32 %v7951, 8388607
        %v7953 = vor.u32 %v7952, 8388608
        %v7954 = vsub.s32 0, %v7953
        %v7955 = vadd.s32 %v7950, 1
        %vm7956 = vcmp.gt.s32.totalorder %v7955, 0
        %v7957 = vsel %vm7956, %v7955, 0
        %v7958 = vshrl.u32 %v7957, 5
        %v7959 = vand.u32 %v7957, 31
        %v7960 = vsub.s32 32, %v7959
        %v7961 = vshrl.u32 683565275, %v7960
        %v7962 = vshll.u32 683565275, %v7959
        %v7963 = vshrl.u32 2475754826, %v7960
        %v7964 = vor.u32 %v7962, %v7963
        %v7965 = vshll.u32 2475754826, %v7959
        %v7966 = vshrl.u32 2131351028, %v7960
        %v7967 = vor.u32 %v7965, %v7966
        %v7968 = vshll.u32 2131351028, %v7959
        %v7969 = vshrl.u32 2102212464, %v7960
        %v7970 = vor.u32 %v7968, %v7969
        %v7971 = vshll.u32 2102212464, %v7959
        %v7972 = vshrl.u32 920167782, %v7960
        %v7973 = vor.u32 %v7971, %v7972
        %v7974 = vshll.u32 920167782, %v7959
        %v7975 = vshrl.u32 1326507024, %v7960
        %v7976 = vor.u32 %v7974, %v7975
        %vm7977 = vcmp.lt.s32.totalorder %v7958, 1
        %vm7978 = vcmp.lt.s32.totalorder %v7958, 2
        %vm7979 = vcmp.lt.s32.totalorder %v7958, 3
        %vm7980 = vcmp.lt.s32.totalorder %v7958, 4
        %v7981 = vsel %vm7977, %v7961, %v7964
        %v7982 = vsel %vm7980, %v7970, 2102212464
        %v7983 = vsel %vm7979, %v7967, %v7982
        %v7984 = vsel %vm7978, %v7981, %v7983
        %v7985 = vsel %vm7977, %v7964, %v7967
        %v7986 = vsel %vm7980, %v7973, 920167782
        %v7987 = vsel %vm7979, %v7970, %v7986
        %v7988 = vsel %vm7978, %v7985, %v7987
        %v7989 = vsel %vm7977, %v7967, %v7970
        %v7990 = vsel %vm7980, %v7976, 1326507024
        %v7991 = vsel %vm7979, %v7973, %v7990
        %v7992 = vsel %vm7978, %v7989, %v7991
        %v7993 = vshll.u32 %v7953, 8
        %v7994 = vmul.u32.u64.compose %v7993, %v7992
        %v7995 = vextract.low.u32 %v7994
        %v7996 = vextract.high.u32 %v7994
        %v7997 = vmul.u32.u64.compose %v7993, %v7988
        %v7998 = vextract.low.u32 %v7997
        %v7999 = vextract.high.u32 %v7997
        %v8000 = vmul.u32 %v7993, %v7984
        %v8001 = vadd.s32 %v7996, %v7998
        %vm8002 = vc.u32 %v7996, %v7998
        %v8003 = vadd.s32 %v7999, 1
        %v8004 = vsel %vm8002, %v8003, %v7999
        %v8005 = vadd.s32 %v8000, %v8004
        %v8006 = vadd.s32 %v8005, 536870912
        %v8007 = vshrl.u32 %v8006, 30
        %v8008 = vshll.u32 %v8007, 30
        %v8009 = vsub.s32 %v8005, %v8008
        %vm8010 = vcmp.lt.s32.totalorder %v8009, 0
        %v8011 = vsub.s32 0, %v8009
        %v8012 = vsel %vm8010, %v8011, %v8009
        %v8013 = vclz %v8012
        %v8014 = vsub.s32 %v8013, 2
        %vm8015 = vcmp.gt.s32.totalorder 0, %v8014
        %v8016 = vsel %vm8015, 0, %v8014
        %v8017 = vsub.s32 32, %v8016
        %v8018 = vshll.u32 %v8009, %v8016
        %v8019 = vshrl.u32 %v8001, %v8017
        %v8020 = vor.u32 %v8018, %v8019
        %v8021 = vsub.s32 4294967266, %v8016
        %v8022 = vadd.s32 %v8021, 127
        %v8023 = vshll.u32 %v8022, 23
        %v8024 = vor.u32 4788187, %v8023
        %v8025 = vand.u32 2147483647, %v8024
        %v8027 = vcvt.s32.f32 %v8020
        %v8028 = vmul.f32 %v8027, %v8025
        %v8029 = vxor.u32 %v8028, 2147483648
        %v8030 = vsel %vm7947, %v8029, %v8028
        %v8031 = vsub.s32 4, %v8007
        %v8032 = vsel %vm7947, %v8031, %v8007
        %v8033 = vsel %vm7946, %v1418, %v8030
        %v8034 = vsel %vm7946, 0, %v8032
        %v8035 = vcosq.f32.pop %v8033
        %v8036 = vsinq.f32.pop %v8033
        %vm8037 = vweird.f32 %v1418
        %v8038 = vand.u32 %v8034, 3
        %vm8039 = vcmp.lt.s32.totalorder %v8038, 2
        %vm8040 = vcmp.eq.s32.totalorder %v8038, 0
        %v8041 = vxor.u32 %v8036, 2147483648
        %v8042 = vsel %vm8040, %v8035, %v8041
        %vm8043 = vcmp.eq.s32.totalorder %v8038, 2
        %v8044 = vxor.u32 %v8035, 2147483648
        %v8045 = vsel %vm8043, %v8044, %v8036
        %v8046 = vsel %vm8039, %v8042, %v8045
        %v8047 = vsel %vm8037, nan, %v8046
        %v8048 = vand.u32 2147483647, %v1419
        %vm8049 = vcmp.le.f32.partialorder %v8048, 0.7853982
        %vm8050 = vcmp.lt.s32.totalorder %v1419, 0
        %v8051 = vand.u32 %v1419, 2139095040
        %v8052 = vshrl.u32 %v8051, 23
        %v8053 = vsub.s32 %v8052, 127
        %v8054 = vand.u32 2147483647, %v1419
        %v8055 = vand.u32 %v8054, 8388607
        %v8056 = vor.u32 %v8055, 8388608
        %v8057 = vsub.s32 0, %v8056
        %v8058 = vadd.s32 %v8053, 1
        %vm8059 = vcmp.gt.s32.totalorder %v8058, 0
        %v8060 = vsel %vm8059, %v8058, 0
        %v8061 = vshrl.u32 %v8060, 5
        %v8062 = vand.u32 %v8060, 31
        %v8063 = vsub.s32 32, %v8062
        %v8064 = vshrl.u32 683565275, %v8063
        %v8065 = vshll.u32 683565275, %v8062
        %v8066 = vshrl.u32 2475754826, %v8063
        %v8067 = vor.u32 %v8065, %v8066
        %v8068 = vshll.u32 2475754826, %v8062
        %v8069 = vshrl.u32 2131351028, %v8063
        %v8070 = vor.u32 %v8068, %v8069
        %v8071 = vshll.u32 2131351028, %v8062
        %v8072 = vshrl.u32 2102212464, %v8063
        %v8073 = vor.u32 %v8071, %v8072
        %v8074 = vshll.u32 2102212464, %v8062
        %v8075 = vshrl.u32 920167782, %v8063
        %v8076 = vor.u32 %v8074, %v8075
        %v8077 = vshll.u32 920167782, %v8062
        %v8078 = vshrl.u32 1326507024, %v8063
        %v8079 = vor.u32 %v8077, %v8078
        %vm8080 = vcmp.lt.s32.totalorder %v8061, 1
        %vm8081 = vcmp.lt.s32.totalorder %v8061, 2
        %vm8082 = vcmp.lt.s32.totalorder %v8061, 3
        %vm8083 = vcmp.lt.s32.totalorder %v8061, 4
        %v8084 = vsel %vm8080, %v8064, %v8067
        %v8085 = vsel %vm8083, %v8073, 2102212464
        %v8086 = vsel %vm8082, %v8070, %v8085
        %v8087 = vsel %vm8081, %v8084, %v8086
        %v8088 = vsel %vm8080, %v8067, %v8070
        %v8089 = vsel %vm8083, %v8076, 920167782
        %v8090 = vsel %vm8082, %v8073, %v8089
        %v8091 = vsel %vm8081, %v8088, %v8090
        %v8092 = vsel %vm8080, %v8070, %v8073
        %v8093 = vsel %vm8083, %v8079, 1326507024
        %v8094 = vsel %vm8082, %v8076, %v8093
        %v8095 = vsel %vm8081, %v8092, %v8094
        %v8096 = vshll.u32 %v8056, 8
        %v8097 = vmul.u32.u64.compose %v8096, %v8095
        %v8098 = vextract.low.u32 %v8097
        %v8099 = vextract.high.u32 %v8097
        %v8100 = vmul.u32.u64.compose %v8096, %v8091
        %v8101 = vextract.low.u32 %v8100
        %v8102 = vextract.high.u32 %v8100
        %v8103 = vmul.u32 %v8096, %v8087
        %v8104 = vadd.s32 %v8099, %v8101
        %vm8105 = vc.u32 %v8099, %v8101
        %v8106 = vadd.s32 %v8102, 1
        %v8107 = vsel %vm8105, %v8106, %v8102
        %v8108 = vadd.s32 %v8103, %v8107
        %v8109 = vadd.s32 %v8108, 536870912
        %v8110 = vshrl.u32 %v8109, 30
        %v8111 = vshll.u32 %v8110, 30
        %v8112 = vsub.s32 %v8108, %v8111
        %vm8113 = vcmp.lt.s32.totalorder %v8112, 0
        %v8114 = vsub.s32 0, %v8112
        %v8115 = vsel %vm8113, %v8114, %v8112
        %v8116 = vclz %v8115
        %v8117 = vsub.s32 %v8116, 2
        %vm8118 = vcmp.gt.s32.totalorder 0, %v8117
        %v8119 = vsel %vm8118, 0, %v8117
        %v8120 = vsub.s32 32, %v8119
        %v8121 = vshll.u32 %v8112, %v8119
        %v8122 = vshrl.u32 %v8104, %v8120
        %v8123 = vor.u32 %v8121, %v8122
        %v8124 = vsub.s32 4294967266, %v8119
        %v8125 = vadd.s32 %v8124, 127
        %v8126 = vshll.u32 %v8125, 23
        %v8127 = vor.u32 4788187, %v8126
        %v8128 = vand.u32 2147483647, %v8127
        %v8130 = vcvt.s32.f32 %v8123
        %v8131 = vmul.f32 %v8130, %v8128
        %v8132 = vxor.u32 %v8131, 2147483648
        %v8133 = vsel %vm8050, %v8132, %v8131
        %v8134 = vsub.s32 4, %v8110
        %v8135 = vsel %vm8050, %v8134, %v8110
        %v8136 = vsel %vm8049, %v1419, %v8133
        %v8137 = vsel %vm8049, 0, %v8135
        %v8138 = vcosq.f32.pop %v8136
        %v8139 = vsinq.f32.pop %v8136
        %vm8140 = vweird.f32 %v1419
        %v8141 = vand.u32 %v8137, 3
        %vm8142 = vcmp.lt.s32.totalorder %v8141, 2
        %vm8143 = vcmp.eq.s32.totalorder %v8141, 0
        %v8144 = vxor.u32 %v8139, 2147483648
        %v8145 = vsel %vm8143, %v8138, %v8144
        %vm8146 = vcmp.eq.s32.totalorder %v8141, 2
        %v8147 = vxor.u32 %v8138, 2147483648
        %v8148 = vsel %vm8146, %v8147, %v8139
        %v8149 = vsel %vm8142, %v8145, %v8148
        %v8150 = vsel %vm8140, nan, %v8149
        %v8151 = vlaneseq
        %v8152 = vshrl.u32 %v8151, 7
        %v8153 = vsub.s32 0, %v8152
        %v8154 = vrot.slane %v1422, %v8153
        %v8155 = vmul.f32 %v4957, %v8154
        %v8156 = vmul.f32 %v5060, %v8154
        %v8157 = vmul.f32 %v5163, %v8154
        %v8158 = vmul.f32 %v5266, %v8154
        %v8159 = vmul.f32 %v5369, %v8154
        %v8160 = vmul.f32 %v5472, %v8154
        %v8161 = vmul.f32 %v5575, %v8154
        %v8162 = vmul.f32 %v5678, %v8154
        %v8163 = vmul.f32 %v5781, %v8154
        %v8164 = vmul.f32 %v5884, %v8154
        %v8165 = vmul.f32 %v5987, %v8154
        %v8166 = vmul.f32 %v6090, %v8154
        %v8167 = vmul.f32 %v6193, %v8154
        %v8168 = vmul.f32 %v6296, %v8154
        %v8169 = vmul.f32 %v6399, %v8154
        %v8170 = vmul.f32 %v6502, %v8154
        %v8171 = vmul.f32 %v6605, %v8154
        %v8172 = vmul.f32 %v6708, %v8154
        %v8173 = vmul.f32 %v6811, %v8154
        %v8174 = vmul.f32 %v6914, %v8154
        %v8175 = vmul.f32 %v7017, %v8154
        %v8176 = vmul.f32 %v7120, %v8154
        %v8177 = vmul.f32 %v7223, %v8154
        %v8178 = vmul.f32 %v7326, %v8154
        %v8179 = vmul.f32 %v7429, %v8154
        %v8180 = vmul.f32 %v7532, %v8154
        %v8181 = vmul.f32 %v7635, %v8154
        %v8182 = vmul.f32 %v7738, %v8154
        %v8183 = vmul.f32 %v7841, %v8154
        %v8184 = vmul.f32 %v7944, %v8154
        %v8185 = vmul.f32 %v8047, %v8154
        %v8186 = vmul.f32 %v8150, %v8154
        %v8187 = vadd.f32 %v4823, %v8155
        %v8188 = vadd.f32 %v4824, %v8156
        %v8189 = vadd.f32 %v4825, %v8157
        %v8190 = vadd.f32 %v4826, %v8158
        %v8191 = vadd.f32 %v4827, %v8159
        %v8192 = vadd.f32 %v4828, %v8160
        %v8193 = vadd.f32 %v4829, %v8161
        %v8194 = vadd.f32 %v4830, %v8162
        %v8195 = vadd.f32 %v4831, %v8163
        %v8196 = vadd.f32 %v4832, %v8164
        %v8197 = vadd.f32 %v4833, %v8165
        %v8198 = vadd.f32 %v4834, %v8166
        %v8199 = vadd.f32 %v4835, %v8167
        %v8200 = vadd.f32 %v4836, %v8168
        %v8201 = vadd.f32 %v4837, %v8169
        %v8202 = vadd.f32 %v4838, %v8170
        %v8203 = vadd.f32 %v4839, %v8171
        %v8204 = vadd.f32 %v4840, %v8172
        %v8205 = vadd.f32 %v4841, %v8173
        %v8206 = vadd.f32 %v4842, %v8174
        %v8207 = vadd.f32 %v4843, %v8175
        %v8208 = vadd.f32 %v4844, %v8176
        %v8209 = vadd.f32 %v4845, %v8177
        %v8210 = vadd.f32 %v4846, %v8178
        %v8211 = vadd.f32 %v4847, %v8179
        %v8212 = vadd.f32 %v4848, %v8180
        %v8213 = vadd.f32 %v4849, %v8181
        %v8214 = vadd.f32 %v4850, %v8182
        %v8215 = vadd.f32 %v4851, %v8183
        %v8216 = vadd.f32 %v4852, %v8184
        %v8217 = vadd.f32 %v4853, %v8185
        %v8218 = vadd.f32 %v4854, %v8186
        %vm8219 = vcmask 1031168
        %8220 = vst.msk [vmem:[%s149] sm:$0xff] %vm8219, %v8187
        %8221 = vst.msk [vmem:[%s149 + $0x8] sm:$0xff] %vm8219, %v8188
        %8222 = vst.msk [vmem:[%s149 + $0x10] sm:$0xff] %vm8219, %v8189
        %8223 = vst.msk [vmem:[%s149 + $0x18] sm:$0xff] %vm8219, %v8190
        %8224 = vst.msk [vmem:[%s149 + $0x20] sm:$0xff] %vm8219, %v8191
        %8225 = vst.msk [vmem:[%s149 + $0x28] sm:$0xff] %vm8219, %v8192
        %8226 = vst.msk [vmem:[%s149 + $0x30] sm:$0xff] %vm8219, %v8193
        %8227 = vst.msk [vmem:[%s149 + $0x38] sm:$0xff] %vm8219, %v8194
        %8228 = vst.msk [vmem:[%s149 + $0x40] sm:$0xff] %vm8219, %v8195
        %8229 = vst.msk [vmem:[%s149 + $0x48] sm:$0xff] %vm8219, %v8196
        %8230 = vst.msk [vmem:[%s149 + $0x50] sm:$0xff] %vm8219, %v8197
        %8231 = vst.msk [vmem:[%s149 + $0x58] sm:$0xff] %vm8219, %v8198
        %8232 = vst.msk [vmem:[%s149 + $0x60] sm:$0xff] %vm8219, %v8199
        %8233 = vst.msk [vmem:[%s149 + $0x68] sm:$0xff] %vm8219, %v8200
        %8234 = vst.msk [vmem:[%s149 + $0x70] sm:$0xff] %vm8219, %v8201
        %8235 = vst.msk [vmem:[%s149 + $0x78] sm:$0xff] %vm8219, %v8202
        %8236 = vst.msk [vmem:[%s149 + $0x80] sm:$0xff] %vm8219, %v8203
        %8237 = vst.msk [vmem:[%s149 + $0x88] sm:$0xff] %vm8219, %v8204
        %8238 = vst.msk [vmem:[%s149 + $0x90] sm:$0xff] %vm8219, %v8205
        %8239 = vst.msk [vmem:[%s149 + $0x98] sm:$0xff] %vm8219, %v8206
        %8240 = vst.msk [vmem:[%s149 + $0xa0] sm:$0xff] %vm8219, %v8207
        %8241 = vst.msk [vmem:[%s149 + $0xa8] sm:$0xff] %vm8219, %v8208
        %8242 = vst.msk [vmem:[%s149 + $0xb0] sm:$0xff] %vm8219, %v8209
        %8243 = vst.msk [vmem:[%s149 + $0xb8] sm:$0xff] %vm8219, %v8210
        %8244 = vst.msk [vmem:[%s149 + $0xc0] sm:$0xff] %vm8219, %v8211
        %8245 = vst.msk [vmem:[%s149 + $0xc8] sm:$0xff] %vm8219, %v8212
        %8246 = vst.msk [vmem:[%s149 + $0xd0] sm:$0xff] %vm8219, %v8213
        %8247 = vst.msk [vmem:[%s149 + $0xd8] sm:$0xff] %vm8219, %v8214
        %8248 = vst.msk [vmem:[%s149 + $0xe0] sm:$0xff] %vm8219, %v8215
        %8249 = vst.msk [vmem:[%s149 + $0xe8] sm:$0xff] %vm8219, %v8216
        %8250 = vst.msk [vmem:[%s149 + $0xf0] sm:$0xff] %vm8219, %v8217
        %8251 = vst.msk [vmem:[%s149 + $0xf8] sm:$0xff] %vm8219, %v8218
        %s8252 = sand.u32 %s71, 1
        %s8253 = scalar_lea.sflag [#allocation3], %s8252
        %s8254 = sand.u32 %s71, 1
        %s8255 = smul.addr %s8254, 256
        %s8256 = scalar_lea.vmem [#allocation2], %s8255
        // Predicated region
        $region29: #{tpu_custom_call.1} parent=27 // pred_check
          %p8257 = pneg %p81
        $region30: #{tpu_custom_call.1} parent=27 // pred_check_branch
          %8259 = sbr.rel (%p8257) target = $region32
        $region31: #{tpu_custom_call.1} parent=27 // pred_region
          %s8260 = smul.u32 32, %s16
          %s8261 = ssub.s32 125, %s8260
          %p8262 = scmp.lt.s32.totalorder %s8261, 32
          %s8263 = scalar_select %p8262, %s8261, 32
          %s8264 = smul.u32 128, %s8263
          %s8266 = ssub.s32 4096, %s8264
          %8267 = vsyncadd %s8253, %s8266
          %p8268 = scmp.ne.s32.totalorder 0, %s8264
          %s8269 = smul.addr %s8260, 128
          %s8270 = scalar_lea.hbm %s2, %s8269
          %s8271 = smul.u32 8, %s8263
          %s8272 = sshll.u32 %s8256, 4
          %s8273 = int_to_ptr.vmem [resolvable:$true] %s8272
          %s8274 = sshll.u32 %s8271, 4
          %8278 = dma.vmem_to_hbm [thread:$0]  (%p8268), %s8273, %s8274, %s8270, %s8253, 128, 128, 8
        $region32: #{tpu_custom_call.1} parent=27 // pred_fallthru
          _
      $region28: #{tpu_custom_call.1} parent=5 // pred_fallthru
        _
      %p8279 = scmp.le.s32.totalorder 2, %s11
      // Predicated region
      $region33: #{tpu_custom_call.1} parent=5 // pred_check
        %p8280 = pneg %p8279
      $region34: #{tpu_custom_call.1} parent=5 // pred_check_branch
        %8282 = sbr.rel (%p8280) target = $region36
      $region35: #{tpu_custom_call.1} parent=5 // pred_region
        %s8283 = ssub.s32 %s11, 2
        // Predicated region
        $region37: #{tpu_custom_call.1} parent=35 // pred_check
          %p8284 = pneg %p87
        $region38: #{tpu_custom_call.1} parent=35 // pred_check_branch
          %8286 = sbr.rel (%p8284) target = $region40
        $region39: #{tpu_custom_call.1} parent=35 // pred_region
          %s8287 = sand.u32 %s72, 1
          %s8288 = scalar_lea.sflag [#allocation3], %s8287
          %s8289 = sand.u32 %s72, 1
          %s8290 = smul.addr %s8289, 256
          %s8291 = scalar_lea.vmem [#allocation2], %s8290
          %8292 = dma.done %s8288, 4096
        $region40: #{tpu_custom_call.1} parent=35 // pred_fallthru
          _
      $region36: #{tpu_custom_call.1} parent=5 // pred_fallthru
        _
    $region6: #{tpu_custom_call.1} parent=1 // loop_footer
      %s15 = sadd.s32 1, %s11
    $region7: #{tpu_custom_call.1} parent=1 // loop_footer_branch
      %10 = sbr.rel target = $region3
    $region8: #{tpu_custom_call.1} parent=1 // loop_exit
      _
    %8293 = vsyncpa [#allocation3], 1
    %s8294 = scalar_lea.sflag [#allocation3], 1
    %8295 = vsyncpa %s8294, 1

</llo_original>
